<compile_context>
chip_gen: v7x
topology: tpu7x:2x2x1
jax: 0.10.0
libtpu: 0.0.40
codegen_flags: <defaults>
</compile_context>

<pallas_src>
import functools
import math

import jax
import jax.numpy as jnp
from jax.experimental import pallas as pl
from jax.experimental.pallas import tpu as pltpu

# ----------------------- config (mirrors CFG) --------------------------------
MAX_LEN = 9            # tgt seq length L = MAX_LEN - 1 = 8
PAD_IDX = 0
VOCAB_SIZE = 227
VOCAB_PAD = 256        # lane-dense (multiple of 128) padded vocab for the head
ENC_LEN = 16           # encoder_length
DIM = 32
NUM_HEADS = 4
HEAD_DIM = DIM // NUM_HEADS
NUM_LAYERS = 2
FFN_DIM = 2048         # nn.TransformerDecoderLayer default dim_feedforward
EPS = 1e-5             # LayerNorm default eps
NEG = -1e9             # large finite negative instead of -inf
EMB_VOCAB = 227        # nn.Embedding(227, dim)

# rows of the per-layer packed `vecs` array (all DIM-wide f32 vectors)
V_CA_BQ, V_SA_BO, V_CA_BO = 0, 1, 2
V_LN1_G, V_LN1_B, V_LN2_G, V_LN2_B, V_LN3_G, V_LN3_B, V_B2 = 3, 4, 5, 6, 7, 8, 9


# ----------------------------- fused Pallas kernel ---------------------------
def _fused_decoder_kernel(x_ref, mem_ref, smask_ref, cmask_ref,
                          qkv_w_ref, qkv_b_ref, caq_w_ref, kv_w_ref, kv_b_ref,
                          wo_ref, vec_ref, w1_ref, b1_ref, w2_ref,
                          w_out_ref, b_out_ref, out_ref,
                          *, n_layers, num_heads, head_dim):
    """Entire decoder forward in one kernel body; everything lives in VMEM."""
    D = num_heads * head_dim

    x = x_ref[...]                      # (Mq, D)    flattened (N*L, D) tgt acts, f32
    mem = mem_ref[...]                  # (Mk, D)    flattened (N*S, D) memory, f32
    smask = smask_ref[...]              # (H*Mq, Mq) causal+pad+batch mask, tiled/head
    cmask = cmask_ref[...]              # (H*Mq, Mk) batch-block mask, tiled/head
    Mq = x.shape[0]

    # hoisted head-lane selector masks (exact zeros outside each head's lanes)
    lane = jax.lax.broadcasted_iota(jnp.int32, (1, D), 1)
    hm = [((lane >= h * head_dim) & (lane < (h + 1) * head_dim)).astype(jnp.float32)
          for h in range(num_heads)]

    def dotw(a, w):  # activation @ bf16 weight, f32 accumulation
        return jnp.dot(a.astype(w.dtype), w, preferred_element_type=jnp.float32)

    def dot_f32(a, b):
        return jnp.dot(a, b, preferred_element_type=jnp.float32)

    def dot_t(a, b):  # a @ b.T without materializing a transpose
        return jax.lax.dot_general(a, b, (((1,), (1,)), ((), ())),
                                   preferred_element_type=jnp.float32)

    def layernorm(v, g, b):
        mu = jnp.mean(v, axis=-1, keepdims=True)
        var = jnp.mean((v - mu) ** 2, axis=-1, keepdims=True)
        return (v - mu) * jax.lax.rsqrt(var + EPS) * g + b

    def attend(q, k, v, mask, w_o, b_o):
        # Sublane-stack head-masked copies of q -> one score matmul, one softmax,
        # one P@V matmul; fold heads back with masked adds.  The 1/sqrt(head_dim)
        # scale is already folded into the q projection weights/biases.
        q_stack = jnp.concatenate([q * hm[h] for h in range(num_heads)], axis=0)
        s = dot_t(q_stack, k) + mask                       # (H*Mq, Mk) f32
        s = s - jnp.max(s, axis=-1, keepdims=True)
        p = jnp.exp(s)
        denom = jnp.sum(p, axis=-1, keepdims=True)         # (H*Mq, 1)
        o_stack = dot_f32(p, v)                            # (H*Mq, D)
        o_stack = o_stack * pl.reciprocal(denom, approx=True)   # deferred normalization
        o = o_stack[0:Mq] * hm[0]
        for h in range(1, num_heads):
            o = o + o_stack[h * Mq:(h + 1) * Mq] * hm[h]
        return dotw(o, w_o) + b_o

    for l in range(n_layers):
        V = vec_ref[l]                                     # (16, D) f32
        wo = wo_ref[l]                                     # (2D, D) bf16

        # --- self-attention: fused [q|k|v] projection of x --------------------
        qkv = dotw(x, qkv_w_ref[l]) + qkv_b_ref[l:l + 1]   # (Mq, 3D)
        q, k, v = qkv[:, 0:D], qkv[:, D:2 * D], qkv[:, 2 * D:3 * D]
        sa = attend(q, k, v, smask, wo[0:D], V[V_SA_BO:V_SA_BO + 1])
        x = layernorm(x + sa, V[V_LN1_G:V_LN1_G + 1], V[V_LN1_B:V_LN1_B + 1])

        # --- cross-attention to encoder memory --------------------------------
        q = dotw(x, caq_w_ref[l]) + V[V_CA_BQ:V_CA_BQ + 1]
        kv = dotw(mem, kv_w_ref[l]) + kv_b_ref[l:l + 1]    # fused [k|v] of mem
        k, v = kv[:, 0:D], kv[:, D:2 * D]
        ca = attend(q, k, v, cmask, wo[D:2 * D], V[V_CA_BO:V_CA_BO + 1])
        x = layernorm(x + ca, V[V_LN2_G:V_LN2_G + 1], V[V_LN2_B:V_LN2_B + 1])

        # --- feed-forward (ReLU) ----------------------------------------------
        h1 = jnp.maximum(dotw(x, w1_ref[l]) + b1_ref[l:l + 1], 0.0)   # (Mq, F)
        ff = dotw(h1, w2_ref[l]) + V[V_B2:V_B2 + 1]
        x = layernorm(x + ff, V[V_LN3_G:V_LN3_G + 1], V[V_LN3_B:V_LN3_B + 1])

    # lane-dense padded vocab head (256 columns, unmasked stores)
    out_ref[...] = dotw(x, w_out_ref[...]) + b_out_ref[...]


# ------------------------------ forward wrapper -------------------------------
def decoder_forward(params, encoder_out, tgt):
    """
    encoder_out: (N, ENC_LEN, DIM) float32
    tgt:         (N, L) int32,  L == MAX_LEN - 1
    returns      (N, L, VOCAB_SIZE) float32
    """
    N, L = tgt.shape
    S = encoder_out.shape[1]
    n_layers = params["w1"].shape[0]

    # embedding gather + positional embeddings (dropout = identity in eval).
    # TODO(synk): embedding gather stays in XLA (data-dependent gather); all
    # transformer compute below runs in the single fused Pallas kernel.
    x = jnp.take(params["embedding"], tgt, axis=0) + params["decoder_pos_embed"]
    mem = encoder_out + params["encoder_pos_embed"]

    # Batch-merged additive masks with a large finite negative: one wide matmul
    # covers the whole batch; cross-batch entries underflow to exactly 0 after
    # softmax.  Rows that would be fully masked (all causally-visible keys PAD)
    # keep their diagonal visible — PyTorch yields NaN for those rows, this
    # guard keeps them finite without cross-batch leakage.
    row_b = jnp.arange(N * L) // L
    pos = jnp.arange(N * L) % L
    same_b = row_b[:, None] == row_b[None, :]
    causal_ok = pos[None, :] <= pos[:, None]
    key_not_pad = (tgt.reshape(-1) != PAD_IDX)[None, :]
    vis = same_b & causal_ok & key_not_pad
    needs_guard = ~jnp.any(vis, axis=-1, keepdims=True)
    vis = vis | (jnp.eye(N * L, dtype=bool) & needs_guard)
    smask = jnp.where(vis, 0.0, NEG).astype(jnp.float32)            # (N*L, N*L)
    mem_b = jnp.arange(N * S) // S
    cmask = jnp.where(row_b[:, None] == mem_b[None, :], 0.0, NEG
                      ).astype(jnp.float32)                         # (N*L, N*S)
    smask_t = jnp.tile(smask, (NUM_HEADS, 1))                       # (H*N*L, N*L)
    cmask_t = jnp.tile(cmask, (NUM_HEADS, 1))                       # (H*N*L, N*S)

    kernel = functools.partial(_fused_decoder_kernel, n_layers=n_layers,
                               num_heads=NUM_HEADS, head_dim=HEAD_DIM)
    vmem = pl.BlockSpec(memory_space=pltpu.MemorySpace.VMEM)
    out = pl.pallas_call(
        kernel,
        out_shape=jax.ShapeDtypeStruct((N * L, VOCAB_PAD), jnp.float32),
        in_specs=[vmem] * 16,
        out_specs=vmem,
    )(x.reshape(N * L, DIM), mem.reshape(N * S, DIM), smask_t, cmask_t,
      params["qkv_w"], params["qkv_b"], params["caq_w"], params["kv_w"],
      params["kv_b"], params["wo"], params["vecs"],
      params["w1"], params["b1"], params["w2"],
      params["w_out"], params["b_out"])

    return out[:, :VOCAB_SIZE].reshape(N, L, VOCAB_SIZE)


# ------------------------------ param init / packing --------------------------
def init_params(key):
    keys = iter(jax.random.split(key, 256))

    def xavier(shape):
        limit = math.sqrt(6.0 / (shape[0] + shape[1]))
        return jax.random.uniform(next(keys), shape, jnp.float32, -limit, limit)

    def trunc_normal(shape, std=0.02):
        return jnp.clip(jax.random.normal(next(keys), shape, jnp.float32) * std,
                        -2 * std, 2 * std)

    def zeros_d():
        return jnp.zeros((DIM,), jnp.float32)

    layers = []
    for _ in range(NUM_LAYERS):
        layers.append({
            "sa_wq": xavier((DIM, DIM)), "sa_bq": zeros_d(),
            "sa_wk": xavier((DIM, DIM)), "sa_bk": zeros_d(),
            "sa_wv": xavier((DIM, DIM)), "sa_bv": zeros_d(),
            "sa_wo": xavier((DIM, DIM)), "sa_bo": zeros_d(),
            "ca_wq": xavier((DIM, DIM)), "ca_bq": zeros_d(),
            "ca_wk": xavier((DIM, DIM)), "ca_bk": zeros_d(),
            "ca_wv": xavier((DIM, DIM)), "ca_bv": zeros_d(),
            "ca_wo": xavier((DIM, DIM)), "ca_bo": zeros_d(),
            "ln1_g": jnp.ones((DIM,), jnp.float32), "ln1_b": zeros_d(),
            "ln2_g": jnp.ones((DIM,), jnp.float32), "ln2_b": zeros_d(),
            "ln3_g": jnp.ones((DIM,), jnp.float32), "ln3_b": zeros_d(),
            "w1": xavier((DIM, FFN_DIM)), "b1": jnp.zeros((FFN_DIM,), jnp.float32),
            "w2": xavier((FFN_DIM, DIM)), "b2": zeros_d(),
        })

    w_out = xavier((DIM, VOCAB_SIZE))
    # lane-dense padded output head (extra columns are zero; sliced in wrapper)
    w_out_pad = jnp.zeros((DIM, VOCAB_PAD), jnp.float32).at[:, :VOCAB_SIZE].set(w_out)
    b_out_pad = jnp.zeros((1, VOCAB_PAD), jnp.float32)

    return {
        "embedding": xavier((EMB_VOCAB, DIM)),
        "decoder_pos_embed": trunc_normal((1, MAX_LEN - 1, DIM)),
        "encoder_pos_embed": trunc_normal((1, ENC_LEN, DIM)),
        "layers": layers,
        "w_out_pad": w_out_pad,
        "b_out_pad": b_out_pad,
    }


def pack_params(raw):
    """Pack per-layer weights into a few dense stacked arrays.

    Weights that feed the MXU are stored bf16 (halves the dominant HBM traffic,
    doubles MXU rate); biases / LayerNorm vectors stay f32.  The attention
    1/sqrt(head_dim) scale is folded into the q projections here.
    """
    scale = 1.0 / math.sqrt(HEAD_DIM)
    qkv_w, qkv_b, caq_w, kv_w, kv_b, wo, vecs, w1, b1, w2 = ([] for _ in range(10))
    for lp in raw["layers"]:
        qkv_w.append(jnp.concatenate(
            [lp["sa_wq"] * scale, lp["sa_wk"], lp["sa_wv"]], axis=1))      # (D, 3D)
        qkv_b.append(jnp.concatenate(
            [lp["sa_bq"] * scale, lp["sa_bk"], lp["sa_bv"]]))              # (3D,)
        caq_w.append(lp["ca_wq"] * scale)                                  # (D, D)
        kv_w.append(jnp.concatenate([lp["ca_wk"], lp["ca_wv"]], axis=1))   # (D, 2D)
        kv_b.append(jnp.concatenate([lp["ca_bk"], lp["ca_bv"]]))           # (2D,)
        wo.append(jnp.concatenate([lp["sa_wo"], lp["ca_wo"]], axis=0))     # (2D, D)
        v = [lp["ca_bq"] * scale, lp["sa_bo"], lp["ca_bo"],
             lp["ln1_g"], lp["ln1_b"], lp["ln2_g"], lp["ln2_b"],
             lp["ln3_g"], lp["ln3_b"], lp["b2"]]
        v += [jnp.zeros((DIM,), jnp.float32)] * (16 - len(v))
        vecs.append(jnp.stack(v))                                          # (16, D)
        w1.append(lp["w1"]); b1.append(lp["b1"].reshape(-1)); w2.append(lp["w2"])
    return {
        "qkv_w": jnp.stack(qkv_w).astype(jnp.bfloat16),   # (nl, D, 3D)
        "qkv_b": jnp.stack(qkv_b),                        # (nl, 3D)   f32
        "caq_w": jnp.stack(caq_w).astype(jnp.bfloat16),   # (nl, D, D)
        "kv_w": jnp.stack(kv_w).astype(jnp.bfloat16),     # (nl, D, 2D)
        "kv_b": jnp.stack(kv_b),                          # (nl, 2D)   f32
        "wo": jnp.stack(wo).astype(jnp.bfloat16),         # (nl, 2D, D)
        "vecs": jnp.stack(vecs),                          # (nl, 16, D) f32
        "w1": jnp.stack(w1).astype(jnp.bfloat16),         # (nl, D, F)
        "b1": jnp.stack(b1),                              # (nl, F)    f32
        "w2": jnp.stack(w2).astype(jnp.bfloat16),         # (nl, F, D)
        "embedding": raw["embedding"],
        "decoder_pos_embed": raw["decoder_pos_embed"],
        "encoder_pos_embed": raw["encoder_pos_embed"],
        "w_out": raw["w_out_pad"].astype(jnp.bfloat16),   # (D, VOCAB_PAD)
        "b_out": raw["b_out_pad"],                        # (1, VOCAB_PAD) f32
    }


# --------------------------------- main ---------------------------------------
if __name__ == "__main__":
    N = 2
    L = MAX_LEN - 1

    root = jax.random.PRNGKey(0)
    k_par, k_enc, k_tgt = jax.random.split(root, 3)

    params = pack_params(init_params(k_par))
    encoder_out = jax.random.normal(k_enc, (N, ENC_LEN, DIM), jnp.float32)
    # tokens in [1, 227) -> no PAD_IDX tokens (matches the reference harness)
    tgt = jax.random.randint(k_tgt, (N, L), 1, EMB_VOCAB, dtype=jnp.int32)

    fwd = jax.jit(decoder_forward)
    logits = jax.block_until_ready(fwd(params, encoder_out, tgt))

    assert logits.shape == (N, L, VOCAB_SIZE)
    assert bool(jnp.all(jnp.isfinite(logits)))
    print("KERNEL_OK")
</pallas_src>

<mosaic_0001>
module attributes {stable_mosaic.version = 11 : i64} {
  func.func @_fused_decoder_kernel(%arg0: memref<16x32xf32, #tpu.memory_space<vmem>>, %arg1: memref<32x32xf32, #tpu.memory_space<vmem>>, %arg2: memref<64x16xf32, #tpu.memory_space<vmem>>, %arg3: memref<64x32xf32, #tpu.memory_space<vmem>>, %arg4: memref<2x32x96xbf16, #tpu.memory_space<vmem>>, %arg5: memref<2x96xf32, #tpu.memory_space<vmem>>, %arg6: memref<2x32x32xbf16, #tpu.memory_space<vmem>>, %arg7: memref<2x32x64xbf16, #tpu.memory_space<vmem>>, %arg8: memref<2x64xf32, #tpu.memory_space<vmem>>, %arg9: memref<2x64x32xbf16, #tpu.memory_space<vmem>>, %arg10: memref<2x16x32xf32, #tpu.memory_space<vmem>>, %arg11: memref<2x32x2048xbf16, #tpu.memory_space<vmem>>, %arg12: memref<2x2048xf32, #tpu.memory_space<vmem>>, %arg13: memref<2x2048x32xbf16, #tpu.memory_space<vmem>>, %arg14: memref<32x256xbf16, #tpu.memory_space<vmem>>, %arg15: memref<1x256xf32, #tpu.memory_space<vmem>>, %arg16: memref<16x256xf32, #tpu.memory_space<vmem>>) attributes {dimension_semantics = [], scalar_prefetch = 0 : i64, scratch_operands = 0 : i64, tpu.core_type = #tpu.core_type<tc>} {
    %c0 = arith.constant 0 : index
    %c0_0 = arith.constant 0 : index
    %0 = vector.load %arg0[%c0, %c0_0] : memref<16x32xf32, #tpu.memory_space<vmem>>, vector<16x32xf32>
    %c0_1 = arith.constant 0 : index
    %c0_2 = arith.constant 0 : index
    %1 = vector.load %arg1[%c0_1, %c0_2] : memref<32x32xf32, #tpu.memory_space<vmem>>, vector<32x32xf32>
    %c0_3 = arith.constant 0 : index
    %c0_4 = arith.constant 0 : index
    %2 = vector.load %arg2[%c0_3, %c0_4] : memref<64x16xf32, #tpu.memory_space<vmem>>, vector<64x16xf32>
    %c0_5 = arith.constant 0 : index
    %c0_6 = arith.constant 0 : index
    %3 = vector.load %arg3[%c0_5, %c0_6] : memref<64x32xf32, #tpu.memory_space<vmem>>, vector<64x32xf32>
    %4 = tpu.iota {dimensions = array<i32: 1>} : vector<1x32xi32>
    %c0_i32 = arith.constant 0 : i32
    %5 = vector.broadcast %c0_i32 : i32 to vector<1x32xi32>
    %6 = arith.cmpi sge, %4, %5 : vector<1x32xi32>
    %c8_i32 = arith.constant 8 : i32
    %7 = vector.broadcast %c8_i32 : i32 to vector<1x32xi32>
    %8 = arith.cmpi slt, %4, %7 : vector<1x32xi32>
    %9 = arith.andi %6, %8 : vector<1x32xi1>
    %10 = arith.extui %9 : vector<1x32xi1> to vector<1x32xi32>
    %11 = arith.sitofp %10 : vector<1x32xi32> to vector<1x32xf32>
    %c8_i32_7 = arith.constant 8 : i32
    %12 = vector.broadcast %c8_i32_7 : i32 to vector<1x32xi32>
    %13 = arith.cmpi sge, %4, %12 : vector<1x32xi32>
    %c16_i32 = arith.constant 16 : i32
    %14 = vector.broadcast %c16_i32 : i32 to vector<1x32xi32>
    %15 = arith.cmpi slt, %4, %14 : vector<1x32xi32>
    %16 = arith.andi %13, %15 : vector<1x32xi1>
    %17 = arith.extui %16 : vector<1x32xi1> to vector<1x32xi32>
    %18 = arith.sitofp %17 : vector<1x32xi32> to vector<1x32xf32>
    %c16_i32_8 = arith.constant 16 : i32
    %19 = vector.broadcast %c16_i32_8 : i32 to vector<1x32xi32>
    %20 = arith.cmpi sge, %4, %19 : vector<1x32xi32>
    %c24_i32 = arith.constant 24 : i32
    %21 = vector.broadcast %c24_i32 : i32 to vector<1x32xi32>
    %22 = arith.cmpi slt, %4, %21 : vector<1x32xi32>
    %23 = arith.andi %20, %22 : vector<1x32xi1>
    %24 = arith.extui %23 : vector<1x32xi1> to vector<1x32xi32>
    %25 = arith.sitofp %24 : vector<1x32xi32> to vector<1x32xf32>
    %c24_i32_9 = arith.constant 24 : i32
    %26 = vector.broadcast %c24_i32_9 : i32 to vector<1x32xi32>
    %27 = arith.cmpi sge, %4, %26 : vector<1x32xi32>
    %c32_i32 = arith.constant 32 : i32
    %28 = vector.broadcast %c32_i32 : i32 to vector<1x32xi32>
    %29 = arith.cmpi slt, %4, %28 : vector<1x32xi32>
    %30 = arith.andi %27, %29 : vector<1x32xi1>
    %31 = arith.extui %30 : vector<1x32xi1> to vector<1x32xi32>
    %32 = arith.sitofp %31 : vector<1x32xi32> to vector<1x32xf32>
    %c0_10 = arith.constant 0 : index
    %c0_11 = arith.constant 0 : index
    %c0_12 = arith.constant 0 : index
    %33 = vector.load %arg10[%c0_10, %c0_11, %c0_12] : memref<2x16x32xf32, #tpu.memory_space<vmem>>, vector<1x16x32xf32>
    %34 = vector.shape_cast %33 : vector<1x16x32xf32> to vector<16x32xf32>
    %c0_13 = arith.constant 0 : index
    %c0_14 = arith.constant 0 : index
    %c0_15 = arith.constant 0 : index
    %35 = vector.load %arg9[%c0_13, %c0_14, %c0_15] : memref<2x64x32xbf16, #tpu.memory_space<vmem>>, vector<1x64x32xbf16>
    %36 = vector.shape_cast %35 : vector<1x64x32xbf16> to vector<64x32xbf16>
    %c0_16 = arith.constant 0 : index
    %c0_17 = arith.constant 0 : index
    %c0_18 = arith.constant 0 : index
    %37 = vector.load %arg4[%c0_16, %c0_17, %c0_18] : memref<2x32x96xbf16, #tpu.memory_space<vmem>>, vector<1x32x96xbf16>
    %38 = vector.shape_cast %37 : vector<1x32x96xbf16> to vector<32x96xbf16>
    %39 = arith.truncf %0 : vector<16x32xf32> to vector<16x32xbf16>
    %cst = arith.constant dense<0.000000e+00> : vector<16x96xf32>
    %40 = tpu.matmul %39, %38, %cst {dimension_numbers = #tpu.dot_dimension_numbers<[1], [0], [0], [1], [0, 0, 1, 1], [], []>} : vector<16x32xbf16>, vector<32x96xbf16>, vector<16x96xf32> -> vector<16x96xf32>
    %c0_19 = arith.constant 0 : index
    %c0_20 = arith.constant 0 : index
    %41 = vector.load %arg5[%c0_19, %c0_20] : memref<2x96xf32, #tpu.memory_space<vmem>>, vector<1x96xf32>
    %42 = vector.broadcast %41 : vector<1x96xf32> to vector<16x96xf32>
    %43 = arith.addf %40, %42 : vector<16x96xf32>
    %44 = vector.extract_strided_slice %43 {offsets = [0, 0], sizes = [16, 32], strides = [1, 1]} : vector<16x96xf32> to vector<16x32xf32>
    %45 = vector.extract_strided_slice %43 {offsets = [0, 32], sizes = [16, 32], strides = [1, 1]} : vector<16x96xf32> to vector<16x32xf32>
    %46 = vector.extract_strided_slice %43 {offsets = [0, 64], sizes = [16, 32], strides = [1, 1]} : vector<16x96xf32> to vector<16x32xf32>
    %47 = vector.extract_strided_slice %36 {offsets = [0, 0], sizes = [32, 32], strides = [1, 1]} : vector<64x32xbf16> to vector<32x32xbf16>
    %48 = vector.extract_strided_slice %34 {offsets = [1, 0], sizes = [1, 32], strides = [1, 1]} : vector<16x32xf32> to vector<1x32xf32>
    %49 = vector.broadcast %11 : vector<1x32xf32> to vector<16x32xf32>
    %50 = arith.mulf %44, %49 : vector<16x32xf32>
    %51 = vector.broadcast %18 : vector<1x32xf32> to vector<16x32xf32>
    %52 = arith.mulf %44, %51 : vector<16x32xf32>
    %53 = vector.broadcast %25 : vector<1x32xf32> to vector<16x32xf32>
    %54 = arith.mulf %44, %53 : vector<16x32xf32>
    %55 = vector.broadcast %32 : vector<1x32xf32> to vector<16x32xf32>
    %56 = arith.mulf %44, %55 : vector<16x32xf32>
    %57 = tpu.concatenate %50, %52, %54, %56 in 0 : vector<16x32xf32>, vector<16x32xf32>, vector<16x32xf32>, vector<16x32xf32> -> vector<64x32xf32>
    %cst_21 = arith.constant dense<0.000000e+00> : vector<64x16xf32>
    %58 = tpu.matmul %57, %45, %cst_21 {dimension_numbers = #tpu.dot_dimension_numbers<[1], [1], [0], [0], [0, 0, 1, 0], [], []>} : vector<64x32xf32>, vector<16x32xf32>, vector<64x16xf32> -> vector<64x16xf32>
    %59 = arith.addf %58, %2 : vector<64x16xf32>
    %cst_22 = arith.constant dense<0xFF800000> : vector<64xf32>
    %60 = vector.multi_reduction <maximumf>, %59, %cst_22 [1] : vector<64x16xf32> to vector<64xf32>
    %61 = vector.shape_cast %60 : vector<64xf32> to vector<64x1xf32>
    %62 = vector.broadcast %61 : vector<64x1xf32> to vector<64x16xf32>
    %63 = arith.subf %59, %62 : vector<64x16xf32>
    %64 = math.exp %63 : vector<64x16xf32>
    %cst_23 = arith.constant dense<0.000000e+00> : vector<64xf32>
    %65 = vector.multi_reduction <add>, %64, %cst_23 [1] : vector<64x16xf32> to vector<64xf32>
    %66 = vector.shape_cast %65 : vector<64xf32> to vector<64x1xf32>
    %cst_24 = arith.constant dense<0.000000e+00> : vector<64x32xf32>
    %67 = tpu.matmul %64, %46, %cst_24 {dimension_numbers = #tpu.dot_dimension_numbers<[1], [0], [0], [1], [0, 0, 1, 1], [], []>} : vector<64x16xf32>, vector<16x32xf32>, vector<64x32xf32> -> vector<64x32xf32>
    %68 = tpu.reciprocal %66 {approx = true} : vector<64x1xf32> -> vector<64x1xf32>
    %69 = vector.broadcast %68 : vector<64x1xf32> to vector<64x32xf32>
    %70 = arith.mulf %67, %69 : vector<64x32xf32>
    %71 = vector.extract_strided_slice %70 {offsets = [0, 0], sizes = [16, 32], strides = [1, 1]} : vector<64x32xf32> to vector<16x32xf32>
    %72 = vector.broadcast %11 : vector<1x32xf32> to vector<16x32xf32>
    %73 = arith.mulf %71, %72 : vector<16x32xf32>
    %74 = vector.extract_strided_slice %70 {offsets = [16, 0], sizes = [16, 32], strides = [1, 1]} : vector<64x32xf32> to vector<16x32xf32>
    %75 = vector.broadcast %18 : vector<1x32xf32> to vector<16x32xf32>
    %76 = arith.mulf %74, %75 : vector<16x32xf32>
    %77 = arith.addf %73, %76 : vector<16x32xf32>
    %78 = vector.extract_strided_slice %70 {offsets = [32, 0], sizes = [16, 32], strides = [1, 1]} : vector<64x32xf32> to vector<16x32xf32>
    %79 = vector.broadcast %25 : vector<1x32xf32> to vector<16x32xf32>
    %80 = arith.mulf %78, %79 : vector<16x32xf32>
    %81 = arith.addf %77, %80 : vector<16x32xf32>
    %82 = vector.extract_strided_slice %70 {offsets = [48, 0], sizes = [16, 32], strides = [1, 1]} : vector<64x32xf32> to vector<16x32xf32>
    %83 = vector.broadcast %32 : vector<1x32xf32> to vector<16x32xf32>
    %84 = arith.mulf %82, %83 : vector<16x32xf32>
    %85 = arith.addf %81, %84 : vector<16x32xf32>
    %86 = arith.truncf %85 : vector<16x32xf32> to vector<16x32xbf16>
    %cst_25 = arith.constant dense<0.000000e+00> : vector<16x32xf32>
    %87 = tpu.matmul %86, %47, %cst_25 {dimension_numbers = #tpu.dot_dimension_numbers<[1], [0], [0], [1], [0, 0, 1, 1], [], []>} : vector<16x32xbf16>, vector<32x32xbf16>, vector<16x32xf32> -> vector<16x32xf32>
    %88 = vector.broadcast %48 : vector<1x32xf32> to vector<16x32xf32>
    %89 = arith.addf %87, %88 : vector<16x32xf32>
    %90 = arith.addf %0, %89 : vector<16x32xf32>
    %91 = vector.extract_strided_slice %34 {offsets = [3, 0], sizes = [1, 32], strides = [1, 1]} : vector<16x32xf32> to vector<1x32xf32>
    %92 = vector.extract_strided_slice %34 {offsets = [4, 0], sizes = [1, 32], strides = [1, 1]} : vector<16x32xf32> to vector<1x32xf32>
    %cst_26 = arith.constant dense<0.000000e+00> : vector<16xf32>
    %93 = vector.multi_reduction <add>, %90, %cst_26 [1] : vector<16x32xf32> to vector<16xf32>
    %94 = vector.shape_cast %93 : vector<16xf32> to vector<16x1xf32>
    %cst_27 = arith.constant 3.200000e+01 : f32
    %95 = vector.broadcast %cst_27 : f32 to vector<16x1xf32>
    %96 = arith.divf %94, %95 : vector<16x1xf32>
    %97 = vector.broadcast %96 : vector<16x1xf32> to vector<16x32xf32>
    %98 = arith.subf %90, %97 : vector<16x32xf32>
    %99 = arith.mulf %98, %98 : vector<16x32xf32>
    %cst_28 = arith.constant dense<0.000000e+00> : vector<16xf32>
    %100 = vector.multi_reduction <add>, %99, %cst_28 [1] : vector<16x32xf32> to vector<16xf32>
    %101 = vector.shape_cast %100 : vector<16xf32> to vector<16x1xf32>
    %cst_29 = arith.constant 3.200000e+01 : f32
    %102 = vector.broadcast %cst_29 : f32 to vector<16x1xf32>
    %103 = arith.divf %101, %102 : vector<16x1xf32>
    %104 = vector.broadcast %96 : vector<16x1xf32> to vector<16x32xf32>
    %105 = arith.subf %90, %104 : vector<16x32xf32>
    %cst_30 = arith.constant 9.99999974E-6 : f32
    %106 = vector.broadcast %cst_30 : f32 to vector<16x1xf32>
    %107 = arith.addf %103, %106 : vector<16x1xf32>
    %108 = math.rsqrt %107 : vector<16x1xf32>
    %109 = vector.broadcast %108 : vector<16x1xf32> to vector<16x32xf32>
    %110 = arith.mulf %105, %109 : vector<16x32xf32>
    %111 = vector.broadcast %91 : vector<1x32xf32> to vector<16x32xf32>
    %112 = arith.mulf %110, %111 : vector<16x32xf32>
    %113 = vector.broadcast %92 : vector<1x32xf32> to vector<16x32xf32>
    %114 = arith.addf %112, %113 : vector<16x32xf32>
    %c0_31 = arith.constant 0 : index
    %c0_32 = arith.constant 0 : index
    %c0_33 = arith.constant 0 : index
    %115 = vector.load %arg6[%c0_31, %c0_32, %c0_33] : memref<2x32x32xbf16, #tpu.memory_space<vmem>>, vector<1x32x32xbf16>
    %116 = vector.shape_cast %115 : vector<1x32x32xbf16> to vector<32x32xbf16>
    %117 = arith.truncf %114 : vector<16x32xf32> to vector<16x32xbf16>
    %cst_34 = arith.constant dense<0.000000e+00> : vector<16x32xf32>
    %118 = tpu.matmul %117, %116, %cst_34 {dimension_numbers = #tpu.dot_dimension_numbers<[1], [0], [0], [1], [0, 0, 1, 1], [], []>} : vector<16x32xbf16>, vector<32x32xbf16>, vector<16x32xf32> -> vector<16x32xf32>
    %119 = vector.extract_strided_slice %34 {offsets = [0, 0], sizes = [1, 32], strides = [1, 1]} : vector<16x32xf32> to vector<1x32xf32>
    %120 = vector.broadcast %119 : vector<1x32xf32> to vector<16x32xf32>
    %121 = arith.addf %118, %120 : vector<16x32xf32>
    %c0_35 = arith.constant 0 : index
    %c0_36 = arith.constant 0 : index
    %c0_37 = arith.constant 0 : index
    %122 = vector.load %arg7[%c0_35, %c0_36, %c0_37] : memref<2x32x64xbf16, #tpu.memory_space<vmem>>, vector<1x32x64xbf16>
    %123 = vector.shape_cast %122 : vector<1x32x64xbf16> to vector<32x64xbf16>
    %124 = arith.truncf %1 : vector<32x32xf32> to vector<32x32xbf16>
    %cst_38 = arith.constant dense<0.000000e+00> : vector<32x64xf32>
    %125 = tpu.matmul %124, %123, %cst_38 {dimension_numbers = #tpu.dot_dimension_numbers<[1], [0], [0], [1], [0, 0, 1, 1], [], []>} : vector<32x32xbf16>, vector<32x64xbf16>, vector<32x64xf32> -> vector<32x64xf32>
    %c0_39 = arith.constant 0 : index
    %c0_40 = arith.constant 0 : index
    %126 = vector.load %arg8[%c0_39, %c0_40] : memref<2x64xf32, #tpu.memory_space<vmem>>, vector<1x64xf32>
    %127 = vector.broadcast %126 : vector<1x64xf32> to vector<32x64xf32>
    %128 = arith.addf %125, %127 : vector<32x64xf32>
    %129 = vector.extract_strided_slice %128 {offsets = [0, 0], sizes = [32, 32], strides = [1, 1]} : vector<32x64xf32> to vector<32x32xf32>
    %130 = vector.extract_strided_slice %128 {offsets = [0, 32], sizes = [32, 32], strides = [1, 1]} : vector<32x64xf32> to vector<32x32xf32>
    %131 = vector.extract_strided_slice %36 {offsets = [32, 0], sizes = [32, 32], strides = [1, 1]} : vector<64x32xbf16> to vector<32x32xbf16>
    %132 = vector.extract_strided_slice %34 {offsets = [2, 0], sizes = [1, 32], strides = [1, 1]} : vector<16x32xf32> to vector<1x32xf32>
    %133 = vector.broadcast %11 : vector<1x32xf32> to vector<16x32xf32>
    %134 = arith.mulf %121, %133 : vector<16x32xf32>
    %135 = vector.broadcast %18 : vector<1x32xf32> to vector<16x32xf32>
    %136 = arith.mulf %121, %135 : vector<16x32xf32>
    %137 = vector.broadcast %25 : vector<1x32xf32> to vector<16x32xf32>
    %138 = arith.mulf %121, %137 : vector<16x32xf32>
    %139 = vector.broadcast %32 : vector<1x32xf32> to vector<16x32xf32>
    %140 = arith.mulf %121, %139 : vector<16x32xf32>
    %141 = tpu.concatenate %134, %136, %138, %140 in 0 : vector<16x32xf32>, vector<16x32xf32>, vector<16x32xf32>, vector<16x32xf32> -> vector<64x32xf32>
    %cst_41 = arith.constant dense<0.000000e+00> : vector<64x32xf32>
    %142 = tpu.matmul %141, %129, %cst_41 {dimension_numbers = #tpu.dot_dimension_numbers<[1], [1], [0], [0], [0, 0, 1, 0], [], []>} : vector<64x32xf32>, vector<32x32xf32>, vector<64x32xf32> -> vector<64x32xf32>
    %143 = arith.addf %142, %3 : vector<64x32xf32>
    %cst_42 = arith.constant dense<0xFF800000> : vector<64xf32>
    %144 = vector.multi_reduction <maximumf>, %143, %cst_42 [1] : vector<64x32xf32> to vector<64xf32>
    %145 = vector.shape_cast %144 : vector<64xf32> to vector<64x1xf32>
    %146 = vector.broadcast %145 : vector<64x1xf32> to vector<64x32xf32>
    %147 = arith.subf %143, %146 : vector<64x32xf32>
    %148 = math.exp %147 : vector<64x32xf32>
    %cst_43 = arith.constant dense<0.000000e+00> : vector<64xf32>
    %149 = vector.multi_reduction <add>, %148, %cst_43 [1] : vector<64x32xf32> to vector<64xf32>
    %150 = vector.shape_cast %149 : vector<64xf32> to vector<64x1xf32>
    %cst_44 = arith.constant dense<0.000000e+00> : vector<64x32xf32>
    %151 = tpu.matmul %148, %130, %cst_44 {dimension_numbers = #tpu.dot_dimension_numbers<[1], [0], [0], [1], [0, 0, 1, 1], [], []>} : vector<64x32xf32>, vector<32x32xf32>, vector<64x32xf32> -> vector<64x32xf32>
    %152 = tpu.reciprocal %150 {approx = true} : vector<64x1xf32> -> vector<64x1xf32>
    %153 = vector.broadcast %152 : vector<64x1xf32> to vector<64x32xf32>
    %154 = arith.mulf %151, %153 : vector<64x32xf32>
    %155 = vector.extract_strided_slice %154 {offsets = [0, 0], sizes = [16, 32], strides = [1, 1]} : vector<64x32xf32> to vector<16x32xf32>
    %156 = vector.broadcast %11 : vector<1x32xf32> to vector<16x32xf32>
    %157 = arith.mulf %155, %156 : vector<16x32xf32>
    %158 = vector.extract_strided_slice %154 {offsets = [16, 0], sizes = [16, 32], strides = [1, 1]} : vector<64x32xf32> to vector<16x32xf32>
    %159 = vector.broadcast %18 : vector<1x32xf32> to vector<16x32xf32>
    %160 = arith.mulf %158, %159 : vector<16x32xf32>
    %161 = arith.addf %157, %160 : vector<16x32xf32>
    %162 = vector.extract_strided_slice %154 {offsets = [32, 0], sizes = [16, 32], strides = [1, 1]} : vector<64x32xf32> to vector<16x32xf32>
    %163 = vector.broadcast %25 : vector<1x32xf32> to vector<16x32xf32>
    %164 = arith.mulf %162, %163 : vector<16x32xf32>
    %165 = arith.addf %161, %164 : vector<16x32xf32>
    %166 = vector.extract_strided_slice %154 {offsets = [48, 0], sizes = [16, 32], strides = [1, 1]} : vector<64x32xf32> to vector<16x32xf32>
    %167 = vector.broadcast %32 : vector<1x32xf32> to vector<16x32xf32>
    %168 = arith.mulf %166, %167 : vector<16x32xf32>
    %169 = arith.addf %165, %168 : vector<16x32xf32>
    %170 = arith.truncf %169 : vector<16x32xf32> to vector<16x32xbf16>
    %cst_45 = arith.constant dense<0.000000e+00> : vector<16x32xf32>
    %171 = tpu.matmul %170, %131, %cst_45 {dimension_numbers = #tpu.dot_dimension_numbers<[1], [0], [0], [1], [0, 0, 1, 1], [], []>} : vector<16x32xbf16>, vector<32x32xbf16>, vector<16x32xf32> -> vector<16x32xf32>
    %172 = vector.broadcast %132 : vector<1x32xf32> to vector<16x32xf32>
    %173 = arith.addf %171, %172 : vector<16x32xf32>
    %174 = arith.addf %114, %173 : vector<16x32xf32>
    %175 = vector.extract_strided_slice %34 {offsets = [5, 0], sizes = [1, 32], strides = [1, 1]} : vector<16x32xf32> to vector<1x32xf32>
    %176 = vector.extract_strided_slice %34 {offsets = [6, 0], sizes = [1, 32], strides = [1, 1]} : vector<16x32xf32> to vector<1x32xf32>
    %cst_46 = arith.constant dense<0.000000e+00> : vector<16xf32>
    %177 = vector.multi_reduction <add>, %174, %cst_46 [1] : vector<16x32xf32> to vector<16xf32>
    %178 = vector.shape_cast %177 : vector<16xf32> to vector<16x1xf32>
    %cst_47 = arith.constant 3.200000e+01 : f32
    %179 = vector.broadcast %cst_47 : f32 to vector<16x1xf32>
    %180 = arith.divf %178, %179 : vector<16x1xf32>
    %181 = vector.broadcast %180 : vector<16x1xf32> to vector<16x32xf32>
    %182 = arith.subf %174, %181 : vector<16x32xf32>
    %183 = arith.mulf %182, %182 : vector<16x32xf32>
    %cst_48 = arith.constant dense<0.000000e+00> : vector<16xf32>
    %184 = vector.multi_reduction <add>, %183, %cst_48 [1] : vector<16x32xf32> to vector<16xf32>
    %185 = vector.shape_cast %184 : vector<16xf32> to vector<16x1xf32>
    %cst_49 = arith.constant 3.200000e+01 : f32
    %186 = vector.broadcast %cst_49 : f32 to vector<16x1xf32>
    %187 = arith.divf %185, %186 : vector<16x1xf32>
    %188 = vector.broadcast %180 : vector<16x1xf32> to vector<16x32xf32>
    %189 = arith.subf %174, %188 : vector<16x32xf32>
    %cst_50 = arith.constant 9.99999974E-6 : f32
    %190 = vector.broadcast %cst_50 : f32 to vector<16x1xf32>
    %191 = arith.addf %187, %190 : vector<16x1xf32>
    %192 = math.rsqrt %191 : vector<16x1xf32>
    %193 = vector.broadcast %192 : vector<16x1xf32> to vector<16x32xf32>
    %194 = arith.mulf %189, %193 : vector<16x32xf32>
    %195 = vector.broadcast %175 : vector<1x32xf32> to vector<16x32xf32>
    %196 = arith.mulf %194, %195 : vector<16x32xf32>
    %197 = vector.broadcast %176 : vector<1x32xf32> to vector<16x32xf32>
    %198 = arith.addf %196, %197 : vector<16x32xf32>
    %c0_51 = arith.constant 0 : index
    %c0_52 = arith.constant 0 : index
    %c0_53 = arith.constant 0 : index
    %199 = vector.load %arg11[%c0_51, %c0_52, %c0_53] : memref<2x32x2048xbf16, #tpu.memory_space<vmem>>, vector<1x32x2048xbf16>
    %200 = vector.shape_cast %199 : vector<1x32x2048xbf16> to vector<32x2048xbf16>
    %201 = arith.truncf %198 : vector<16x32xf32> to vector<16x32xbf16>
    %cst_54 = arith.constant dense<0.000000e+00> : vector<16x2048xf32>
    %202 = tpu.matmul %201, %200, %cst_54 {dimension_numbers = #tpu.dot_dimension_numbers<[1], [0], [0], [1], [0, 0, 1, 1], [], []>} : vector<16x32xbf16>, vector<32x2048xbf16>, vector<16x2048xf32> -> vector<16x2048xf32>
    %c0_55 = arith.constant 0 : index
    %c0_56 = arith.constant 0 : index
    %203 = vector.load %arg12[%c0_55, %c0_56] : memref<2x2048xf32, #tpu.memory_space<vmem>>, vector<1x2048xf32>
    %204 = vector.broadcast %203 : vector<1x2048xf32> to vector<16x2048xf32>
    %205 = arith.addf %202, %204 : vector<16x2048xf32>
    %cst_57 = arith.constant 0.000000e+00 : f32
    %206 = vector.broadcast %cst_57 : f32 to vector<16x2048xf32>
    %207 = arith.maximumf %205, %206 : vector<16x2048xf32>
    %c0_58 = arith.constant 0 : index
    %c0_59 = arith.constant 0 : index
    %c0_60 = arith.constant 0 : index
    %208 = vector.load %arg13[%c0_58, %c0_59, %c0_60] : memref<2x2048x32xbf16, #tpu.memory_space<vmem>>, vector<1x2048x32xbf16>
    %209 = vector.shape_cast %208 : vector<1x2048x32xbf16> to vector<2048x32xbf16>
    %210 = arith.truncf %207 : vector<16x2048xf32> to vector<16x2048xbf16>
    %cst_61 = arith.constant dense<0.000000e+00> : vector<16x32xf32>
    %211 = tpu.matmul %210, %209, %cst_61 {dimension_numbers = #tpu.dot_dimension_numbers<[1], [0], [0], [1], [0, 0, 1, 1], [], []>} : vector<16x2048xbf16>, vector<2048x32xbf16>, vector<16x32xf32> -> vector<16x32xf32>
    %212 = vector.extract_strided_slice %34 {offsets = [9, 0], sizes = [1, 32], strides = [1, 1]} : vector<16x32xf32> to vector<1x32xf32>
    %213 = vector.broadcast %212 : vector<1x32xf32> to vector<16x32xf32>
    %214 = arith.addf %211, %213 : vector<16x32xf32>
    %215 = arith.addf %198, %214 : vector<16x32xf32>
    %216 = vector.extract_strided_slice %34 {offsets = [7, 0], sizes = [1, 32], strides = [1, 1]} : vector<16x32xf32> to vector<1x32xf32>
    %217 = vector.extract_strided_slice %34 {offsets = [8, 0], sizes = [1, 32], strides = [1, 1]} : vector<16x32xf32> to vector<1x32xf32>
    %cst_62 = arith.constant dense<0.000000e+00> : vector<16xf32>
    %218 = vector.multi_reduction <add>, %215, %cst_62 [1] : vector<16x32xf32> to vector<16xf32>
    %219 = vector.shape_cast %218 : vector<16xf32> to vector<16x1xf32>
    %cst_63 = arith.constant 3.200000e+01 : f32
    %220 = vector.broadcast %cst_63 : f32 to vector<16x1xf32>
    %221 = arith.divf %219, %220 : vector<16x1xf32>
    %222 = vector.broadcast %221 : vector<16x1xf32> to vector<16x32xf32>
    %223 = arith.subf %215, %222 : vector<16x32xf32>
    %224 = arith.mulf %223, %223 : vector<16x32xf32>
    %cst_64 = arith.constant dense<0.000000e+00> : vector<16xf32>
    %225 = vector.multi_reduction <add>, %224, %cst_64 [1] : vector<16x32xf32> to vector<16xf32>
    %226 = vector.shape_cast %225 : vector<16xf32> to vector<16x1xf32>
    %cst_65 = arith.constant 3.200000e+01 : f32
    %227 = vector.broadcast %cst_65 : f32 to vector<16x1xf32>
    %228 = arith.divf %226, %227 : vector<16x1xf32>
    %229 = vector.broadcast %221 : vector<16x1xf32> to vector<16x32xf32>
    %230 = arith.subf %215, %229 : vector<16x32xf32>
    %cst_66 = arith.constant 9.99999974E-6 : f32
    %231 = vector.broadcast %cst_66 : f32 to vector<16x1xf32>
    %232 = arith.addf %228, %231 : vector<16x1xf32>
    %233 = math.rsqrt %232 : vector<16x1xf32>
    %234 = vector.broadcast %233 : vector<16x1xf32> to vector<16x32xf32>
    %235 = arith.mulf %230, %234 : vector<16x32xf32>
    %236 = vector.broadcast %216 : vector<1x32xf32> to vector<16x32xf32>
    %237 = arith.mulf %235, %236 : vector<16x32xf32>
    %238 = vector.broadcast %217 : vector<1x32xf32> to vector<16x32xf32>
    %239 = arith.addf %237, %238 : vector<16x32xf32>
    %c1 = arith.constant 1 : index
    %c0_67 = arith.constant 0 : index
    %c0_68 = arith.constant 0 : index
    %240 = vector.load %arg10[%c1, %c0_67, %c0_68] : memref<2x16x32xf32, #tpu.memory_space<vmem>>, vector<1x16x32xf32>
    %241 = vector.shape_cast %240 : vector<1x16x32xf32> to vector<16x32xf32>
    %c1_69 = arith.constant 1 : index
    %c0_70 = arith.constant 0 : index
    %c0_71 = arith.constant 0 : index
    %242 = vector.load %arg9[%c1_69, %c0_70, %c0_71] : memref<2x64x32xbf16, #tpu.memory_space<vmem>>, vector<1x64x32xbf16>
    %243 = vector.shape_cast %242 : vector<1x64x32xbf16> to vector<64x32xbf16>
    %c1_72 = arith.constant 1 : index
    %c0_73 = arith.constant 0 : index
    %c0_74 = arith.constant 0 : index
    %244 = vector.load %arg4[%c1_72, %c0_73, %c0_74] : memref<2x32x96xbf16, #tpu.memory_space<vmem>>, vector<1x32x96xbf16>
    %245 = vector.shape_cast %244 : vector<1x32x96xbf16> to vector<32x96xbf16>
    %246 = arith.truncf %239 : vector<16x32xf32> to vector<16x32xbf16>
    %cst_75 = arith.constant dense<0.000000e+00> : vector<16x96xf32>
    %247 = tpu.matmul %246, %245, %cst_75 {dimension_numbers = #tpu.dot_dimension_numbers<[1], [0], [0], [1], [0, 0, 1, 1], [], []>} : vector<16x32xbf16>, vector<32x96xbf16>, vector<16x96xf32> -> vector<16x96xf32>
    %c1_76 = arith.constant 1 : index
    %c0_77 = arith.constant 0 : index
    %248 = vector.load %arg5[%c1_76, %c0_77] : memref<2x96xf32, #tpu.memory_space<vmem>>, vector<1x96xf32>
    %249 = vector.broadcast %248 : vector<1x96xf32> to vector<16x96xf32>
    %250 = arith.addf %247, %249 : vector<16x96xf32>
    %251 = vector.extract_strided_slice %250 {offsets = [0, 0], sizes = [16, 32], strides = [1, 1]} : vector<16x96xf32> to vector<16x32xf32>
    %252 = vector.extract_strided_slice %250 {offsets = [0, 32], sizes = [16, 32], strides = [1, 1]} : vector<16x96xf32> to vector<16x32xf32>
    %253 = vector.extract_strided_slice %250 {offsets = [0, 64], sizes = [16, 32], strides = [1, 1]} : vector<16x96xf32> to vector<16x32xf32>
    %254 = vector.extract_strided_slice %243 {offsets = [0, 0], sizes = [32, 32], strides = [1, 1]} : vector<64x32xbf16> to vector<32x32xbf16>
    %255 = vector.extract_strided_slice %241 {offsets = [1, 0], sizes = [1, 32], strides = [1, 1]} : vector<16x32xf32> to vector<1x32xf32>
    %256 = vector.broadcast %11 : vector<1x32xf32> to vector<16x32xf32>
    %257 = arith.mulf %251, %256 : vector<16x32xf32>
    %258 = vector.broadcast %18 : vector<1x32xf32> to vector<16x32xf32>
    %259 = arith.mulf %251, %258 : vector<16x32xf32>
    %260 = vector.broadcast %25 : vector<1x32xf32> to vector<16x32xf32>
    %261 = arith.mulf %251, %260 : vector<16x32xf32>
    %262 = vector.broadcast %32 : vector<1x32xf32> to vector<16x32xf32>
    %263 = arith.mulf %251, %262 : vector<16x32xf32>
    %264 = tpu.concatenate %257, %259, %261, %263 in 0 : vector<16x32xf32>, vector<16x32xf32>, vector<16x32xf32>, vector<16x32xf32> -> vector<64x32xf32>
    %cst_78 = arith.constant dense<0.000000e+00> : vector<64x16xf32>
    %265 = tpu.matmul %264, %252, %cst_78 {dimension_numbers = #tpu.dot_dimension_numbers<[1], [1], [0], [0], [0, 0, 1, 0], [], []>} : vector<64x32xf32>, vector<16x32xf32>, vector<64x16xf32> -> vector<64x16xf32>
    %266 = arith.addf %265, %2 : vector<64x16xf32>
    %cst_79 = arith.constant dense<0xFF800000> : vector<64xf32>
    %267 = vector.multi_reduction <maximumf>, %266, %cst_79 [1] : vector<64x16xf32> to vector<64xf32>
    %268 = vector.shape_cast %267 : vector<64xf32> to vector<64x1xf32>
    %269 = vector.broadcast %268 : vector<64x1xf32> to vector<64x16xf32>
    %270 = arith.subf %266, %269 : vector<64x16xf32>
    %271 = math.exp %270 : vector<64x16xf32>
    %cst_80 = arith.constant dense<0.000000e+00> : vector<64xf32>
    %272 = vector.multi_reduction <add>, %271, %cst_80 [1] : vector<64x16xf32> to vector<64xf32>
    %273 = vector.shape_cast %272 : vector<64xf32> to vector<64x1xf32>
    %cst_81 = arith.constant dense<0.000000e+00> : vector<64x32xf32>
    %274 = tpu.matmul %271, %253, %cst_81 {dimension_numbers = #tpu.dot_dimension_numbers<[1], [0], [0], [1], [0, 0, 1, 1], [], []>} : vector<64x16xf32>, vector<16x32xf32>, vector<64x32xf32> -> vector<64x32xf32>
    %275 = tpu.reciprocal %273 {approx = true} : vector<64x1xf32> -> vector<64x1xf32>
    %276 = vector.broadcast %275 : vector<64x1xf32> to vector<64x32xf32>
    %277 = arith.mulf %274, %276 : vector<64x32xf32>
    %278 = vector.extract_strided_slice %277 {offsets = [0, 0], sizes = [16, 32], strides = [1, 1]} : vector<64x32xf32> to vector<16x32xf32>
    %279 = vector.broadcast %11 : vector<1x32xf32> to vector<16x32xf32>
    %280 = arith.mulf %278, %279 : vector<16x32xf32>
    %281 = vector.extract_strided_slice %277 {offsets = [16, 0], sizes = [16, 32], strides = [1, 1]} : vector<64x32xf32> to vector<16x32xf32>
    %282 = vector.broadcast %18 : vector<1x32xf32> to vector<16x32xf32>
    %283 = arith.mulf %281, %282 : vector<16x32xf32>
    %284 = arith.addf %280, %283 : vector<16x32xf32>
    %285 = vector.extract_strided_slice %277 {offsets = [32, 0], sizes = [16, 32], strides = [1, 1]} : vector<64x32xf32> to vector<16x32xf32>
    %286 = vector.broadcast %25 : vector<1x32xf32> to vector<16x32xf32>
    %287 = arith.mulf %285, %286 : vector<16x32xf32>
    %288 = arith.addf %284, %287 : vector<16x32xf32>
    %289 = vector.extract_strided_slice %277 {offsets = [48, 0], sizes = [16, 32], strides = [1, 1]} : vector<64x32xf32> to vector<16x32xf32>
    %290 = vector.broadcast %32 : vector<1x32xf32> to vector<16x32xf32>
    %291 = arith.mulf %289, %290 : vector<16x32xf32>
    %292 = arith.addf %288, %291 : vector<16x32xf32>
    %293 = arith.truncf %292 : vector<16x32xf32> to vector<16x32xbf16>
    %cst_82 = arith.constant dense<0.000000e+00> : vector<16x32xf32>
    %294 = tpu.matmul %293, %254, %cst_82 {dimension_numbers = #tpu.dot_dimension_numbers<[1], [0], [0], [1], [0, 0, 1, 1], [], []>} : vector<16x32xbf16>, vector<32x32xbf16>, vector<16x32xf32> -> vector<16x32xf32>
    %295 = vector.broadcast %255 : vector<1x32xf32> to vector<16x32xf32>
    %296 = arith.addf %294, %295 : vector<16x32xf32>
    %297 = arith.addf %239, %296 : vector<16x32xf32>
    %298 = vector.extract_strided_slice %241 {offsets = [3, 0], sizes = [1, 32], strides = [1, 1]} : vector<16x32xf32> to vector<1x32xf32>
    %299 = vector.extract_strided_slice %241 {offsets = [4, 0], sizes = [1, 32], strides = [1, 1]} : vector<16x32xf32> to vector<1x32xf32>
    %cst_83 = arith.constant dense<0.000000e+00> : vector<16xf32>
    %300 = vector.multi_reduction <add>, %297, %cst_83 [1] : vector<16x32xf32> to vector<16xf32>
    %301 = vector.shape_cast %300 : vector<16xf32> to vector<16x1xf32>
    %cst_84 = arith.constant 3.200000e+01 : f32
    %302 = vector.broadcast %cst_84 : f32 to vector<16x1xf32>
    %303 = arith.divf %301, %302 : vector<16x1xf32>
    %304 = vector.broadcast %303 : vector<16x1xf32> to vector<16x32xf32>
    %305 = arith.subf %297, %304 : vector<16x32xf32>
    %306 = arith.mulf %305, %305 : vector<16x32xf32>
    %cst_85 = arith.constant dense<0.000000e+00> : vector<16xf32>
    %307 = vector.multi_reduction <add>, %306, %cst_85 [1] : vector<16x32xf32> to vector<16xf32>
    %308 = vector.shape_cast %307 : vector<16xf32> to vector<16x1xf32>
    %cst_86 = arith.constant 3.200000e+01 : f32
    %309 = vector.broadcast %cst_86 : f32 to vector<16x1xf32>
    %310 = arith.divf %308, %309 : vector<16x1xf32>
    %311 = vector.broadcast %303 : vector<16x1xf32> to vector<16x32xf32>
    %312 = arith.subf %297, %311 : vector<16x32xf32>
    %cst_87 = arith.constant 9.99999974E-6 : f32
    %313 = vector.broadcast %cst_87 : f32 to vector<16x1xf32>
    %314 = arith.addf %310, %313 : vector<16x1xf32>
    %315 = math.rsqrt %314 : vector<16x1xf32>
    %316 = vector.broadcast %315 : vector<16x1xf32> to vector<16x32xf32>
    %317 = arith.mulf %312, %316 : vector<16x32xf32>
    %318 = vector.broadcast %298 : vector<1x32xf32> to vector<16x32xf32>
    %319 = arith.mulf %317, %318 : vector<16x32xf32>
    %320 = vector.broadcast %299 : vector<1x32xf32> to vector<16x32xf32>
    %321 = arith.addf %319, %320 : vector<16x32xf32>
    %c1_88 = arith.constant 1 : index
    %c0_89 = arith.constant 0 : index
    %c0_90 = arith.constant 0 : index
    %322 = vector.load %arg6[%c1_88, %c0_89, %c0_90] : memref<2x32x32xbf16, #tpu.memory_space<vmem>>, vector<1x32x32xbf16>
    %323 = vector.shape_cast %322 : vector<1x32x32xbf16> to vector<32x32xbf16>
    %324 = arith.truncf %321 : vector<16x32xf32> to vector<16x32xbf16>
    %cst_91 = arith.constant dense<0.000000e+00> : vector<16x32xf32>
    %325 = tpu.matmul %324, %323, %cst_91 {dimension_numbers = #tpu.dot_dimension_numbers<[1], [0], [0], [1], [0, 0, 1, 1], [], []>} : vector<16x32xbf16>, vector<32x32xbf16>, vector<16x32xf32> -> vector<16x32xf32>
    %326 = vector.extract_strided_slice %241 {offsets = [0, 0], sizes = [1, 32], strides = [1, 1]} : vector<16x32xf32> to vector<1x32xf32>
    %327 = vector.broadcast %326 : vector<1x32xf32> to vector<16x32xf32>
    %328 = arith.addf %325, %327 : vector<16x32xf32>
    %c1_92 = arith.constant 1 : index
    %c0_93 = arith.constant 0 : index
    %c0_94 = arith.constant 0 : index
    %329 = vector.load %arg7[%c1_92, %c0_93, %c0_94] : memref<2x32x64xbf16, #tpu.memory_space<vmem>>, vector<1x32x64xbf16>
    %330 = vector.shape_cast %329 : vector<1x32x64xbf16> to vector<32x64xbf16>
    %331 = arith.truncf %1 : vector<32x32xf32> to vector<32x32xbf16>
    %cst_95 = arith.constant dense<0.000000e+00> : vector<32x64xf32>
    %332 = tpu.matmul %331, %330, %cst_95 {dimension_numbers = #tpu.dot_dimension_numbers<[1], [0], [0], [1], [0, 0, 1, 1], [], []>} : vector<32x32xbf16>, vector<32x64xbf16>, vector<32x64xf32> -> vector<32x64xf32>
    %c1_96 = arith.constant 1 : index
    %c0_97 = arith.constant 0 : index
    %333 = vector.load %arg8[%c1_96, %c0_97] : memref<2x64xf32, #tpu.memory_space<vmem>>, vector<1x64xf32>
    %334 = vector.broadcast %333 : vector<1x64xf32> to vector<32x64xf32>
    %335 = arith.addf %332, %334 : vector<32x64xf32>
    %336 = vector.extract_strided_slice %335 {offsets = [0, 0], sizes = [32, 32], strides = [1, 1]} : vector<32x64xf32> to vector<32x32xf32>
    %337 = vector.extract_strided_slice %335 {offsets = [0, 32], sizes = [32, 32], strides = [1, 1]} : vector<32x64xf32> to vector<32x32xf32>
    %338 = vector.extract_strided_slice %243 {offsets = [32, 0], sizes = [32, 32], strides = [1, 1]} : vector<64x32xbf16> to vector<32x32xbf16>
    %339 = vector.extract_strided_slice %241 {offsets = [2, 0], sizes = [1, 32], strides = [1, 1]} : vector<16x32xf32> to vector<1x32xf32>
    %340 = vector.broadcast %11 : vector<1x32xf32> to vector<16x32xf32>
    %341 = arith.mulf %328, %340 : vector<16x32xf32>
    %342 = vector.broadcast %18 : vector<1x32xf32> to vector<16x32xf32>
    %343 = arith.mulf %328, %342 : vector<16x32xf32>
    %344 = vector.broadcast %25 : vector<1x32xf32> to vector<16x32xf32>
    %345 = arith.mulf %328, %344 : vector<16x32xf32>
    %346 = vector.broadcast %32 : vector<1x32xf32> to vector<16x32xf32>
    %347 = arith.mulf %328, %346 : vector<16x32xf32>
    %348 = tpu.concatenate %341, %343, %345, %347 in 0 : vector<16x32xf32>, vector<16x32xf32>, vector<16x32xf32>, vector<16x32xf32> -> vector<64x32xf32>
    %cst_98 = arith.constant dense<0.000000e+00> : vector<64x32xf32>
    %349 = tpu.matmul %348, %336, %cst_98 {dimension_numbers = #tpu.dot_dimension_numbers<[1], [1], [0], [0], [0, 0, 1, 0], [], []>} : vector<64x32xf32>, vector<32x32xf32>, vector<64x32xf32> -> vector<64x32xf32>
    %350 = arith.addf %349, %3 : vector<64x32xf32>
    %cst_99 = arith.constant dense<0xFF800000> : vector<64xf32>
    %351 = vector.multi_reduction <maximumf>, %350, %cst_99 [1] : vector<64x32xf32> to vector<64xf32>
    %352 = vector.shape_cast %351 : vector<64xf32> to vector<64x1xf32>
    %353 = vector.broadcast %352 : vector<64x1xf32> to vector<64x32xf32>
    %354 = arith.subf %350, %353 : vector<64x32xf32>
    %355 = math.exp %354 : vector<64x32xf32>
    %cst_100 = arith.constant dense<0.000000e+00> : vector<64xf32>
    %356 = vector.multi_reduction <add>, %355, %cst_100 [1] : vector<64x32xf32> to vector<64xf32>
    %357 = vector.shape_cast %356 : vector<64xf32> to vector<64x1xf32>
    %cst_101 = arith.constant dense<0.000000e+00> : vector<64x32xf32>
    %358 = tpu.matmul %355, %337, %cst_101 {dimension_numbers = #tpu.dot_dimension_numbers<[1], [0], [0], [1], [0, 0, 1, 1], [], []>} : vector<64x32xf32>, vector<32x32xf32>, vector<64x32xf32> -> vector<64x32xf32>
    %359 = tpu.reciprocal %357 {approx = true} : vector<64x1xf32> -> vector<64x1xf32>
    %360 = vector.broadcast %359 : vector<64x1xf32> to vector<64x32xf32>
    %361 = arith.mulf %358, %360 : vector<64x32xf32>
    %362 = vector.extract_strided_slice %361 {offsets = [0, 0], sizes = [16, 32], strides = [1, 1]} : vector<64x32xf32> to vector<16x32xf32>
    %363 = vector.broadcast %11 : vector<1x32xf32> to vector<16x32xf32>
    %364 = arith.mulf %362, %363 : vector<16x32xf32>
    %365 = vector.extract_strided_slice %361 {offsets = [16, 0], sizes = [16, 32], strides = [1, 1]} : vector<64x32xf32> to vector<16x32xf32>
    %366 = vector.broadcast %18 : vector<1x32xf32> to vector<16x32xf32>
    %367 = arith.mulf %365, %366 : vector<16x32xf32>
    %368 = arith.addf %364, %367 : vector<16x32xf32>
    %369 = vector.extract_strided_slice %361 {offsets = [32, 0], sizes = [16, 32], strides = [1, 1]} : vector<64x32xf32> to vector<16x32xf32>
    %370 = vector.broadcast %25 : vector<1x32xf32> to vector<16x32xf32>
    %371 = arith.mulf %369, %370 : vector<16x32xf32>
    %372 = arith.addf %368, %371 : vector<16x32xf32>
    %373 = vector.extract_strided_slice %361 {offsets = [48, 0], sizes = [16, 32], strides = [1, 1]} : vector<64x32xf32> to vector<16x32xf32>
    %374 = vector.broadcast %32 : vector<1x32xf32> to vector<16x32xf32>
    %375 = arith.mulf %373, %374 : vector<16x32xf32>
    %376 = arith.addf %372, %375 : vector<16x32xf32>
    %377 = arith.truncf %376 : vector<16x32xf32> to vector<16x32xbf16>
    %cst_102 = arith.constant dense<0.000000e+00> : vector<16x32xf32>
    %378 = tpu.matmul %377, %338, %cst_102 {dimension_numbers = #tpu.dot_dimension_numbers<[1], [0], [0], [1], [0, 0, 1, 1], [], []>} : vector<16x32xbf16>, vector<32x32xbf16>, vector<16x32xf32> -> vector<16x32xf32>
    %379 = vector.broadcast %339 : vector<1x32xf32> to vector<16x32xf32>
    %380 = arith.addf %378, %379 : vector<16x32xf32>
    %381 = arith.addf %321, %380 : vector<16x32xf32>
    %382 = vector.extract_strided_slice %241 {offsets = [5, 0], sizes = [1, 32], strides = [1, 1]} : vector<16x32xf32> to vector<1x32xf32>
    %383 = vector.extract_strided_slice %241 {offsets = [6, 0], sizes = [1, 32], strides = [1, 1]} : vector<16x32xf32> to vector<1x32xf32>
    %cst_103 = arith.constant dense<0.000000e+00> : vector<16xf32>
    %384 = vector.multi_reduction <add>, %381, %cst_103 [1] : vector<16x32xf32> to vector<16xf32>
    %385 = vector.shape_cast %384 : vector<16xf32> to vector<16x1xf32>
    %cst_104 = arith.constant 3.200000e+01 : f32
    %386 = vector.broadcast %cst_104 : f32 to vector<16x1xf32>
    %387 = arith.divf %385, %386 : vector<16x1xf32>
    %388 = vector.broadcast %387 : vector<16x1xf32> to vector<16x32xf32>
    %389 = arith.subf %381, %388 : vector<16x32xf32>
    %390 = arith.mulf %389, %389 : vector<16x32xf32>
    %cst_105 = arith.constant dense<0.000000e+00> : vector<16xf32>
    %391 = vector.multi_reduction <add>, %390, %cst_105 [1] : vector<16x32xf32> to vector<16xf32>
    %392 = vector.shape_cast %391 : vector<16xf32> to vector<16x1xf32>
    %cst_106 = arith.constant 3.200000e+01 : f32
    %393 = vector.broadcast %cst_106 : f32 to vector<16x1xf32>
    %394 = arith.divf %392, %393 : vector<16x1xf32>
    %395 = vector.broadcast %387 : vector<16x1xf32> to vector<16x32xf32>
    %396 = arith.subf %381, %395 : vector<16x32xf32>
    %cst_107 = arith.constant 9.99999974E-6 : f32
    %397 = vector.broadcast %cst_107 : f32 to vector<16x1xf32>
    %398 = arith.addf %394, %397 : vector<16x1xf32>
    %399 = math.rsqrt %398 : vector<16x1xf32>
    %400 = vector.broadcast %399 : vector<16x1xf32> to vector<16x32xf32>
    %401 = arith.mulf %396, %400 : vector<16x32xf32>
    %402 = vector.broadcast %382 : vector<1x32xf32> to vector<16x32xf32>
    %403 = arith.mulf %401, %402 : vector<16x32xf32>
    %404 = vector.broadcast %383 : vector<1x32xf32> to vector<16x32xf32>
    %405 = arith.addf %403, %404 : vector<16x32xf32>
    %c1_108 = arith.constant 1 : index
    %c0_109 = arith.constant 0 : index
    %c0_110 = arith.constant 0 : index
    %406 = vector.load %arg11[%c1_108, %c0_109, %c0_110] : memref<2x32x2048xbf16, #tpu.memory_space<vmem>>, vector<1x32x2048xbf16>
    %407 = vector.shape_cast %406 : vector<1x32x2048xbf16> to vector<32x2048xbf16>
    %408 = arith.truncf %405 : vector<16x32xf32> to vector<16x32xbf16>
    %cst_111 = arith.constant dense<0.000000e+00> : vector<16x2048xf32>
    %409 = tpu.matmul %408, %407, %cst_111 {dimension_numbers = #tpu.dot_dimension_numbers<[1], [0], [0], [1], [0, 0, 1, 1], [], []>} : vector<16x32xbf16>, vector<32x2048xbf16>, vector<16x2048xf32> -> vector<16x2048xf32>
    %c1_112 = arith.constant 1 : index
    %c0_113 = arith.constant 0 : index
    %410 = vector.load %arg12[%c1_112, %c0_113] : memref<2x2048xf32, #tpu.memory_space<vmem>>, vector<1x2048xf32>
    %411 = vector.broadcast %410 : vector<1x2048xf32> to vector<16x2048xf32>
    %412 = arith.addf %409, %411 : vector<16x2048xf32>
    %cst_114 = arith.constant 0.000000e+00 : f32
    %413 = vector.broadcast %cst_114 : f32 to vector<16x2048xf32>
    %414 = arith.maximumf %412, %413 : vector<16x2048xf32>
    %c1_115 = arith.constant 1 : index
    %c0_116 = arith.constant 0 : index
    %c0_117 = arith.constant 0 : index
    %415 = vector.load %arg13[%c1_115, %c0_116, %c0_117] : memref<2x2048x32xbf16, #tpu.memory_space<vmem>>, vector<1x2048x32xbf16>
    %416 = vector.shape_cast %415 : vector<1x2048x32xbf16> to vector<2048x32xbf16>
    %417 = arith.truncf %414 : vector<16x2048xf32> to vector<16x2048xbf16>
    %cst_118 = arith.constant dense<0.000000e+00> : vector<16x32xf32>
    %418 = tpu.matmul %417, %416, %cst_118 {dimension_numbers = #tpu.dot_dimension_numbers<[1], [0], [0], [1], [0, 0, 1, 1], [], []>} : vector<16x2048xbf16>, vector<2048x32xbf16>, vector<16x32xf32> -> vector<16x32xf32>
    %419 = vector.extract_strided_slice %241 {offsets = [9, 0], sizes = [1, 32], strides = [1, 1]} : vector<16x32xf32> to vector<1x32xf32>
    %420 = vector.broadcast %419 : vector<1x32xf32> to vector<16x32xf32>
    %421 = arith.addf %418, %420 : vector<16x32xf32>
    %422 = arith.addf %405, %421 : vector<16x32xf32>
    %423 = vector.extract_strided_slice %241 {offsets = [7, 0], sizes = [1, 32], strides = [1, 1]} : vector<16x32xf32> to vector<1x32xf32>
    %424 = vector.extract_strided_slice %241 {offsets = [8, 0], sizes = [1, 32], strides = [1, 1]} : vector<16x32xf32> to vector<1x32xf32>
    %cst_119 = arith.constant dense<0.000000e+00> : vector<16xf32>
    %425 = vector.multi_reduction <add>, %422, %cst_119 [1] : vector<16x32xf32> to vector<16xf32>
    %426 = vector.shape_cast %425 : vector<16xf32> to vector<16x1xf32>
    %cst_120 = arith.constant 3.200000e+01 : f32
    %427 = vector.broadcast %cst_120 : f32 to vector<16x1xf32>
    %428 = arith.divf %426, %427 : vector<16x1xf32>
    %429 = vector.broadcast %428 : vector<16x1xf32> to vector<16x32xf32>
    %430 = arith.subf %422, %429 : vector<16x32xf32>
    %431 = arith.mulf %430, %430 : vector<16x32xf32>
    %cst_121 = arith.constant dense<0.000000e+00> : vector<16xf32>
    %432 = vector.multi_reduction <add>, %431, %cst_121 [1] : vector<16x32xf32> to vector<16xf32>
    %433 = vector.shape_cast %432 : vector<16xf32> to vector<16x1xf32>
    %cst_122 = arith.constant 3.200000e+01 : f32
    %434 = vector.broadcast %cst_122 : f32 to vector<16x1xf32>
    %435 = arith.divf %433, %434 : vector<16x1xf32>
    %436 = vector.broadcast %428 : vector<16x1xf32> to vector<16x32xf32>
    %437 = arith.subf %422, %436 : vector<16x32xf32>
    %cst_123 = arith.constant 9.99999974E-6 : f32
    %438 = vector.broadcast %cst_123 : f32 to vector<16x1xf32>
    %439 = arith.addf %435, %438 : vector<16x1xf32>
    %440 = math.rsqrt %439 : vector<16x1xf32>
    %441 = vector.broadcast %440 : vector<16x1xf32> to vector<16x32xf32>
    %442 = arith.mulf %437, %441 : vector<16x32xf32>
    %443 = vector.broadcast %423 : vector<1x32xf32> to vector<16x32xf32>
    %444 = arith.mulf %442, %443 : vector<16x32xf32>
    %445 = vector.broadcast %424 : vector<1x32xf32> to vector<16x32xf32>
    %446 = arith.addf %444, %445 : vector<16x32xf32>
    %c0_124 = arith.constant 0 : index
    %c0_125 = arith.constant 0 : index
    %447 = vector.load %arg14[%c0_124, %c0_125] : memref<32x256xbf16, #tpu.memory_space<vmem>>, vector<32x256xbf16>
    %448 = arith.truncf %446 : vector<16x32xf32> to vector<16x32xbf16>
    %cst_126 = arith.constant dense<0.000000e+00> : vector<16x256xf32>
    %449 = tpu.matmul %448, %447, %cst_126 {dimension_numbers = #tpu.dot_dimension_numbers<[1], [0], [0], [1], [0, 0, 1, 1], [], []>} : vector<16x32xbf16>, vector<32x256xbf16>, vector<16x256xf32> -> vector<16x256xf32>
    %c0_127 = arith.constant 0 : index
    %c0_128 = arith.constant 0 : index
    %450 = vector.load %arg15[%c0_127, %c0_128] : memref<1x256xf32, #tpu.memory_space<vmem>>, vector<1x256xf32>
    %451 = vector.broadcast %450 : vector<1x256xf32> to vector<16x256xf32>
    %452 = arith.addf %449, %451 : vector<16x256xf32>
    %c0_129 = arith.constant 0 : index
    %c0_130 = arith.constant 0 : index
    %453 = vector.load %arg16[%c0_129, %c0_130] : memref<16x256xf32, #tpu.memory_space<vmem>>, vector<16x256xf32>
    tpu.vector_store %arg16[%c0_129, %c0_130], %452 {strides = array<i32>} : memref<16x256xf32, #tpu.memory_space<vmem>>, vector<16x256xf32>,
    return
  }
}

</mosaic_0001>

<llo_original>
// kernel: decoder_forward.1
$region0: #{decoder_forward.1}
  #allocation0 [shape = 'u32[]', space=smem, size = 0x4, offset = 0x4, fixed_abs, tag = 'smem constant byte address 0x4 - core index']
  #allocation1 [shape = 'u32[144,128]{1,0:T(1,128)}', space=vmem, size = 0x12000, scoped, tag = 'internal scratch']
  %s0 = inlined_call_operand.vmem [shape: f32[16,32], index: 0, kind: input, shape index: {}]
  %s1 = inlined_call_operand.vmem [shape: f32[32,32], index: 1, kind: input, shape index: {}]
  %s2 = inlined_call_operand.vmem [shape: f32[64,16], index: 2, kind: input, shape index: {}]
  %s3 = inlined_call_operand.vmem [shape: f32[64,32], index: 3, kind: input, shape index: {}]
  %s4 = inlined_call_operand.vmem [shape: bf16[2,32,96], index: 4, kind: input, shape index: {}]
  %s5 = inlined_call_operand.vmem [shape: f32[2,96], index: 5, kind: input, shape index: {}]
  %s6 = inlined_call_operand.vmem [shape: bf16[2,32,32], index: 6, kind: input, shape index: {}]
  %s7 = inlined_call_operand.vmem [shape: bf16[2,32,64], index: 7, kind: input, shape index: {}]
  %s8 = inlined_call_operand.vmem [shape: f32[2,64], index: 8, kind: input, shape index: {}]
  %s9 = inlined_call_operand.vmem [shape: bf16[2,64,32], index: 9, kind: input, shape index: {}]
  %s10 = inlined_call_operand.vmem [shape: f32[2,16,32], index: 10, kind: input, shape index: {}]
  %s11 = inlined_call_operand.vmem [shape: bf16[2,32,2048], index: 11, kind: input, shape index: {}]
  %s12 = inlined_call_operand.vmem [shape: f32[2,2048], index: 12, kind: input, shape index: {}]
  %s13 = inlined_call_operand.vmem [shape: bf16[2,2048,32], index: 13, kind: input, shape index: {}]
  %s14 = inlined_call_operand.vmem [shape: bf16[32,256], index: 14, kind: input, shape index: {}]
  %s15 = inlined_call_operand.vmem [shape: f32[1,256], index: 15, kind: input, shape index: {}]
  %s16 = inlined_call_operand.vmem [shape: f32[16,256], index: 16, kind: output, shape index: {}]
  %s17 = sld [smem:[#allocation0]]
  $region74: #{decoder_forward.1} parent=0
    _
  %s19 = ssub.s32 1, %s17
  %s20 = scalar_select 0, %s19, %s17
  // Predicated region
  $region2: #{decoder_forward.1} parent=0 // pred_check
    _
  $region3: #{decoder_forward.1} parent=0 // pred_check_branch
    %22 = sbr.rel (0) target = $region5
  $region4: #{decoder_forward.1} parent=0 // pred_region
    _
  $region5: #{decoder_forward.1} parent=0 // pred_fallthru
    _
  // Predicated region
  $region6: #{decoder_forward.1} parent=0 // pred_check
    _
  $region7: #{decoder_forward.1} parent=0 // pred_check_branch
    %24 = sbr.rel (0) target = $region9
  $region8: #{decoder_forward.1} parent=0 // pred_region
    _
  $region9: #{decoder_forward.1} parent=0 // pred_fallthru
    _
  // Predicated region
  $region10: #{decoder_forward.1} parent=0 // pred_check
    _
  $region11: #{decoder_forward.1} parent=0 // pred_check_branch
    %26 = sbr.rel (0) target = $region13
  $region12: #{decoder_forward.1} parent=0 // pred_region
    _
  $region13: #{decoder_forward.1} parent=0 // pred_fallthru
    _
  // Predicated region
  $region14: #{decoder_forward.1} parent=0 // pred_check
    _
  $region15: #{decoder_forward.1} parent=0 // pred_check_branch
    %28 = sbr.rel (0) target = $region17
  $region16: #{decoder_forward.1} parent=0 // pred_region
    _
  $region17: #{decoder_forward.1} parent=0 // pred_fallthru
    _
  // Predicated region
  $region18: #{decoder_forward.1} parent=0 // pred_check
    _
  $region19: #{decoder_forward.1} parent=0 // pred_check_branch
    %30 = sbr.rel (0) target = $region21
  $region20: #{decoder_forward.1} parent=0 // pred_region
    _
  $region21: #{decoder_forward.1} parent=0 // pred_fallthru
    _
  // Predicated region
  $region22: #{decoder_forward.1} parent=0 // pred_check
    _
  $region23: #{decoder_forward.1} parent=0 // pred_check_branch
    %32 = sbr.rel (0) target = $region25
  $region24: #{decoder_forward.1} parent=0 // pred_region
    _
  $region25: #{decoder_forward.1} parent=0 // pred_fallthru
    _
  // Predicated region
  $region26: #{decoder_forward.1} parent=0 // pred_check
    _
  $region27: #{decoder_forward.1} parent=0 // pred_check_branch
    %34 = sbr.rel (0) target = $region29
  $region28: #{decoder_forward.1} parent=0 // pred_region
    _
  $region29: #{decoder_forward.1} parent=0 // pred_fallthru
    _
  // Predicated region
  $region30: #{decoder_forward.1} parent=0 // pred_check
    _
  $region31: #{decoder_forward.1} parent=0 // pred_check_branch
    %36 = sbr.rel (0) target = $region33
  $region32: #{decoder_forward.1} parent=0 // pred_region
    _
  $region33: #{decoder_forward.1} parent=0 // pred_fallthru
    _
  // Predicated region
  $region34: #{decoder_forward.1} parent=0 // pred_check
    _
  $region35: #{decoder_forward.1} parent=0 // pred_check_branch
    %38 = sbr.rel (0) target = $region37
  $region36: #{decoder_forward.1} parent=0 // pred_region
    _
  $region37: #{decoder_forward.1} parent=0 // pred_fallthru
    _
  // Predicated region
  $region38: #{decoder_forward.1} parent=0 // pred_check
    _
  $region39: #{decoder_forward.1} parent=0 // pred_check_branch
    %40 = sbr.rel (0) target = $region41
  $region40: #{decoder_forward.1} parent=0 // pred_region
    _
  $region41: #{decoder_forward.1} parent=0 // pred_fallthru
    _
  // Predicated region
  $region42: #{decoder_forward.1} parent=0 // pred_check
    _
  $region43: #{decoder_forward.1} parent=0 // pred_check_branch
    %42 = sbr.rel (0) target = $region45
  $region44: #{decoder_forward.1} parent=0 // pred_region
    _
  $region45: #{decoder_forward.1} parent=0 // pred_fallthru
    _
  // Predicated region
  $region46: #{decoder_forward.1} parent=0 // pred_check
    _
  $region47: #{decoder_forward.1} parent=0 // pred_check_branch
    %44 = sbr.rel (0) target = $region49
  $region48: #{decoder_forward.1} parent=0 // pred_region
    _
  $region49: #{decoder_forward.1} parent=0 // pred_fallthru
    _
  // Predicated region
  $region50: #{decoder_forward.1} parent=0 // pred_check
    _
  $region51: #{decoder_forward.1} parent=0 // pred_check_branch
    %46 = sbr.rel (0) target = $region53
  $region52: #{decoder_forward.1} parent=0 // pred_region
    _
  $region53: #{decoder_forward.1} parent=0 // pred_fallthru
    _
  // Predicated region
  $region54: #{decoder_forward.1} parent=0 // pred_check
    _
  $region55: #{decoder_forward.1} parent=0 // pred_check_branch
    %48 = sbr.rel (0) target = $region57
  $region56: #{decoder_forward.1} parent=0 // pred_region
    _
  $region57: #{decoder_forward.1} parent=0 // pred_fallthru
    _
  // Predicated region
  $region58: #{decoder_forward.1} parent=0 // pred_check
    _
  $region59: #{decoder_forward.1} parent=0 // pred_check_branch
    %50 = sbr.rel (0) target = $region61
  $region60: #{decoder_forward.1} parent=0 // pred_region
    _
  $region61: #{decoder_forward.1} parent=0 // pred_fallthru
    _
  // Predicated region
  $region62: #{decoder_forward.1} parent=0 // pred_check
    _
  $region63: #{decoder_forward.1} parent=0 // pred_check_branch
    %52 = sbr.rel (0) target = $region65
  $region64: #{decoder_forward.1} parent=0 // pred_region
    _
  $region65: #{decoder_forward.1} parent=0 // pred_fallthru
    _
  %v54 = vld [vmem:[%s0] sm:$0xff]
  %v55 = vld [vmem:[%s0 + $0x8] sm:$0xff]
  %v56 = vld [vmem:[%s1] sm:$0xff]
  %v57 = vld [vmem:[%s1 + $0x8] sm:$0xff]
  %v58 = vld [vmem:[%s1 + $0x10] sm:$0xff]
  %v59 = vld [vmem:[%s1 + $0x18] sm:$0xff]
  %v60 = vld [vmem:[%s2] sm:$0xff]
  %v61 = vld [vmem:[%s2 + $0x8] sm:$0xff]
  %v62 = vld [vmem:[%s2 + $0x10] sm:$0xff]
  %v63 = vld [vmem:[%s2 + $0x18] sm:$0xff]
  %v64 = vld [vmem:[%s2 + $0x20] sm:$0xff]
  %v65 = vld [vmem:[%s2 + $0x28] sm:$0xff]
  %v66 = vld [vmem:[%s2 + $0x30] sm:$0xff]
  %v67 = vld [vmem:[%s2 + $0x38] sm:$0xff]
  %v68 = vld [vmem:[%s3] sm:$0xff]
  %v69 = vld [vmem:[%s3 + $0x8] sm:$0xff]
  %v70 = vld [vmem:[%s3 + $0x10] sm:$0xff]
  %v71 = vld [vmem:[%s3 + $0x18] sm:$0xff]
  %v72 = vld [vmem:[%s3 + $0x20] sm:$0xff]
  %v73 = vld [vmem:[%s3 + $0x28] sm:$0xff]
  %v74 = vld [vmem:[%s3 + $0x30] sm:$0xff]
  %v75 = vld [vmem:[%s3 + $0x38] sm:$0xff]
  %v76 = vlaneseq
  %v77 = vand.u32 %v76, 127
  %vm78 = vcmp.ge.s32.totalorder %v77, 0
  %vm79 = vcmp.lt.s32.totalorder %v77, 8
  %vm80 = vmand %vm78, %vm79
  %v81 = vsel %vm80, 1, 0
  %v82 = vcvt.s32.f32 %v81
  %vm83 = vcmp.ge.s32.totalorder %v77, 8
  %vm84 = vcmp.lt.s32.totalorder %v77, 16
  %vm85 = vmand %vm83, %vm84
  %v86 = vsel %vm85, 1, 0
  %v87 = vcvt.s32.f32 %v86
  %vm88 = vcmp.ge.s32.totalorder %v77, 16
  %vm89 = vcmp.lt.s32.totalorder %v77, 24
  %vm90 = vmand %vm88, %vm89
  %v91 = vsel %vm90, 1, 0
  %v92 = vcvt.s32.f32 %v91
  %vm93 = vcmp.ge.s32.totalorder %v77, 24
  %vm94 = vcmp.lt.s32.totalorder %v77, 32
  %vm95 = vmand %vm93, %vm94
  %v96 = vsel %vm95, 1, 0
  %v97 = vcvt.s32.f32 %v96
  %v98 = vld [vmem:[%s10] sm:$0xff]
  %v99 = vld [vmem:[%s10 + $0x8] sm:$0xff]
  %v100 = vld [vmem:[%s9] sm:$0xf]
  %v101 = vld [vmem:[%s9 + $0x4] sm:$0xf]
  %v102 = vld [vmem:[%s9 + $0x8] sm:$0xf]
  %v103 = vld [vmem:[%s9 + $0xc] sm:$0xf]
  %v104 = vld [vmem:[%s9 + $0x10] sm:$0xf]
  %v105 = vld [vmem:[%s9 + $0x14] sm:$0xf]
  %v106 = vld [vmem:[%s9 + $0x18] sm:$0xf]
  %v107 = vld [vmem:[%s9 + $0x1c] sm:$0xf]
  %v108 = vld [vmem:[%s4] sm:$0xf]
  %v109 = vld [vmem:[%s4 + $0x4] sm:$0xf]
  %v110 = vld [vmem:[%s4 + $0x8] sm:$0xf]
  %v111 = vld [vmem:[%s4 + $0xc] sm:$0xf]
  %v112 = vpack.c.bf16 %v55, %v54
  %v113 = vld [vmem:[%s5] sm:$0x1]
  %v114 = vlaneseq
  %v115 = vshrl.u32 %v114, 7
  %v116 = vsub.s32 0, %v115
  %v117 = vrot.slane %v113, %v116
  %v122 = vunpack.c.l.b16 %v108
  %v123 = vunpack.c.l.b16 %v109
  %v124 = vunpack.c.l.b16 %v110
  %v125 = vunpack.c.l.b16 %v111
  %v126 = vpack.c.b16 %v123, %v122
  %v127 = vpack.c.b16 %v125, %v124
  %vm130 = vcmask 261120
  %v132 = vsel %vm130, %v112, 0
  %134 = vmatprep.subr.bf16.mxu0 0
  %135 = vmatpush1.bf16.msra.mxu0 %v126
  %136 = vmatprep.subr.bf16.mxu0 0
  %137 = vmatpush1.bf16.msra.mxu0 %v127
  %138 = vmatprep.subr.bf16.mxu0 0
  %139 = vmatpush1.bf16.msra.mxu0 0
  %140 = vmatprep.subr.bf16.mxu0 0
  %141 = vmatpush1.bf16.msra.mxu0 0
  %142 = vmatprep.subr.bf16.mxu0 0
  %143 = vmatpush1.bf16.msra.mxu0 0
  %144 = vmatprep.subr.bf16.mxu0 0
  %145 = vmatpush1.bf16.msra.mxu0 0
  %146 = vmatprep.subr.bf16.mxu0 0
  %147 = vmatpush1.bf16.msra.mxu0 0
  %148 = vmatprep.subr.bf16.mxu0 0
  %149 = vmatpush1.bf16.msra.mxu0 0
  %150 = vmatprep.subr.bf16.mxu0 0
  %151 = vmatpush1.bf16.msra.mxu0 0
  %152 = vmatprep.subr.bf16.mxu0 0
  %153 = vmatpush1.bf16.msra.mxu0 0
  %154 = vmatprep.subr.bf16.mxu0 0
  %155 = vmatpush1.bf16.msra.mxu0 0
  %156 = vmatprep.subr.bf16.mxu0 0
  %157 = vmatpush1.bf16.msra.mxu0 0
  %158 = vmatprep.subr.bf16.mxu0 0
  %159 = vmatpush1.bf16.msra.mxu0 0
  %160 = vmatprep.subr.bf16.mxu0 0
  %161 = vmatpush1.bf16.msra.mxu0 0
  %162 = vmatprep.subr.bf16.mxu0 0
  %163 = vmatpush1.bf16.msra.mxu0 0
  %164 = vmatprep.subr.bf16.mxu0 0
  %165 = vmatpush1.bf16.msra.mxu0 0
  %166 = vmatprep.mubr.bf16.mxu0 0
  %167 = vmatmul.mubr.bf16.gmra.mrb[0].mxu0 %v132
  %v168 = vpop.f32.mrb[0].mxu0
  %v169 = vadd.f32 %v117, %v168
  %v170 = vpop.f32.mrb[0].mxu0
  %v171 = vpop.f32.mrb[0].mxu0
  %v172 = vadd.f32 %v117, %v171
  %v173 = vpop.f32.mrb[0].mxu0
  %174 = vdwg.mxu0
  %v175 = vmul.f32 %v169, %v82
  %v176 = vmul.f32 %v172, %v82
  %v177 = vmul.f32 %v169, %v87
  %v178 = vmul.f32 %v172, %v87
  %v179 = vmul.f32 %v169, %v92
  %v180 = vmul.f32 %v172, %v92
  %v181 = vmul.f32 %v169, %v97
  %v182 = vmul.f32 %v172, %v97
  %185 = vrot.lane.b32.xlu0 %v169, 96
  %v186 = vpop.permute.xlu0 %185
  %187 = vrot.lane.b32.xlu0 %v172, 96
  %v188 = vpop.permute.xlu0 %187
  %v190 = vsel %vm130, %v175, 0
  %v193 = vsel %vm130, %v176, 0
  %v196 = vsel %vm130, %v177, 0
  %v199 = vsel %vm130, %v178, 0
  %v202 = vsel %vm130, %v179, 0
  %v205 = vsel %vm130, %v180, 0
  %v208 = vsel %vm130, %v181, 0
  %v211 = vsel %vm130, %v182, 0
  %v213 = vsel %vm130, %v186, 0
  %v215 = vsel %vm130, %v188, 0
  %217 = vmatprep.subr.mxu0 0.0
  %218 = vmatpush1.xpose.msra.mxu0 %v213
  %219 = vmatprep.subr.mxu0 0.0
  %220 = vmatpush1.xpose.msra.mxu0 %v215
  %221 = vmatprep.subr.mxu0 0.0
  %222 = vmatpush1.xpose.msra.mxu0 0.0
  %223 = vmatprep.subr.mxu0 0.0
  %224 = vmatpush1.xpose.msra.mxu0 0.0
  %225 = vmatprep.subr.mxu0 0.0
  %226 = vmatpush1.xpose.msra.mxu0 0.0
  %227 = vmatprep.subr.mxu0 0.0
  %228 = vmatpush1.xpose.msra.mxu0 0.0
  %229 = vmatprep.subr.mxu0 0.0
  %230 = vmatpush1.xpose.msra.mxu0 0.0
  %231 = vmatprep.subr.mxu0 0.0
  %232 = vmatpush1.xpose.msra.mxu0 0.0
  %233 = vmatprep.subr.mxu0 0.0
  %234 = vmatpush1.xpose.msra.mxu0 0.0
  %235 = vmatprep.subr.mxu0 0.0
  %236 = vmatpush1.xpose.msra.mxu0 0.0
  %237 = vmatprep.subr.mxu0 0.0
  %238 = vmatpush1.xpose.msra.mxu0 0.0
  %239 = vmatprep.subr.mxu0 0.0
  %240 = vmatpush1.xpose.msra.mxu0 0.0
  %241 = vmatprep.subr.mxu0 0.0
  %242 = vmatpush1.xpose.msra.mxu0 0.0
  %243 = vmatprep.subr.mxu0 0.0
  %244 = vmatpush1.xpose.msra.mxu0 0.0
  %245 = vmatprep.subr.mxu0 0.0
  %246 = vmatpush1.xpose.msra.mxu0 0.0
  %247 = vmatprep.subr.mxu0 0.0
  %248 = vmatpush1.xpose.msra.mxu0 0.0
  %249 = vmatprep.subr.mxu0 0.0
  %250 = vmatpush1.xpose.msra.mxu0 0.0
  %251 = vmatprep.subr.mxu0 0.0
  %252 = vmatpush1.xpose.msra.mxu0 0.0
  %253 = vmatprep.subr.mxu0 0.0
  %254 = vmatpush1.xpose.msra.mxu0 0.0
  %255 = vmatprep.subr.mxu0 0.0
  %256 = vmatpush1.xpose.msra.mxu0 0.0
  %257 = vmatprep.subr.mxu0 0.0
  %258 = vmatpush1.xpose.msra.mxu0 0.0
  %259 = vmatprep.subr.mxu0 0.0
  %260 = vmatpush1.xpose.msra.mxu0 0.0
  %261 = vmatprep.subr.mxu0 0.0
  %262 = vmatpush1.xpose.msra.mxu0 0.0
  %263 = vmatprep.subr.mxu0 0.0
  %264 = vmatpush1.xpose.msra.mxu0 0.0
  %265 = vmatprep.subr.mxu0 0.0
  %266 = vmatpush1.xpose.msra.mxu0 0.0
  %267 = vmatprep.subr.mxu0 0.0
  %268 = vmatpush1.xpose.msra.mxu0 0.0
  %269 = vmatprep.subr.mxu0 0.0
  %270 = vmatpush1.xpose.msra.mxu0 0.0
  %271 = vmatprep.subr.mxu0 0.0
  %272 = vmatpush1.xpose.msra.mxu0 0.0
  %273 = vmatprep.subr.mxu0 0.0
  %274 = vmatpush1.xpose.msra.mxu0 0.0
  %275 = vmatprep.subr.mxu0 0.0
  %276 = vmatpush1.xpose.msra.mxu0 0.0
  %277 = vmatprep.subr.mxu0 0.0
  %278 = vmatpush1.xpose.msra.mxu0 0.0
  %279 = vmatprep.subr.mxu0 0.0
  %280 = vmatpush1.xpose.msra.mxu0 0.0
  %281 = vmatprep.mubr.f32.mxu0 0.0
  %282 = vmatmul.mubr.f32.gmra.mrb[0].mxu0 %v190
  %v283 = vpop.f32.mrb[0].mxu0
  %v284 = vadd.f32 %v60, %v283
  %v285 = vpop.f32.mrb[0].mxu0
  %286 = vmatprep.mubr.f32.mxu0 0.0
  %287 = vmatmul.mubr.f32.gmra.mrb[0].mxu0 %v193
  %v288 = vpop.f32.mrb[0].mxu0
  %v289 = vadd.f32 %v61, %v288
  %v290 = vpop.f32.mrb[0].mxu0
  %291 = vmatprep.mubr.f32.mxu0 0.0
  %292 = vmatmul.mubr.f32.gmra.mrb[0].mxu0 %v196
  %v293 = vpop.f32.mrb[0].mxu0
  %v294 = vadd.f32 %v62, %v293
  %v295 = vpop.f32.mrb[0].mxu0
  %296 = vmatprep.mubr.f32.mxu0 0.0
  %297 = vmatmul.mubr.f32.gmra.mrb[0].mxu0 %v199
  %v298 = vpop.f32.mrb[0].mxu0
  %v299 = vadd.f32 %v63, %v298
  %v300 = vpop.f32.mrb[0].mxu0
  %301 = vmatprep.mubr.f32.mxu0 0.0
  %302 = vmatmul.mubr.f32.gmra.mrb[0].mxu0 %v202
  %v303 = vpop.f32.mrb[0].mxu0
  %v304 = vadd.f32 %v64, %v303
  %v305 = vpop.f32.mrb[0].mxu0
  %306 = vmatprep.mubr.f32.mxu0 0.0
  %307 = vmatmul.mubr.f32.gmra.mrb[0].mxu0 %v205
  %v308 = vpop.f32.mrb[0].mxu0
  %v309 = vadd.f32 %v65, %v308
  %v310 = vpop.f32.mrb[0].mxu0
  %311 = vmatprep.mubr.f32.mxu0 0.0
  %312 = vmatmul.mubr.f32.gmra.mrb[0].mxu0 %v208
  %v313 = vpop.f32.mrb[0].mxu0
  %v314 = vadd.f32 %v66, %v313
  %v315 = vpop.f32.mrb[0].mxu0
  %316 = vmatprep.mubr.f32.mxu0 0.0
  %317 = vmatmul.mubr.f32.gmra.mrb[0].mxu0 %v211
  %v318 = vpop.f32.mrb[0].mxu0
  %v319 = vadd.f32 %v67, %v318
  %v320 = vpop.f32.mrb[0].mxu0
  %321 = vdwg.mxu0
  %vm322 = vcmask 130048
  %v323 = vsel %vm322, %v284, -inf
  %324 = vmax.xlane.f32.xlu0 %v323
  %v325 = vpop.xlane.xlu0 %324
  %v326 = vsel %vm322, %v289, -inf
  %327 = vmax.xlane.f32.xlu0 %v326
  %v328 = vpop.xlane.xlu0 %327
  %v329 = vsel %vm322, %v294, -inf
  %330 = vmax.xlane.f32.xlu0 %v329
  %v331 = vpop.xlane.xlu0 %330
  %v332 = vsel %vm322, %v299, -inf
  %333 = vmax.xlane.f32.xlu0 %v332
  %v334 = vpop.xlane.xlu0 %333
  %v335 = vsel %vm322, %v304, -inf
  %336 = vmax.xlane.f32.xlu0 %v335
  %v337 = vpop.xlane.xlu0 %336
  %v338 = vsel %vm322, %v309, -inf
  %339 = vmax.xlane.f32.xlu0 %v338
  %v340 = vpop.xlane.xlu0 %339
  %v341 = vsel %vm322, %v314, -inf
  %342 = vmax.xlane.f32.xlu0 %v341
  %v343 = vpop.xlane.xlu0 %342
  %v344 = vsel %vm322, %v319, -inf
  %345 = vmax.xlane.f32.xlu0 %v344
  %v346 = vpop.xlane.xlu0 %345
  %v347 = vsub.f32 %v284, %v325
  %v348 = vsub.f32 %v289, %v328
  %v349 = vsub.f32 %v294, %v331
  %v350 = vsub.f32 %v299, %v334
  %v351 = vsub.f32 %v304, %v337
  %v352 = vsub.f32 %v309, %v340
  %v353 = vsub.f32 %v314, %v343
  %v354 = vsub.f32 %v319, %v346
  %v355 = vmul.f32 %v347, 1.442695
  %v356 = vpow.pop %v355
  %v357 = vmul.f32 %v348, 1.442695
  %v358 = vpow.pop %v357
  %v359 = vmul.f32 %v349, 1.442695
  %v360 = vpow.pop %v359
  %v361 = vmul.f32 %v350, 1.442695
  %v362 = vpow.pop %v361
  %v363 = vmul.f32 %v351, 1.442695
  %v364 = vpow.pop %v363
  %v365 = vmul.f32 %v352, 1.442695
  %v366 = vpow.pop %v365
  %v367 = vmul.f32 %v353, 1.442695
  %v368 = vpow.pop %v367
  %v369 = vmul.f32 %v354, 1.442695
  %v370 = vpow.pop %v369
  %v371 = vsel %vm322, %v356, 0.0
  %372 = vadd.xlane.f32.xlu0 %v371
  %v373 = vpop.xlane.xlu0 %372
  %v374 = vsel %vm322, %v358, 0.0
  %375 = vadd.xlane.f32.xlu0 %v374
  %v376 = vpop.xlane.xlu0 %375
  %v377 = vsel %vm322, %v360, 0.0
  %378 = vadd.xlane.f32.xlu0 %v377
  %v379 = vpop.xlane.xlu0 %378
  %v380 = vsel %vm322, %v362, 0.0
  %381 = vadd.xlane.f32.xlu0 %v380
  %v382 = vpop.xlane.xlu0 %381
  %v383 = vsel %vm322, %v364, 0.0
  %384 = vadd.xlane.f32.xlu0 %v383
  %v385 = vpop.xlane.xlu0 %384
  %v386 = vsel %vm322, %v366, 0.0
  %387 = vadd.xlane.f32.xlu0 %v386
  %v388 = vpop.xlane.xlu0 %387
  %v389 = vsel %vm322, %v368, 0.0
  %390 = vadd.xlane.f32.xlu0 %v389
  %v391 = vpop.xlane.xlu0 %390
  %v392 = vsel %vm322, %v370, 0.0
  %393 = vadd.xlane.f32.xlu0 %v392
  %v394 = vpop.xlane.xlu0 %393
  %395 = vrot.lane.b32.xlu0 %v169, 64
  %v396 = vpop.permute.xlu0 %395
  %397 = vrot.lane.b32.xlu0 %v172, 64
  %v398 = vpop.permute.xlu0 %397
  %v402 = vsel %vm322, %v356, 0
  %v405 = vsel %vm322, %v358, 0
  %v408 = vsel %vm322, %v360, 0
  %v411 = vsel %vm322, %v362, 0
  %v414 = vsel %vm322, %v364, 0
  %v417 = vsel %vm322, %v366, 0
  %v420 = vsel %vm322, %v368, 0
  %v423 = vsel %vm322, %v370, 0
  %425 = vmatprep.subr.mxu0 0.0
  %426 = vmatpush1.msra.mxu0 %v396
  %427 = vmatprep.subr.mxu0 0.0
  %428 = vmatpush1.msra.mxu0 %v398
  %429 = vmatprep.subr.mxu0 0.0
  %430 = vmatpush1.msra.mxu0 0.0
  %431 = vmatprep.subr.mxu0 0.0
  %432 = vmatpush1.msra.mxu0 0.0
  %433 = vmatprep.subr.mxu0 0.0
  %434 = vmatpush1.msra.mxu0 0.0
  %435 = vmatprep.subr.mxu0 0.0
  %436 = vmatpush1.msra.mxu0 0.0
  %437 = vmatprep.subr.mxu0 0.0
  %438 = vmatpush1.msra.mxu0 0.0
  %439 = vmatprep.subr.mxu0 0.0
  %440 = vmatpush1.msra.mxu0 0.0
  %441 = vmatprep.subr.mxu0 0.0
  %442 = vmatpush1.msra.mxu0 0.0
  %443 = vmatprep.subr.mxu0 0.0
  %444 = vmatpush1.msra.mxu0 0.0
  %445 = vmatprep.subr.mxu0 0.0
  %446 = vmatpush1.msra.mxu0 0.0
  %447 = vmatprep.subr.mxu0 0.0
  %448 = vmatpush1.msra.mxu0 0.0
  %449 = vmatprep.subr.mxu0 0.0
  %450 = vmatpush1.msra.mxu0 0.0
  %451 = vmatprep.subr.mxu0 0.0
  %452 = vmatpush1.msra.mxu0 0.0
  %453 = vmatprep.subr.mxu0 0.0
  %454 = vmatpush1.msra.mxu0 0.0
  %455 = vmatprep.subr.mxu0 0.0
  %456 = vmatpush1.msra.mxu0 0.0
  %457 = vmatprep.subr.mxu0 0.0
  %458 = vmatpush1.msra.mxu0 0.0
  %459 = vmatprep.subr.mxu0 0.0
  %460 = vmatpush1.msra.mxu0 0.0
  %461 = vmatprep.subr.mxu0 0.0
  %462 = vmatpush1.msra.mxu0 0.0
  %463 = vmatprep.subr.mxu0 0.0
  %464 = vmatpush1.msra.mxu0 0.0
  %465 = vmatprep.subr.mxu0 0.0
  %466 = vmatpush1.msra.mxu0 0.0
  %467 = vmatprep.subr.mxu0 0.0
  %468 = vmatpush1.msra.mxu0 0.0
  %469 = vmatprep.subr.mxu0 0.0
  %470 = vmatpush1.msra.mxu0 0.0
  %471 = vmatprep.subr.mxu0 0.0
  %472 = vmatpush1.msra.mxu0 0.0
  %473 = vmatprep.subr.mxu0 0.0
  %474 = vmatpush1.msra.mxu0 0.0
  %475 = vmatprep.subr.mxu0 0.0
  %476 = vmatpush1.msra.mxu0 0.0
  %477 = vmatprep.subr.mxu0 0.0
  %478 = vmatpush1.msra.mxu0 0.0
  %479 = vmatprep.subr.mxu0 0.0
  %480 = vmatpush1.msra.mxu0 0.0
  %481 = vmatprep.subr.mxu0 0.0
  %482 = vmatpush1.msra.mxu0 0.0
  %483 = vmatprep.subr.mxu0 0.0
  %484 = vmatpush1.msra.mxu0 0.0
  %485 = vmatprep.subr.mxu0 0.0
  %486 = vmatpush1.msra.mxu0 0.0
  %487 = vmatprep.subr.mxu0 0.0
  %488 = vmatpush1.msra.mxu0 0.0
  %489 = vmatprep.mubr.f32.mxu0 0.0
  %490 = vmatmul.mubr.f32.gmra.mrb[0].mxu0 %v402
  %v491 = vpop.f32.mrb[0].mxu0
  %v492 = vadd.f32 0.0, %v491
  %v493 = vpop.f32.mrb[0].mxu0
  %494 = vmatprep.mubr.f32.mxu0 0.0
  %495 = vmatmul.mubr.f32.gmra.mrb[0].mxu0 %v405
  %v496 = vpop.f32.mrb[0].mxu0
  %v497 = vadd.f32 0.0, %v496
  %v498 = vpop.f32.mrb[0].mxu0
  %499 = vmatprep.mubr.f32.mxu0 0.0
  %500 = vmatmul.mubr.f32.gmra.mrb[0].mxu0 %v408
  %v501 = vpop.f32.mrb[0].mxu0
  %v502 = vadd.f32 0.0, %v501
  %v503 = vpop.f32.mrb[0].mxu0
  %504 = vmatprep.mubr.f32.mxu0 0.0
  %505 = vmatmul.mubr.f32.gmra.mrb[0].mxu0 %v411
  %v506 = vpop.f32.mrb[0].mxu0
  %v507 = vadd.f32 0.0, %v506
  %v508 = vpop.f32.mrb[0].mxu0
  %509 = vmatprep.mubr.f32.mxu0 0.0
  %510 = vmatmul.mubr.f32.gmra.mrb[0].mxu0 %v414
  %v511 = vpop.f32.mrb[0].mxu0
  %v512 = vadd.f32 0.0, %v511
  %v513 = vpop.f32.mrb[0].mxu0
  %514 = vmatprep.mubr.f32.mxu0 0.0
  %515 = vmatmul.mubr.f32.gmra.mrb[0].mxu0 %v417
  %v516 = vpop.f32.mrb[0].mxu0
  %v517 = vadd.f32 0.0, %v516
  %v518 = vpop.f32.mrb[0].mxu0
  %519 = vmatprep.mubr.f32.mxu0 0.0
  %520 = vmatmul.mubr.f32.gmra.mrb[0].mxu0 %v420
  %v521 = vpop.f32.mrb[0].mxu0
  %v522 = vadd.f32 0.0, %v521
  %v523 = vpop.f32.mrb[0].mxu0
  %524 = vmatprep.mubr.f32.mxu0 0.0
  %525 = vmatmul.mubr.f32.gmra.mrb[0].mxu0 %v423
  %v526 = vpop.f32.mrb[0].mxu0
  %v527 = vadd.f32 0.0, %v526
  %v528 = vpop.f32.mrb[0].mxu0
  %529 = vdwg.mxu0
  %v530 = vrcp.pop %v373
  %v531 = vrcp.pop %v376
  %v532 = vrcp.pop %v379
  %v533 = vrcp.pop %v382
  %v534 = vrcp.pop %v385
  %v535 = vrcp.pop %v388
  %v536 = vrcp.pop %v391
  %v537 = vrcp.pop %v394
  %v538 = vmul.f32 %v492, %v530
  %v539 = vmul.f32 %v497, %v531
  %v540 = vmul.f32 %v502, %v532
  %v541 = vmul.f32 %v507, %v533
  %v542 = vmul.f32 %v512, %v534
  %v543 = vmul.f32 %v517, %v535
  %v544 = vmul.f32 %v522, %v536
  %v545 = vmul.f32 %v527, %v537
  %v546 = vmul.f32 %v538, %v82
  %v547 = vmul.f32 %v539, %v82
  %v548 = vmul.f32 %v540, %v87
  %v549 = vmul.f32 %v541, %v87
  %v550 = vadd.f32 %v546, %v548
  %v551 = vadd.f32 %v547, %v549
  %v552 = vmul.f32 %v542, %v92
  %v553 = vmul.f32 %v543, %v92
  %v554 = vadd.f32 %v550, %v552
  %v555 = vadd.f32 %v551, %v553
  %v556 = vmul.f32 %v544, %v97
  %v557 = vmul.f32 %v545, %v97
  %v558 = vadd.f32 %v554, %v556
  %v559 = vadd.f32 %v555, %v557
  %v560 = vpack.c.bf16 %v559, %v558
  %v561 = vlaneseq
  %v562 = vshrl.u32 %v561, 7
  %v563 = vsub.s32 1, %v562
  %v564 = vrot.slane %v98, %v563
  %v569 = vunpack.c.l.b16 %v100
  %v570 = vunpack.c.l.b16 %v101
  %v571 = vunpack.c.l.b16 %v102
  %v572 = vunpack.c.l.b16 %v103
  %v573 = vpack.c.b16 %v570, %v569
  %v574 = vpack.c.b16 %v572, %v571
  %v578 = vsel %vm130, %v560, 0
  %580 = vmatprep.subr.bf16.mxu0 0
  %581 = vmatpush1.bf16.msra.mxu0 %v573
  %582 = vmatprep.subr.bf16.mxu0 0
  %583 = vmatpush1.bf16.msra.mxu0 %v574
  %584 = vmatprep.subr.bf16.mxu0 0
  %585 = vmatpush1.bf16.msra.mxu0 0
  %586 = vmatprep.subr.bf16.mxu0 0
  %587 = vmatpush1.bf16.msra.mxu0 0
  %588 = vmatprep.subr.bf16.mxu0 0
  %589 = vmatpush1.bf16.msra.mxu0 0
  %590 = vmatprep.subr.bf16.mxu0 0
  %591 = vmatpush1.bf16.msra.mxu0 0
  %592 = vmatprep.subr.bf16.mxu0 0
  %593 = vmatpush1.bf16.msra.mxu0 0
  %594 = vmatprep.subr.bf16.mxu0 0
  %595 = vmatpush1.bf16.msra.mxu0 0
  %596 = vmatprep.subr.bf16.mxu0 0
  %597 = vmatpush1.bf16.msra.mxu0 0
  %598 = vmatprep.subr.bf16.mxu0 0
  %599 = vmatpush1.bf16.msra.mxu0 0
  %600 = vmatprep.subr.bf16.mxu0 0
  %601 = vmatpush1.bf16.msra.mxu0 0
  %602 = vmatprep.subr.bf16.mxu0 0
  %603 = vmatpush1.bf16.msra.mxu0 0
  %604 = vmatprep.subr.bf16.mxu0 0
  %605 = vmatpush1.bf16.msra.mxu0 0
  %606 = vmatprep.subr.bf16.mxu0 0
  %607 = vmatpush1.bf16.msra.mxu0 0
  %608 = vmatprep.subr.bf16.mxu0 0
  %609 = vmatpush1.bf16.msra.mxu0 0
  %610 = vmatprep.subr.bf16.mxu0 0
  %611 = vmatpush1.bf16.msra.mxu0 0
  %612 = vmatprep.mubr.bf16.mxu0 0
  %613 = vmatmul.mubr.bf16.gmra.mrb[0].mxu0 %v578
  %v614 = vpop.f32.mrb[0].mxu0
  %v615 = vadd.f32 %v564, %v614
  %v616 = vpop.f32.mrb[0].mxu0
  %v617 = vpop.f32.mrb[0].mxu0
  %v618 = vadd.f32 %v564, %v617
  %v619 = vpop.f32.mrb[0].mxu0
  %620 = vdwg.mxu0
  %v621 = vadd.f32 %v54, %v615
  %v622 = vadd.f32 %v55, %v618
  %v623 = vsel %vm130, %v621, 0.0
  %624 = vadd.xlane.f32.xlu0 %v623
  %v625 = vpop.xlane.xlu0 %624
  %v626 = vsel %vm130, %v622, 0.0
  %627 = vadd.xlane.f32.xlu0 %v626
  %v628 = vpop.xlane.xlu0 %627
  %v629 = vrcp.pop 32.0
  %v630 = vmul.f32 %v625, %v629
  %v631 = vmul.f32 %v628, %v629
  %v632 = vsub.f32 %v621, %v630
  %v633 = vsub.f32 %v622, %v631
  %v634 = vmul.f32 %v632, %v632
  %v635 = vmul.f32 %v633, %v633
  %v636 = vsel %vm130, %v634, 0.0
  %637 = vadd.xlane.f32.xlu0 %v636
  %v638 = vpop.xlane.xlu0 %637
  %v639 = vsel %vm130, %v635, 0.0
  %640 = vadd.xlane.f32.xlu0 %v639
  %v641 = vpop.xlane.xlu0 %640
  %v642 = vmul.f32 %v638, %v629
  %v643 = vmul.f32 %v641, %v629
  %v644 = vadd.f32 %v642, 1e-05
  %v645 = vadd.f32 %v643, 1e-05
  %v646 = vrsqrt.pop %v644
  %v647 = vrsqrt.pop %v645
  %v648 = vmul.f32 %v632, %v646
  %v649 = vmul.f32 %v633, %v647
  %v650 = vlaneseq
  %v651 = vshrl.u32 %v650, 7
  %v652 = vsub.s32 3, %v651
  %v653 = vrot.slane %v98, %v652
  %v654 = vmul.f32 %v648, %v653
  %v655 = vmul.f32 %v649, %v653
  %v656 = vlaneseq
  %v657 = vshrl.u32 %v656, 7
  %v658 = vsub.s32 4, %v657
  %v659 = vrot.slane %v98, %v658
  %v660 = vadd.f32 %v654, %v659
  %v661 = vadd.f32 %v655, %v659
  %v662 = vld [vmem:[%s6] sm:$0xf]
  %v663 = vld [vmem:[%s6 + $0x4] sm:$0xf]
  %v664 = vld [vmem:[%s6 + $0x8] sm:$0xf]
  %v665 = vld [vmem:[%s6 + $0xc] sm:$0xf]
  %v666 = vpack.c.bf16 %v661, %v660
  %v667 = vlaneseq
  %v668 = vshrl.u32 %v667, 7
  %v669 = vsub.s32 0, %v668
  %v670 = vrot.slane %v98, %v669
  %v675 = vunpack.c.l.b16 %v662
  %v676 = vunpack.c.l.b16 %v663
  %v677 = vunpack.c.l.b16 %v664
  %v678 = vunpack.c.l.b16 %v665
  %v679 = vpack.c.b16 %v676, %v675
  %v680 = vpack.c.b16 %v678, %v677
  %v684 = vsel %vm130, %v666, 0
  %686 = vmatprep.subr.bf16.mxu0 0
  %687 = vmatpush1.bf16.msra.mxu0 %v679
  %688 = vmatprep.subr.bf16.mxu0 0
  %689 = vmatpush1.bf16.msra.mxu0 %v680
  %690 = vmatprep.subr.bf16.mxu0 0
  %691 = vmatpush1.bf16.msra.mxu0 0
  %692 = vmatprep.subr.bf16.mxu0 0
  %693 = vmatpush1.bf16.msra.mxu0 0
  %694 = vmatprep.subr.bf16.mxu0 0
  %695 = vmatpush1.bf16.msra.mxu0 0
  %696 = vmatprep.subr.bf16.mxu0 0
  %697 = vmatpush1.bf16.msra.mxu0 0
  %698 = vmatprep.subr.bf16.mxu0 0
  %699 = vmatpush1.bf16.msra.mxu0 0
  %700 = vmatprep.subr.bf16.mxu0 0
  %701 = vmatpush1.bf16.msra.mxu0 0
  %702 = vmatprep.subr.bf16.mxu0 0
  %703 = vmatpush1.bf16.msra.mxu0 0
  %704 = vmatprep.subr.bf16.mxu0 0
  %705 = vmatpush1.bf16.msra.mxu0 0
  %706 = vmatprep.subr.bf16.mxu0 0
  %707 = vmatpush1.bf16.msra.mxu0 0
  %708 = vmatprep.subr.bf16.mxu0 0
  %709 = vmatpush1.bf16.msra.mxu0 0
  %710 = vmatprep.subr.bf16.mxu0 0
  %711 = vmatpush1.bf16.msra.mxu0 0
  %712 = vmatprep.subr.bf16.mxu0 0
  %713 = vmatpush1.bf16.msra.mxu0 0
  %714 = vmatprep.subr.bf16.mxu0 0
  %715 = vmatpush1.bf16.msra.mxu0 0
  %716 = vmatprep.subr.bf16.mxu0 0
  %717 = vmatpush1.bf16.msra.mxu0 0
  %718 = vmatprep.mubr.bf16.mxu0 0
  %719 = vmatmul.mubr.bf16.gmra.mrb[0].mxu0 %v684
  %v720 = vpop.f32.mrb[0].mxu0
  %v721 = vadd.f32 %v670, %v720
  %v722 = vpop.f32.mrb[0].mxu0
  %v723 = vpop.f32.mrb[0].mxu0
  %v724 = vadd.f32 %v670, %v723
  %v725 = vpop.f32.mrb[0].mxu0
  %726 = vdwg.mxu0
  %v727 = vld [vmem:[%s7] sm:$0xf]
  %v728 = vld [vmem:[%s7 + $0x4] sm:$0xf]
  %v729 = vld [vmem:[%s7 + $0x8] sm:$0xf]
  %v730 = vld [vmem:[%s7 + $0xc] sm:$0xf]
  %v731 = vpack.c.bf16 %v57, %v56
  %v732 = vpack.c.bf16 %v59, %v58
  %v733 = vld [vmem:[%s8] sm:$0x1]
  %v734 = vlaneseq
  %v735 = vshrl.u32 %v734, 7
  %v736 = vsub.s32 0, %v735
  %v737 = vrot.slane %v733, %v736
  %v742 = vunpack.c.l.b16 %v727
  %v743 = vunpack.c.l.b16 %v728
  %v744 = vunpack.c.l.b16 %v729
  %v745 = vunpack.c.l.b16 %v730
  %v746 = vpack.c.b16 %v743, %v742
  %v747 = vpack.c.b16 %v745, %v744
  %v751 = vsel %vm130, %v731, 0
  %v754 = vsel %vm130, %v732, 0
  %756 = vmatprep.subr.bf16.mxu0 0
  %757 = vmatpush1.bf16.msra.mxu0 %v746
  %758 = vmatprep.subr.bf16.mxu0 0
  %759 = vmatpush1.bf16.msra.mxu0 %v747
  %760 = vmatprep.subr.bf16.mxu0 0
  %761 = vmatpush1.bf16.msra.mxu0 0
  %762 = vmatprep.subr.bf16.mxu0 0
  %763 = vmatpush1.bf16.msra.mxu0 0
  %764 = vmatprep.subr.bf16.mxu0 0
  %765 = vmatpush1.bf16.msra.mxu0 0
  %766 = vmatprep.subr.bf16.mxu0 0
  %767 = vmatpush1.bf16.msra.mxu0 0
  %768 = vmatprep.subr.bf16.mxu0 0
  %769 = vmatpush1.bf16.msra.mxu0 0
  %770 = vmatprep.subr.bf16.mxu0 0
  %771 = vmatpush1.bf16.msra.mxu0 0
  %772 = vmatprep.subr.bf16.mxu0 0
  %773 = vmatpush1.bf16.msra.mxu0 0
  %774 = vmatprep.subr.bf16.mxu0 0
  %775 = vmatpush1.bf16.msra.mxu0 0
  %776 = vmatprep.subr.bf16.mxu0 0
  %777 = vmatpush1.bf16.msra.mxu0 0
  %778 = vmatprep.subr.bf16.mxu0 0
  %779 = vmatpush1.bf16.msra.mxu0 0
  %780 = vmatprep.subr.bf16.mxu0 0
  %781 = vmatpush1.bf16.msra.mxu0 0
  %782 = vmatprep.subr.bf16.mxu0 0
  %783 = vmatpush1.bf16.msra.mxu0 0
  %784 = vmatprep.subr.bf16.mxu0 0
  %785 = vmatpush1.bf16.msra.mxu0 0
  %786 = vmatprep.subr.bf16.mxu0 0
  %787 = vmatpush1.bf16.msra.mxu0 0
  %788 = vmatprep.mubr.bf16.mxu0 0
  %789 = vmatmul.mubr.bf16.gmra.mrb[0].mxu0 %v751
  %v790 = vpop.f32.mrb[0].mxu0
  %v791 = vadd.f32 %v737, %v790
  %v792 = vpop.f32.mrb[0].mxu0
  %v793 = vpop.f32.mrb[0].mxu0
  %v794 = vadd.f32 %v737, %v793
  %v795 = vpop.f32.mrb[0].mxu0
  %796 = vmatprep.mubr.bf16.mxu0 0
  %797 = vmatmul.mubr.bf16.gmra.mrb[0].mxu0 %v754
  %v798 = vpop.f32.mrb[0].mxu0
  %v799 = vadd.f32 %v737, %v798
  %v800 = vpop.f32.mrb[0].mxu0
  %v801 = vpop.f32.mrb[0].mxu0
  %v802 = vadd.f32 %v737, %v801
  %v803 = vpop.f32.mrb[0].mxu0
  %804 = vdwg.mxu0
  %v805 = vmul.f32 %v721, %v82
  %v806 = vmul.f32 %v724, %v82
  %v807 = vmul.f32 %v721, %v87
  %v808 = vmul.f32 %v724, %v87
  %v809 = vmul.f32 %v721, %v92
  %v810 = vmul.f32 %v724, %v92
  %v811 = vmul.f32 %v721, %v97
  %v812 = vmul.f32 %v724, %v97
  %v814 = vsel %vm130, %v805, 0
  %v817 = vsel %vm130, %v806, 0
  %v820 = vsel %vm130, %v807, 0
  %v823 = vsel %vm130, %v808, 0
  %v826 = vsel %vm130, %v809, 0
  %v829 = vsel %vm130, %v810, 0
  %v832 = vsel %vm130, %v811, 0
  %v835 = vsel %vm130, %v812, 0
  %v838 = vsel %vm130, %v791, 0
  %v841 = vsel %vm130, %v794, 0
  %v844 = vsel %vm130, %v799, 0
  %v847 = vsel %vm130, %v802, 0
  %849 = vmatprep.subr.mxu0 0.0
  %850 = vmatpush1.xpose.msra.mxu0 %v838
  %851 = vmatprep.subr.mxu0 0.0
  %852 = vmatpush1.xpose.msra.mxu0 %v841
  %853 = vmatprep.subr.mxu0 0.0
  %854 = vmatpush1.xpose.msra.mxu0 %v844
  %855 = vmatprep.subr.mxu0 0.0
  %856 = vmatpush1.xpose.msra.mxu0 %v847
  %857 = vmatprep.subr.mxu0 0.0
  %858 = vmatpush1.xpose.msra.mxu0 0.0
  %859 = vmatprep.subr.mxu0 0.0
  %860 = vmatpush1.xpose.msra.mxu0 0.0
  %861 = vmatprep.subr.mxu0 0.0
  %862 = vmatpush1.xpose.msra.mxu0 0.0
  %863 = vmatprep.subr.mxu0 0.0
  %864 = vmatpush1.xpose.msra.mxu0 0.0
  %865 = vmatprep.subr.mxu0 0.0
  %866 = vmatpush1.xpose.msra.mxu0 0.0
  %867 = vmatprep.subr.mxu0 0.0
  %868 = vmatpush1.xpose.msra.mxu0 0.0
  %869 = vmatprep.subr.mxu0 0.0
  %870 = vmatpush1.xpose.msra.mxu0 0.0
  %871 = vmatprep.subr.mxu0 0.0
  %872 = vmatpush1.xpose.msra.mxu0 0.0
  %873 = vmatprep.subr.mxu0 0.0
  %874 = vmatpush1.xpose.msra.mxu0 0.0
  %875 = vmatprep.subr.mxu0 0.0
  %876 = vmatpush1.xpose.msra.mxu0 0.0
  %877 = vmatprep.subr.mxu0 0.0
  %878 = vmatpush1.xpose.msra.mxu0 0.0
  %879 = vmatprep.subr.mxu0 0.0
  %880 = vmatpush1.xpose.msra.mxu0 0.0
  %881 = vmatprep.subr.mxu0 0.0
  %882 = vmatpush1.xpose.msra.mxu0 0.0
  %883 = vmatprep.subr.mxu0 0.0
  %884 = vmatpush1.xpose.msra.mxu0 0.0
  %885 = vmatprep.subr.mxu0 0.0
  %886 = vmatpush1.xpose.msra.mxu0 0.0
  %887 = vmatprep.subr.mxu0 0.0
  %888 = vmatpush1.xpose.msra.mxu0 0.0
  %889 = vmatprep.subr.mxu0 0.0
  %890 = vmatpush1.xpose.msra.mxu0 0.0
  %891 = vmatprep.subr.mxu0 0.0
  %892 = vmatpush1.xpose.msra.mxu0 0.0
  %893 = vmatprep.subr.mxu0 0.0
  %894 = vmatpush1.xpose.msra.mxu0 0.0
  %895 = vmatprep.subr.mxu0 0.0
  %896 = vmatpush1.xpose.msra.mxu0 0.0
  %897 = vmatprep.subr.mxu0 0.0
  %898 = vmatpush1.xpose.msra.mxu0 0.0
  %899 = vmatprep.subr.mxu0 0.0
  %900 = vmatpush1.xpose.msra.mxu0 0.0
  %901 = vmatprep.subr.mxu0 0.0
  %902 = vmatpush1.xpose.msra.mxu0 0.0
  %903 = vmatprep.subr.mxu0 0.0
  %904 = vmatpush1.xpose.msra.mxu0 0.0
  %905 = vmatprep.subr.mxu0 0.0
  %906 = vmatpush1.xpose.msra.mxu0 0.0
  %907 = vmatprep.subr.mxu0 0.0
  %908 = vmatpush1.xpose.msra.mxu0 0.0
  %909 = vmatprep.subr.mxu0 0.0
  %910 = vmatpush1.xpose.msra.mxu0 0.0
  %911 = vmatprep.subr.mxu0 0.0
  %912 = vmatpush1.xpose.msra.mxu0 0.0
  %913 = vmatprep.mubr.f32.mxu0 0.0
  %914 = vmatmul.mubr.f32.gmra.mrb[0].mxu0 %v814
  %v915 = vpop.f32.mrb[0].mxu0
  %v916 = vadd.f32 %v68, %v915
  %v917 = vpop.f32.mrb[0].mxu0
  %918 = vmatprep.mubr.f32.mxu0 0.0
  %919 = vmatmul.mubr.f32.gmra.mrb[0].mxu0 %v817
  %v920 = vpop.f32.mrb[0].mxu0
  %v921 = vadd.f32 %v69, %v920
  %v922 = vpop.f32.mrb[0].mxu0
  %923 = vmatprep.mubr.f32.mxu0 0.0
  %924 = vmatmul.mubr.f32.gmra.mrb[0].mxu0 %v820
  %v925 = vpop.f32.mrb[0].mxu0
  %v926 = vadd.f32 %v70, %v925
  %v927 = vpop.f32.mrb[0].mxu0
  %928 = vmatprep.mubr.f32.mxu0 0.0
  %929 = vmatmul.mubr.f32.gmra.mrb[0].mxu0 %v823
  %v930 = vpop.f32.mrb[0].mxu0
  %v931 = vadd.f32 %v71, %v930
  %v932 = vpop.f32.mrb[0].mxu0
  %933 = vmatprep.mubr.f32.mxu0 0.0
  %934 = vmatmul.mubr.f32.gmra.mrb[0].mxu0 %v826
  %v935 = vpop.f32.mrb[0].mxu0
  %v936 = vadd.f32 %v72, %v935
  %v937 = vpop.f32.mrb[0].mxu0
  %938 = vmatprep.mubr.f32.mxu0 0.0
  %939 = vmatmul.mubr.f32.gmra.mrb[0].mxu0 %v829
  %v940 = vpop.f32.mrb[0].mxu0
  %v941 = vadd.f32 %v73, %v940
  %v942 = vpop.f32.mrb[0].mxu0
  %943 = vmatprep.mubr.f32.mxu0 0.0
  %944 = vmatmul.mubr.f32.gmra.mrb[0].mxu0 %v832
  %v945 = vpop.f32.mrb[0].mxu0
  %v946 = vadd.f32 %v74, %v945
  %v947 = vpop.f32.mrb[0].mxu0
  %948 = vmatprep.mubr.f32.mxu0 0.0
  %949 = vmatmul.mubr.f32.gmra.mrb[0].mxu0 %v835
  %v950 = vpop.f32.mrb[0].mxu0
  %v951 = vadd.f32 %v75, %v950
  %v952 = vpop.f32.mrb[0].mxu0
  %953 = vdwg.mxu0
  %v954 = vsel %vm130, %v916, -inf
  %955 = vmax.xlane.f32.xlu0 %v954
  %v956 = vpop.xlane.xlu0 %955
  %v957 = vsel %vm130, %v921, -inf
  %958 = vmax.xlane.f32.xlu0 %v957
  %v959 = vpop.xlane.xlu0 %958
  %v960 = vsel %vm130, %v926, -inf
  %961 = vmax.xlane.f32.xlu0 %v960
  %v962 = vpop.xlane.xlu0 %961
  %v963 = vsel %vm130, %v931, -inf
  %964 = vmax.xlane.f32.xlu0 %v963
  %v965 = vpop.xlane.xlu0 %964
  %v966 = vsel %vm130, %v936, -inf
  %967 = vmax.xlane.f32.xlu0 %v966
  %v968 = vpop.xlane.xlu0 %967
  %v969 = vsel %vm130, %v941, -inf
  %970 = vmax.xlane.f32.xlu0 %v969
  %v971 = vpop.xlane.xlu0 %970
  %v972 = vsel %vm130, %v946, -inf
  %973 = vmax.xlane.f32.xlu0 %v972
  %v974 = vpop.xlane.xlu0 %973
  %v975 = vsel %vm130, %v951, -inf
  %976 = vmax.xlane.f32.xlu0 %v975
  %v977 = vpop.xlane.xlu0 %976
  %v978 = vsub.f32 %v916, %v956
  %v979 = vsub.f32 %v921, %v959
  %v980 = vsub.f32 %v926, %v962
  %v981 = vsub.f32 %v931, %v965
  %v982 = vsub.f32 %v936, %v968
  %v983 = vsub.f32 %v941, %v971
  %v984 = vsub.f32 %v946, %v974
  %v985 = vsub.f32 %v951, %v977
  %v986 = vmul.f32 %v978, 1.442695
  %v987 = vpow.pop %v986
  %v988 = vmul.f32 %v979, 1.442695
  %v989 = vpow.pop %v988
  %v990 = vmul.f32 %v980, 1.442695
  %v991 = vpow.pop %v990
  %v992 = vmul.f32 %v981, 1.442695
  %v993 = vpow.pop %v992
  %v994 = vmul.f32 %v982, 1.442695
  %v995 = vpow.pop %v994
  %v996 = vmul.f32 %v983, 1.442695
  %v997 = vpow.pop %v996
  %v998 = vmul.f32 %v984, 1.442695
  %v999 = vpow.pop %v998
  %v1000 = vmul.f32 %v985, 1.442695
  %v1001 = vpow.pop %v1000
  %v1002 = vsel %vm130, %v987, 0.0
  %1003 = vadd.xlane.f32.xlu0 %v1002
  %v1004 = vpop.xlane.xlu0 %1003
  %v1005 = vsel %vm130, %v989, 0.0
  %1006 = vadd.xlane.f32.xlu0 %v1005
  %v1007 = vpop.xlane.xlu0 %1006
  %v1008 = vsel %vm130, %v991, 0.0
  %1009 = vadd.xlane.f32.xlu0 %v1008
  %v1010 = vpop.xlane.xlu0 %1009
  %v1011 = vsel %vm130, %v993, 0.0
  %1012 = vadd.xlane.f32.xlu0 %v1011
  %v1013 = vpop.xlane.xlu0 %1012
  %v1014 = vsel %vm130, %v995, 0.0
  %1015 = vadd.xlane.f32.xlu0 %v1014
  %v1016 = vpop.xlane.xlu0 %1015
  %v1017 = vsel %vm130, %v997, 0.0
  %1018 = vadd.xlane.f32.xlu0 %v1017
  %v1019 = vpop.xlane.xlu0 %1018
  %v1020 = vsel %vm130, %v999, 0.0
  %1021 = vadd.xlane.f32.xlu0 %v1020
  %v1022 = vpop.xlane.xlu0 %1021
  %v1023 = vsel %vm130, %v1001, 0.0
  %1024 = vadd.xlane.f32.xlu0 %v1023
  %v1025 = vpop.xlane.xlu0 %1024
  %1026 = vrot.lane.b32.xlu0 %v791, 96
  %v1027 = vpop.permute.xlu0 %1026
  %1028 = vrot.lane.b32.xlu0 %v794, 96
  %v1029 = vpop.permute.xlu0 %1028
  %1030 = vrot.lane.b32.xlu0 %v799, 96
  %v1031 = vpop.permute.xlu0 %1030
  %1032 = vrot.lane.b32.xlu0 %v802, 96
  %v1033 = vpop.permute.xlu0 %1032
  %v1039 = vsel %vm130, %v987, 0
  %v1042 = vsel %vm130, %v989, 0
  %v1045 = vsel %vm130, %v991, 0
  %v1048 = vsel %vm130, %v993, 0
  %v1051 = vsel %vm130, %v995, 0
  %v1054 = vsel %vm130, %v997, 0
  %v1057 = vsel %vm130, %v999, 0
  %v1060 = vsel %vm130, %v1001, 0
  %1062 = vmatprep.subr.mxu0 0.0
  %1063 = vmatpush1.msra.mxu0 %v1027
  %1064 = vmatprep.subr.mxu0 0.0
  %1065 = vmatpush1.msra.mxu0 %v1029
  %1066 = vmatprep.subr.mxu0 0.0
  %1067 = vmatpush1.msra.mxu0 %v1031
  %1068 = vmatprep.subr.mxu0 0.0
  %1069 = vmatpush1.msra.mxu0 %v1033
  %1070 = vmatprep.subr.mxu0 0.0
  %1071 = vmatpush1.msra.mxu0 0.0
  %1072 = vmatprep.subr.mxu0 0.0
  %1073 = vmatpush1.msra.mxu0 0.0
  %1074 = vmatprep.subr.mxu0 0.0
  %1075 = vmatpush1.msra.mxu0 0.0
  %1076 = vmatprep.subr.mxu0 0.0
  %1077 = vmatpush1.msra.mxu0 0.0
  %1078 = vmatprep.subr.mxu0 0.0
  %1079 = vmatpush1.msra.mxu0 0.0
  %1080 = vmatprep.subr.mxu0 0.0
  %1081 = vmatpush1.msra.mxu0 0.0
  %1082 = vmatprep.subr.mxu0 0.0
  %1083 = vmatpush1.msra.mxu0 0.0
  %1084 = vmatprep.subr.mxu0 0.0
  %1085 = vmatpush1.msra.mxu0 0.0
  %1086 = vmatprep.subr.mxu0 0.0
  %1087 = vmatpush1.msra.mxu0 0.0
  %1088 = vmatprep.subr.mxu0 0.0
  %1089 = vmatpush1.msra.mxu0 0.0
  %1090 = vmatprep.subr.mxu0 0.0
  %1091 = vmatpush1.msra.mxu0 0.0
  %1092 = vmatprep.subr.mxu0 0.0
  %1093 = vmatpush1.msra.mxu0 0.0
  %1094 = vmatprep.subr.mxu0 0.0
  %1095 = vmatpush1.msra.mxu0 0.0
  %1096 = vmatprep.subr.mxu0 0.0
  %1097 = vmatpush1.msra.mxu0 0.0
  %1098 = vmatprep.subr.mxu0 0.0
  %1099 = vmatpush1.msra.mxu0 0.0
  %1100 = vmatprep.subr.mxu0 0.0
  %1101 = vmatpush1.msra.mxu0 0.0
  %1102 = vmatprep.subr.mxu0 0.0
  %1103 = vmatpush1.msra.mxu0 0.0
  %1104 = vmatprep.subr.mxu0 0.0
  %1105 = vmatpush1.msra.mxu0 0.0
  %1106 = vmatprep.subr.mxu0 0.0
  %1107 = vmatpush1.msra.mxu0 0.0
  %1108 = vmatprep.subr.mxu0 0.0
  %1109 = vmatpush1.msra.mxu0 0.0
  %1110 = vmatprep.subr.mxu0 0.0
  %1111 = vmatpush1.msra.mxu0 0.0
  %1112 = vmatprep.subr.mxu0 0.0
  %1113 = vmatpush1.msra.mxu0 0.0
  %1114 = vmatprep.subr.mxu0 0.0
  %1115 = vmatpush1.msra.mxu0 0.0
  %1116 = vmatprep.subr.mxu0 0.0
  %1117 = vmatpush1.msra.mxu0 0.0
  %1118 = vmatprep.subr.mxu0 0.0
  %1119 = vmatpush1.msra.mxu0 0.0
  %1120 = vmatprep.subr.mxu0 0.0
  %1121 = vmatpush1.msra.mxu0 0.0
  %1122 = vmatprep.subr.mxu0 0.0
  %1123 = vmatpush1.msra.mxu0 0.0
  %1124 = vmatprep.subr.mxu0 0.0
  %1125 = vmatpush1.msra.mxu0 0.0
  %1126 = vmatprep.mubr.f32.mxu0 0.0
  %1127 = vmatmul.mubr.f32.gmra.mrb[0].mxu0 %v1039
  %v1128 = vpop.f32.mrb[0].mxu0
  %v1129 = vadd.f32 0.0, %v1128
  %v1130 = vpop.f32.mrb[0].mxu0
  %1131 = vmatprep.mubr.f32.mxu0 0.0
  %1132 = vmatmul.mubr.f32.gmra.mrb[0].mxu0 %v1042
  %v1133 = vpop.f32.mrb[0].mxu0
  %v1134 = vadd.f32 0.0, %v1133
  %v1135 = vpop.f32.mrb[0].mxu0
  %1136 = vmatprep.mubr.f32.mxu0 0.0
  %1137 = vmatmul.mubr.f32.gmra.mrb[0].mxu0 %v1045
  %v1138 = vpop.f32.mrb[0].mxu0
  %v1139 = vadd.f32 0.0, %v1138
  %v1140 = vpop.f32.mrb[0].mxu0
  %1141 = vmatprep.mubr.f32.mxu0 0.0
  %1142 = vmatmul.mubr.f32.gmra.mrb[0].mxu0 %v1048
  %v1143 = vpop.f32.mrb[0].mxu0
  %v1144 = vadd.f32 0.0, %v1143
  %v1145 = vpop.f32.mrb[0].mxu0
  %1146 = vmatprep.mubr.f32.mxu0 0.0
  %1147 = vmatmul.mubr.f32.gmra.mrb[0].mxu0 %v1051
  %v1148 = vpop.f32.mrb[0].mxu0
  %v1149 = vadd.f32 0.0, %v1148
  %v1150 = vpop.f32.mrb[0].mxu0
  %1151 = vmatprep.mubr.f32.mxu0 0.0
  %1152 = vmatmul.mubr.f32.gmra.mrb[0].mxu0 %v1054
  %v1153 = vpop.f32.mrb[0].mxu0
  %v1154 = vadd.f32 0.0, %v1153
  %v1155 = vpop.f32.mrb[0].mxu0
  %1156 = vmatprep.mubr.f32.mxu0 0.0
  %1157 = vmatmul.mubr.f32.gmra.mrb[0].mxu0 %v1057
  %v1158 = vpop.f32.mrb[0].mxu0
  %v1159 = vadd.f32 0.0, %v1158
  %v1160 = vpop.f32.mrb[0].mxu0
  %1161 = vmatprep.mubr.f32.mxu0 0.0
  %1162 = vmatmul.mubr.f32.gmra.mrb[0].mxu0 %v1060
  %v1163 = vpop.f32.mrb[0].mxu0
  %v1164 = vadd.f32 0.0, %v1163
  %v1165 = vpop.f32.mrb[0].mxu0
  %1166 = vdwg.mxu0
  %v1167 = vrcp.pop %v1004
  %v1168 = vrcp.pop %v1007
  %v1169 = vrcp.pop %v1010
  %v1170 = vrcp.pop %v1013
  %v1171 = vrcp.pop %v1016
  %v1172 = vrcp.pop %v1019
  %v1173 = vrcp.pop %v1022
  %v1174 = vrcp.pop %v1025
  %v1175 = vmul.f32 %v1129, %v1167
  %v1176 = vmul.f32 %v1134, %v1168
  %v1177 = vmul.f32 %v1139, %v1169
  %v1178 = vmul.f32 %v1144, %v1170
  %v1179 = vmul.f32 %v1149, %v1171
  %v1180 = vmul.f32 %v1154, %v1172
  %v1181 = vmul.f32 %v1159, %v1173
  %v1182 = vmul.f32 %v1164, %v1174
  %v1183 = vmul.f32 %v1175, %v82
  %v1184 = vmul.f32 %v1176, %v82
  %v1185 = vmul.f32 %v1177, %v87
  %v1186 = vmul.f32 %v1178, %v87
  %v1187 = vadd.f32 %v1183, %v1185
  %v1188 = vadd.f32 %v1184, %v1186
  %v1189 = vmul.f32 %v1179, %v92
  %v1190 = vmul.f32 %v1180, %v92
  %v1191 = vadd.f32 %v1187, %v1189
  %v1192 = vadd.f32 %v1188, %v1190
  %v1193 = vmul.f32 %v1181, %v97
  %v1194 = vmul.f32 %v1182, %v97
  %v1195 = vadd.f32 %v1191, %v1193
  %v1196 = vadd.f32 %v1192, %v1194
  %v1197 = vpack.c.bf16 %v1196, %v1195
  %v1198 = vlaneseq
  %v1199 = vshrl.u32 %v1198, 7
  %v1200 = vsub.s32 2, %v1199
  %v1201 = vrot.slane %v98, %v1200
  %v1206 = vunpack.c.l.b16 %v104
  %v1207 = vunpack.c.l.b16 %v105
  %v1208 = vunpack.c.l.b16 %v106
  %v1209 = vunpack.c.l.b16 %v107
  %v1210 = vpack.c.b16 %v1207, %v1206
  %v1211 = vpack.c.b16 %v1209, %v1208
  %v1215 = vsel %vm130, %v1197, 0
  %1217 = vmatprep.subr.bf16.mxu0 0
  %1218 = vmatpush1.bf16.msra.mxu0 %v1210
  %1219 = vmatprep.subr.bf16.mxu0 0
  %1220 = vmatpush1.bf16.msra.mxu0 %v1211
  %1221 = vmatprep.subr.bf16.mxu0 0
  %1222 = vmatpush1.bf16.msra.mxu0 0
  %1223 = vmatprep.subr.bf16.mxu0 0
  %1224 = vmatpush1.bf16.msra.mxu0 0
  %1225 = vmatprep.subr.bf16.mxu0 0
  %1226 = vmatpush1.bf16.msra.mxu0 0
  %1227 = vmatprep.subr.bf16.mxu0 0
  %1228 = vmatpush1.bf16.msra.mxu0 0
  %1229 = vmatprep.subr.bf16.mxu0 0
  %1230 = vmatpush1.bf16.msra.mxu0 0
  %1231 = vmatprep.subr.bf16.mxu0 0
  %1232 = vmatpush1.bf16.msra.mxu0 0
  %1233 = vmatprep.subr.bf16.mxu0 0
  %1234 = vmatpush1.bf16.msra.mxu0 0
  %1235 = vmatprep.subr.bf16.mxu0 0
  %1236 = vmatpush1.bf16.msra.mxu0 0
  %1237 = vmatprep.subr.bf16.mxu0 0
  %1238 = vmatpush1.bf16.msra.mxu0 0
  %1239 = vmatprep.subr.bf16.mxu0 0
  %1240 = vmatpush1.bf16.msra.mxu0 0
  %1241 = vmatprep.subr.bf16.mxu0 0
  %1242 = vmatpush1.bf16.msra.mxu0 0
  %1243 = vmatprep.subr.bf16.mxu0 0
  %1244 = vmatpush1.bf16.msra.mxu0 0
  %1245 = vmatprep.subr.bf16.mxu0 0
  %1246 = vmatpush1.bf16.msra.mxu0 0
  %1247 = vmatprep.subr.bf16.mxu0 0
  %1248 = vmatpush1.bf16.msra.mxu0 0
  %1249 = vmatprep.mubr.bf16.mxu0 0
  %1250 = vmatmul.mubr.bf16.gmra.mrb[0].mxu0 %v1215
  %v1251 = vpop.f32.mrb[0].mxu0
  %v1252 = vadd.f32 %v1201, %v1251
  %v1253 = vpop.f32.mrb[0].mxu0
  %v1254 = vpop.f32.mrb[0].mxu0
  %v1255 = vadd.f32 %v1201, %v1254
  %v1256 = vpop.f32.mrb[0].mxu0
  %1257 = vdwg.mxu0
  %v1258 = vadd.f32 %v660, %v1252
  %v1259 = vadd.f32 %v661, %v1255
  %v1260 = vsel %vm130, %v1258, 0.0
  %1261 = vadd.xlane.f32.xlu0 %v1260
  %v1262 = vpop.xlane.xlu0 %1261
  %v1263 = vsel %vm130, %v1259, 0.0
  %1264 = vadd.xlane.f32.xlu0 %v1263
  %v1265 = vpop.xlane.xlu0 %1264
  %v1266 = vmul.f32 %v1262, %v629
  %v1267 = vmul.f32 %v1265, %v629
  %v1268 = vsub.f32 %v1258, %v1266
  %v1269 = vsub.f32 %v1259, %v1267
  %v1270 = vmul.f32 %v1268, %v1268
  %v1271 = vmul.f32 %v1269, %v1269
  %v1272 = vsel %vm130, %v1270, 0.0
  %1273 = vadd.xlane.f32.xlu0 %v1272
  %v1274 = vpop.xlane.xlu0 %1273
  %v1275 = vsel %vm130, %v1271, 0.0
  %1276 = vadd.xlane.f32.xlu0 %v1275
  %v1277 = vpop.xlane.xlu0 %1276
  %v1278 = vmul.f32 %v1274, %v629
  %v1279 = vmul.f32 %v1277, %v629
  %v1280 = vadd.f32 %v1278, 1e-05
  %v1281 = vadd.f32 %v1279, 1e-05
  %v1282 = vrsqrt.pop %v1280
  %v1283 = vrsqrt.pop %v1281
  %v1284 = vmul.f32 %v1268, %v1282
  %v1285 = vmul.f32 %v1269, %v1283
  %v1286 = vlaneseq
  %v1287 = vshrl.u32 %v1286, 7
  %v1288 = vsub.s32 5, %v1287
  %v1289 = vrot.slane %v98, %v1288
  %v1290 = vmul.f32 %v1284, %v1289
  %v1291 = vmul.f32 %v1285, %v1289
  %v1292 = vlaneseq
  %v1293 = vshrl.u32 %v1292, 7
  %v1294 = vsub.s32 6, %v1293
  %v1295 = vrot.slane %v98, %v1294
  %v1296 = vadd.f32 %v1290, %v1295
  %v1297 = vadd.f32 %v1291, %v1295
  %v1298 = vld [vmem:[%s11] sm:$0xff]
  %v1299 = vld [vmem:[%s11 + $0x8] sm:$0xff]
  %v1300 = vld [vmem:[%s11 + $0x10] sm:$0xff]
  %v1301 = vld [vmem:[%s11 + $0x18] sm:$0xff]
  %v1302 = vld [vmem:[%s11 + $0x20] sm:$0xff]
  %v1303 = vld [vmem:[%s11 + $0x28] sm:$0xff]
  %v1304 = vld [vmem:[%s11 + $0x30] sm:$0xff]
  %v1305 = vld [vmem:[%s11 + $0x38] sm:$0xff]
  %v1306 = vld [vmem:[%s11 + $0x40] sm:$0xff]
  %v1307 = vld [vmem:[%s11 + $0x48] sm:$0xff]
  %v1308 = vld [vmem:[%s11 + $0x50] sm:$0xff]
  %v1309 = vld [vmem:[%s11 + $0x58] sm:$0xff]
  %v1310 = vld [vmem:[%s11 + $0x60] sm:$0xff]
  %v1311 = vld [vmem:[%s11 + $0x68] sm:$0xff]
  %v1312 = vld [vmem:[%s11 + $0x70] sm:$0xff]
  %v1313 = vld [vmem:[%s11 + $0x78] sm:$0xff]
  %v1314 = vld [vmem:[%s11 + $0x80] sm:$0xff]
  %v1315 = vld [vmem:[%s11 + $0x88] sm:$0xff]
  %v1316 = vld [vmem:[%s11 + $0x90] sm:$0xff]
  %v1317 = vld [vmem:[%s11 + $0x98] sm:$0xff]
  %v1318 = vld [vmem:[%s11 + $0xa0] sm:$0xff]
  %v1319 = vld [vmem:[%s11 + $0xa8] sm:$0xff]
  %v1320 = vld [vmem:[%s11 + $0xb0] sm:$0xff]
  %v1321 = vld [vmem:[%s11 + $0xb8] sm:$0xff]
  %v1322 = vld [vmem:[%s11 + $0xc0] sm:$0xff]
  %v1323 = vld [vmem:[%s11 + $0xc8] sm:$0xff]
  %v1324 = vld [vmem:[%s11 + $0xd0] sm:$0xff]
  %v1325 = vld [vmem:[%s11 + $0xd8] sm:$0xff]
  %v1326 = vld [vmem:[%s11 + $0xe0] sm:$0xff]
  %v1327 = vld [vmem:[%s11 + $0xe8] sm:$0xff]
  %v1328 = vld [vmem:[%s11 + $0xf0] sm:$0xff]
  %v1329 = vld [vmem:[%s11 + $0xf8] sm:$0xff]
  %v1330 = vpack.c.bf16 %v1297, %v1296
  %v1331 = vld [vmem:[%s12] ss:$2 sm:$0xff]
  %s1332 = scalar_lea.vmem %s12, 16
  %v1333 = vld [vmem:[%s1332] ss:$2 sm:$0xff]
  %v1336 = vlaneseq
  %v1337 = vshrl.u32 %v1336, 7
  %v1338 = vsub.s32 0, %v1337
  %v1339 = vrot.slane %v1331, %v1338
  %v1340 = vlaneseq
  %v1341 = vshrl.u32 %v1340, 7
  %v1342 = vsub.s32 1, %v1341
  %v1343 = vrot.slane %v1331, %v1342
  %v1344 = vlaneseq
  %v1345 = vshrl.u32 %v1344, 7
  %v1346 = vsub.s32 2, %v1345
  %v1347 = vrot.slane %v1331, %v1346
  %v1348 = vlaneseq
  %v1349 = vshrl.u32 %v1348, 7
  %v1350 = vsub.s32 3, %v1349
  %v1351 = vrot.slane %v1331, %v1350
  %v1352 = vlaneseq
  %v1353 = vshrl.u32 %v1352, 7
  %v1354 = vsub.s32 4, %v1353
  %v1355 = vrot.slane %v1331, %v1354
  %v1356 = vlaneseq
  %v1357 = vshrl.u32 %v1356, 7
  %v1358 = vsub.s32 5, %v1357
  %v1359 = vrot.slane %v1331, %v1358
  %v1360 = vlaneseq
  %v1361 = vshrl.u32 %v1360, 7
  %v1362 = vsub.s32 6, %v1361
  %v1363 = vrot.slane %v1331, %v1362
  %v1364 = vlaneseq
  %v1365 = vshrl.u32 %v1364, 7
  %v1366 = vsub.s32 7, %v1365
  %v1367 = vrot.slane %v1331, %v1366
  %v1368 = vlaneseq
  %v1369 = vshrl.u32 %v1368, 7
  %v1370 = vsub.s32 0, %v1369
  %v1371 = vrot.slane %v1333, %v1370
  %v1372 = vlaneseq
  %v1373 = vshrl.u32 %v1372, 7
  %v1374 = vsub.s32 1, %v1373
  %v1375 = vrot.slane %v1333, %v1374
  %v1376 = vlaneseq
  %v1377 = vshrl.u32 %v1376, 7
  %v1378 = vsub.s32 2, %v1377
  %v1379 = vrot.slane %v1333, %v1378
  %v1380 = vlaneseq
  %v1381 = vshrl.u32 %v1380, 7
  %v1382 = vsub.s32 3, %v1381
  %v1383 = vrot.slane %v1333, %v1382
  %v1384 = vlaneseq
  %v1385 = vshrl.u32 %v1384, 7
  %v1386 = vsub.s32 4, %v1385
  %v1387 = vrot.slane %v1333, %v1386
  %v1388 = vlaneseq
  %v1389 = vshrl.u32 %v1388, 7
  %v1390 = vsub.s32 5, %v1389
  %v1391 = vrot.slane %v1333, %v1390
  %v1392 = vlaneseq
  %v1393 = vshrl.u32 %v1392, 7
  %v1394 = vsub.s32 6, %v1393
  %v1395 = vrot.slane %v1333, %v1394
  %v1396 = vlaneseq
  %v1397 = vshrl.u32 %v1396, 7
  %v1398 = vsub.s32 7, %v1397
  %v1399 = vrot.slane %v1333, %v1398
  %v1448 = vunpack.c.l.b16 %v1298
  %v1449 = vunpack.c.h.b16 %v1298
  %v1450 = vunpack.c.l.b16 %v1299
  %v1451 = vunpack.c.h.b16 %v1299
  %v1452 = vunpack.c.l.b16 %v1300
  %v1453 = vunpack.c.h.b16 %v1300
  %v1454 = vunpack.c.l.b16 %v1301
  %v1455 = vunpack.c.h.b16 %v1301
  %v1456 = vunpack.c.l.b16 %v1302
  %v1457 = vunpack.c.h.b16 %v1302
  %v1458 = vunpack.c.l.b16 %v1303
  %v1459 = vunpack.c.h.b16 %v1303
  %v1460 = vunpack.c.l.b16 %v1304
  %v1461 = vunpack.c.h.b16 %v1304
  %v1462 = vunpack.c.l.b16 %v1305
  %v1463 = vunpack.c.h.b16 %v1305
  %v1464 = vunpack.c.l.b16 %v1306
  %v1465 = vunpack.c.h.b16 %v1306
  %v1466 = vunpack.c.l.b16 %v1307
  %v1467 = vunpack.c.h.b16 %v1307
  %v1468 = vunpack.c.l.b16 %v1308
  %v1469 = vunpack.c.h.b16 %v1308
  %v1470 = vunpack.c.l.b16 %v1309
  %v1471 = vunpack.c.h.b16 %v1309
  %v1472 = vunpack.c.l.b16 %v1310
  %v1473 = vunpack.c.h.b16 %v1310
  %v1474 = vunpack.c.l.b16 %v1311
  %v1475 = vunpack.c.h.b16 %v1311
  %v1476 = vunpack.c.l.b16 %v1312
  %v1477 = vunpack.c.h.b16 %v1312
  %v1478 = vunpack.c.l.b16 %v1313
  %v1479 = vunpack.c.h.b16 %v1313
  %v1480 = vunpack.c.l.b16 %v1314
  %v1481 = vunpack.c.h.b16 %v1314
  %v1482 = vunpack.c.l.b16 %v1315
  %v1483 = vunpack.c.h.b16 %v1315
  %v1484 = vunpack.c.l.b16 %v1316
  %v1485 = vunpack.c.h.b16 %v1316
  %v1486 = vunpack.c.l.b16 %v1317
  %v1487 = vunpack.c.h.b16 %v1317
  %v1488 = vunpack.c.l.b16 %v1318
  %v1489 = vunpack.c.h.b16 %v1318
  %v1490 = vunpack.c.l.b16 %v1319
  %v1491 = vunpack.c.h.b16 %v1319
  %v1492 = vunpack.c.l.b16 %v1320
  %v1493 = vunpack.c.h.b16 %v1320
  %v1494 = vunpack.c.l.b16 %v1321
  %v1495 = vunpack.c.h.b16 %v1321
  %v1496 = vunpack.c.l.b16 %v1322
  %v1497 = vunpack.c.h.b16 %v1322
  %v1498 = vunpack.c.l.b16 %v1323
  %v1499 = vunpack.c.h.b16 %v1323
  %v1500 = vunpack.c.l.b16 %v1324
  %v1501 = vunpack.c.h.b16 %v1324
  %v1502 = vunpack.c.l.b16 %v1325
  %v1503 = vunpack.c.h.b16 %v1325
  %v1504 = vunpack.c.l.b16 %v1326
  %v1505 = vunpack.c.h.b16 %v1326
  %v1506 = vunpack.c.l.b16 %v1327
  %v1507 = vunpack.c.h.b16 %v1327
  %v1508 = vunpack.c.l.b16 %v1328
  %v1509 = vunpack.c.h.b16 %v1328
  %v1510 = vunpack.c.l.b16 %v1329
  %v1511 = vunpack.c.h.b16 %v1329
  %v1512 = vpack.c.b16 %v1464, %v1448
  %v1513 = vpack.c.b16 %v1465, %v1449
  %v1514 = vpack.c.b16 %v1466, %v1450
  %v1515 = vpack.c.b16 %v1467, %v1451
  %v1516 = vpack.c.b16 %v1468, %v1452
  %v1517 = vpack.c.b16 %v1469, %v1453
  %v1518 = vpack.c.b16 %v1470, %v1454
  %v1519 = vpack.c.b16 %v1471, %v1455
  %v1520 = vpack.c.b16 %v1472, %v1456
  %v1521 = vpack.c.b16 %v1473, %v1457
  %v1522 = vpack.c.b16 %v1474, %v1458
  %v1523 = vpack.c.b16 %v1475, %v1459
  %v1524 = vpack.c.b16 %v1476, %v1460
  %v1525 = vpack.c.b16 %v1477, %v1461
  %v1526 = vpack.c.b16 %v1478, %v1462
  %v1527 = vpack.c.b16 %v1479, %v1463
  %v1528 = vpack.c.b16 %v1496, %v1480
  %v1529 = vpack.c.b16 %v1497, %v1481
  %v1530 = vpack.c.b16 %v1498, %v1482
  %v1531 = vpack.c.b16 %v1499, %v1483
  %v1532 = vpack.c.b16 %v1500, %v1484
  %v1533 = vpack.c.b16 %v1501, %v1485
  %v1534 = vpack.c.b16 %v1502, %v1486
  %v1535 = vpack.c.b16 %v1503, %v1487
  %v1536 = vpack.c.b16 %v1504, %v1488
  %v1537 = vpack.c.b16 %v1505, %v1489
  %v1538 = vpack.c.b16 %v1506, %v1490
  %v1539 = vpack.c.b16 %v1507, %v1491
  %v1540 = vpack.c.b16 %v1508, %v1492
  %v1541 = vpack.c.b16 %v1509, %v1493
  %v1542 = vpack.c.b16 %v1510, %v1494
  %v1543 = vpack.c.b16 %v1511, %v1495
  %v1577 = vsel %vm130, %v1330, 0
  %1579 = vmatprep.subr.bf16.mxu0 %v1513
  %1580 = vmatpush1.bf16.msra.mxu0 %v1512
  %1581 = vmatprep.subr.bf16.mxu0 %v1529
  %1582 = vmatpush1.bf16.msra.mxu0 %v1528
  %1583 = vmatprep.subr.bf16.mxu0 0
  %1584 = vmatpush1.bf16.msra.mxu0 0
  %1585 = vmatprep.subr.bf16.mxu0 0
  %1586 = vmatpush1.bf16.msra.mxu0 0
  %1587 = vmatprep.subr.bf16.mxu0 0
  %1588 = vmatpush1.bf16.msra.mxu0 0
  %1589 = vmatprep.subr.bf16.mxu0 0
  %1590 = vmatpush1.bf16.msra.mxu0 0
  %1591 = vmatprep.subr.bf16.mxu0 0
  %1592 = vmatpush1.bf16.msra.mxu0 0
  %1593 = vmatprep.subr.bf16.mxu0 0
  %1594 = vmatpush1.bf16.msra.mxu0 0
  %1595 = vmatprep.subr.bf16.mxu0 0
  %1596 = vmatpush1.bf16.msra.mxu0 0
  %1597 = vmatprep.subr.bf16.mxu0 0
  %1598 = vmatpush1.bf16.msra.mxu0 0
  %1599 = vmatprep.subr.bf16.mxu0 0
  %1600 = vmatpush1.bf16.msra.mxu0 0
  %1601 = vmatprep.subr.bf16.mxu0 0
  %1602 = vmatpush1.bf16.msra.mxu0 0
  %1603 = vmatprep.subr.bf16.mxu0 0
  %1604 = vmatpush1.bf16.msra.mxu0 0
  %1605 = vmatprep.subr.bf16.mxu0 0
  %1606 = vmatpush1.bf16.msra.mxu0 0
  %1607 = vmatprep.subr.bf16.mxu0 0
  %1608 = vmatpush1.bf16.msra.mxu0 0
  %1609 = vmatprep.subr.bf16.mxu0 0
  %1610 = vmatpush1.bf16.msra.mxu0 0
  %1611 = vmatprep.mubr.bf16.mxu0 0
  %1612 = vmatmul.mubr.bf16.gmra.mrb[0].mxu0 %v1577
  %v1613 = vpop.f32.mrb[0].mxu0
  %v1614 = vadd.f32 %v1339, %v1613
  %v1615 = vpop.f32.mrb[0].mxu0
  %v1616 = vadd.f32 %v1343, %v1615
  %v1617 = vpop.f32.mrb[0].mxu0
  %v1618 = vadd.f32 %v1339, %v1617
  %v1619 = vpop.f32.mrb[0].mxu0
  %v1620 = vadd.f32 %v1343, %v1619
  %1621 = vdwg.mxu0
  %1622 = vmatprep.subr.bf16.mxu0 %v1515
  %1623 = vmatpush1.bf16.msra.mxu0 %v1514
  %1624 = vmatprep.subr.bf16.mxu0 %v1531
  %1625 = vmatpush1.bf16.msra.mxu0 %v1530
  %1626 = vmatprep.subr.bf16.mxu0 0
  %1627 = vmatpush1.bf16.msra.mxu0 0
  %1628 = vmatprep.subr.bf16.mxu0 0
  %1629 = vmatpush1.bf16.msra.mxu0 0
  %1630 = vmatprep.subr.bf16.mxu0 0
  %1631 = vmatpush1.bf16.msra.mxu0 0
  %1632 = vmatprep.subr.bf16.mxu0 0
  %1633 = vmatpush1.bf16.msra.mxu0 0
  %1634 = vmatprep.subr.bf16.mxu0 0
  %1635 = vmatpush1.bf16.msra.mxu0 0
  %1636 = vmatprep.subr.bf16.mxu0 0
  %1637 = vmatpush1.bf16.msra.mxu0 0
  %1638 = vmatprep.subr.bf16.mxu0 0
  %1639 = vmatpush1.bf16.msra.mxu0 0
  %1640 = vmatprep.subr.bf16.mxu0 0
  %1641 = vmatpush1.bf16.msra.mxu0 0
  %1642 = vmatprep.subr.bf16.mxu0 0
  %1643 = vmatpush1.bf16.msra.mxu0 0
  %1644 = vmatprep.subr.bf16.mxu0 0
  %1645 = vmatpush1.bf16.msra.mxu0 0
  %1646 = vmatprep.subr.bf16.mxu0 0
  %1647 = vmatpush1.bf16.msra.mxu0 0
  %1648 = vmatprep.subr.bf16.mxu0 0
  %1649 = vmatpush1.bf16.msra.mxu0 0
  %1650 = vmatprep.subr.bf16.mxu0 0
  %1651 = vmatpush1.bf16.msra.mxu0 0
  %1652 = vmatprep.subr.bf16.mxu0 0
  %1653 = vmatpush1.bf16.msra.mxu0 0
  %1654 = vmatprep.mubr.bf16.mxu0 0
  %1655 = vmatmul.mubr.bf16.gmra.mrb[0].mxu0 %v1577
  %v1656 = vpop.f32.mrb[0].mxu0
  %v1657 = vadd.f32 %v1347, %v1656
  %v1658 = vpop.f32.mrb[0].mxu0
  %v1659 = vadd.f32 %v1351, %v1658
  %v1660 = vpop.f32.mrb[0].mxu0
  %v1661 = vadd.f32 %v1347, %v1660
  %v1662 = vpop.f32.mrb[0].mxu0
  %v1663 = vadd.f32 %v1351, %v1662
  %1664 = vdwg.mxu0
  %1665 = vmatprep.subr.bf16.mxu0 %v1517
  %1666 = vmatpush1.bf16.msra.mxu0 %v1516
  %1667 = vmatprep.subr.bf16.mxu0 %v1533
  %1668 = vmatpush1.bf16.msra.mxu0 %v1532
  %1669 = vmatprep.subr.bf16.mxu0 0
  %1670 = vmatpush1.bf16.msra.mxu0 0
  %1671 = vmatprep.subr.bf16.mxu0 0
  %1672 = vmatpush1.bf16.msra.mxu0 0
  %1673 = vmatprep.subr.bf16.mxu0 0
  %1674 = vmatpush1.bf16.msra.mxu0 0
  %1675 = vmatprep.subr.bf16.mxu0 0
  %1676 = vmatpush1.bf16.msra.mxu0 0
  %1677 = vmatprep.subr.bf16.mxu0 0
  %1678 = vmatpush1.bf16.msra.mxu0 0
  %1679 = vmatprep.subr.bf16.mxu0 0
  %1680 = vmatpush1.bf16.msra.mxu0 0
  %1681 = vmatprep.subr.bf16.mxu0 0
  %1682 = vmatpush1.bf16.msra.mxu0 0
  %1683 = vmatprep.subr.bf16.mxu0 0
  %1684 = vmatpush1.bf16.msra.mxu0 0
  %1685 = vmatprep.subr.bf16.mxu0 0
  %1686 = vmatpush1.bf16.msra.mxu0 0
  %1687 = vmatprep.subr.bf16.mxu0 0
  %1688 = vmatpush1.bf16.msra.mxu0 0
  %1689 = vmatprep.subr.bf16.mxu0 0
  %1690 = vmatpush1.bf16.msra.mxu0 0
  %1691 = vmatprep.subr.bf16.mxu0 0
  %1692 = vmatpush1.bf16.msra.mxu0 0
  %1693 = vmatprep.subr.bf16.mxu0 0
  %1694 = vmatpush1.bf16.msra.mxu0 0
  %1695 = vmatprep.subr.bf16.mxu0 0
  %1696 = vmatpush1.bf16.msra.mxu0 0
  %1697 = vmatprep.mubr.bf16.mxu0 0
  %1698 = vmatmul.mubr.bf16.gmra.mrb[0].mxu0 %v1577
  %v1699 = vpop.f32.mrb[0].mxu0
  %v1700 = vadd.f32 %v1355, %v1699
  %v1701 = vpop.f32.mrb[0].mxu0
  %v1702 = vadd.f32 %v1359, %v1701
  %v1703 = vpop.f32.mrb[0].mxu0
  %v1704 = vadd.f32 %v1355, %v1703
  %v1705 = vpop.f32.mrb[0].mxu0
  %v1706 = vadd.f32 %v1359, %v1705
  %1707 = vdwg.mxu0
  %1708 = vmatprep.subr.bf16.mxu0 %v1519
  %1709 = vmatpush1.bf16.msra.mxu0 %v1518
  %1710 = vmatprep.subr.bf16.mxu0 %v1535
  %1711 = vmatpush1.bf16.msra.mxu0 %v1534
  %1712 = vmatprep.subr.bf16.mxu0 0
  %1713 = vmatpush1.bf16.msra.mxu0 0
  %1714 = vmatprep.subr.bf16.mxu0 0
  %1715 = vmatpush1.bf16.msra.mxu0 0
  %1716 = vmatprep.subr.bf16.mxu0 0
  %1717 = vmatpush1.bf16.msra.mxu0 0
  %1718 = vmatprep.subr.bf16.mxu0 0
  %1719 = vmatpush1.bf16.msra.mxu0 0
  %1720 = vmatprep.subr.bf16.mxu0 0
  %1721 = vmatpush1.bf16.msra.mxu0 0
  %1722 = vmatprep.subr.bf16.mxu0 0
  %1723 = vmatpush1.bf16.msra.mxu0 0
  %1724 = vmatprep.subr.bf16.mxu0 0
  %1725 = vmatpush1.bf16.msra.mxu0 0
  %1726 = vmatprep.subr.bf16.mxu0 0
  %1727 = vmatpush1.bf16.msra.mxu0 0
  %1728 = vmatprep.subr.bf16.mxu0 0
  %1729 = vmatpush1.bf16.msra.mxu0 0
  %1730 = vmatprep.subr.bf16.mxu0 0
  %1731 = vmatpush1.bf16.msra.mxu0 0
  %1732 = vmatprep.subr.bf16.mxu0 0
  %1733 = vmatpush1.bf16.msra.mxu0 0
  %1734 = vmatprep.subr.bf16.mxu0 0
  %1735 = vmatpush1.bf16.msra.mxu0 0
  %1736 = vmatprep.subr.bf16.mxu0 0
  %1737 = vmatpush1.bf16.msra.mxu0 0
  %1738 = vmatprep.subr.bf16.mxu0 0
  %1739 = vmatpush1.bf16.msra.mxu0 0
  %1740 = vmatprep.mubr.bf16.mxu0 0
  %1741 = vmatmul.mubr.bf16.gmra.mrb[0].mxu0 %v1577
  %v1742 = vpop.f32.mrb[0].mxu0
  %v1743 = vadd.f32 %v1363, %v1742
  %v1744 = vpop.f32.mrb[0].mxu0
  %v1745 = vadd.f32 %v1367, %v1744
  %v1746 = vpop.f32.mrb[0].mxu0
  %v1747 = vadd.f32 %v1363, %v1746
  %v1748 = vpop.f32.mrb[0].mxu0
  %v1749 = vadd.f32 %v1367, %v1748
  %1750 = vdwg.mxu0
  %1751 = vmatprep.subr.bf16.mxu0 %v1521
  %1752 = vmatpush1.bf16.msra.mxu0 %v1520
  %1753 = vmatprep.subr.bf16.mxu0 %v1537
  %1754 = vmatpush1.bf16.msra.mxu0 %v1536
  %1755 = vmatprep.subr.bf16.mxu0 0
  %1756 = vmatpush1.bf16.msra.mxu0 0
  %1757 = vmatprep.subr.bf16.mxu0 0
  %1758 = vmatpush1.bf16.msra.mxu0 0
  %1759 = vmatprep.subr.bf16.mxu0 0
  %1760 = vmatpush1.bf16.msra.mxu0 0
  %1761 = vmatprep.subr.bf16.mxu0 0
  %1762 = vmatpush1.bf16.msra.mxu0 0
  %1763 = vmatprep.subr.bf16.mxu0 0
  %1764 = vmatpush1.bf16.msra.mxu0 0
  %1765 = vmatprep.subr.bf16.mxu0 0
  %1766 = vmatpush1.bf16.msra.mxu0 0
  %1767 = vmatprep.subr.bf16.mxu0 0
  %1768 = vmatpush1.bf16.msra.mxu0 0
  %1769 = vmatprep.subr.bf16.mxu0 0
  %1770 = vmatpush1.bf16.msra.mxu0 0
  %1771 = vmatprep.subr.bf16.mxu0 0
  %1772 = vmatpush1.bf16.msra.mxu0 0
  %1773 = vmatprep.subr.bf16.mxu0 0
  %1774 = vmatpush1.bf16.msra.mxu0 0
  %1775 = vmatprep.subr.bf16.mxu0 0
  %1776 = vmatpush1.bf16.msra.mxu0 0
  %1777 = vmatprep.subr.bf16.mxu0 0
  %1778 = vmatpush1.bf16.msra.mxu0 0
  %1779 = vmatprep.subr.bf16.mxu0 0
  %1780 = vmatpush1.bf16.msra.mxu0 0
  %1781 = vmatprep.subr.bf16.mxu0 0
  %1782 = vmatpush1.bf16.msra.mxu0 0
  %1783 = vmatprep.mubr.bf16.mxu0 0
  %1784 = vmatmul.mubr.bf16.gmra.mrb[0].mxu0 %v1577
  %v1785 = vpop.f32.mrb[0].mxu0
  %v1786 = vadd.f32 %v1371, %v1785
  %v1787 = vpop.f32.mrb[0].mxu0
  %v1788 = vadd.f32 %v1375, %v1787
  %v1789 = vpop.f32.mrb[0].mxu0
  %v1790 = vadd.f32 %v1371, %v1789
  %v1791 = vpop.f32.mrb[0].mxu0
  %v1792 = vadd.f32 %v1375, %v1791
  %1793 = vdwg.mxu0
  %1794 = vmatprep.subr.bf16.mxu0 %v1523
  %1795 = vmatpush1.bf16.msra.mxu0 %v1522
  %1796 = vmatprep.subr.bf16.mxu0 %v1539
  %1797 = vmatpush1.bf16.msra.mxu0 %v1538
  %1798 = vmatprep.subr.bf16.mxu0 0
  %1799 = vmatpush1.bf16.msra.mxu0 0
  %1800 = vmatprep.subr.bf16.mxu0 0
  %1801 = vmatpush1.bf16.msra.mxu0 0
  %1802 = vmatprep.subr.bf16.mxu0 0
  %1803 = vmatpush1.bf16.msra.mxu0 0
  %1804 = vmatprep.subr.bf16.mxu0 0
  %1805 = vmatpush1.bf16.msra.mxu0 0
  %1806 = vmatprep.subr.bf16.mxu0 0
  %1807 = vmatpush1.bf16.msra.mxu0 0
  %1808 = vmatprep.subr.bf16.mxu0 0
  %1809 = vmatpush1.bf16.msra.mxu0 0
  %1810 = vmatprep.subr.bf16.mxu0 0
  %1811 = vmatpush1.bf16.msra.mxu0 0
  %1812 = vmatprep.subr.bf16.mxu0 0
  %1813 = vmatpush1.bf16.msra.mxu0 0
  %1814 = vmatprep.subr.bf16.mxu0 0
  %1815 = vmatpush1.bf16.msra.mxu0 0
  %1816 = vmatprep.subr.bf16.mxu0 0
  %1817 = vmatpush1.bf16.msra.mxu0 0
  %1818 = vmatprep.subr.bf16.mxu0 0
  %1819 = vmatpush1.bf16.msra.mxu0 0
  %1820 = vmatprep.subr.bf16.mxu0 0
  %1821 = vmatpush1.bf16.msra.mxu0 0
  %1822 = vmatprep.subr.bf16.mxu0 0
  %1823 = vmatpush1.bf16.msra.mxu0 0
  %1824 = vmatprep.subr.bf16.mxu0 0
  %1825 = vmatpush1.bf16.msra.mxu0 0
  %1826 = vmatprep.mubr.bf16.mxu0 0
  %1827 = vmatmul.mubr.bf16.gmra.mrb[0].mxu0 %v1577
  %v1828 = vpop.f32.mrb[0].mxu0
  %v1829 = vadd.f32 %v1379, %v1828
  %v1830 = vpop.f32.mrb[0].mxu0
  %v1831 = vadd.f32 %v1383, %v1830
  %v1832 = vpop.f32.mrb[0].mxu0
  %v1833 = vadd.f32 %v1379, %v1832
  %v1834 = vpop.f32.mrb[0].mxu0
  %v1835 = vadd.f32 %v1383, %v1834
  %1836 = vdwg.mxu0
  %1837 = vmatprep.subr.bf16.mxu0 %v1525
  %1838 = vmatpush1.bf16.msra.mxu0 %v1524
  %1839 = vmatprep.subr.bf16.mxu0 %v1541
  %1840 = vmatpush1.bf16.msra.mxu0 %v1540
  %1841 = vmatprep.subr.bf16.mxu0 0
  %1842 = vmatpush1.bf16.msra.mxu0 0
  %1843 = vmatprep.subr.bf16.mxu0 0
  %1844 = vmatpush1.bf16.msra.mxu0 0
  %1845 = vmatprep.subr.bf16.mxu0 0
  %1846 = vmatpush1.bf16.msra.mxu0 0
  %1847 = vmatprep.subr.bf16.mxu0 0
  %1848 = vmatpush1.bf16.msra.mxu0 0
  %1849 = vmatprep.subr.bf16.mxu0 0
  %1850 = vmatpush1.bf16.msra.mxu0 0
  %1851 = vmatprep.subr.bf16.mxu0 0
  %1852 = vmatpush1.bf16.msra.mxu0 0
  %1853 = vmatprep.subr.bf16.mxu0 0
  %1854 = vmatpush1.bf16.msra.mxu0 0
  %1855 = vmatprep.subr.bf16.mxu0 0
  %1856 = vmatpush1.bf16.msra.mxu0 0
  %1857 = vmatprep.subr.bf16.mxu0 0
  %1858 = vmatpush1.bf16.msra.mxu0 0
  %1859 = vmatprep.subr.bf16.mxu0 0
  %1860 = vmatpush1.bf16.msra.mxu0 0
  %1861 = vmatprep.subr.bf16.mxu0 0
  %1862 = vmatpush1.bf16.msra.mxu0 0
  %1863 = vmatprep.subr.bf16.mxu0 0
  %1864 = vmatpush1.bf16.msra.mxu0 0
  %1865 = vmatprep.subr.bf16.mxu0 0
  %1866 = vmatpush1.bf16.msra.mxu0 0
  %1867 = vmatprep.subr.bf16.mxu0 0
  %1868 = vmatpush1.bf16.msra.mxu0 0
  %1869 = vmatprep.mubr.bf16.mxu0 0
  %1870 = vmatmul.mubr.bf16.gmra.mrb[0].mxu0 %v1577
  %v1871 = vpop.f32.mrb[0].mxu0
  %v1872 = vadd.f32 %v1387, %v1871
  %v1873 = vpop.f32.mrb[0].mxu0
  %v1874 = vadd.f32 %v1391, %v1873
  %v1875 = vpop.f32.mrb[0].mxu0
  %v1876 = vadd.f32 %v1387, %v1875
  %v1877 = vpop.f32.mrb[0].mxu0
  %v1878 = vadd.f32 %v1391, %v1877
  %1879 = vdwg.mxu0
  %1880 = vmatprep.subr.bf16.mxu0 %v1527
  %1881 = vmatpush1.bf16.msra.mxu0 %v1526
  %1882 = vmatprep.subr.bf16.mxu0 %v1543
  %1883 = vmatpush1.bf16.msra.mxu0 %v1542
  %1884 = vmatprep.subr.bf16.mxu0 0
  %1885 = vmatpush1.bf16.msra.mxu0 0
  %1886 = vmatprep.subr.bf16.mxu0 0
  %1887 = vmatpush1.bf16.msra.mxu0 0
  %1888 = vmatprep.subr.bf16.mxu0 0
  %1889 = vmatpush1.bf16.msra.mxu0 0
  %1890 = vmatprep.subr.bf16.mxu0 0
  %1891 = vmatpush1.bf16.msra.mxu0 0
  %1892 = vmatprep.subr.bf16.mxu0 0
  %1893 = vmatpush1.bf16.msra.mxu0 0
  %1894 = vmatprep.subr.bf16.mxu0 0
  %1895 = vmatpush1.bf16.msra.mxu0 0
  %1896 = vmatprep.subr.bf16.mxu0 0
  %1897 = vmatpush1.bf16.msra.mxu0 0
  %1898 = vmatprep.subr.bf16.mxu0 0
  %1899 = vmatpush1.bf16.msra.mxu0 0
  %1900 = vmatprep.subr.bf16.mxu0 0
  %1901 = vmatpush1.bf16.msra.mxu0 0
  %1902 = vmatprep.subr.bf16.mxu0 0
  %1903 = vmatpush1.bf16.msra.mxu0 0
  %1904 = vmatprep.subr.bf16.mxu0 0
  %1905 = vmatpush1.bf16.msra.mxu0 0
  %1906 = vmatprep.subr.bf16.mxu0 0
  %1907 = vmatpush1.bf16.msra.mxu0 0
  %1908 = vmatprep.subr.bf16.mxu0 0
  %1909 = vmatpush1.bf16.msra.mxu0 0
  %1910 = vmatprep.subr.bf16.mxu0 0
  %1911 = vmatpush1.bf16.msra.mxu0 0
  %1912 = vmatprep.mubr.bf16.mxu0 0
  %1913 = vmatmul.mubr.bf16.gmra.mrb[0].mxu0 %v1577
  %v1914 = vpop.f32.mrb[0].mxu0
  %v1915 = vadd.f32 %v1395, %v1914
  %v1916 = vpop.f32.mrb[0].mxu0
  %v1917 = vadd.f32 %v1399, %v1916
  %v1918 = vpop.f32.mrb[0].mxu0
  %v1919 = vadd.f32 %v1395, %v1918
  %v1920 = vpop.f32.mrb[0].mxu0
  %v1921 = vadd.f32 %v1399, %v1920
  %1922 = vdwg.mxu0
  %v1923 = vmax.f32 %v1614, 0.0
  %v1924 = vmax.f32 %v1616, 0.0
  %v1925 = vmax.f32 %v1657, 0.0
  %v1926 = vmax.f32 %v1659, 0.0
  %v1927 = vmax.f32 %v1700, 0.0
  %v1928 = vmax.f32 %v1702, 0.0
  %v1929 = vmax.f32 %v1743, 0.0
  %v1930 = vmax.f32 %v1745, 0.0
  %v1931 = vmax.f32 %v1786, 0.0
  %v1932 = vmax.f32 %v1788, 0.0
  %v1933 = vmax.f32 %v1829, 0.0
  %v1934 = vmax.f32 %v1831, 0.0
  %v1935 = vmax.f32 %v1872, 0.0
  %v1936 = vmax.f32 %v1874, 0.0
  %v1937 = vmax.f32 %v1915, 0.0
  %v1938 = vmax.f32 %v1917, 0.0
  %v1939 = vmax.f32 %v1618, 0.0
  %v1940 = vmax.f32 %v1620, 0.0
  %v1941 = vmax.f32 %v1661, 0.0
  %v1942 = vmax.f32 %v1663, 0.0
  %v1943 = vmax.f32 %v1704, 0.0
  %v1944 = vmax.f32 %v1706, 0.0
  %v1945 = vmax.f32 %v1747, 0.0
  %v1946 = vmax.f32 %v1749, 0.0
  %v1947 = vmax.f32 %v1790, 0.0
  %v1948 = vmax.f32 %v1792, 0.0
  %v1949 = vmax.f32 %v1833, 0.0
  %v1950 = vmax.f32 %v1835, 0.0
  %v1951 = vmax.f32 %v1876, 0.0
  %v1952 = vmax.f32 %v1878, 0.0
  %v1953 = vmax.f32 %v1919, 0.0
  %v1954 = vmax.f32 %v1921, 0.0
  %v1955 = vld [vmem:[%s13] sm:$0xf]
  %v1956 = vld [vmem:[%s13 + $0x4] sm:$0xf]
  %v1957 = vld [vmem:[%s13 + $0x8] sm:$0xf]
  %v1958 = vld [vmem:[%s13 + $0xc] sm:$0xf]
  %v1959 = vld [vmem:[%s13 + $0x10] sm:$0xf]
  %v1960 = vld [vmem:[%s13 + $0x14] sm:$0xf]
  %v1961 = vld [vmem:[%s13 + $0x18] sm:$0xf]
  %v1962 = vld [vmem:[%s13 + $0x1c] sm:$0xf]
  %v1963 = vld [vmem:[%s13 + $0x20] sm:$0xf]
  %v1964 = vld [vmem:[%s13 + $0x24] sm:$0xf]
  %v1965 = vld [vmem:[%s13 + $0x28] sm:$0xf]
  %v1966 = vld [vmem:[%s13 + $0x2c] sm:$0xf]
  %v1967 = vld [vmem:[%s13 + $0x30] sm:$0xf]
  %v1968 = vld [vmem:[%s13 + $0x34] sm:$0xf]
  %v1969 = vld [vmem:[%s13 + $0x38] sm:$0xf]
  %v1970 = vld [vmem:[%s13 + $0x3c] sm:$0xf]
  %v1971 = vld [vmem:[%s13 + $0x40] sm:$0xf]
  %v1972 = vld [vmem:[%s13 + $0x44] sm:$0xf]
  %v1973 = vld [vmem:[%s13 + $0x48] sm:$0xf]
  %v1974 = vld [vmem:[%s13 + $0x4c] sm:$0xf]
  %v1975 = vld [vmem:[%s13 + $0x50] sm:$0xf]
  %v1976 = vld [vmem:[%s13 + $0x54] sm:$0xf]
  %v1977 = vld [vmem:[%s13 + $0x58] sm:$0xf]
  %v1978 = vld [vmem:[%s13 + $0x5c] sm:$0xf]
  %v1979 = vld [vmem:[%s13 + $0x60] sm:$0xf]
  %v1980 = vld [vmem:[%s13 + $0x64] sm:$0xf]
  %v1981 = vld [vmem:[%s13 + $0x68] sm:$0xf]
  %v1982 = vld [vmem:[%s13 + $0x6c] sm:$0xf]
  %v1983 = vld [vmem:[%s13 + $0x70] sm:$0xf]
  %v1984 = vld [vmem:[%s13 + $0x74] sm:$0xf]
  %v1985 = vld [vmem:[%s13 + $0x78] sm:$0xf]
  %v1986 = vld [vmem:[%s13 + $0x7c] sm:$0xf]
  %v1987 = vld [vmem:[%s13 + $0x80] sm:$0xf]
  %v1988 = vld [vmem:[%s13 + $0x84] sm:$0xf]
  %v1989 = vld [vmem:[%s13 + $0x88] sm:$0xf]
  %v1990 = vld [vmem:[%s13 + $0x8c] sm:$0xf]
  %v1991 = vld [vmem:[%s13 + $0x90] sm:$0xf]
  %v1992 = vld [vmem:[%s13 + $0x94] sm:$0xf]
  %v1993 = vld [vmem:[%s13 + $0x98] sm:$0xf]
  %v1994 = vld [vmem:[%s13 + $0x9c] sm:$0xf]
  %v1995 = vld [vmem:[%s13 + $0xa0] sm:$0xf]
  %v1996 = vld [vmem:[%s13 + $0xa4] sm:$0xf]
  %v1997 = vld [vmem:[%s13 + $0xa8] sm:$0xf]
  %v1998 = vld [vmem:[%s13 + $0xac] sm:$0xf]
  %v1999 = vld [vmem:[%s13 + $0xb0] sm:$0xf]
  %v2000 = vld [vmem:[%s13 + $0xb4] sm:$0xf]
  %v2001 = vld [vmem:[%s13 + $0xb8] sm:$0xf]
  %v2002 = vld [vmem:[%s13 + $0xbc] sm:$0xf]
  %v2003 = vld [vmem:[%s13 + $0xc0] sm:$0xf]
  %v2004 = vld [vmem:[%s13 + $0xc4] sm:$0xf]
  %v2005 = vld [vmem:[%s13 + $0xc8] sm:$0xf]
  %v2006 = vld [vmem:[%s13 + $0xcc] sm:$0xf]
  %v2007 = vld [vmem:[%s13 + $0xd0] sm:$0xf]
  %v2008 = vld [vmem:[%s13 + $0xd4] sm:$0xf]
  %v2009 = vld [vmem:[%s13 + $0xd8] sm:$0xf]
  %v2010 = vld [vmem:[%s13 + $0xdc] sm:$0xf]
  %v2011 = vld [vmem:[%s13 + $0xe0] sm:$0xf]
  %v2012 = vld [vmem:[%s13 + $0xe4] sm:$0xf]
  %v2013 = vld [vmem:[%s13 + $0xe8] sm:$0xf]
  %v2014 = vld [vmem:[%s13 + $0xec] sm:$0xf]
  %v2015 = vld [vmem:[%s13 + $0xf0] sm:$0xf]
  %v2016 = vld [vmem:[%s13 + $0xf4] sm:$0xf]
  %v2017 = vld [vmem:[%s13 + $0xf8] sm:$0xf]
  %v2018 = vld [vmem:[%s13 + $0xfc] sm:$0xf]
  %v2019 = vld [vmem:[%s13 + $0x100] sm:$0xf]
  %v2020 = vld [vmem:[%s13 + $0x104] sm:$0xf]
  %v2021 = vld [vmem:[%s13 + $0x108] sm:$0xf]
  %v2022 = vld [vmem:[%s13 + $0x10c] sm:$0xf]
  %v2023 = vld [vmem:[%s13 + $0x110] sm:$0xf]
  %v2024 = vld [vmem:[%s13 + $0x114] sm:$0xf]
  %v2025 = vld [vmem:[%s13 + $0x118] sm:$0xf]
  %v2026 = vld [vmem:[%s13 + $0x11c] sm:$0xf]
  %v2027 = vld [vmem:[%s13 + $0x120] sm:$0xf]
  %v2028 = vld [vmem:[%s13 + $0x124] sm:$0xf]
  %v2029 = vld [vmem:[%s13 + $0x128] sm:$0xf]
  %v2030 = vld [vmem:[%s13 + $0x12c] sm:$0xf]
  %v2031 = vld [vmem:[%s13 + $0x130] sm:$0xf]
  %v2032 = vld [vmem:[%s13 + $0x134] sm:$0xf]
  %v2033 = vld [vmem:[%s13 + $0x138] sm:$0xf]
  %v2034 = vld [vmem:[%s13 + $0x13c] sm:$0xf]
  %v2035 = vld [vmem:[%s13 + $0x140] sm:$0xf]
  %v2036 = vld [vmem:[%s13 + $0x144] sm:$0xf]
  %v2037 = vld [vmem:[%s13 + $0x148] sm:$0xf]
  %v2038 = vld [vmem:[%s13 + $0x14c] sm:$0xf]
  %v2039 = vld [vmem:[%s13 + $0x150] sm:$0xf]
  %v2040 = vld [vmem:[%s13 + $0x154] sm:$0xf]
  %v2041 = vld [vmem:[%s13 + $0x158] sm:$0xf]
  %v2042 = vld [vmem:[%s13 + $0x15c] sm:$0xf]
  %v2043 = vld [vmem:[%s13 + $0x160] sm:$0xf]
  %v2044 = vld [vmem:[%s13 + $0x164] sm:$0xf]
  %v2045 = vld [vmem:[%s13 + $0x168] sm:$0xf]
  %v2046 = vld [vmem:[%s13 + $0x16c] sm:$0xf]
  %v2047 = vld [vmem:[%s13 + $0x170] sm:$0xf]
  %v2048 = vld [vmem:[%s13 + $0x174] sm:$0xf]
  %v2049 = vld [vmem:[%s13 + $0x178] sm:$0xf]
  %v2050 = vld [vmem:[%s13 + $0x17c] sm:$0xf]
  %v2051 = vld [vmem:[%s13 + $0x180] sm:$0xf]
  %v2052 = vld [vmem:[%s13 + $0x184] sm:$0xf]
  %v2053 = vld [vmem:[%s13 + $0x188] sm:$0xf]
  %v2054 = vld [vmem:[%s13 + $0x18c] sm:$0xf]
  %v2055 = vld [vmem:[%s13 + $0x190] sm:$0xf]
  %v2056 = vld [vmem:[%s13 + $0x194] sm:$0xf]
  %v2057 = vld [vmem:[%s13 + $0x198] sm:$0xf]
  %v2058 = vld [vmem:[%s13 + $0x19c] sm:$0xf]
  %v2059 = vld [vmem:[%s13 + $0x1a0] sm:$0xf]
  %v2060 = vld [vmem:[%s13 + $0x1a4] sm:$0xf]
  %v2061 = vld [vmem:[%s13 + $0x1a8] sm:$0xf]
  %v2062 = vld [vmem:[%s13 + $0x1ac] sm:$0xf]
  %v2063 = vld [vmem:[%s13 + $0x1b0] sm:$0xf]
  %v2064 = vld [vmem:[%s13 + $0x1b4] sm:$0xf]
  %v2065 = vld [vmem:[%s13 + $0x1b8] sm:$0xf]
  %v2066 = vld [vmem:[%s13 + $0x1bc] sm:$0xf]
  %v2067 = vld [vmem:[%s13 + $0x1c0] sm:$0xf]
  %v2068 = vld [vmem:[%s13 + $0x1c4] sm:$0xf]
  %v2069 = vld [vmem:[%s13 + $0x1c8] sm:$0xf]
  %v2070 = vld [vmem:[%s13 + $0x1cc] sm:$0xf]
  %v2071 = vld [vmem:[%s13 + $0x1d0] sm:$0xf]
  %v2072 = vld [vmem:[%s13 + $0x1d4] sm:$0xf]
  %v2073 = vld [vmem:[%s13 + $0x1d8] sm:$0xf]
  %v2074 = vld [vmem:[%s13 + $0x1dc] sm:$0xf]
  %v2075 = vld [vmem:[%s13 + $0x1e0] sm:$0xf]
  %v2076 = vld [vmem:[%s13 + $0x1e4] sm:$0xf]
  %v2077 = vld [vmem:[%s13 + $0x1e8] sm:$0xf]
  %v2078 = vld [vmem:[%s13 + $0x1ec] sm:$0xf]
  %v2079 = vld [vmem:[%s13 + $0x1f0] sm:$0xf]
  %v2080 = vld [vmem:[%s13 + $0x1f4] sm:$0xf]
  %v2081 = vld [vmem:[%s13 + $0x1f8] sm:$0xf]
  %v2082 = vld [vmem:[%s13 + $0x1fc] sm:$0xf]
  %v2083 = vld [vmem:[%s13 + $0x200] sm:$0xf]
  %v2084 = vld [vmem:[%s13 + $0x204] sm:$0xf]
  %v2085 = vld [vmem:[%s13 + $0x208] sm:$0xf]
  %v2086 = vld [vmem:[%s13 + $0x20c] sm:$0xf]
  %v2087 = vld [vmem:[%s13 + $0x210] sm:$0xf]
  %v2088 = vld [vmem:[%s13 + $0x214] sm:$0xf]
  %v2089 = vld [vmem:[%s13 + $0x218] sm:$0xf]
  %v2090 = vld [vmem:[%s13 + $0x21c] sm:$0xf]
  %v2091 = vld [vmem:[%s13 + $0x220] sm:$0xf]
  %v2092 = vld [vmem:[%s13 + $0x224] sm:$0xf]
  %v2093 = vld [vmem:[%s13 + $0x228] sm:$0xf]
  %v2094 = vld [vmem:[%s13 + $0x22c] sm:$0xf]
  %v2095 = vld [vmem:[%s13 + $0x230] sm:$0xf]
  %v2096 = vld [vmem:[%s13 + $0x234] sm:$0xf]
  %v2097 = vld [vmem:[%s13 + $0x238] sm:$0xf]
  %v2098 = vld [vmem:[%s13 + $0x23c] sm:$0xf]
  %v2099 = vld [vmem:[%s13 + $0x240] sm:$0xf]
  %v2100 = vld [vmem:[%s13 + $0x244] sm:$0xf]
  %v2101 = vld [vmem:[%s13 + $0x248] sm:$0xf]
  %v2102 = vld [vmem:[%s13 + $0x24c] sm:$0xf]
  %v2103 = vld [vmem:[%s13 + $0x250] sm:$0xf]
  %v2104 = vld [vmem:[%s13 + $0x254] sm:$0xf]
  %v2105 = vld [vmem:[%s13 + $0x258] sm:$0xf]
  %v2106 = vld [vmem:[%s13 + $0x25c] sm:$0xf]
  %v2107 = vld [vmem:[%s13 + $0x260] sm:$0xf]
  %v2108 = vld [vmem:[%s13 + $0x264] sm:$0xf]
  %v2109 = vld [vmem:[%s13 + $0x268] sm:$0xf]
  %v2110 = vld [vmem:[%s13 + $0x26c] sm:$0xf]
  %v2111 = vld [vmem:[%s13 + $0x270] sm:$0xf]
  %v2112 = vld [vmem:[%s13 + $0x274] sm:$0xf]
  %v2113 = vld [vmem:[%s13 + $0x278] sm:$0xf]
  %v2114 = vld [vmem:[%s13 + $0x27c] sm:$0xf]
  %v2115 = vld [vmem:[%s13 + $0x280] sm:$0xf]
  %v2116 = vld [vmem:[%s13 + $0x284] sm:$0xf]
  %v2117 = vld [vmem:[%s13 + $0x288] sm:$0xf]
  %v2118 = vld [vmem:[%s13 + $0x28c] sm:$0xf]
  %v2119 = vld [vmem:[%s13 + $0x290] sm:$0xf]
  %v2120 = vld [vmem:[%s13 + $0x294] sm:$0xf]
  %v2121 = vld [vmem:[%s13 + $0x298] sm:$0xf]
  %v2122 = vld [vmem:[%s13 + $0x29c] sm:$0xf]
  %v2123 = vld [vmem:[%s13 + $0x2a0] sm:$0xf]
  %v2124 = vld [vmem:[%s13 + $0x2a4] sm:$0xf]
  %v2125 = vld [vmem:[%s13 + $0x2a8] sm:$0xf]
  %v2126 = vld [vmem:[%s13 + $0x2ac] sm:$0xf]
  %v2127 = vld [vmem:[%s13 + $0x2b0] sm:$0xf]
  %v2128 = vld [vmem:[%s13 + $0x2b4] sm:$0xf]
  %v2129 = vld [vmem:[%s13 + $0x2b8] sm:$0xf]
  %v2130 = vld [vmem:[%s13 + $0x2bc] sm:$0xf]
  %v2131 = vld [vmem:[%s13 + $0x2c0] sm:$0xf]
  %v2132 = vld [vmem:[%s13 + $0x2c4] sm:$0xf]
  %v2133 = vld [vmem:[%s13 + $0x2c8] sm:$0xf]
  %v2134 = vld [vmem:[%s13 + $0x2cc] sm:$0xf]
  %v2135 = vld [vmem:[%s13 + $0x2d0] sm:$0xf]
  %v2136 = vld [vmem:[%s13 + $0x2d4] sm:$0xf]
  %v2137 = vld [vmem:[%s13 + $0x2d8] sm:$0xf]
  %v2138 = vld [vmem:[%s13 + $0x2dc] sm:$0xf]
  %v2139 = vld [vmem:[%s13 + $0x2e0] sm:$0xf]
  %v2140 = vld [vmem:[%s13 + $0x2e4] sm:$0xf]
  %v2141 = vld [vmem:[%s13 + $0x2e8] sm:$0xf]
  %v2142 = vld [vmem:[%s13 + $0x2ec] sm:$0xf]
  %v2143 = vld [vmem:[%s13 + $0x2f0] sm:$0xf]
  %v2144 = vld [vmem:[%s13 + $0x2f4] sm:$0xf]
  %v2145 = vld [vmem:[%s13 + $0x2f8] sm:$0xf]
  %v2146 = vld [vmem:[%s13 + $0x2fc] sm:$0xf]
  %v2147 = vld [vmem:[%s13 + $0x300] sm:$0xf]
  %v2148 = vld [vmem:[%s13 + $0x304] sm:$0xf]
  %v2149 = vld [vmem:[%s13 + $0x308] sm:$0xf]
  %v2150 = vld [vmem:[%s13 + $0x30c] sm:$0xf]
  %v2151 = vld [vmem:[%s13 + $0x310] sm:$0xf]
  %v2152 = vld [vmem:[%s13 + $0x314] sm:$0xf]
  %v2153 = vld [vmem:[%s13 + $0x318] sm:$0xf]
  %v2154 = vld [vmem:[%s13 + $0x31c] sm:$0xf]
  %v2155 = vld [vmem:[%s13 + $0x320] sm:$0xf]
  %v2156 = vld [vmem:[%s13 + $0x324] sm:$0xf]
  %v2157 = vld [vmem:[%s13 + $0x328] sm:$0xf]
  %v2158 = vld [vmem:[%s13 + $0x32c] sm:$0xf]
  %v2159 = vld [vmem:[%s13 + $0x330] sm:$0xf]
  %v2160 = vld [vmem:[%s13 + $0x334] sm:$0xf]
  %v2161 = vld [vmem:[%s13 + $0x338] sm:$0xf]
  %v2162 = vld [vmem:[%s13 + $0x33c] sm:$0xf]
  %v2163 = vld [vmem:[%s13 + $0x340] sm:$0xf]
  %v2164 = vld [vmem:[%s13 + $0x344] sm:$0xf]
  %v2165 = vld [vmem:[%s13 + $0x348] sm:$0xf]
  %v2166 = vld [vmem:[%s13 + $0x34c] sm:$0xf]
  %v2167 = vld [vmem:[%s13 + $0x350] sm:$0xf]
  %v2168 = vld [vmem:[%s13 + $0x354] sm:$0xf]
  %v2169 = vld [vmem:[%s13 + $0x358] sm:$0xf]
  %v2170 = vld [vmem:[%s13 + $0x35c] sm:$0xf]
  %v2171 = vld [vmem:[%s13 + $0x360] sm:$0xf]
  %v2172 = vld [vmem:[%s13 + $0x364] sm:$0xf]
  %v2173 = vld [vmem:[%s13 + $0x368] sm:$0xf]
  %v2174 = vld [vmem:[%s13 + $0x36c] sm:$0xf]
  %v2175 = vld [vmem:[%s13 + $0x370] sm:$0xf]
  %v2176 = vld [vmem:[%s13 + $0x374] sm:$0xf]
  %v2177 = vld [vmem:[%s13 + $0x378] sm:$0xf]
  %v2178 = vld [vmem:[%s13 + $0x37c] sm:$0xf]
  %v2179 = vld [vmem:[%s13 + $0x380] sm:$0xf]
  %v2180 = vld [vmem:[%s13 + $0x384] sm:$0xf]
  %v2181 = vld [vmem:[%s13 + $0x388] sm:$0xf]
  %v2182 = vld [vmem:[%s13 + $0x38c] sm:$0xf]
  %v2183 = vld [vmem:[%s13 + $0x390] sm:$0xf]
  %v2184 = vld [vmem:[%s13 + $0x394] sm:$0xf]
  %v2185 = vld [vmem:[%s13 + $0x398] sm:$0xf]
  %v2186 = vld [vmem:[%s13 + $0x39c] sm:$0xf]
  %v2187 = vld [vmem:[%s13 + $0x3a0] sm:$0xf]
  %v2188 = vld [vmem:[%s13 + $0x3a4] sm:$0xf]
  %v2189 = vld [vmem:[%s13 + $0x3a8] sm:$0xf]
  %v2190 = vld [vmem:[%s13 + $0x3ac] sm:$0xf]
  %v2191 = vld [vmem:[%s13 + $0x3b0] sm:$0xf]
  %v2192 = vld [vmem:[%s13 + $0x3b4] sm:$0xf]
  %v2193 = vld [vmem:[%s13 + $0x3b8] sm:$0xf]
  %v2194 = vld [vmem:[%s13 + $0x3bc] sm:$0xf]
  %v2195 = vld [vmem:[%s13 + $0x3c0] sm:$0xf]
  %v2196 = vld [vmem:[%s13 + $0x3c4] sm:$0xf]
  %v2197 = vld [vmem:[%s13 + $0x3c8] sm:$0xf]
  %v2198 = vld [vmem:[%s13 + $0x3cc] sm:$0xf]
  %v2199 = vld [vmem:[%s13 + $0x3d0] sm:$0xf]
  %v2200 = vld [vmem:[%s13 + $0x3d4] sm:$0xf]
  %v2201 = vld [vmem:[%s13 + $0x3d8] sm:$0xf]
  %v2202 = vld [vmem:[%s13 + $0x3dc] sm:$0xf]
  %v2203 = vld [vmem:[%s13 + $0x3e0] sm:$0xf]
  %v2204 = vld [vmem:[%s13 + $0x3e4] sm:$0xf]
  %v2205 = vld [vmem:[%s13 + $0x3e8] sm:$0xf]
  %v2206 = vld [vmem:[%s13 + $0x3ec] sm:$0xf]
  %v2207 = vld [vmem:[%s13 + $0x3f0] sm:$0xf]
  %v2208 = vld [vmem:[%s13 + $0x3f4] sm:$0xf]
  %v2209 = vld [vmem:[%s13 + $0x3f8] sm:$0xf]
  %v2210 = vld [vmem:[%s13 + $0x3fc] sm:$0xf]
  %v2211 = vpack.c.bf16 %v1939, %v1923
  %v2212 = vpack.c.bf16 %v1940, %v1924
  %v2213 = vpack.c.bf16 %v1941, %v1925
  %v2214 = vpack.c.bf16 %v1942, %v1926
  %v2215 = vpack.c.bf16 %v1943, %v1927
  %v2216 = vpack.c.bf16 %v1944, %v1928
  %v2217 = vpack.c.bf16 %v1945, %v1929
  %v2218 = vpack.c.bf16 %v1946, %v1930
  %v2219 = vpack.c.bf16 %v1947, %v1931
  %v2220 = vpack.c.bf16 %v1948, %v1932
  %v2221 = vpack.c.bf16 %v1949, %v1933
  %v2222 = vpack.c.bf16 %v1950, %v1934
  %v2223 = vpack.c.bf16 %v1951, %v1935
  %v2224 = vpack.c.bf16 %v1952, %v1936
  %v2225 = vpack.c.bf16 %v1953, %v1937
  %v2226 = vpack.c.bf16 %v1954, %v1938
  %v2227 = vlaneseq
  %v2228 = vshrl.u32 %v2227, 7
  %v2229 = vsub.s32 1, %v2228
  %v2230 = vrot.slane %v99, %v2229
  %v2487 = vunpack.c.l.b16 %v1955
  %v2488 = vunpack.c.l.b16 %v1956
  %v2489 = vunpack.c.l.b16 %v1957
  %v2490 = vunpack.c.l.b16 %v1958
  %v2491 = vunpack.c.l.b16 %v1959
  %v2492 = vunpack.c.l.b16 %v1960
  %v2493 = vunpack.c.l.b16 %v1961
  %v2494 = vunpack.c.l.b16 %v1962
  %v2495 = vunpack.c.l.b16 %v1963
  %v2496 = vunpack.c.l.b16 %v1964
  %v2497 = vunpack.c.l.b16 %v1965
  %v2498 = vunpack.c.l.b16 %v1966
  %v2499 = vunpack.c.l.b16 %v1967
  %v2500 = vunpack.c.l.b16 %v1968
  %v2501 = vunpack.c.l.b16 %v1969
  %v2502 = vunpack.c.l.b16 %v1970
  %v2503 = vunpack.c.l.b16 %v1971
  %v2504 = vunpack.c.l.b16 %v1972
  %v2505 = vunpack.c.l.b16 %v1973
  %v2506 = vunpack.c.l.b16 %v1974
  %v2507 = vunpack.c.l.b16 %v1975
  %v2508 = vunpack.c.l.b16 %v1976
  %v2509 = vunpack.c.l.b16 %v1977
  %v2510 = vunpack.c.l.b16 %v1978
  %v2511 = vunpack.c.l.b16 %v1979
  %v2512 = vunpack.c.l.b16 %v1980
  %v2513 = vunpack.c.l.b16 %v1981
  %v2514 = vunpack.c.l.b16 %v1982
  %v2515 = vunpack.c.l.b16 %v1983
  %v2516 = vunpack.c.l.b16 %v1984
  %v2517 = vunpack.c.l.b16 %v1985
  %v2518 = vunpack.c.l.b16 %v1986
  %v2519 = vunpack.c.l.b16 %v1987
  %v2520 = vunpack.c.l.b16 %v1988
  %v2521 = vunpack.c.l.b16 %v1989
  %v2522 = vunpack.c.l.b16 %v1990
  %v2523 = vunpack.c.l.b16 %v1991
  %v2524 = vunpack.c.l.b16 %v1992
  %v2525 = vunpack.c.l.b16 %v1993
  %v2526 = vunpack.c.l.b16 %v1994
  %v2527 = vunpack.c.l.b16 %v1995
  %v2528 = vunpack.c.l.b16 %v1996
  %v2529 = vunpack.c.l.b16 %v1997
  %v2530 = vunpack.c.l.b16 %v1998
  %v2531 = vunpack.c.l.b16 %v1999
  %v2532 = vunpack.c.l.b16 %v2000
  %v2533 = vunpack.c.l.b16 %v2001
  %v2534 = vunpack.c.l.b16 %v2002
  %v2535 = vunpack.c.l.b16 %v2003
  %v2536 = vunpack.c.l.b16 %v2004
  %v2537 = vunpack.c.l.b16 %v2005
  %v2538 = vunpack.c.l.b16 %v2006
  %v2539 = vunpack.c.l.b16 %v2007
  %v2540 = vunpack.c.l.b16 %v2008
  %v2541 = vunpack.c.l.b16 %v2009
  %v2542 = vunpack.c.l.b16 %v2010
  %v2543 = vunpack.c.l.b16 %v2011
  %v2544 = vunpack.c.l.b16 %v2012
  %v2545 = vunpack.c.l.b16 %v2013
  %v2546 = vunpack.c.l.b16 %v2014
  %v2547 = vunpack.c.l.b16 %v2015
  %v2548 = vunpack.c.l.b16 %v2016
  %v2549 = vunpack.c.l.b16 %v2017
  %v2550 = vunpack.c.l.b16 %v2018
  %v2551 = vunpack.c.l.b16 %v2019
  %v2552 = vunpack.c.l.b16 %v2020
  %v2553 = vunpack.c.l.b16 %v2021
  %v2554 = vunpack.c.l.b16 %v2022
  %v2555 = vunpack.c.l.b16 %v2023
  %v2556 = vunpack.c.l.b16 %v2024
  %v2557 = vunpack.c.l.b16 %v2025
  %v2558 = vunpack.c.l.b16 %v2026
  %v2559 = vunpack.c.l.b16 %v2027
  %v2560 = vunpack.c.l.b16 %v2028
  %v2561 = vunpack.c.l.b16 %v2029
  %v2562 = vunpack.c.l.b16 %v2030
  %v2563 = vunpack.c.l.b16 %v2031
  %v2564 = vunpack.c.l.b16 %v2032
  %v2565 = vunpack.c.l.b16 %v2033
  %v2566 = vunpack.c.l.b16 %v2034
  %v2567 = vunpack.c.l.b16 %v2035
  %v2568 = vunpack.c.l.b16 %v2036
  %v2569 = vunpack.c.l.b16 %v2037
  %v2570 = vunpack.c.l.b16 %v2038
  %v2571 = vunpack.c.l.b16 %v2039
  %v2572 = vunpack.c.l.b16 %v2040
  %v2573 = vunpack.c.l.b16 %v2041
  %v2574 = vunpack.c.l.b16 %v2042
  %v2575 = vunpack.c.l.b16 %v2043
  %v2576 = vunpack.c.l.b16 %v2044
  %v2577 = vunpack.c.l.b16 %v2045
  %v2578 = vunpack.c.l.b16 %v2046
  %v2579 = vunpack.c.l.b16 %v2047
  %v2580 = vunpack.c.l.b16 %v2048
  %v2581 = vunpack.c.l.b16 %v2049
  %v2582 = vunpack.c.l.b16 %v2050
  %v2583 = vunpack.c.l.b16 %v2051
  %v2584 = vunpack.c.l.b16 %v2052
  %v2585 = vunpack.c.l.b16 %v2053
  %v2586 = vunpack.c.l.b16 %v2054
  %v2587 = vunpack.c.l.b16 %v2055
  %v2588 = vunpack.c.l.b16 %v2056
  %v2589 = vunpack.c.l.b16 %v2057
  %v2590 = vunpack.c.l.b16 %v2058
  %v2591 = vunpack.c.l.b16 %v2059
  %v2592 = vunpack.c.l.b16 %v2060
  %v2593 = vunpack.c.l.b16 %v2061
  %v2594 = vunpack.c.l.b16 %v2062
  %v2595 = vunpack.c.l.b16 %v2063
  %v2596 = vunpack.c.l.b16 %v2064
  %v2597 = vunpack.c.l.b16 %v2065
  %v2598 = vunpack.c.l.b16 %v2066
  %v2599 = vunpack.c.l.b16 %v2067
  %v2600 = vunpack.c.l.b16 %v2068
  %v2601 = vunpack.c.l.b16 %v2069
  %v2602 = vunpack.c.l.b16 %v2070
  %v2603 = vunpack.c.l.b16 %v2071
  %v2604 = vunpack.c.l.b16 %v2072
  %v2605 = vunpack.c.l.b16 %v2073
  %v2606 = vunpack.c.l.b16 %v2074
  %v2607 = vunpack.c.l.b16 %v2075
  %v2608 = vunpack.c.l.b16 %v2076
  %v2609 = vunpack.c.l.b16 %v2077
  %v2610 = vunpack.c.l.b16 %v2078
  %v2611 = vunpack.c.l.b16 %v2079
  %v2612 = vunpack.c.l.b16 %v2080
  %v2613 = vunpack.c.l.b16 %v2081
  %v2614 = vunpack.c.l.b16 %v2082
  %v2615 = vunpack.c.l.b16 %v2083
  %v2616 = vunpack.c.l.b16 %v2084
  %v2617 = vunpack.c.l.b16 %v2085
  %v2618 = vunpack.c.l.b16 %v2086
  %v2619 = vunpack.c.l.b16 %v2087
  %v2620 = vunpack.c.l.b16 %v2088
  %v2621 = vunpack.c.l.b16 %v2089
  %v2622 = vunpack.c.l.b16 %v2090
  %v2623 = vunpack.c.l.b16 %v2091
  %v2624 = vunpack.c.l.b16 %v2092
  %v2625 = vunpack.c.l.b16 %v2093
  %v2626 = vunpack.c.l.b16 %v2094
  %v2627 = vunpack.c.l.b16 %v2095
  %v2628 = vunpack.c.l.b16 %v2096
  %v2629 = vunpack.c.l.b16 %v2097
  %v2630 = vunpack.c.l.b16 %v2098
  %v2631 = vunpack.c.l.b16 %v2099
  %v2632 = vunpack.c.l.b16 %v2100
  %v2633 = vunpack.c.l.b16 %v2101
  %v2634 = vunpack.c.l.b16 %v2102
  %v2635 = vunpack.c.l.b16 %v2103
  %v2636 = vunpack.c.l.b16 %v2104
  %v2637 = vunpack.c.l.b16 %v2105
  %v2638 = vunpack.c.l.b16 %v2106
  %v2639 = vunpack.c.l.b16 %v2107
  %v2640 = vunpack.c.l.b16 %v2108
  %v2641 = vunpack.c.l.b16 %v2109
  %v2642 = vunpack.c.l.b16 %v2110
  %v2643 = vunpack.c.l.b16 %v2111
  %v2644 = vunpack.c.l.b16 %v2112
  %v2645 = vunpack.c.l.b16 %v2113
  %v2646 = vunpack.c.l.b16 %v2114
  %v2647 = vunpack.c.l.b16 %v2115
  %v2648 = vunpack.c.l.b16 %v2116
  %v2649 = vunpack.c.l.b16 %v2117
  %v2650 = vunpack.c.l.b16 %v2118
  %v2651 = vunpack.c.l.b16 %v2119
  %v2652 = vunpack.c.l.b16 %v2120
  %v2653 = vunpack.c.l.b16 %v2121
  %v2654 = vunpack.c.l.b16 %v2122
  %v2655 = vunpack.c.l.b16 %v2123
  %v2656 = vunpack.c.l.b16 %v2124
  %v2657 = vunpack.c.l.b16 %v2125
  %v2658 = vunpack.c.l.b16 %v2126
  %v2659 = vunpack.c.l.b16 %v2127
  %v2660 = vunpack.c.l.b16 %v2128
  %v2661 = vunpack.c.l.b16 %v2129
  %v2662 = vunpack.c.l.b16 %v2130
  %v2663 = vunpack.c.l.b16 %v2131
  %v2664 = vunpack.c.l.b16 %v2132
  %v2665 = vunpack.c.l.b16 %v2133
  %v2666 = vunpack.c.l.b16 %v2134
  %v2667 = vunpack.c.l.b16 %v2135
  %v2668 = vunpack.c.l.b16 %v2136
  %v2669 = vunpack.c.l.b16 %v2137
  %v2670 = vunpack.c.l.b16 %v2138
  %v2671 = vunpack.c.l.b16 %v2139
  %v2672 = vunpack.c.l.b16 %v2140
  %v2673 = vunpack.c.l.b16 %v2141
  %v2674 = vunpack.c.l.b16 %v2142
  %v2675 = vunpack.c.l.b16 %v2143
  %v2676 = vunpack.c.l.b16 %v2144
  %v2677 = vunpack.c.l.b16 %v2145
  %v2678 = vunpack.c.l.b16 %v2146
  %v2679 = vunpack.c.l.b16 %v2147
  %v2680 = vunpack.c.l.b16 %v2148
  %v2681 = vunpack.c.l.b16 %v2149
  %v2682 = vunpack.c.l.b16 %v2150
  %v2683 = vunpack.c.l.b16 %v2151
  %v2684 = vunpack.c.l.b16 %v2152
  %v2685 = vunpack.c.l.b16 %v2153
  %v2686 = vunpack.c.l.b16 %v2154
  %v2687 = vunpack.c.l.b16 %v2155
  %v2688 = vunpack.c.l.b16 %v2156
  %v2689 = vunpack.c.l.b16 %v2157
  %v2690 = vunpack.c.l.b16 %v2158
  %v2691 = vunpack.c.l.b16 %v2159
  %v2692 = vunpack.c.l.b16 %v2160
  %v2693 = vunpack.c.l.b16 %v2161
  %v2694 = vunpack.c.l.b16 %v2162
  %v2695 = vunpack.c.l.b16 %v2163
  %v2696 = vunpack.c.l.b16 %v2164
  %v2697 = vunpack.c.l.b16 %v2165
  %v2698 = vunpack.c.l.b16 %v2166
  %v2699 = vunpack.c.l.b16 %v2167
  %v2700 = vunpack.c.l.b16 %v2168
  %v2701 = vunpack.c.l.b16 %v2169
  %v2702 = vunpack.c.l.b16 %v2170
  %v2703 = vunpack.c.l.b16 %v2171
  %v2704 = vunpack.c.l.b16 %v2172
  %v2705 = vunpack.c.l.b16 %v2173
  %v2706 = vunpack.c.l.b16 %v2174
  %v2707 = vunpack.c.l.b16 %v2175
  %v2708 = vunpack.c.l.b16 %v2176
  %v2709 = vunpack.c.l.b16 %v2177
  %v2710 = vunpack.c.l.b16 %v2178
  %v2711 = vunpack.c.l.b16 %v2179
  %v2712 = vunpack.c.l.b16 %v2180
  %v2713 = vunpack.c.l.b16 %v2181
  %v2714 = vunpack.c.l.b16 %v2182
  %v2715 = vunpack.c.l.b16 %v2183
  %v2716 = vunpack.c.l.b16 %v2184
  %v2717 = vunpack.c.l.b16 %v2185
  %v2718 = vunpack.c.l.b16 %v2186
  %v2719 = vunpack.c.l.b16 %v2187
  %v2720 = vunpack.c.l.b16 %v2188
  %v2721 = vunpack.c.l.b16 %v2189
  %v2722 = vunpack.c.l.b16 %v2190
  %v2723 = vunpack.c.l.b16 %v2191
  %v2724 = vunpack.c.l.b16 %v2192
  %v2725 = vunpack.c.l.b16 %v2193
  %v2726 = vunpack.c.l.b16 %v2194
  %v2727 = vunpack.c.l.b16 %v2195
  %v2728 = vunpack.c.l.b16 %v2196
  %v2729 = vunpack.c.l.b16 %v2197
  %v2730 = vunpack.c.l.b16 %v2198
  %v2731 = vunpack.c.l.b16 %v2199
  %v2732 = vunpack.c.l.b16 %v2200
  %v2733 = vunpack.c.l.b16 %v2201
  %v2734 = vunpack.c.l.b16 %v2202
  %v2735 = vunpack.c.l.b16 %v2203
  %v2736 = vunpack.c.l.b16 %v2204
  %v2737 = vunpack.c.l.b16 %v2205
  %v2738 = vunpack.c.l.b16 %v2206
  %v2739 = vunpack.c.l.b16 %v2207
  %v2740 = vunpack.c.l.b16 %v2208
  %v2741 = vunpack.c.l.b16 %v2209
  %v2742 = vunpack.c.l.b16 %v2210
  %v2743 = vpack.c.b16 %v2488, %v2487
  %v2744 = vpack.c.b16 %v2490, %v2489
  %v2745 = vpack.c.b16 %v2492, %v2491
  %v2746 = vpack.c.b16 %v2494, %v2493
  %v2747 = vpack.c.b16 %v2496, %v2495
  %v2748 = vpack.c.b16 %v2498, %v2497
  %v2749 = vpack.c.b16 %v2500, %v2499
  %v2750 = vpack.c.b16 %v2502, %v2501
  %v2751 = vpack.c.b16 %v2504, %v2503
  %v2752 = vpack.c.b16 %v2506, %v2505
  %v2753 = vpack.c.b16 %v2508, %v2507
  %v2754 = vpack.c.b16 %v2510, %v2509
  %v2755 = vpack.c.b16 %v2512, %v2511
  %v2756 = vpack.c.b16 %v2514, %v2513
  %v2757 = vpack.c.b16 %v2516, %v2515
  %v2758 = vpack.c.b16 %v2518, %v2517
  %v2759 = vpack.c.b16 %v2520, %v2519
  %v2760 = vpack.c.b16 %v2522, %v2521
  %v2761 = vpack.c.b16 %v2524, %v2523
  %v2762 = vpack.c.b16 %v2526, %v2525
  %v2763 = vpack.c.b16 %v2528, %v2527
  %v2764 = vpack.c.b16 %v2530, %v2529
  %v2765 = vpack.c.b16 %v2532, %v2531
  %v2766 = vpack.c.b16 %v2534, %v2533
  %v2767 = vpack.c.b16 %v2536, %v2535
  %v2768 = vpack.c.b16 %v2538, %v2537
  %v2769 = vpack.c.b16 %v2540, %v2539
  %v2770 = vpack.c.b16 %v2542, %v2541
  %v2771 = vpack.c.b16 %v2544, %v2543
  %v2772 = vpack.c.b16 %v2546, %v2545
  %v2773 = vpack.c.b16 %v2548, %v2547
  %v2774 = vpack.c.b16 %v2550, %v2549
  %v2775 = vpack.c.b16 %v2552, %v2551
  %v2776 = vpack.c.b16 %v2554, %v2553
  %v2777 = vpack.c.b16 %v2556, %v2555
  %v2778 = vpack.c.b16 %v2558, %v2557
  %v2779 = vpack.c.b16 %v2560, %v2559
  %v2780 = vpack.c.b16 %v2562, %v2561
  %v2781 = vpack.c.b16 %v2564, %v2563
  %v2782 = vpack.c.b16 %v2566, %v2565
  %v2783 = vpack.c.b16 %v2568, %v2567
  %v2784 = vpack.c.b16 %v2570, %v2569
  %v2785 = vpack.c.b16 %v2572, %v2571
  %v2786 = vpack.c.b16 %v2574, %v2573
  %v2787 = vpack.c.b16 %v2576, %v2575
  %v2788 = vpack.c.b16 %v2578, %v2577
  %v2789 = vpack.c.b16 %v2580, %v2579
  %v2790 = vpack.c.b16 %v2582, %v2581
  %v2791 = vpack.c.b16 %v2584, %v2583
  %v2792 = vpack.c.b16 %v2586, %v2585
  %v2793 = vpack.c.b16 %v2588, %v2587
  %v2794 = vpack.c.b16 %v2590, %v2589
  %v2795 = vpack.c.b16 %v2592, %v2591
  %v2796 = vpack.c.b16 %v2594, %v2593
  %v2797 = vpack.c.b16 %v2596, %v2595
  %v2798 = vpack.c.b16 %v2598, %v2597
  %v2799 = vpack.c.b16 %v2600, %v2599
  %v2800 = vpack.c.b16 %v2602, %v2601
  %v2801 = vpack.c.b16 %v2604, %v2603
  %v2802 = vpack.c.b16 %v2606, %v2605
  %v2803 = vpack.c.b16 %v2608, %v2607
  %v2804 = vpack.c.b16 %v2610, %v2609
  %v2805 = vpack.c.b16 %v2612, %v2611
  %v2806 = vpack.c.b16 %v2614, %v2613
  %v2807 = vpack.c.b16 %v2616, %v2615
  %v2808 = vpack.c.b16 %v2618, %v2617
  %v2809 = vpack.c.b16 %v2620, %v2619
  %v2810 = vpack.c.b16 %v2622, %v2621
  %v2811 = vpack.c.b16 %v2624, %v2623
  %v2812 = vpack.c.b16 %v2626, %v2625
  %v2813 = vpack.c.b16 %v2628, %v2627
  %v2814 = vpack.c.b16 %v2630, %v2629
  %v2815 = vpack.c.b16 %v2632, %v2631
  %v2816 = vpack.c.b16 %v2634, %v2633
  %v2817 = vpack.c.b16 %v2636, %v2635
  %v2818 = vpack.c.b16 %v2638, %v2637
  %v2819 = vpack.c.b16 %v2640, %v2639
  %v2820 = vpack.c.b16 %v2642, %v2641
  %v2821 = vpack.c.b16 %v2644, %v2643
  %v2822 = vpack.c.b16 %v2646, %v2645
  %v2823 = vpack.c.b16 %v2648, %v2647
  %v2824 = vpack.c.b16 %v2650, %v2649
  %v2825 = vpack.c.b16 %v2652, %v2651
  %v2826 = vpack.c.b16 %v2654, %v2653
  %v2827 = vpack.c.b16 %v2656, %v2655
  %v2828 = vpack.c.b16 %v2658, %v2657
  %v2829 = vpack.c.b16 %v2660, %v2659
  %v2830 = vpack.c.b16 %v2662, %v2661
  %v2831 = vpack.c.b16 %v2664, %v2663
  %v2832 = vpack.c.b16 %v2666, %v2665
  %v2833 = vpack.c.b16 %v2668, %v2667
  %v2834 = vpack.c.b16 %v2670, %v2669
  %v2835 = vpack.c.b16 %v2672, %v2671
  %v2836 = vpack.c.b16 %v2674, %v2673
  %v2837 = vpack.c.b16 %v2676, %v2675
  %v2838 = vpack.c.b16 %v2678, %v2677
  %v2839 = vpack.c.b16 %v2680, %v2679
  %v2840 = vpack.c.b16 %v2682, %v2681
  %v2841 = vpack.c.b16 %v2684, %v2683
  %v2842 = vpack.c.b16 %v2686, %v2685
  %v2843 = vpack.c.b16 %v2688, %v2687
  %v2844 = vpack.c.b16 %v2690, %v2689
  %v2845 = vpack.c.b16 %v2692, %v2691
  %v2846 = vpack.c.b16 %v2694, %v2693
  %v2847 = vpack.c.b16 %v2696, %v2695
  %v2848 = vpack.c.b16 %v2698, %v2697
  %v2849 = vpack.c.b16 %v2700, %v2699
  %v2850 = vpack.c.b16 %v2702, %v2701
  %v2851 = vpack.c.b16 %v2704, %v2703
  %v2852 = vpack.c.b16 %v2706, %v2705
  %v2853 = vpack.c.b16 %v2708, %v2707
  %v2854 = vpack.c.b16 %v2710, %v2709
  %v2855 = vpack.c.b16 %v2712, %v2711
  %v2856 = vpack.c.b16 %v2714, %v2713
  %v2857 = vpack.c.b16 %v2716, %v2715
  %v2858 = vpack.c.b16 %v2718, %v2717
  %v2859 = vpack.c.b16 %v2720, %v2719
  %v2860 = vpack.c.b16 %v2722, %v2721
  %v2861 = vpack.c.b16 %v2724, %v2723
  %v2862 = vpack.c.b16 %v2726, %v2725
  %v2863 = vpack.c.b16 %v2728, %v2727
  %v2864 = vpack.c.b16 %v2730, %v2729
  %v2865 = vpack.c.b16 %v2732, %v2731
  %v2866 = vpack.c.b16 %v2734, %v2733
  %v2867 = vpack.c.b16 %v2736, %v2735
  %v2868 = vpack.c.b16 %v2738, %v2737
  %v2869 = vpack.c.b16 %v2740, %v2739
  %v2870 = vpack.c.b16 %v2742, %v2741
  %2999 = vmatprep.subr.bf16.mxu0 0
  %3000 = vmatpush1.bf16.msra.mxu0 %v2743
  %3001 = vmatprep.subr.bf16.mxu0 0
  %3002 = vmatpush1.bf16.msra.mxu0 %v2744
  %3003 = vmatprep.subr.bf16.mxu0 0
  %3004 = vmatpush1.bf16.msra.mxu0 %v2745
  %3005 = vmatprep.subr.bf16.mxu0 0
  %3006 = vmatpush1.bf16.msra.mxu0 %v2746
  %3007 = vmatprep.subr.bf16.mxu0 0
  %3008 = vmatpush1.bf16.msra.mxu0 %v2747
  %3009 = vmatprep.subr.bf16.mxu0 0
  %3010 = vmatpush1.bf16.msra.mxu0 %v2748
  %3011 = vmatprep.subr.bf16.mxu0 0
  %3012 = vmatpush1.bf16.msra.mxu0 %v2749
  %3013 = vmatprep.subr.bf16.mxu0 0
  %3014 = vmatpush1.bf16.msra.mxu0 %v2750
  %3015 = vmatprep.subr.bf16.mxu0 0
  %3016 = vmatpush1.bf16.msra.mxu0 %v2751
  %3017 = vmatprep.subr.bf16.mxu0 0
  %3018 = vmatpush1.bf16.msra.mxu0 %v2752
  %3019 = vmatprep.subr.bf16.mxu0 0
  %3020 = vmatpush1.bf16.msra.mxu0 %v2753
  %3021 = vmatprep.subr.bf16.mxu0 0
  %3022 = vmatpush1.bf16.msra.mxu0 %v2754
  %3023 = vmatprep.subr.bf16.mxu0 0
  %3024 = vmatpush1.bf16.msra.mxu0 %v2755
  %3025 = vmatprep.subr.bf16.mxu0 0
  %3026 = vmatpush1.bf16.msra.mxu0 %v2756
  %3027 = vmatprep.subr.bf16.mxu0 0
  %3028 = vmatpush1.bf16.msra.mxu0 %v2757
  %3029 = vmatprep.subr.bf16.mxu0 0
  %3030 = vmatpush1.bf16.msra.mxu0 %v2758
  %3031 = vmatprep.mubr.bf16.mxu0 %v2212
  %3032 = vmatmul.mubr.bf16.gmra.mrb[0].mxu0 %v2211
  %v3033 = vpop.f32.mrb[0].mxu0
  %v3034 = vadd.f32 %v2230, %v3033
  %v3035 = vpop.f32.mrb[0].mxu0
  %v3036 = vpop.f32.mrb[0].mxu0
  %v3037 = vadd.f32 %v2230, %v3036
  %v3038 = vpop.f32.mrb[0].mxu0
  %3039 = vdwg.mxu0
  %3040 = vmatprep.subr.bf16.mxu0 0
  %3041 = vmatpush1.bf16.msra.mxu0 %v2759
  %3042 = vmatprep.subr.bf16.mxu0 0
  %3043 = vmatpush1.bf16.msra.mxu0 %v2760
  %3044 = vmatprep.subr.bf16.mxu0 0
  %3045 = vmatpush1.bf16.msra.mxu0 %v2761
  %3046 = vmatprep.subr.bf16.mxu0 0
  %3047 = vmatpush1.bf16.msra.mxu0 %v2762
  %3048 = vmatprep.subr.bf16.mxu0 0
  %3049 = vmatpush1.bf16.msra.mxu0 %v2763
  %3050 = vmatprep.subr.bf16.mxu0 0
  %3051 = vmatpush1.bf16.msra.mxu0 %v2764
  %3052 = vmatprep.subr.bf16.mxu0 0
  %3053 = vmatpush1.bf16.msra.mxu0 %v2765
  %3054 = vmatprep.subr.bf16.mxu0 0
  %3055 = vmatpush1.bf16.msra.mxu0 %v2766
  %3056 = vmatprep.subr.bf16.mxu0 0
  %3057 = vmatpush1.bf16.msra.mxu0 %v2767
  %3058 = vmatprep.subr.bf16.mxu0 0
  %3059 = vmatpush1.bf16.msra.mxu0 %v2768
  %3060 = vmatprep.subr.bf16.mxu0 0
  %3061 = vmatpush1.bf16.msra.mxu0 %v2769
  %3062 = vmatprep.subr.bf16.mxu0 0
  %3063 = vmatpush1.bf16.msra.mxu0 %v2770
  %3064 = vmatprep.subr.bf16.mxu0 0
  %3065 = vmatpush1.bf16.msra.mxu0 %v2771
  %3066 = vmatprep.subr.bf16.mxu0 0
  %3067 = vmatpush1.bf16.msra.mxu0 %v2772
  %3068 = vmatprep.subr.bf16.mxu0 0
  %3069 = vmatpush1.bf16.msra.mxu0 %v2773
  %3070 = vmatprep.subr.bf16.mxu0 0
  %3071 = vmatpush1.bf16.msra.mxu0 %v2774
  %3072 = vmatprep.mubr.bf16.mxu0 %v2214
  %3073 = vmatmul.mubr.bf16.gmra.mrb[0].mxu0 %v2213
  %v3074 = vpop.f32.mrb[0].mxu0
  %v3075 = vadd.f32 %v3034, %v3074
  %v3076 = vpop.f32.mrb[0].mxu0
  %v3077 = vpop.f32.mrb[0].mxu0
  %v3078 = vadd.f32 %v3037, %v3077
  %v3079 = vpop.f32.mrb[0].mxu0
  %3080 = vdwg.mxu0
  %3081 = vmatprep.subr.bf16.mxu0 0
  %3082 = vmatpush1.bf16.msra.mxu0 %v2775
  %3083 = vmatprep.subr.bf16.mxu0 0
  %3084 = vmatpush1.bf16.msra.mxu0 %v2776
  %3085 = vmatprep.subr.bf16.mxu0 0
  %3086 = vmatpush1.bf16.msra.mxu0 %v2777
  %3087 = vmatprep.subr.bf16.mxu0 0
  %3088 = vmatpush1.bf16.msra.mxu0 %v2778
  %3089 = vmatprep.subr.bf16.mxu0 0
  %3090 = vmatpush1.bf16.msra.mxu0 %v2779
  %3091 = vmatprep.subr.bf16.mxu0 0
  %3092 = vmatpush1.bf16.msra.mxu0 %v2780
  %3093 = vmatprep.subr.bf16.mxu0 0
  %3094 = vmatpush1.bf16.msra.mxu0 %v2781
  %3095 = vmatprep.subr.bf16.mxu0 0
  %3096 = vmatpush1.bf16.msra.mxu0 %v2782
  %3097 = vmatprep.subr.bf16.mxu0 0
  %3098 = vmatpush1.bf16.msra.mxu0 %v2783
  %3099 = vmatprep.subr.bf16.mxu0 0
  %3100 = vmatpush1.bf16.msra.mxu0 %v2784
  %3101 = vmatprep.subr.bf16.mxu0 0
  %3102 = vmatpush1.bf16.msra.mxu0 %v2785
  %3103 = vmatprep.subr.bf16.mxu0 0
  %3104 = vmatpush1.bf16.msra.mxu0 %v2786
  %3105 = vmatprep.subr.bf16.mxu0 0
  %3106 = vmatpush1.bf16.msra.mxu0 %v2787
  %3107 = vmatprep.subr.bf16.mxu0 0
  %3108 = vmatpush1.bf16.msra.mxu0 %v2788
  %3109 = vmatprep.subr.bf16.mxu0 0
  %3110 = vmatpush1.bf16.msra.mxu0 %v2789
  %3111 = vmatprep.subr.bf16.mxu0 0
  %3112 = vmatpush1.bf16.msra.mxu0 %v2790
  %3113 = vmatprep.mubr.bf16.mxu0 %v2216
  %3114 = vmatmul.mubr.bf16.gmra.mrb[0].mxu0 %v2215
  %v3115 = vpop.f32.mrb[0].mxu0
  %v3116 = vadd.f32 %v3075, %v3115
  %v3117 = vpop.f32.mrb[0].mxu0
  %v3118 = vpop.f32.mrb[0].mxu0
  %v3119 = vadd.f32 %v3078, %v3118
  %v3120 = vpop.f32.mrb[0].mxu0
  %3121 = vdwg.mxu0
  %3122 = vmatprep.subr.bf16.mxu0 0
  %3123 = vmatpush1.bf16.msra.mxu0 %v2791
  %3124 = vmatprep.subr.bf16.mxu0 0
  %3125 = vmatpush1.bf16.msra.mxu0 %v2792
  %3126 = vmatprep.subr.bf16.mxu0 0
  %3127 = vmatpush1.bf16.msra.mxu0 %v2793
  %3128 = vmatprep.subr.bf16.mxu0 0
  %3129 = vmatpush1.bf16.msra.mxu0 %v2794
  %3130 = vmatprep.subr.bf16.mxu0 0
  %3131 = vmatpush1.bf16.msra.mxu0 %v2795
  %3132 = vmatprep.subr.bf16.mxu0 0
  %3133 = vmatpush1.bf16.msra.mxu0 %v2796
  %3134 = vmatprep.subr.bf16.mxu0 0
  %3135 = vmatpush1.bf16.msra.mxu0 %v2797
  %3136 = vmatprep.subr.bf16.mxu0 0
  %3137 = vmatpush1.bf16.msra.mxu0 %v2798
  %3138 = vmatprep.subr.bf16.mxu0 0
  %3139 = vmatpush1.bf16.msra.mxu0 %v2799
  %3140 = vmatprep.subr.bf16.mxu0 0
  %3141 = vmatpush1.bf16.msra.mxu0 %v2800
  %3142 = vmatprep.subr.bf16.mxu0 0
  %3143 = vmatpush1.bf16.msra.mxu0 %v2801
  %3144 = vmatprep.subr.bf16.mxu0 0
  %3145 = vmatpush1.bf16.msra.mxu0 %v2802
  %3146 = vmatprep.subr.bf16.mxu0 0
  %3147 = vmatpush1.bf16.msra.mxu0 %v2803
  %3148 = vmatprep.subr.bf16.mxu0 0
  %3149 = vmatpush1.bf16.msra.mxu0 %v2804
  %3150 = vmatprep.subr.bf16.mxu0 0
  %3151 = vmatpush1.bf16.msra.mxu0 %v2805
  %3152 = vmatprep.subr.bf16.mxu0 0
  %3153 = vmatpush1.bf16.msra.mxu0 %v2806
  %3154 = vmatprep.mubr.bf16.mxu0 %v2218
  %3155 = vmatmul.mubr.bf16.gmra.mrb[0].mxu0 %v2217
  %v3156 = vpop.f32.mrb[0].mxu0
  %v3157 = vadd.f32 %v3116, %v3156
  %v3158 = vpop.f32.mrb[0].mxu0
  %v3159 = vpop.f32.mrb[0].mxu0
  %v3160 = vadd.f32 %v3119, %v3159
  %v3161 = vpop.f32.mrb[0].mxu0
  %3162 = vdwg.mxu0
  %3163 = vmatprep.subr.bf16.mxu0 0
  %3164 = vmatpush1.bf16.msra.mxu0 %v2807
  %3165 = vmatprep.subr.bf16.mxu0 0
  %3166 = vmatpush1.bf16.msra.mxu0 %v2808
  %3167 = vmatprep.subr.bf16.mxu0 0
  %3168 = vmatpush1.bf16.msra.mxu0 %v2809
  %3169 = vmatprep.subr.bf16.mxu0 0
  %3170 = vmatpush1.bf16.msra.mxu0 %v2810
  %3171 = vmatprep.subr.bf16.mxu0 0
  %3172 = vmatpush1.bf16.msra.mxu0 %v2811
  %3173 = vmatprep.subr.bf16.mxu0 0
  %3174 = vmatpush1.bf16.msra.mxu0 %v2812
  %3175 = vmatprep.subr.bf16.mxu0 0
  %3176 = vmatpush1.bf16.msra.mxu0 %v2813
  %3177 = vmatprep.subr.bf16.mxu0 0
  %3178 = vmatpush1.bf16.msra.mxu0 %v2814
  %3179 = vmatprep.subr.bf16.mxu0 0
  %3180 = vmatpush1.bf16.msra.mxu0 %v2815
  %3181 = vmatprep.subr.bf16.mxu0 0
  %3182 = vmatpush1.bf16.msra.mxu0 %v2816
  %3183 = vmatprep.subr.bf16.mxu0 0
  %3184 = vmatpush1.bf16.msra.mxu0 %v2817
  %3185 = vmatprep.subr.bf16.mxu0 0
  %3186 = vmatpush1.bf16.msra.mxu0 %v2818
  %3187 = vmatprep.subr.bf16.mxu0 0
  %3188 = vmatpush1.bf16.msra.mxu0 %v2819
  %3189 = vmatprep.subr.bf16.mxu0 0
  %3190 = vmatpush1.bf16.msra.mxu0 %v2820
  %3191 = vmatprep.subr.bf16.mxu0 0
  %3192 = vmatpush1.bf16.msra.mxu0 %v2821
  %3193 = vmatprep.subr.bf16.mxu0 0
  %3194 = vmatpush1.bf16.msra.mxu0 %v2822
  %3195 = vmatprep.mubr.bf16.mxu0 %v2220
  %3196 = vmatmul.mubr.bf16.gmra.mrb[0].mxu0 %v2219
  %v3197 = vpop.f32.mrb[0].mxu0
  %v3198 = vadd.f32 %v3157, %v3197
  %v3199 = vpop.f32.mrb[0].mxu0
  %v3200 = vpop.f32.mrb[0].mxu0
  %v3201 = vadd.f32 %v3160, %v3200
  %v3202 = vpop.f32.mrb[0].mxu0
  %3203 = vdwg.mxu0
  %3204 = vmatprep.subr.bf16.mxu0 0
  %3205 = vmatpush1.bf16.msra.mxu0 %v2823
  %3206 = vmatprep.subr.bf16.mxu0 0
  %3207 = vmatpush1.bf16.msra.mxu0 %v2824
  %3208 = vmatprep.subr.bf16.mxu0 0
  %3209 = vmatpush1.bf16.msra.mxu0 %v2825
  %3210 = vmatprep.subr.bf16.mxu0 0
  %3211 = vmatpush1.bf16.msra.mxu0 %v2826
  %3212 = vmatprep.subr.bf16.mxu0 0
  %3213 = vmatpush1.bf16.msra.mxu0 %v2827
  %3214 = vmatprep.subr.bf16.mxu0 0
  %3215 = vmatpush1.bf16.msra.mxu0 %v2828
  %3216 = vmatprep.subr.bf16.mxu0 0
  %3217 = vmatpush1.bf16.msra.mxu0 %v2829
  %3218 = vmatprep.subr.bf16.mxu0 0
  %3219 = vmatpush1.bf16.msra.mxu0 %v2830
  %3220 = vmatprep.subr.bf16.mxu0 0
  %3221 = vmatpush1.bf16.msra.mxu0 %v2831
  %3222 = vmatprep.subr.bf16.mxu0 0
  %3223 = vmatpush1.bf16.msra.mxu0 %v2832
  %3224 = vmatprep.subr.bf16.mxu0 0
  %3225 = vmatpush1.bf16.msra.mxu0 %v2833
  %3226 = vmatprep.subr.bf16.mxu0 0
  %3227 = vmatpush1.bf16.msra.mxu0 %v2834
  %3228 = vmatprep.subr.bf16.mxu0 0
  %3229 = vmatpush1.bf16.msra.mxu0 %v2835
  %3230 = vmatprep.subr.bf16.mxu0 0
  %3231 = vmatpush1.bf16.msra.mxu0 %v2836
  %3232 = vmatprep.subr.bf16.mxu0 0
  %3233 = vmatpush1.bf16.msra.mxu0 %v2837
  %3234 = vmatprep.subr.bf16.mxu0 0
  %3235 = vmatpush1.bf16.msra.mxu0 %v2838
  %3236 = vmatprep.mubr.bf16.mxu0 %v2222
  %3237 = vmatmul.mubr.bf16.gmra.mrb[0].mxu0 %v2221
  %v3238 = vpop.f32.mrb[0].mxu0
  %v3239 = vadd.f32 %v3198, %v3238
  %v3240 = vpop.f32.mrb[0].mxu0
  %v3241 = vpop.f32.mrb[0].mxu0
  %v3242 = vadd.f32 %v3201, %v3241
  %v3243 = vpop.f32.mrb[0].mxu0
  %3244 = vdwg.mxu0
  %3245 = vmatprep.subr.bf16.mxu0 0
  %3246 = vmatpush1.bf16.msra.mxu0 %v2839
  %3247 = vmatprep.subr.bf16.mxu0 0
  %3248 = vmatpush1.bf16.msra.mxu0 %v2840
  %3249 = vmatprep.subr.bf16.mxu0 0
  %3250 = vmatpush1.bf16.msra.mxu0 %v2841
  %3251 = vmatprep.subr.bf16.mxu0 0
  %3252 = vmatpush1.bf16.msra.mxu0 %v2842
  %3253 = vmatprep.subr.bf16.mxu0 0
  %3254 = vmatpush1.bf16.msra.mxu0 %v2843
  %3255 = vmatprep.subr.bf16.mxu0 0
  %3256 = vmatpush1.bf16.msra.mxu0 %v2844
  %3257 = vmatprep.subr.bf16.mxu0 0
  %3258 = vmatpush1.bf16.msra.mxu0 %v2845
  %3259 = vmatprep.subr.bf16.mxu0 0
  %3260 = vmatpush1.bf16.msra.mxu0 %v2846
  %3261 = vmatprep.subr.bf16.mxu0 0
  %3262 = vmatpush1.bf16.msra.mxu0 %v2847
  %3263 = vmatprep.subr.bf16.mxu0 0
  %3264 = vmatpush1.bf16.msra.mxu0 %v2848
  %3265 = vmatprep.subr.bf16.mxu0 0
  %3266 = vmatpush1.bf16.msra.mxu0 %v2849
  %3267 = vmatprep.subr.bf16.mxu0 0
  %3268 = vmatpush1.bf16.msra.mxu0 %v2850
  %3269 = vmatprep.subr.bf16.mxu0 0
  %3270 = vmatpush1.bf16.msra.mxu0 %v2851
  %3271 = vmatprep.subr.bf16.mxu0 0
  %3272 = vmatpush1.bf16.msra.mxu0 %v2852
  %3273 = vmatprep.subr.bf16.mxu0 0
  %3274 = vmatpush1.bf16.msra.mxu0 %v2853
  %3275 = vmatprep.subr.bf16.mxu0 0
  %3276 = vmatpush1.bf16.msra.mxu0 %v2854
  %3277 = vmatprep.mubr.bf16.mxu0 %v2224
  %3278 = vmatmul.mubr.bf16.gmra.mrb[0].mxu0 %v2223
  %v3279 = vpop.f32.mrb[0].mxu0
  %v3280 = vadd.f32 %v3239, %v3279
  %v3281 = vpop.f32.mrb[0].mxu0
  %v3282 = vpop.f32.mrb[0].mxu0
  %v3283 = vadd.f32 %v3242, %v3282
  %v3284 = vpop.f32.mrb[0].mxu0
  %3285 = vdwg.mxu0
  %3286 = vmatprep.subr.bf16.mxu0 0
  %3287 = vmatpush1.bf16.msra.mxu0 %v2855
  %3288 = vmatprep.subr.bf16.mxu0 0
  %3289 = vmatpush1.bf16.msra.mxu0 %v2856
  %3290 = vmatprep.subr.bf16.mxu0 0
  %3291 = vmatpush1.bf16.msra.mxu0 %v2857
  %3292 = vmatprep.subr.bf16.mxu0 0
  %3293 = vmatpush1.bf16.msra.mxu0 %v2858
  %3294 = vmatprep.subr.bf16.mxu0 0
  %3295 = vmatpush1.bf16.msra.mxu0 %v2859
  %3296 = vmatprep.subr.bf16.mxu0 0
  %3297 = vmatpush1.bf16.msra.mxu0 %v2860
  %3298 = vmatprep.subr.bf16.mxu0 0
  %3299 = vmatpush1.bf16.msra.mxu0 %v2861
  %3300 = vmatprep.subr.bf16.mxu0 0
  %3301 = vmatpush1.bf16.msra.mxu0 %v2862
  %3302 = vmatprep.subr.bf16.mxu0 0
  %3303 = vmatpush1.bf16.msra.mxu0 %v2863
  %3304 = vmatprep.subr.bf16.mxu0 0
  %3305 = vmatpush1.bf16.msra.mxu0 %v2864
  %3306 = vmatprep.subr.bf16.mxu0 0
  %3307 = vmatpush1.bf16.msra.mxu0 %v2865
  %3308 = vmatprep.subr.bf16.mxu0 0
  %3309 = vmatpush1.bf16.msra.mxu0 %v2866
  %3310 = vmatprep.subr.bf16.mxu0 0
  %3311 = vmatpush1.bf16.msra.mxu0 %v2867
  %3312 = vmatprep.subr.bf16.mxu0 0
  %3313 = vmatpush1.bf16.msra.mxu0 %v2868
  %3314 = vmatprep.subr.bf16.mxu0 0
  %3315 = vmatpush1.bf16.msra.mxu0 %v2869
  %3316 = vmatprep.subr.bf16.mxu0 0
  %3317 = vmatpush1.bf16.msra.mxu0 %v2870
  %3318 = vmatprep.mubr.bf16.mxu0 %v2226
  %3319 = vmatmul.mubr.bf16.gmra.mrb[0].mxu0 %v2225
  %v3320 = vpop.f32.mrb[0].mxu0
  %v3321 = vadd.f32 %v3280, %v3320
  %v3322 = vpop.f32.mrb[0].mxu0
  %v3323 = vpop.f32.mrb[0].mxu0
  %v3324 = vadd.f32 %v3283, %v3323
  %v3325 = vpop.f32.mrb[0].mxu0
  %3326 = vdwg.mxu0
  %v3327 = vadd.f32 %v1296, %v3321
  %v3328 = vadd.f32 %v1297, %v3324
  %v3329 = vsel %vm130, %v3327, 0.0
  %3330 = vadd.xlane.f32.xlu0 %v3329
  %v3331 = vpop.xlane.xlu0 %3330
  %v3332 = vsel %vm130, %v3328, 0.0
  %3333 = vadd.xlane.f32.xlu0 %v3332
  %v3334 = vpop.xlane.xlu0 %3333
  %v3335 = vmul.f32 %v3331, %v629
  %v3336 = vmul.f32 %v3334, %v629
  %v3337 = vsub.f32 %v3327, %v3335
  %v3338 = vsub.f32 %v3328, %v3336
  %v3339 = vmul.f32 %v3337, %v3337
  %v3340 = vmul.f32 %v3338, %v3338
  %v3341 = vsel %vm130, %v3339, 0.0
  %3342 = vadd.xlane.f32.xlu0 %v3341
  %v3343 = vpop.xlane.xlu0 %3342
  %v3344 = vsel %vm130, %v3340, 0.0
  %3345 = vadd.xlane.f32.xlu0 %v3344
  %v3346 = vpop.xlane.xlu0 %3345
  %v3347 = vmul.f32 %v3343, %v629
  %v3348 = vmul.f32 %v3346, %v629
  %v3349 = vadd.f32 %v3347, 1e-05
  %v3350 = vadd.f32 %v3348, 1e-05
  %v3351 = vrsqrt.pop %v3349
  %v3352 = vrsqrt.pop %v3350
  %v3353 = vmul.f32 %v3337, %v3351
  %v3354 = vmul.f32 %v3338, %v3352
  %v3355 = vlaneseq
  %v3356 = vshrl.u32 %v3355, 7
  %v3357 = vsub.s32 7, %v3356
  %v3358 = vrot.slane %v98, %v3357
  %v3359 = vmul.f32 %v3353, %v3358
  %v3360 = vmul.f32 %v3354, %v3358
  %v3361 = vlaneseq
  %v3362 = vshrl.u32 %v3361, 7
  %v3363 = vsub.s32 0, %v3362
  %v3364 = vrot.slane %v99, %v3363
  %v3365 = vadd.f32 %v3359, %v3364
  %v3366 = vadd.f32 %v3360, %v3364
  %s3367 = scalar_lea.vmem %s10, 16
  %v3368 = vld [vmem:[%s3367] sm:$0xff]
  %v3369 = vld [vmem:[%s3367 + $0x8] sm:$0xff]
  %s3370 = scalar_lea.vmem %s9, 32
  %v3371 = vld [vmem:[%s3370] sm:$0xf]
  %v3372 = vld [vmem:[%s3370 + $0x4] sm:$0xf]
  %v3373 = vld [vmem:[%s3370 + $0x8] sm:$0xf]
  %v3374 = vld [vmem:[%s3370 + $0xc] sm:$0xf]
  %v3375 = vld [vmem:[%s3370 + $0x10] sm:$0xf]
  %v3376 = vld [vmem:[%s3370 + $0x14] sm:$0xf]
  %v3377 = vld [vmem:[%s3370 + $0x18] sm:$0xf]
  %v3378 = vld [vmem:[%s3370 + $0x1c] sm:$0xf]
  %s3379 = scalar_lea.vmem %s4, 16
  %v3380 = vld [vmem:[%s3379] sm:$0xf]
  %v3381 = vld [vmem:[%s3379 + $0x4] sm:$0xf]
  %v3382 = vld [vmem:[%s3379 + $0x8] sm:$0xf]
  %v3383 = vld [vmem:[%s3379 + $0xc] sm:$0xf]
  %v3384 = vpack.c.bf16 %v3366, %v3365
  %v3385 = vld [vmem:[%s5 + $0x1] sm:$0x1]
  %v3386 = vlaneseq
  %v3387 = vshrl.u32 %v3386, 7
  %v3388 = vsub.s32 0, %v3387
  %v3389 = vrot.slane %v3385, %v3388
  %v3394 = vunpack.c.l.b16 %v3380
  %v3395 = vunpack.c.l.b16 %v3381
  %v3396 = vunpack.c.l.b16 %v3382
  %v3397 = vunpack.c.l.b16 %v3383
  %v3398 = vpack.c.b16 %v3395, %v3394
  %v3399 = vpack.c.b16 %v3397, %v3396
  %v3403 = vsel %vm130, %v3384, 0
  %3405 = vmatprep.subr.bf16.mxu0 0
  %3406 = vmatpush1.bf16.msra.mxu0 %v3398
  %3407 = vmatprep.subr.bf16.mxu0 0
  %3408 = vmatpush1.bf16.msra.mxu0 %v3399
  %3409 = vmatprep.subr.bf16.mxu0 0
  %3410 = vmatpush1.bf16.msra.mxu0 0
  %3411 = vmatprep.subr.bf16.mxu0 0
  %3412 = vmatpush1.bf16.msra.mxu0 0
  %3413 = vmatprep.subr.bf16.mxu0 0
  %3414 = vmatpush1.bf16.msra.mxu0 0
  %3415 = vmatprep.subr.bf16.mxu0 0
  %3416 = vmatpush1.bf16.msra.mxu0 0
  %3417 = vmatprep.subr.bf16.mxu0 0
  %3418 = vmatpush1.bf16.msra.mxu0 0
  %3419 = vmatprep.subr.bf16.mxu0 0
  %3420 = vmatpush1.bf16.msra.mxu0 0
  %3421 = vmatprep.subr.bf16.mxu0 0
  %3422 = vmatpush1.bf16.msra.mxu0 0
  %3423 = vmatprep.subr.bf16.mxu0 0
  %3424 = vmatpush1.bf16.msra.mxu0 0
  %3425 = vmatprep.subr.bf16.mxu0 0
  %3426 = vmatpush1.bf16.msra.mxu0 0
  %3427 = vmatprep.subr.bf16.mxu0 0
  %3428 = vmatpush1.bf16.msra.mxu0 0
  %3429 = vmatprep.subr.bf16.mxu0 0
  %3430 = vmatpush1.bf16.msra.mxu0 0
  %3431 = vmatprep.subr.bf16.mxu0 0
  %3432 = vmatpush1.bf16.msra.mxu0 0
  %3433 = vmatprep.subr.bf16.mxu0 0
  %3434 = vmatpush1.bf16.msra.mxu0 0
  %3435 = vmatprep.subr.bf16.mxu0 0
  %3436 = vmatpush1.bf16.msra.mxu0 0
  %3437 = vmatprep.mubr.bf16.mxu0 0
  %3438 = vmatmul.mubr.bf16.gmra.mrb[0].mxu0 %v3403
  %v3439 = vpop.f32.mrb[0].mxu0
  %v3440 = vadd.f32 %v3389, %v3439
  %v3441 = vpop.f32.mrb[0].mxu0
  %v3442 = vpop.f32.mrb[0].mxu0
  %v3443 = vadd.f32 %v3389, %v3442
  %v3444 = vpop.f32.mrb[0].mxu0
  %3445 = vdwg.mxu0
  %v3446 = vmul.f32 %v3440, %v82
  %v3447 = vmul.f32 %v3443, %v82
  %v3448 = vmul.f32 %v3440, %v87
  %v3449 = vmul.f32 %v3443, %v87
  %v3450 = vmul.f32 %v3440, %v92
  %v3451 = vmul.f32 %v3443, %v92
  %v3452 = vmul.f32 %v3440, %v97
  %v3453 = vmul.f32 %v3443, %v97
  %3456 = vrot.lane.b32.xlu0 %v3440, 96
  %v3457 = vpop.permute.xlu0 %3456
  %3458 = vrot.lane.b32.xlu0 %v3443, 96
  %v3459 = vpop.permute.xlu0 %3458
  %v3461 = vsel %vm130, %v3446, 0
  %v3464 = vsel %vm130, %v3447, 0
  %v3467 = vsel %vm130, %v3448, 0
  %v3470 = vsel %vm130, %v3449, 0
  %v3473 = vsel %vm130, %v3450, 0
  %v3476 = vsel %vm130, %v3451, 0
  %v3479 = vsel %vm130, %v3452, 0
  %v3482 = vsel %vm130, %v3453, 0
  %v3484 = vsel %vm130, %v3457, 0
  %v3486 = vsel %vm130, %v3459, 0
  %3488 = vmatprep.subr.mxu0 0.0
  %3489 = vmatpush1.xpose.msra.mxu0 %v3484
  %3490 = vmatprep.subr.mxu0 0.0
  %3491 = vmatpush1.xpose.msra.mxu0 %v3486
  %3492 = vmatprep.subr.mxu0 0.0
  %3493 = vmatpush1.xpose.msra.mxu0 0.0
  %3494 = vmatprep.subr.mxu0 0.0
  %3495 = vmatpush1.xpose.msra.mxu0 0.0
  %3496 = vmatprep.subr.mxu0 0.0
  %3497 = vmatpush1.xpose.msra.mxu0 0.0
  %3498 = vmatprep.subr.mxu0 0.0
  %3499 = vmatpush1.xpose.msra.mxu0 0.0
  %3500 = vmatprep.subr.mxu0 0.0
  %3501 = vmatpush1.xpose.msra.mxu0 0.0
  %3502 = vmatprep.subr.mxu0 0.0
  %3503 = vmatpush1.xpose.msra.mxu0 0.0
  %3504 = vmatprep.subr.mxu0 0.0
  %3505 = vmatpush1.xpose.msra.mxu0 0.0
  %3506 = vmatprep.subr.mxu0 0.0
  %3507 = vmatpush1.xpose.msra.mxu0 0.0
  %3508 = vmatprep.subr.mxu0 0.0
  %3509 = vmatpush1.xpose.msra.mxu0 0.0
  %3510 = vmatprep.subr.mxu0 0.0
  %3511 = vmatpush1.xpose.msra.mxu0 0.0
  %3512 = vmatprep.subr.mxu0 0.0
  %3513 = vmatpush1.xpose.msra.mxu0 0.0
  %3514 = vmatprep.subr.mxu0 0.0
  %3515 = vmatpush1.xpose.msra.mxu0 0.0
  %3516 = vmatprep.subr.mxu0 0.0
  %3517 = vmatpush1.xpose.msra.mxu0 0.0
  %3518 = vmatprep.subr.mxu0 0.0
  %3519 = vmatpush1.xpose.msra.mxu0 0.0
  %3520 = vmatprep.subr.mxu0 0.0
  %3521 = vmatpush1.xpose.msra.mxu0 0.0
  %3522 = vmatprep.subr.mxu0 0.0
  %3523 = vmatpush1.xpose.msra.mxu0 0.0
  %3524 = vmatprep.subr.mxu0 0.0
  %3525 = vmatpush1.xpose.msra.mxu0 0.0
  %3526 = vmatprep.subr.mxu0 0.0
  %3527 = vmatpush1.xpose.msra.mxu0 0.0
  %3528 = vmatprep.subr.mxu0 0.0
  %3529 = vmatpush1.xpose.msra.mxu0 0.0
  %3530 = vmatprep.subr.mxu0 0.0
  %3531 = vmatpush1.xpose.msra.mxu0 0.0
  %3532 = vmatprep.subr.mxu0 0.0
  %3533 = vmatpush1.xpose.msra.mxu0 0.0
  %3534 = vmatprep.subr.mxu0 0.0
  %3535 = vmatpush1.xpose.msra.mxu0 0.0
  %3536 = vmatprep.subr.mxu0 0.0
  %3537 = vmatpush1.xpose.msra.mxu0 0.0
  %3538 = vmatprep.subr.mxu0 0.0
  %3539 = vmatpush1.xpose.msra.mxu0 0.0
  %3540 = vmatprep.subr.mxu0 0.0
  %3541 = vmatpush1.xpose.msra.mxu0 0.0
  %3542 = vmatprep.subr.mxu0 0.0
  %3543 = vmatpush1.xpose.msra.mxu0 0.0
  %3544 = vmatprep.subr.mxu0 0.0
  %3545 = vmatpush1.xpose.msra.mxu0 0.0
  %3546 = vmatprep.subr.mxu0 0.0
  %3547 = vmatpush1.xpose.msra.mxu0 0.0
  %3548 = vmatprep.subr.mxu0 0.0
  %3549 = vmatpush1.xpose.msra.mxu0 0.0
  %3550 = vmatprep.subr.mxu0 0.0
  %3551 = vmatpush1.xpose.msra.mxu0 0.0
  %3552 = vmatprep.mubr.f32.mxu0 0.0
  %3553 = vmatmul.mubr.f32.gmra.mrb[0].mxu0 %v3461
  %v3554 = vpop.f32.mrb[0].mxu0
  %v3555 = vadd.f32 %v60, %v3554
  %v3556 = vpop.f32.mrb[0].mxu0
  %3557 = vmatprep.mubr.f32.mxu0 0.0
  %3558 = vmatmul.mubr.f32.gmra.mrb[0].mxu0 %v3464
  %v3559 = vpop.f32.mrb[0].mxu0
  %v3560 = vadd.f32 %v61, %v3559
  %v3561 = vpop.f32.mrb[0].mxu0
  %3562 = vmatprep.mubr.f32.mxu0 0.0
  %3563 = vmatmul.mubr.f32.gmra.mrb[0].mxu0 %v3467
  %v3564 = vpop.f32.mrb[0].mxu0
  %v3565 = vadd.f32 %v62, %v3564
  %v3566 = vpop.f32.mrb[0].mxu0
  %3567 = vmatprep.mubr.f32.mxu0 0.0
  %3568 = vmatmul.mubr.f32.gmra.mrb[0].mxu0 %v3470
  %v3569 = vpop.f32.mrb[0].mxu0
  %v3570 = vadd.f32 %v63, %v3569
  %v3571 = vpop.f32.mrb[0].mxu0
  %3572 = vmatprep.mubr.f32.mxu0 0.0
  %3573 = vmatmul.mubr.f32.gmra.mrb[0].mxu0 %v3473
  %v3574 = vpop.f32.mrb[0].mxu0
  %v3575 = vadd.f32 %v64, %v3574
  %v3576 = vpop.f32.mrb[0].mxu0
  %3577 = vmatprep.mubr.f32.mxu0 0.0
  %3578 = vmatmul.mubr.f32.gmra.mrb[0].mxu0 %v3476
  %v3579 = vpop.f32.mrb[0].mxu0
  %v3580 = vadd.f32 %v65, %v3579
  %v3581 = vpop.f32.mrb[0].mxu0
  %3582 = vmatprep.mubr.f32.mxu0 0.0
  %3583 = vmatmul.mubr.f32.gmra.mrb[0].mxu0 %v3479
  %v3584 = vpop.f32.mrb[0].mxu0
  %v3585 = vadd.f32 %v66, %v3584
  %v3586 = vpop.f32.mrb[0].mxu0
  %3587 = vmatprep.mubr.f32.mxu0 0.0
  %3588 = vmatmul.mubr.f32.gmra.mrb[0].mxu0 %v3482
  %v3589 = vpop.f32.mrb[0].mxu0
  %v3590 = vadd.f32 %v67, %v3589
  %v3591 = vpop.f32.mrb[0].mxu0
  %3592 = vdwg.mxu0
  %v3593 = vsel %vm322, %v3555, -inf
  %3594 = vmax.xlane.f32.xlu0 %v3593
  %v3595 = vpop.xlane.xlu0 %3594
  %v3596 = vsel %vm322, %v3560, -inf
  %3597 = vmax.xlane.f32.xlu0 %v3596
  %v3598 = vpop.xlane.xlu0 %3597
  %v3599 = vsel %vm322, %v3565, -inf
  %3600 = vmax.xlane.f32.xlu0 %v3599
  %v3601 = vpop.xlane.xlu0 %3600
  %v3602 = vsel %vm322, %v3570, -inf
  %3603 = vmax.xlane.f32.xlu0 %v3602
  %v3604 = vpop.xlane.xlu0 %3603
  %v3605 = vsel %vm322, %v3575, -inf
  %3606 = vmax.xlane.f32.xlu0 %v3605
  %v3607 = vpop.xlane.xlu0 %3606
  %v3608 = vsel %vm322, %v3580, -inf
  %3609 = vmax.xlane.f32.xlu0 %v3608
  %v3610 = vpop.xlane.xlu0 %3609
  %v3611 = vsel %vm322, %v3585, -inf
  %3612 = vmax.xlane.f32.xlu0 %v3611
  %v3613 = vpop.xlane.xlu0 %3612
  %v3614 = vsel %vm322, %v3590, -inf
  %3615 = vmax.xlane.f32.xlu0 %v3614
  %v3616 = vpop.xlane.xlu0 %3615
  %v3617 = vsub.f32 %v3555, %v3595
  %v3618 = vsub.f32 %v3560, %v3598
  %v3619 = vsub.f32 %v3565, %v3601
  %v3620 = vsub.f32 %v3570, %v3604
  %v3621 = vsub.f32 %v3575, %v3607
  %v3622 = vsub.f32 %v3580, %v3610
  %v3623 = vsub.f32 %v3585, %v3613
  %v3624 = vsub.f32 %v3590, %v3616
  %v3625 = vmul.f32 %v3617, 1.442695
  %v3626 = vpow.pop %v3625
  %v3627 = vmul.f32 %v3618, 1.442695
  %v3628 = vpow.pop %v3627
  %v3629 = vmul.f32 %v3619, 1.442695
  %v3630 = vpow.pop %v3629
  %v3631 = vmul.f32 %v3620, 1.442695
  %v3632 = vpow.pop %v3631
  %v3633 = vmul.f32 %v3621, 1.442695
  %v3634 = vpow.pop %v3633
  %v3635 = vmul.f32 %v3622, 1.442695
  %v3636 = vpow.pop %v3635
  %v3637 = vmul.f32 %v3623, 1.442695
  %v3638 = vpow.pop %v3637
  %v3639 = vmul.f32 %v3624, 1.442695
  %v3640 = vpow.pop %v3639
  %v3641 = vsel %vm322, %v3626, 0.0
  %3642 = vadd.xlane.f32.xlu0 %v3641
  %v3643 = vpop.xlane.xlu0 %3642
  %v3644 = vsel %vm322, %v3628, 0.0
  %3645 = vadd.xlane.f32.xlu0 %v3644
  %v3646 = vpop.xlane.xlu0 %3645
  %v3647 = vsel %vm322, %v3630, 0.0
  %3648 = vadd.xlane.f32.xlu0 %v3647
  %v3649 = vpop.xlane.xlu0 %3648
  %v3650 = vsel %vm322, %v3632, 0.0
  %3651 = vadd.xlane.f32.xlu0 %v3650
  %v3652 = vpop.xlane.xlu0 %3651
  %v3653 = vsel %vm322, %v3634, 0.0
  %3654 = vadd.xlane.f32.xlu0 %v3653
  %v3655 = vpop.xlane.xlu0 %3654
  %v3656 = vsel %vm322, %v3636, 0.0
  %3657 = vadd.xlane.f32.xlu0 %v3656
  %v3658 = vpop.xlane.xlu0 %3657
  %v3659 = vsel %vm322, %v3638, 0.0
  %3660 = vadd.xlane.f32.xlu0 %v3659
  %v3661 = vpop.xlane.xlu0 %3660
  %v3662 = vsel %vm322, %v3640, 0.0
  %3663 = vadd.xlane.f32.xlu0 %v3662
  %v3664 = vpop.xlane.xlu0 %3663
  %3665 = vrot.lane.b32.xlu0 %v3440, 64
  %v3666 = vpop.permute.xlu0 %3665
  %3667 = vrot.lane.b32.xlu0 %v3443, 64
  %v3668 = vpop.permute.xlu0 %3667
  %v3672 = vsel %vm322, %v3626, 0
  %v3675 = vsel %vm322, %v3628, 0
  %v3678 = vsel %vm322, %v3630, 0
  %v3681 = vsel %vm322, %v3632, 0
  %v3684 = vsel %vm322, %v3634, 0
  %v3687 = vsel %vm322, %v3636, 0
  %v3690 = vsel %vm322, %v3638, 0
  %v3693 = vsel %vm322, %v3640, 0
  %3695 = vmatprep.subr.mxu0 0.0
  %3696 = vmatpush1.msra.mxu0 %v3666
  %3697 = vmatprep.subr.mxu0 0.0
  %3698 = vmatpush1.msra.mxu0 %v3668
  %3699 = vmatprep.subr.mxu0 0.0
  %3700 = vmatpush1.msra.mxu0 0.0
  %3701 = vmatprep.subr.mxu0 0.0
  %3702 = vmatpush1.msra.mxu0 0.0
  %3703 = vmatprep.subr.mxu0 0.0
  %3704 = vmatpush1.msra.mxu0 0.0
  %3705 = vmatprep.subr.mxu0 0.0
  %3706 = vmatpush1.msra.mxu0 0.0
  %3707 = vmatprep.subr.mxu0 0.0
  %3708 = vmatpush1.msra.mxu0 0.0
  %3709 = vmatprep.subr.mxu0 0.0
  %3710 = vmatpush1.msra.mxu0 0.0
  %3711 = vmatprep.subr.mxu0 0.0
  %3712 = vmatpush1.msra.mxu0 0.0
  %3713 = vmatprep.subr.mxu0 0.0
  %3714 = vmatpush1.msra.mxu0 0.0
  %3715 = vmatprep.subr.mxu0 0.0
  %3716 = vmatpush1.msra.mxu0 0.0
  %3717 = vmatprep.subr.mxu0 0.0
  %3718 = vmatpush1.msra.mxu0 0.0
  %3719 = vmatprep.subr.mxu0 0.0
  %3720 = vmatpush1.msra.mxu0 0.0
  %3721 = vmatprep.subr.mxu0 0.0
  %3722 = vmatpush1.msra.mxu0 0.0
  %3723 = vmatprep.subr.mxu0 0.0
  %3724 = vmatpush1.msra.mxu0 0.0
  %3725 = vmatprep.subr.mxu0 0.0
  %3726 = vmatpush1.msra.mxu0 0.0
  %3727 = vmatprep.subr.mxu0 0.0
  %3728 = vmatpush1.msra.mxu0 0.0
  %3729 = vmatprep.subr.mxu0 0.0
  %3730 = vmatpush1.msra.mxu0 0.0
  %3731 = vmatprep.subr.mxu0 0.0
  %3732 = vmatpush1.msra.mxu0 0.0
  %3733 = vmatprep.subr.mxu0 0.0
  %3734 = vmatpush1.msra.mxu0 0.0
  %3735 = vmatprep.subr.mxu0 0.0
  %3736 = vmatpush1.msra.mxu0 0.0
  %3737 = vmatprep.subr.mxu0 0.0
  %3738 = vmatpush1.msra.mxu0 0.0
  %3739 = vmatprep.subr.mxu0 0.0
  %3740 = vmatpush1.msra.mxu0 0.0
  %3741 = vmatprep.subr.mxu0 0.0
  %3742 = vmatpush1.msra.mxu0 0.0
  %3743 = vmatprep.subr.mxu0 0.0
  %3744 = vmatpush1.msra.mxu0 0.0
  %3745 = vmatprep.subr.mxu0 0.0
  %3746 = vmatpush1.msra.mxu0 0.0
  %3747 = vmatprep.subr.mxu0 0.0
  %3748 = vmatpush1.msra.mxu0 0.0
  %3749 = vmatprep.subr.mxu0 0.0
  %3750 = vmatpush1.msra.mxu0 0.0
  %3751 = vmatprep.subr.mxu0 0.0
  %3752 = vmatpush1.msra.mxu0 0.0
  %3753 = vmatprep.subr.mxu0 0.0
  %3754 = vmatpush1.msra.mxu0 0.0
  %3755 = vmatprep.subr.mxu0 0.0
  %3756 = vmatpush1.msra.mxu0 0.0
  %3757 = vmatprep.subr.mxu0 0.0
  %3758 = vmatpush1.msra.mxu0 0.0
  %3759 = vmatprep.mubr.f32.mxu0 0.0
  %3760 = vmatmul.mubr.f32.gmra.mrb[0].mxu0 %v3672
  %v3761 = vpop.f32.mrb[0].mxu0
  %v3762 = vadd.f32 0.0, %v3761
  %v3763 = vpop.f32.mrb[0].mxu0
  %3764 = vmatprep.mubr.f32.mxu0 0.0
  %3765 = vmatmul.mubr.f32.gmra.mrb[0].mxu0 %v3675
  %v3766 = vpop.f32.mrb[0].mxu0
  %v3767 = vadd.f32 0.0, %v3766
  %v3768 = vpop.f32.mrb[0].mxu0
  %3769 = vmatprep.mubr.f32.mxu0 0.0
  %3770 = vmatmul.mubr.f32.gmra.mrb[0].mxu0 %v3678
  %v3771 = vpop.f32.mrb[0].mxu0
  %v3772 = vadd.f32 0.0, %v3771
  %v3773 = vpop.f32.mrb[0].mxu0
  %3774 = vmatprep.mubr.f32.mxu0 0.0
  %3775 = vmatmul.mubr.f32.gmra.mrb[0].mxu0 %v3681
  %v3776 = vpop.f32.mrb[0].mxu0
  %v3777 = vadd.f32 0.0, %v3776
  %v3778 = vpop.f32.mrb[0].mxu0
  %3779 = vmatprep.mubr.f32.mxu0 0.0
  %3780 = vmatmul.mubr.f32.gmra.mrb[0].mxu0 %v3684
  %v3781 = vpop.f32.mrb[0].mxu0
  %v3782 = vadd.f32 0.0, %v3781
  %v3783 = vpop.f32.mrb[0].mxu0
  %3784 = vmatprep.mubr.f32.mxu0 0.0
  %3785 = vmatmul.mubr.f32.gmra.mrb[0].mxu0 %v3687
  %v3786 = vpop.f32.mrb[0].mxu0
  %v3787 = vadd.f32 0.0, %v3786
  %v3788 = vpop.f32.mrb[0].mxu0
  %3789 = vmatprep.mubr.f32.mxu0 0.0
  %3790 = vmatmul.mubr.f32.gmra.mrb[0].mxu0 %v3690
  %v3791 = vpop.f32.mrb[0].mxu0
  %v3792 = vadd.f32 0.0, %v3791
  %v3793 = vpop.f32.mrb[0].mxu0
  %3794 = vmatprep.mubr.f32.mxu0 0.0
  %3795 = vmatmul.mubr.f32.gmra.mrb[0].mxu0 %v3693
  %v3796 = vpop.f32.mrb[0].mxu0
  %v3797 = vadd.f32 0.0, %v3796
  %v3798 = vpop.f32.mrb[0].mxu0
  %3799 = vdwg.mxu0
  %v3800 = vrcp.pop %v3643
  %v3801 = vrcp.pop %v3646
  %v3802 = vrcp.pop %v3649
  %v3803 = vrcp.pop %v3652
  %v3804 = vrcp.pop %v3655
  %v3805 = vrcp.pop %v3658
  %v3806 = vrcp.pop %v3661
  %v3807 = vrcp.pop %v3664
  %v3808 = vmul.f32 %v3762, %v3800
  %v3809 = vmul.f32 %v3767, %v3801
  %v3810 = vmul.f32 %v3772, %v3802
  %v3811 = vmul.f32 %v3777, %v3803
  %v3812 = vmul.f32 %v3782, %v3804
  %v3813 = vmul.f32 %v3787, %v3805
  %v3814 = vmul.f32 %v3792, %v3806
  %v3815 = vmul.f32 %v3797, %v3807
  %v3816 = vmul.f32 %v3808, %v82
  %v3817 = vmul.f32 %v3809, %v82
  %v3818 = vmul.f32 %v3810, %v87
  %v3819 = vmul.f32 %v3811, %v87
  %v3820 = vadd.f32 %v3816, %v3818
  %v3821 = vadd.f32 %v3817, %v3819
  %v3822 = vmul.f32 %v3812, %v92
  %v3823 = vmul.f32 %v3813, %v92
  %v3824 = vadd.f32 %v3820, %v3822
  %v3825 = vadd.f32 %v3821, %v3823
  %v3826 = vmul.f32 %v3814, %v97
  %v3827 = vmul.f32 %v3815, %v97
  %v3828 = vadd.f32 %v3824, %v3826
  %v3829 = vadd.f32 %v3825, %v3827
  %v3830 = vpack.c.bf16 %v3829, %v3828
  %v3831 = vlaneseq
  %v3832 = vshrl.u32 %v3831, 7
  %v3833 = vsub.s32 1, %v3832
  %v3834 = vrot.slane %v3368, %v3833
  %v3839 = vunpack.c.l.b16 %v3371
  %v3840 = vunpack.c.l.b16 %v3372
  %v3841 = vunpack.c.l.b16 %v3373
  %v3842 = vunpack.c.l.b16 %v3374
  %v3843 = vpack.c.b16 %v3840, %v3839
  %v3844 = vpack.c.b16 %v3842, %v3841
  %v3848 = vsel %vm130, %v3830, 0
  %3850 = vmatprep.subr.bf16.mxu0 0
  %3851 = vmatpush1.bf16.msra.mxu0 %v3843
  %3852 = vmatprep.subr.bf16.mxu0 0
  %3853 = vmatpush1.bf16.msra.mxu0 %v3844
  %3854 = vmatprep.subr.bf16.mxu0 0
  %3855 = vmatpush1.bf16.msra.mxu0 0
  %3856 = vmatprep.subr.bf16.mxu0 0
  %3857 = vmatpush1.bf16.msra.mxu0 0
  %3858 = vmatprep.subr.bf16.mxu0 0
  %3859 = vmatpush1.bf16.msra.mxu0 0
  %3860 = vmatprep.subr.bf16.mxu0 0
  %3861 = vmatpush1.bf16.msra.mxu0 0
  %3862 = vmatprep.subr.bf16.mxu0 0
  %3863 = vmatpush1.bf16.msra.mxu0 0
  %3864 = vmatprep.subr.bf16.mxu0 0
  %3865 = vmatpush1.bf16.msra.mxu0 0
  %3866 = vmatprep.subr.bf16.mxu0 0
  %3867 = vmatpush1.bf16.msra.mxu0 0
  %3868 = vmatprep.subr.bf16.mxu0 0
  %3869 = vmatpush1.bf16.msra.mxu0 0
  %3870 = vmatprep.subr.bf16.mxu0 0
  %3871 = vmatpush1.bf16.msra.mxu0 0
  %3872 = vmatprep.subr.bf16.mxu0 0
  %3873 = vmatpush1.bf16.msra.mxu0 0
  %3874 = vmatprep.subr.bf16.mxu0 0
  %3875 = vmatpush1.bf16.msra.mxu0 0
  %3876 = vmatprep.subr.bf16.mxu0 0
  %3877 = vmatpush1.bf16.msra.mxu0 0
  %3878 = vmatprep.subr.bf16.mxu0 0
  %3879 = vmatpush1.bf16.msra.mxu0 0
  %3880 = vmatprep.subr.bf16.mxu0 0
  %3881 = vmatpush1.bf16.msra.mxu0 0
  %3882 = vmatprep.mubr.bf16.mxu0 0
  %3883 = vmatmul.mubr.bf16.gmra.mrb[0].mxu0 %v3848
  %v3884 = vpop.f32.mrb[0].mxu0
  %v3885 = vadd.f32 %v3834, %v3884
  %v3886 = vpop.f32.mrb[0].mxu0
  %v3887 = vpop.f32.mrb[0].mxu0
  %v3888 = vadd.f32 %v3834, %v3887
  %v3889 = vpop.f32.mrb[0].mxu0
  %3890 = vdwg.mxu0
  %v3891 = vadd.f32 %v3365, %v3885
  %v3892 = vadd.f32 %v3366, %v3888
  %v3893 = vsel %vm130, %v3891, 0.0
  %3894 = vadd.xlane.f32.xlu0 %v3893
  %v3895 = vpop.xlane.xlu0 %3894
  %v3896 = vsel %vm130, %v3892, 0.0
  %3897 = vadd.xlane.f32.xlu0 %v3896
  %v3898 = vpop.xlane.xlu0 %3897
  %v3899 = vmul.f32 %v3895, %v629
  %v3900 = vmul.f32 %v3898, %v629
  %v3901 = vsub.f32 %v3891, %v3899
  %v3902 = vsub.f32 %v3892, %v3900
  %v3903 = vmul.f32 %v3901, %v3901
  %v3904 = vmul.f32 %v3902, %v3902
  %v3905 = vsel %vm130, %v3903, 0.0
  %3906 = vadd.xlane.f32.xlu0 %v3905
  %v3907 = vpop.xlane.xlu0 %3906
  %v3908 = vsel %vm130, %v3904, 0.0
  %3909 = vadd.xlane.f32.xlu0 %v3908
  %v3910 = vpop.xlane.xlu0 %3909
  %v3911 = vmul.f32 %v3907, %v629
  %v3912 = vmul.f32 %v3910, %v629
  %v3913 = vadd.f32 %v3911, 1e-05
  %v3914 = vadd.f32 %v3912, 1e-05
  %v3915 = vrsqrt.pop %v3913
  %v3916 = vrsqrt.pop %v3914
  %v3917 = vmul.f32 %v3901, %v3915
  %v3918 = vmul.f32 %v3902, %v3916
  %v3919 = vlaneseq
  %v3920 = vshrl.u32 %v3919, 7
  %v3921 = vsub.s32 3, %v3920
  %v3922 = vrot.slane %v3368, %v3921
  %v3923 = vmul.f32 %v3917, %v3922
  %v3924 = vmul.f32 %v3918, %v3922
  %v3925 = vlaneseq
  %v3926 = vshrl.u32 %v3925, 7
  %v3927 = vsub.s32 4, %v3926
  %v3928 = vrot.slane %v3368, %v3927
  %v3929 = vadd.f32 %v3923, %v3928
  %v3930 = vadd.f32 %v3924, %v3928
  %s3931 = scalar_lea.vmem %s6, 16
  %v3932 = vld [vmem:[%s3931] sm:$0xf]
  %v3933 = vld [vmem:[%s3931 + $0x4] sm:$0xf]
  %v3934 = vld [vmem:[%s3931 + $0x8] sm:$0xf]
  %v3935 = vld [vmem:[%s3931 + $0xc] sm:$0xf]
  %v3936 = vpack.c.bf16 %v3930, %v3929
  %v3937 = vlaneseq
  %v3938 = vshrl.u32 %v3937, 7
  %v3939 = vsub.s32 0, %v3938
  %v3940 = vrot.slane %v3368, %v3939
  %v3945 = vunpack.c.l.b16 %v3932
  %v3946 = vunpack.c.l.b16 %v3933
  %v3947 = vunpack.c.l.b16 %v3934
  %v3948 = vunpack.c.l.b16 %v3935
  %v3949 = vpack.c.b16 %v3946, %v3945
  %v3950 = vpack.c.b16 %v3948, %v3947
  %v3954 = vsel %vm130, %v3936, 0
  %3956 = vmatprep.subr.bf16.mxu0 0
  %3957 = vmatpush1.bf16.msra.mxu0 %v3949
  %3958 = vmatprep.subr.bf16.mxu0 0
  %3959 = vmatpush1.bf16.msra.mxu0 %v3950
  %3960 = vmatprep.subr.bf16.mxu0 0
  %3961 = vmatpush1.bf16.msra.mxu0 0
  %3962 = vmatprep.subr.bf16.mxu0 0
  %3963 = vmatpush1.bf16.msra.mxu0 0
  %3964 = vmatprep.subr.bf16.mxu0 0
  %3965 = vmatpush1.bf16.msra.mxu0 0
  %3966 = vmatprep.subr.bf16.mxu0 0
  %3967 = vmatpush1.bf16.msra.mxu0 0
  %3968 = vmatprep.subr.bf16.mxu0 0
  %3969 = vmatpush1.bf16.msra.mxu0 0
  %3970 = vmatprep.subr.bf16.mxu0 0
  %3971 = vmatpush1.bf16.msra.mxu0 0
  %3972 = vmatprep.subr.bf16.mxu0 0
  %3973 = vmatpush1.bf16.msra.mxu0 0
  %3974 = vmatprep.subr.bf16.mxu0 0
  %3975 = vmatpush1.bf16.msra.mxu0 0
  %3976 = vmatprep.subr.bf16.mxu0 0
  %3977 = vmatpush1.bf16.msra.mxu0 0
  %3978 = vmatprep.subr.bf16.mxu0 0
  %3979 = vmatpush1.bf16.msra.mxu0 0
  %3980 = vmatprep.subr.bf16.mxu0 0
  %3981 = vmatpush1.bf16.msra.mxu0 0
  %3982 = vmatprep.subr.bf16.mxu0 0
  %3983 = vmatpush1.bf16.msra.mxu0 0
  %3984 = vmatprep.subr.bf16.mxu0 0
  %3985 = vmatpush1.bf16.msra.mxu0 0
  %3986 = vmatprep.subr.bf16.mxu0 0
  %3987 = vmatpush1.bf16.msra.mxu0 0
  %3988 = vmatprep.mubr.bf16.mxu0 0
  %3989 = vmatmul.mubr.bf16.gmra.mrb[0].mxu0 %v3954
  %v3990 = vpop.f32.mrb[0].mxu0
  %v3991 = vadd.f32 %v3940, %v3990
  %v3992 = vpop.f32.mrb[0].mxu0
  %v3993 = vpop.f32.mrb[0].mxu0
  %v3994 = vadd.f32 %v3940, %v3993
  %v3995 = vpop.f32.mrb[0].mxu0
  %3996 = vdwg.mxu0
  %s3997 = scalar_lea.vmem %s7, 16
  %v3998 = vld [vmem:[%s3997] sm:$0xf]
  %v3999 = vld [vmem:[%s3997 + $0x4] sm:$0xf]
  %v4000 = vld [vmem:[%s3997 + $0x8] sm:$0xf]
  %v4001 = vld [vmem:[%s3997 + $0xc] sm:$0xf]
  %v4002 = vld [vmem:[%s8 + $0x1] sm:$0x1]
  %v4003 = vlaneseq
  %v4004 = vshrl.u32 %v4003, 7
  %v4005 = vsub.s32 0, %v4004
  %v4006 = vrot.slane %v4002, %v4005
  %v4011 = vunpack.c.l.b16 %v3998
  %v4012 = vunpack.c.l.b16 %v3999
  %v4013 = vunpack.c.l.b16 %v4000
  %v4014 = vunpack.c.l.b16 %v4001
  %v4015 = vpack.c.b16 %v4012, %v4011
  %v4016 = vpack.c.b16 %v4014, %v4013
  %4019 = vmatprep.subr.bf16.mxu0 0
  %4020 = vmatpush1.bf16.msra.mxu0 %v4015
  %4021 = vmatprep.subr.bf16.mxu0 0
  %4022 = vmatpush1.bf16.msra.mxu0 %v4016
  %4023 = vmatprep.subr.bf16.mxu0 0
  %4024 = vmatpush1.bf16.msra.mxu0 0
  %4025 = vmatprep.subr.bf16.mxu0 0
  %4026 = vmatpush1.bf16.msra.mxu0 0
  %4027 = vmatprep.subr.bf16.mxu0 0
  %4028 = vmatpush1.bf16.msra.mxu0 0
  %4029 = vmatprep.subr.bf16.mxu0 0
  %4030 = vmatpush1.bf16.msra.mxu0 0
  %4031 = vmatprep.subr.bf16.mxu0 0
  %4032 = vmatpush1.bf16.msra.mxu0 0
  %4033 = vmatprep.subr.bf16.mxu0 0
  %4034 = vmatpush1.bf16.msra.mxu0 0
  %4035 = vmatprep.subr.bf16.mxu0 0
  %4036 = vmatpush1.bf16.msra.mxu0 0
  %4037 = vmatprep.subr.bf16.mxu0 0
  %4038 = vmatpush1.bf16.msra.mxu0 0
  %4039 = vmatprep.subr.bf16.mxu0 0
  %4040 = vmatpush1.bf16.msra.mxu0 0
  %4041 = vmatprep.subr.bf16.mxu0 0
  %4042 = vmatpush1.bf16.msra.mxu0 0
  %4043 = vmatprep.subr.bf16.mxu0 0
  %4044 = vmatpush1.bf16.msra.mxu0 0
  %4045 = vmatprep.subr.bf16.mxu0 0
  %4046 = vmatpush1.bf16.msra.mxu0 0
  %4047 = vmatprep.subr.bf16.mxu0 0
  %4048 = vmatpush1.bf16.msra.mxu0 0
  %4049 = vmatprep.subr.bf16.mxu0 0
  %4050 = vmatpush1.bf16.msra.mxu0 0
  %4051 = vmatprep.mubr.bf16.mxu0 0
  %4052 = vmatmul.mubr.bf16.gmra.mrb[0].mxu0 %v751
  %v4053 = vpop.f32.mrb[0].mxu0
  %v4054 = vadd.f32 %v4006, %v4053
  %v4055 = vpop.f32.mrb[0].mxu0
  %v4056 = vpop.f32.mrb[0].mxu0
  %v4057 = vadd.f32 %v4006, %v4056
  %v4058 = vpop.f32.mrb[0].mxu0
  %4059 = vmatprep.mubr.bf16.mxu0 0
  %4060 = vmatmul.mubr.bf16.gmra.mrb[0].mxu0 %v754
  %v4061 = vpop.f32.mrb[0].mxu0
  %v4062 = vadd.f32 %v4006, %v4061
  %v4063 = vpop.f32.mrb[0].mxu0
  %v4064 = vpop.f32.mrb[0].mxu0
  %v4065 = vadd.f32 %v4006, %v4064
  %v4066 = vpop.f32.mrb[0].mxu0
  %4067 = vdwg.mxu0
  %v4068 = vmul.f32 %v3991, %v82
  %v4069 = vmul.f32 %v3994, %v82
  %v4070 = vmul.f32 %v3991, %v87
  %v4071 = vmul.f32 %v3994, %v87
  %v4072 = vmul.f32 %v3991, %v92
  %v4073 = vmul.f32 %v3994, %v92
  %v4074 = vmul.f32 %v3991, %v97
  %v4075 = vmul.f32 %v3994, %v97
  %v4077 = vsel %vm130, %v4068, 0
  %v4080 = vsel %vm130, %v4069, 0
  %v4083 = vsel %vm130, %v4070, 0
  %v4086 = vsel %vm130, %v4071, 0
  %v4089 = vsel %vm130, %v4072, 0
  %v4092 = vsel %vm130, %v4073, 0
  %v4095 = vsel %vm130, %v4074, 0
  %v4098 = vsel %vm130, %v4075, 0
  %v4101 = vsel %vm130, %v4054, 0
  %v4104 = vsel %vm130, %v4057, 0
  %v4107 = vsel %vm130, %v4062, 0
  %v4110 = vsel %vm130, %v4065, 0
  %4112 = vmatprep.subr.mxu0 0.0
  %4113 = vmatpush1.xpose.msra.mxu0 %v4101
  %4114 = vmatprep.subr.mxu0 0.0
  %4115 = vmatpush1.xpose.msra.mxu0 %v4104
  %4116 = vmatprep.subr.mxu0 0.0
  %4117 = vmatpush1.xpose.msra.mxu0 %v4107
  %4118 = vmatprep.subr.mxu0 0.0
  %4119 = vmatpush1.xpose.msra.mxu0 %v4110
  %4120 = vmatprep.subr.mxu0 0.0
  %4121 = vmatpush1.xpose.msra.mxu0 0.0
  %4122 = vmatprep.subr.mxu0 0.0
  %4123 = vmatpush1.xpose.msra.mxu0 0.0
  %4124 = vmatprep.subr.mxu0 0.0
  %4125 = vmatpush1.xpose.msra.mxu0 0.0
  %4126 = vmatprep.subr.mxu0 0.0
  %4127 = vmatpush1.xpose.msra.mxu0 0.0
  %4128 = vmatprep.subr.mxu0 0.0
  %4129 = vmatpush1.xpose.msra.mxu0 0.0
  %4130 = vmatprep.subr.mxu0 0.0
  %4131 = vmatpush1.xpose.msra.mxu0 0.0
  %4132 = vmatprep.subr.mxu0 0.0
  %4133 = vmatpush1.xpose.msra.mxu0 0.0
  %4134 = vmatprep.subr.mxu0 0.0
  %4135 = vmatpush1.xpose.msra.mxu0 0.0
  %4136 = vmatprep.subr.mxu0 0.0
  %4137 = vmatpush1.xpose.msra.mxu0 0.0
  %4138 = vmatprep.subr.mxu0 0.0
  %4139 = vmatpush1.xpose.msra.mxu0 0.0
  %4140 = vmatprep.subr.mxu0 0.0
  %4141 = vmatpush1.xpose.msra.mxu0 0.0
  %4142 = vmatprep.subr.mxu0 0.0
  %4143 = vmatpush1.xpose.msra.mxu0 0.0
  %4144 = vmatprep.subr.mxu0 0.0
  %4145 = vmatpush1.xpose.msra.mxu0 0.0
  %4146 = vmatprep.subr.mxu0 0.0
  %4147 = vmatpush1.xpose.msra.mxu0 0.0
  %4148 = vmatprep.subr.mxu0 0.0
  %4149 = vmatpush1.xpose.msra.mxu0 0.0
  %4150 = vmatprep.subr.mxu0 0.0
  %4151 = vmatpush1.xpose.msra.mxu0 0.0
  %4152 = vmatprep.subr.mxu0 0.0
  %4153 = vmatpush1.xpose.msra.mxu0 0.0
  %4154 = vmatprep.subr.mxu0 0.0
  %4155 = vmatpush1.xpose.msra.mxu0 0.0
  %4156 = vmatprep.subr.mxu0 0.0
  %4157 = vmatpush1.xpose.msra.mxu0 0.0
  %4158 = vmatprep.subr.mxu0 0.0
  %4159 = vmatpush1.xpose.msra.mxu0 0.0
  %4160 = vmatprep.subr.mxu0 0.0
  %4161 = vmatpush1.xpose.msra.mxu0 0.0
  %4162 = vmatprep.subr.mxu0 0.0
  %4163 = vmatpush1.xpose.msra.mxu0 0.0
  %4164 = vmatprep.subr.mxu0 0.0
  %4165 = vmatpush1.xpose.msra.mxu0 0.0
  %4166 = vmatprep.subr.mxu0 0.0
  %4167 = vmatpush1.xpose.msra.mxu0 0.0
  %4168 = vmatprep.subr.mxu0 0.0
  %4169 = vmatpush1.xpose.msra.mxu0 0.0
  %4170 = vmatprep.subr.mxu0 0.0
  %4171 = vmatpush1.xpose.msra.mxu0 0.0
  %4172 = vmatprep.subr.mxu0 0.0
  %4173 = vmatpush1.xpose.msra.mxu0 0.0
  %4174 = vmatprep.subr.mxu0 0.0
  %4175 = vmatpush1.xpose.msra.mxu0 0.0
  %4176 = vmatprep.mubr.f32.mxu0 0.0
  %4177 = vmatmul.mubr.f32.gmra.mrb[0].mxu0 %v4077
  %v4178 = vpop.f32.mrb[0].mxu0
  %v4179 = vadd.f32 %v68, %v4178
  %v4180 = vpop.f32.mrb[0].mxu0
  %4181 = vmatprep.mubr.f32.mxu0 0.0
  %4182 = vmatmul.mubr.f32.gmra.mrb[0].mxu0 %v4080
  %v4183 = vpop.f32.mrb[0].mxu0
  %v4184 = vadd.f32 %v69, %v4183
  %v4185 = vpop.f32.mrb[0].mxu0
  %4186 = vmatprep.mubr.f32.mxu0 0.0
  %4187 = vmatmul.mubr.f32.gmra.mrb[0].mxu0 %v4083
  %v4188 = vpop.f32.mrb[0].mxu0
  %v4189 = vadd.f32 %v70, %v4188
  %v4190 = vpop.f32.mrb[0].mxu0
  %4191 = vmatprep.mubr.f32.mxu0 0.0
  %4192 = vmatmul.mubr.f32.gmra.mrb[0].mxu0 %v4086
  %v4193 = vpop.f32.mrb[0].mxu0
  %v4194 = vadd.f32 %v71, %v4193
  %v4195 = vpop.f32.mrb[0].mxu0
  %4196 = vmatprep.mubr.f32.mxu0 0.0
  %4197 = vmatmul.mubr.f32.gmra.mrb[0].mxu0 %v4089
  %v4198 = vpop.f32.mrb[0].mxu0
  %v4199 = vadd.f32 %v72, %v4198
  %v4200 = vpop.f32.mrb[0].mxu0
  %4201 = vmatprep.mubr.f32.mxu0 0.0
  %4202 = vmatmul.mubr.f32.gmra.mrb[0].mxu0 %v4092
  %v4203 = vpop.f32.mrb[0].mxu0
  %v4204 = vadd.f32 %v73, %v4203
  %v4205 = vpop.f32.mrb[0].mxu0
  %4206 = vmatprep.mubr.f32.mxu0 0.0
  %4207 = vmatmul.mubr.f32.gmra.mrb[0].mxu0 %v4095
  %v4208 = vpop.f32.mrb[0].mxu0
  %v4209 = vadd.f32 %v74, %v4208
  %v4210 = vpop.f32.mrb[0].mxu0
  %4211 = vmatprep.mubr.f32.mxu0 0.0
  %4212 = vmatmul.mubr.f32.gmra.mrb[0].mxu0 %v4098
  %v4213 = vpop.f32.mrb[0].mxu0
  %v4214 = vadd.f32 %v75, %v4213
  %v4215 = vpop.f32.mrb[0].mxu0
  %4216 = vdwg.mxu0
  %v4217 = vsel %vm130, %v4179, -inf
  %4218 = vmax.xlane.f32.xlu0 %v4217
  %v4219 = vpop.xlane.xlu0 %4218
  %v4220 = vsel %vm130, %v4184, -inf
  %4221 = vmax.xlane.f32.xlu0 %v4220
  %v4222 = vpop.xlane.xlu0 %4221
  %v4223 = vsel %vm130, %v4189, -inf
  %4224 = vmax.xlane.f32.xlu0 %v4223
  %v4225 = vpop.xlane.xlu0 %4224
  %v4226 = vsel %vm130, %v4194, -inf
  %4227 = vmax.xlane.f32.xlu0 %v4226
  %v4228 = vpop.xlane.xlu0 %4227
  %v4229 = vsel %vm130, %v4199, -inf
  %4230 = vmax.xlane.f32.xlu0 %v4229
  %v4231 = vpop.xlane.xlu0 %4230
  %v4232 = vsel %vm130, %v4204, -inf
  %4233 = vmax.xlane.f32.xlu0 %v4232
  %v4234 = vpop.xlane.xlu0 %4233
  %v4235 = vsel %vm130, %v4209, -inf
  %4236 = vmax.xlane.f32.xlu0 %v4235
  %v4237 = vpop.xlane.xlu0 %4236
  %v4238 = vsel %vm130, %v4214, -inf
  %4239 = vmax.xlane.f32.xlu0 %v4238
  %v4240 = vpop.xlane.xlu0 %4239
  %v4241 = vsub.f32 %v4179, %v4219
  %v4242 = vsub.f32 %v4184, %v4222
  %v4243 = vsub.f32 %v4189, %v4225
  %v4244 = vsub.f32 %v4194, %v4228
  %v4245 = vsub.f32 %v4199, %v4231
  %v4246 = vsub.f32 %v4204, %v4234
  %v4247 = vsub.f32 %v4209, %v4237
  %v4248 = vsub.f32 %v4214, %v4240
  %v4249 = vmul.f32 %v4241, 1.442695
  %v4250 = vpow.pop %v4249
  %v4251 = vmul.f32 %v4242, 1.442695
  %v4252 = vpow.pop %v4251
  %v4253 = vmul.f32 %v4243, 1.442695
  %v4254 = vpow.pop %v4253
  %v4255 = vmul.f32 %v4244, 1.442695
  %v4256 = vpow.pop %v4255
  %v4257 = vmul.f32 %v4245, 1.442695
  %v4258 = vpow.pop %v4257
  %v4259 = vmul.f32 %v4246, 1.442695
  %v4260 = vpow.pop %v4259
  %v4261 = vmul.f32 %v4247, 1.442695
  %v4262 = vpow.pop %v4261
  %v4263 = vmul.f32 %v4248, 1.442695
  %v4264 = vpow.pop %v4263
  %v4265 = vsel %vm130, %v4250, 0.0
  %4266 = vadd.xlane.f32.xlu0 %v4265
  %v4267 = vpop.xlane.xlu0 %4266
  %v4268 = vsel %vm130, %v4252, 0.0
  %4269 = vadd.xlane.f32.xlu0 %v4268
  %v4270 = vpop.xlane.xlu0 %4269
  %v4271 = vsel %vm130, %v4254, 0.0
  %4272 = vadd.xlane.f32.xlu0 %v4271
  %v4273 = vpop.xlane.xlu0 %4272
  %v4274 = vsel %vm130, %v4256, 0.0
  %4275 = vadd.xlane.f32.xlu0 %v4274
  %v4276 = vpop.xlane.xlu0 %4275
  %v4277 = vsel %vm130, %v4258, 0.0
  %4278 = vadd.xlane.f32.xlu0 %v4277
  %v4279 = vpop.xlane.xlu0 %4278
  %v4280 = vsel %vm130, %v4260, 0.0
  %4281 = vadd.xlane.f32.xlu0 %v4280
  %v4282 = vpop.xlane.xlu0 %4281
  %v4283 = vsel %vm130, %v4262, 0.0
  %4284 = vadd.xlane.f32.xlu0 %v4283
  %v4285 = vpop.xlane.xlu0 %4284
  %v4286 = vsel %vm130, %v4264, 0.0
  %4287 = vadd.xlane.f32.xlu0 %v4286
  %v4288 = vpop.xlane.xlu0 %4287
  %4289 = vrot.lane.b32.xlu0 %v4054, 96
  %v4290 = vpop.permute.xlu0 %4289
  %4291 = vrot.lane.b32.xlu0 %v4057, 96
  %v4292 = vpop.permute.xlu0 %4291
  %4293 = vrot.lane.b32.xlu0 %v4062, 96
  %v4294 = vpop.permute.xlu0 %4293
  %4295 = vrot.lane.b32.xlu0 %v4065, 96
  %v4296 = vpop.permute.xlu0 %4295
  %v4302 = vsel %vm130, %v4250, 0
  %v4305 = vsel %vm130, %v4252, 0
  %v4308 = vsel %vm130, %v4254, 0
  %v4311 = vsel %vm130, %v4256, 0
  %v4314 = vsel %vm130, %v4258, 0
  %v4317 = vsel %vm130, %v4260, 0
  %v4320 = vsel %vm130, %v4262, 0
  %v4323 = vsel %vm130, %v4264, 0
  %4325 = vmatprep.subr.mxu0 0.0
  %4326 = vmatpush1.msra.mxu0 %v4290
  %4327 = vmatprep.subr.mxu0 0.0
  %4328 = vmatpush1.msra.mxu0 %v4292
  %4329 = vmatprep.subr.mxu0 0.0
  %4330 = vmatpush1.msra.mxu0 %v4294
  %4331 = vmatprep.subr.mxu0 0.0
  %4332 = vmatpush1.msra.mxu0 %v4296
  %4333 = vmatprep.subr.mxu0 0.0
  %4334 = vmatpush1.msra.mxu0 0.0
  %4335 = vmatprep.subr.mxu0 0.0
  %4336 = vmatpush1.msra.mxu0 0.0
  %4337 = vmatprep.subr.mxu0 0.0
  %4338 = vmatpush1.msra.mxu0 0.0
  %4339 = vmatprep.subr.mxu0 0.0
  %4340 = vmatpush1.msra.mxu0 0.0
  %4341 = vmatprep.subr.mxu0 0.0
  %4342 = vmatpush1.msra.mxu0 0.0
  %4343 = vmatprep.subr.mxu0 0.0
  %4344 = vmatpush1.msra.mxu0 0.0
  %4345 = vmatprep.subr.mxu0 0.0
  %4346 = vmatpush1.msra.mxu0 0.0
  %4347 = vmatprep.subr.mxu0 0.0
  %4348 = vmatpush1.msra.mxu0 0.0
  %4349 = vmatprep.subr.mxu0 0.0
  %4350 = vmatpush1.msra.mxu0 0.0
  %4351 = vmatprep.subr.mxu0 0.0
  %4352 = vmatpush1.msra.mxu0 0.0
  %4353 = vmatprep.subr.mxu0 0.0
  %4354 = vmatpush1.msra.mxu0 0.0
  %4355 = vmatprep.subr.mxu0 0.0
  %4356 = vmatpush1.msra.mxu0 0.0
  %4357 = vmatprep.subr.mxu0 0.0
  %4358 = vmatpush1.msra.mxu0 0.0
  %4359 = vmatprep.subr.mxu0 0.0
  %4360 = vmatpush1.msra.mxu0 0.0
  %4361 = vmatprep.subr.mxu0 0.0
  %4362 = vmatpush1.msra.mxu0 0.0
  %4363 = vmatprep.subr.mxu0 0.0
  %4364 = vmatpush1.msra.mxu0 0.0
  %4365 = vmatprep.subr.mxu0 0.0
  %4366 = vmatpush1.msra.mxu0 0.0
  %4367 = vmatprep.subr.mxu0 0.0
  %4368 = vmatpush1.msra.mxu0 0.0
  %4369 = vmatprep.subr.mxu0 0.0
  %4370 = vmatpush1.msra.mxu0 0.0
  %4371 = vmatprep.subr.mxu0 0.0
  %4372 = vmatpush1.msra.mxu0 0.0
  %4373 = vmatprep.subr.mxu0 0.0
  %4374 = vmatpush1.msra.mxu0 0.0
  %4375 = vmatprep.subr.mxu0 0.0
  %4376 = vmatpush1.msra.mxu0 0.0
  %4377 = vmatprep.subr.mxu0 0.0
  %4378 = vmatpush1.msra.mxu0 0.0
  %4379 = vmatprep.subr.mxu0 0.0
  %4380 = vmatpush1.msra.mxu0 0.0
  %4381 = vmatprep.subr.mxu0 0.0
  %4382 = vmatpush1.msra.mxu0 0.0
  %4383 = vmatprep.subr.mxu0 0.0
  %4384 = vmatpush1.msra.mxu0 0.0
  %4385 = vmatprep.subr.mxu0 0.0
  %4386 = vmatpush1.msra.mxu0 0.0
  %4387 = vmatprep.subr.mxu0 0.0
  %4388 = vmatpush1.msra.mxu0 0.0
  %4389 = vmatprep.mubr.f32.mxu0 0.0
  %4390 = vmatmul.mubr.f32.gmra.mrb[0].mxu0 %v4302
  %v4391 = vpop.f32.mrb[0].mxu0
  %v4392 = vadd.f32 0.0, %v4391
  %v4393 = vpop.f32.mrb[0].mxu0
  %4394 = vmatprep.mubr.f32.mxu0 0.0
  %4395 = vmatmul.mubr.f32.gmra.mrb[0].mxu0 %v4305
  %v4396 = vpop.f32.mrb[0].mxu0
  %v4397 = vadd.f32 0.0, %v4396
  %v4398 = vpop.f32.mrb[0].mxu0
  %4399 = vmatprep.mubr.f32.mxu0 0.0
  %4400 = vmatmul.mubr.f32.gmra.mrb[0].mxu0 %v4308
  %v4401 = vpop.f32.mrb[0].mxu0
  %v4402 = vadd.f32 0.0, %v4401
  %v4403 = vpop.f32.mrb[0].mxu0
  %4404 = vmatprep.mubr.f32.mxu0 0.0
  %4405 = vmatmul.mubr.f32.gmra.mrb[0].mxu0 %v4311
  %v4406 = vpop.f32.mrb[0].mxu0
  %v4407 = vadd.f32 0.0, %v4406
  %v4408 = vpop.f32.mrb[0].mxu0
  %4409 = vmatprep.mubr.f32.mxu0 0.0
  %4410 = vmatmul.mubr.f32.gmra.mrb[0].mxu0 %v4314
  %v4411 = vpop.f32.mrb[0].mxu0
  %v4412 = vadd.f32 0.0, %v4411
  %v4413 = vpop.f32.mrb[0].mxu0
  %4414 = vmatprep.mubr.f32.mxu0 0.0
  %4415 = vmatmul.mubr.f32.gmra.mrb[0].mxu0 %v4317
  %v4416 = vpop.f32.mrb[0].mxu0
  %v4417 = vadd.f32 0.0, %v4416
  %v4418 = vpop.f32.mrb[0].mxu0
  %4419 = vmatprep.mubr.f32.mxu0 0.0
  %4420 = vmatmul.mubr.f32.gmra.mrb[0].mxu0 %v4320
  %v4421 = vpop.f32.mrb[0].mxu0
  %v4422 = vadd.f32 0.0, %v4421
  %v4423 = vpop.f32.mrb[0].mxu0
  %4424 = vmatprep.mubr.f32.mxu0 0.0
  %4425 = vmatmul.mubr.f32.gmra.mrb[0].mxu0 %v4323
  %v4426 = vpop.f32.mrb[0].mxu0
  %v4427 = vadd.f32 0.0, %v4426
  %v4428 = vpop.f32.mrb[0].mxu0
  %4429 = vdwg.mxu0
  %v4430 = vrcp.pop %v4267
  %v4431 = vrcp.pop %v4270
  %v4432 = vrcp.pop %v4273
  %v4433 = vrcp.pop %v4276
  %v4434 = vrcp.pop %v4279
  %v4435 = vrcp.pop %v4282
  %v4436 = vrcp.pop %v4285
  %v4437 = vrcp.pop %v4288
  %v4438 = vmul.f32 %v4392, %v4430
  %v4439 = vmul.f32 %v4397, %v4431
  %v4440 = vmul.f32 %v4402, %v4432
  %v4441 = vmul.f32 %v4407, %v4433
  %v4442 = vmul.f32 %v4412, %v4434
  %v4443 = vmul.f32 %v4417, %v4435
  %v4444 = vmul.f32 %v4422, %v4436
  %v4445 = vmul.f32 %v4427, %v4437
  %v4446 = vmul.f32 %v4438, %v82
  %v4447 = vmul.f32 %v4439, %v82
  %v4448 = vmul.f32 %v4440, %v87
  %v4449 = vmul.f32 %v4441, %v87
  %v4450 = vadd.f32 %v4446, %v4448
  %v4451 = vadd.f32 %v4447, %v4449
  %v4452 = vmul.f32 %v4442, %v92
  %v4453 = vmul.f32 %v4443, %v92
  %v4454 = vadd.f32 %v4450, %v4452
  %v4455 = vadd.f32 %v4451, %v4453
  %v4456 = vmul.f32 %v4444, %v97
  %v4457 = vmul.f32 %v4445, %v97
  %v4458 = vadd.f32 %v4454, %v4456
  %v4459 = vadd.f32 %v4455, %v4457
  %v4460 = vpack.c.bf16 %v4459, %v4458
  %v4461 = vlaneseq
  %v4462 = vshrl.u32 %v4461, 7
  %v4463 = vsub.s32 2, %v4462
  %v4464 = vrot.slane %v3368, %v4463
  %v4469 = vunpack.c.l.b16 %v3375
  %v4470 = vunpack.c.l.b16 %v3376
  %v4471 = vunpack.c.l.b16 %v3377
  %v4472 = vunpack.c.l.b16 %v3378
  %v4473 = vpack.c.b16 %v4470, %v4469
  %v4474 = vpack.c.b16 %v4472, %v4471
  %v4478 = vsel %vm130, %v4460, 0
  %4480 = vmatprep.subr.bf16.mxu0 0
  %4481 = vmatpush1.bf16.msra.mxu0 %v4473
  %4482 = vmatprep.subr.bf16.mxu0 0
  %4483 = vmatpush1.bf16.msra.mxu0 %v4474
  %4484 = vmatprep.subr.bf16.mxu0 0
  %4485 = vmatpush1.bf16.msra.mxu0 0
  %4486 = vmatprep.subr.bf16.mxu0 0
  %4487 = vmatpush1.bf16.msra.mxu0 0
  %4488 = vmatprep.subr.bf16.mxu0 0
  %4489 = vmatpush1.bf16.msra.mxu0 0
  %4490 = vmatprep.subr.bf16.mxu0 0
  %4491 = vmatpush1.bf16.msra.mxu0 0
  %4492 = vmatprep.subr.bf16.mxu0 0
  %4493 = vmatpush1.bf16.msra.mxu0 0
  %4494 = vmatprep.subr.bf16.mxu0 0
  %4495 = vmatpush1.bf16.msra.mxu0 0
  %4496 = vmatprep.subr.bf16.mxu0 0
  %4497 = vmatpush1.bf16.msra.mxu0 0
  %4498 = vmatprep.subr.bf16.mxu0 0
  %4499 = vmatpush1.bf16.msra.mxu0 0
  %4500 = vmatprep.subr.bf16.mxu0 0
  %4501 = vmatpush1.bf16.msra.mxu0 0
  %4502 = vmatprep.subr.bf16.mxu0 0
  %4503 = vmatpush1.bf16.msra.mxu0 0
  %4504 = vmatprep.subr.bf16.mxu0 0
  %4505 = vmatpush1.bf16.msra.mxu0 0
  %4506 = vmatprep.subr.bf16.mxu0 0
  %4507 = vmatpush1.bf16.msra.mxu0 0
  %4508 = vmatprep.subr.bf16.mxu0 0
  %4509 = vmatpush1.bf16.msra.mxu0 0
  %4510 = vmatprep.subr.bf16.mxu0 0
  %4511 = vmatpush1.bf16.msra.mxu0 0
  %4512 = vmatprep.mubr.bf16.mxu0 0
  %4513 = vmatmul.mubr.bf16.gmra.mrb[0].mxu0 %v4478
  %v4514 = vpop.f32.mrb[0].mxu0
  %v4515 = vadd.f32 %v4464, %v4514
  %v4516 = vpop.f32.mrb[0].mxu0
  %v4517 = vpop.f32.mrb[0].mxu0
  %v4518 = vadd.f32 %v4464, %v4517
  %v4519 = vpop.f32.mrb[0].mxu0
  %4520 = vdwg.mxu0
  %v4521 = vadd.f32 %v3929, %v4515
  %v4522 = vadd.f32 %v3930, %v4518
  %v4523 = vsel %vm130, %v4521, 0.0
  %4524 = vadd.xlane.f32.xlu0 %v4523
  %v4525 = vpop.xlane.xlu0 %4524
  %v4526 = vsel %vm130, %v4522, 0.0
  %4527 = vadd.xlane.f32.xlu0 %v4526
  %v4528 = vpop.xlane.xlu0 %4527
  %v4529 = vmul.f32 %v4525, %v629
  %v4530 = vmul.f32 %v4528, %v629
  %v4531 = vsub.f32 %v4521, %v4529
  %v4532 = vsub.f32 %v4522, %v4530
  %v4533 = vmul.f32 %v4531, %v4531
  %v4534 = vmul.f32 %v4532, %v4532
  %v4535 = vsel %vm130, %v4533, 0.0
  %4536 = vadd.xlane.f32.xlu0 %v4535
  %v4537 = vpop.xlane.xlu0 %4536
  %v4538 = vsel %vm130, %v4534, 0.0
  %4539 = vadd.xlane.f32.xlu0 %v4538
  %v4540 = vpop.xlane.xlu0 %4539
  %v4541 = vmul.f32 %v4537, %v629
  %v4542 = vmul.f32 %v4540, %v629
  %v4543 = vadd.f32 %v4541, 1e-05
  %v4544 = vadd.f32 %v4542, 1e-05
  %v4545 = vrsqrt.pop %v4543
  %v4546 = vrsqrt.pop %v4544
  %v4547 = vmul.f32 %v4531, %v4545
  %v4548 = vmul.f32 %v4532, %v4546
  %v4549 = vlaneseq
  %v4550 = vshrl.u32 %v4549, 7
  %v4551 = vsub.s32 5, %v4550
  %v4552 = vrot.slane %v3368, %v4551
  %v4553 = vmul.f32 %v4547, %v4552
  %v4554 = vmul.f32 %v4548, %v4552
  %v4555 = vlaneseq
  %v4556 = vshrl.u32 %v4555, 7
  %v4557 = vsub.s32 6, %v4556
  %v4558 = vrot.slane %v3368, %v4557
  %v4559 = vadd.f32 %v4553, %v4558
  %v4560 = vadd.f32 %v4554, %v4558
  %s4561 = scalar_lea.vmem %s11, 256
  %v4562 = vld [vmem:[%s4561] sm:$0xff]
  %v4563 = vld [vmem:[%s4561 + $0x8] sm:$0xff]
  %v4564 = vld [vmem:[%s4561 + $0x10] sm:$0xff]
  %v4565 = vld [vmem:[%s4561 + $0x18] sm:$0xff]
  %v4566 = vld [vmem:[%s4561 + $0x20] sm:$0xff]
  %v4567 = vld [vmem:[%s4561 + $0x28] sm:$0xff]
  %v4568 = vld [vmem:[%s4561 + $0x30] sm:$0xff]
  %v4569 = vld [vmem:[%s4561 + $0x38] sm:$0xff]
  %v4570 = vld [vmem:[%s4561 + $0x40] sm:$0xff]
  %v4571 = vld [vmem:[%s4561 + $0x48] sm:$0xff]
  %v4572 = vld [vmem:[%s4561 + $0x50] sm:$0xff]
  %v4573 = vld [vmem:[%s4561 + $0x58] sm:$0xff]
  %v4574 = vld [vmem:[%s4561 + $0x60] sm:$0xff]
  %v4575 = vld [vmem:[%s4561 + $0x68] sm:$0xff]
  %v4576 = vld [vmem:[%s4561 + $0x70] sm:$0xff]
  %v4577 = vld [vmem:[%s4561 + $0x78] sm:$0xff]
  %v4578 = vld [vmem:[%s4561 + $0x80] sm:$0xff]
  %v4579 = vld [vmem:[%s4561 + $0x88] sm:$0xff]
  %v4580 = vld [vmem:[%s4561 + $0x90] sm:$0xff]
  %v4581 = vld [vmem:[%s4561 + $0x98] sm:$0xff]
  %v4582 = vld [vmem:[%s4561 + $0xa0] sm:$0xff]
  %v4583 = vld [vmem:[%s4561 + $0xa8] sm:$0xff]
  %v4584 = vld [vmem:[%s4561 + $0xb0] sm:$0xff]
  %v4585 = vld [vmem:[%s4561 + $0xb8] sm:$0xff]
  %v4586 = vld [vmem:[%s4561 + $0xc0] sm:$0xff]
  %v4587 = vld [vmem:[%s4561 + $0xc8] sm:$0xff]
  %v4588 = vld [vmem:[%s4561 + $0xd0] sm:$0xff]
  %v4589 = vld [vmem:[%s4561 + $0xd8] sm:$0xff]
  %v4590 = vld [vmem:[%s4561 + $0xe0] sm:$0xff]
  %v4591 = vld [vmem:[%s4561 + $0xe8] sm:$0xff]
  %v4592 = vld [vmem:[%s4561 + $0xf0] sm:$0xff]
  %v4593 = vld [vmem:[%s4561 + $0xf8] sm:$0xff]
  %v4594 = vpack.c.bf16 %v4560, %v4559
  %s4595 = scalar_lea.vmem %s12, 1
  %v4596 = vld [vmem:[%s4595] ss:$2 sm:$0xff]
  %s4597 = scalar_lea.vmem %s12, 17
  %v4598 = vld [vmem:[%s4597] ss:$2 sm:$0xff]
  %v4601 = vlaneseq
  %v4602 = vshrl.u32 %v4601, 7
  %v4603 = vsub.s32 0, %v4602
  %v4604 = vrot.slane %v4596, %v4603
  %v4605 = vlaneseq
  %v4606 = vshrl.u32 %v4605, 7
  %v4607 = vsub.s32 1, %v4606
  %v4608 = vrot.slane %v4596, %v4607
  %v4609 = vlaneseq
  %v4610 = vshrl.u32 %v4609, 7
  %v4611 = vsub.s32 2, %v4610
  %v4612 = vrot.slane %v4596, %v4611
  %v4613 = vlaneseq
  %v4614 = vshrl.u32 %v4613, 7
  %v4615 = vsub.s32 3, %v4614
  %v4616 = vrot.slane %v4596, %v4615
  %v4617 = vlaneseq
  %v4618 = vshrl.u32 %v4617, 7
  %v4619 = vsub.s32 4, %v4618
  %v4620 = vrot.slane %v4596, %v4619
  %v4621 = vlaneseq
  %v4622 = vshrl.u32 %v4621, 7
  %v4623 = vsub.s32 5, %v4622
  %v4624 = vrot.slane %v4596, %v4623
  %v4625 = vlaneseq
  %v4626 = vshrl.u32 %v4625, 7
  %v4627 = vsub.s32 6, %v4626
  %v4628 = vrot.slane %v4596, %v4627
  %v4629 = vlaneseq
  %v4630 = vshrl.u32 %v4629, 7
  %v4631 = vsub.s32 7, %v4630
  %v4632 = vrot.slane %v4596, %v4631
  %v4633 = vlaneseq
  %v4634 = vshrl.u32 %v4633, 7
  %v4635 = vsub.s32 0, %v4634
  %v4636 = vrot.slane %v4598, %v4635
  %v4637 = vlaneseq
  %v4638 = vshrl.u32 %v4637, 7
  %v4639 = vsub.s32 1, %v4638
  %v4640 = vrot.slane %v4598, %v4639
  %v4641 = vlaneseq
  %v4642 = vshrl.u32 %v4641, 7
  %v4643 = vsub.s32 2, %v4642
  %v4644 = vrot.slane %v4598, %v4643
  %v4645 = vlaneseq
  %v4646 = vshrl.u32 %v4645, 7
  %v4647 = vsub.s32 3, %v4646
  %v4648 = vrot.slane %v4598, %v4647
  %v4649 = vlaneseq
  %v4650 = vshrl.u32 %v4649, 7
  %v4651 = vsub.s32 4, %v4650
  %v4652 = vrot.slane %v4598, %v4651
  %v4653 = vlaneseq
  %v4654 = vshrl.u32 %v4653, 7
  %v4655 = vsub.s32 5, %v4654
  %v4656 = vrot.slane %v4598, %v4655
  %v4657 = vlaneseq
  %v4658 = vshrl.u32 %v4657, 7
  %v4659 = vsub.s32 6, %v4658
  %v4660 = vrot.slane %v4598, %v4659
  %v4661 = vlaneseq
  %v4662 = vshrl.u32 %v4661, 7
  %v4663 = vsub.s32 7, %v4662
  %v4664 = vrot.slane %v4598, %v4663
  %v4713 = vunpack.c.l.b16 %v4562
  %v4714 = vunpack.c.h.b16 %v4562
  %v4715 = vunpack.c.l.b16 %v4563
  %v4716 = vunpack.c.h.b16 %v4563
  %v4717 = vunpack.c.l.b16 %v4564
  %v4718 = vunpack.c.h.b16 %v4564
  %v4719 = vunpack.c.l.b16 %v4565
  %v4720 = vunpack.c.h.b16 %v4565
  %v4721 = vunpack.c.l.b16 %v4566
  %v4722 = vunpack.c.h.b16 %v4566
  %v4723 = vunpack.c.l.b16 %v4567
  %v4724 = vunpack.c.h.b16 %v4567
  %v4725 = vunpack.c.l.b16 %v4568
  %v4726 = vunpack.c.h.b16 %v4568
  %v4727 = vunpack.c.l.b16 %v4569
  %v4728 = vunpack.c.h.b16 %v4569
  %v4729 = vunpack.c.l.b16 %v4570
  %v4730 = vunpack.c.h.b16 %v4570
  %v4731 = vunpack.c.l.b16 %v4571
  %v4732 = vunpack.c.h.b16 %v4571
  %v4733 = vunpack.c.l.b16 %v4572
  %v4734 = vunpack.c.h.b16 %v4572
  %v4735 = vunpack.c.l.b16 %v4573
  %v4736 = vunpack.c.h.b16 %v4573
  %v4737 = vunpack.c.l.b16 %v4574
  %v4738 = vunpack.c.h.b16 %v4574
  %v4739 = vunpack.c.l.b16 %v4575
  %v4740 = vunpack.c.h.b16 %v4575
  %v4741 = vunpack.c.l.b16 %v4576
  %v4742 = vunpack.c.h.b16 %v4576
  %v4743 = vunpack.c.l.b16 %v4577
  %v4744 = vunpack.c.h.b16 %v4577
  %v4745 = vunpack.c.l.b16 %v4578
  %v4746 = vunpack.c.h.b16 %v4578
  %v4747 = vunpack.c.l.b16 %v4579
  %v4748 = vunpack.c.h.b16 %v4579
  %v4749 = vunpack.c.l.b16 %v4580
  %v4750 = vunpack.c.h.b16 %v4580
  %v4751 = vunpack.c.l.b16 %v4581
  %v4752 = vunpack.c.h.b16 %v4581
  %v4753 = vunpack.c.l.b16 %v4582
  %v4754 = vunpack.c.h.b16 %v4582
  %v4755 = vunpack.c.l.b16 %v4583
  %v4756 = vunpack.c.h.b16 %v4583
  %v4757 = vunpack.c.l.b16 %v4584
  %v4758 = vunpack.c.h.b16 %v4584
  %v4759 = vunpack.c.l.b16 %v4585
  %v4760 = vunpack.c.h.b16 %v4585
  %v4761 = vunpack.c.l.b16 %v4586
  %v4762 = vunpack.c.h.b16 %v4586
  %v4763 = vunpack.c.l.b16 %v4587
  %v4764 = vunpack.c.h.b16 %v4587
  %v4765 = vunpack.c.l.b16 %v4588
  %v4766 = vunpack.c.h.b16 %v4588
  %v4767 = vunpack.c.l.b16 %v4589
  %v4768 = vunpack.c.h.b16 %v4589
  %v4769 = vunpack.c.l.b16 %v4590
  %v4770 = vunpack.c.h.b16 %v4590
  %v4771 = vunpack.c.l.b16 %v4591
  %v4772 = vunpack.c.h.b16 %v4591
  %v4773 = vunpack.c.l.b16 %v4592
  %v4774 = vunpack.c.h.b16 %v4592
  %v4775 = vunpack.c.l.b16 %v4593
  %v4776 = vunpack.c.h.b16 %v4593
  %v4777 = vpack.c.b16 %v4729, %v4713
  %v4778 = vpack.c.b16 %v4730, %v4714
  %v4779 = vpack.c.b16 %v4731, %v4715
  %v4780 = vpack.c.b16 %v4732, %v4716
  %v4781 = vpack.c.b16 %v4733, %v4717
  %v4782 = vpack.c.b16 %v4734, %v4718
  %v4783 = vpack.c.b16 %v4735, %v4719
  %v4784 = vpack.c.b16 %v4736, %v4720
  %v4785 = vpack.c.b16 %v4737, %v4721
  %v4786 = vpack.c.b16 %v4738, %v4722
  %v4787 = vpack.c.b16 %v4739, %v4723
  %v4788 = vpack.c.b16 %v4740, %v4724
  %v4789 = vpack.c.b16 %v4741, %v4725
  %v4790 = vpack.c.b16 %v4742, %v4726
  %v4791 = vpack.c.b16 %v4743, %v4727
  %v4792 = vpack.c.b16 %v4744, %v4728
  %v4793 = vpack.c.b16 %v4761, %v4745
  %v4794 = vpack.c.b16 %v4762, %v4746
  %v4795 = vpack.c.b16 %v4763, %v4747
  %v4796 = vpack.c.b16 %v4764, %v4748
  %v4797 = vpack.c.b16 %v4765, %v4749
  %v4798 = vpack.c.b16 %v4766, %v4750
  %v4799 = vpack.c.b16 %v4767, %v4751
  %v4800 = vpack.c.b16 %v4768, %v4752
  %v4801 = vpack.c.b16 %v4769, %v4753
  %v4802 = vpack.c.b16 %v4770, %v4754
  %v4803 = vpack.c.b16 %v4771, %v4755
  %v4804 = vpack.c.b16 %v4772, %v4756
  %v4805 = vpack.c.b16 %v4773, %v4757
  %v4806 = vpack.c.b16 %v4774, %v4758
  %v4807 = vpack.c.b16 %v4775, %v4759
  %v4808 = vpack.c.b16 %v4776, %v4760
  %v4842 = vsel %vm130, %v4594, 0
  %4844 = vmatprep.subr.bf16.mxu0 %v4778
  %4845 = vmatpush1.bf16.msra.mxu0 %v4777
  %4846 = vmatprep.subr.bf16.mxu0 %v4794
  %4847 = vmatpush1.bf16.msra.mxu0 %v4793
  %4848 = vmatprep.subr.bf16.mxu0 0
  %4849 = vmatpush1.bf16.msra.mxu0 0
  %4850 = vmatprep.subr.bf16.mxu0 0
  %4851 = vmatpush1.bf16.msra.mxu0 0
  %4852 = vmatprep.subr.bf16.mxu0 0
  %4853 = vmatpush1.bf16.msra.mxu0 0
  %4854 = vmatprep.subr.bf16.mxu0 0
  %4855 = vmatpush1.bf16.msra.mxu0 0
  %4856 = vmatprep.subr.bf16.mxu0 0
  %4857 = vmatpush1.bf16.msra.mxu0 0
  %4858 = vmatprep.subr.bf16.mxu0 0
  %4859 = vmatpush1.bf16.msra.mxu0 0
  %4860 = vmatprep.subr.bf16.mxu0 0
  %4861 = vmatpush1.bf16.msra.mxu0 0
  %4862 = vmatprep.subr.bf16.mxu0 0
  %4863 = vmatpush1.bf16.msra.mxu0 0
  %4864 = vmatprep.subr.bf16.mxu0 0
  %4865 = vmatpush1.bf16.msra.mxu0 0
  %4866 = vmatprep.subr.bf16.mxu0 0
  %4867 = vmatpush1.bf16.msra.mxu0 0
  %4868 = vmatprep.subr.bf16.mxu0 0
  %4869 = vmatpush1.bf16.msra.mxu0 0
  %4870 = vmatprep.subr.bf16.mxu0 0
  %4871 = vmatpush1.bf16.msra.mxu0 0
  %4872 = vmatprep.subr.bf16.mxu0 0
  %4873 = vmatpush1.bf16.msra.mxu0 0
  %4874 = vmatprep.subr.bf16.mxu0 0
  %4875 = vmatpush1.bf16.msra.mxu0 0
  %4876 = vmatprep.mubr.bf16.mxu0 0
  %4877 = vmatmul.mubr.bf16.gmra.mrb[0].mxu0 %v4842
  %v4878 = vpop.f32.mrb[0].mxu0
  %v4879 = vadd.f32 %v4604, %v4878
  %v4880 = vpop.f32.mrb[0].mxu0
  %v4881 = vadd.f32 %v4608, %v4880
  %v4882 = vpop.f32.mrb[0].mxu0
  %v4883 = vadd.f32 %v4604, %v4882
  %v4884 = vpop.f32.mrb[0].mxu0
  %v4885 = vadd.f32 %v4608, %v4884
  %4886 = vdwg.mxu0
  %4887 = vmatprep.subr.bf16.mxu0 %v4780
  %4888 = vmatpush1.bf16.msra.mxu0 %v4779
  %4889 = vmatprep.subr.bf16.mxu0 %v4796
  %4890 = vmatpush1.bf16.msra.mxu0 %v4795
  %4891 = vmatprep.subr.bf16.mxu0 0
  %4892 = vmatpush1.bf16.msra.mxu0 0
  %4893 = vmatprep.subr.bf16.mxu0 0
  %4894 = vmatpush1.bf16.msra.mxu0 0
  %4895 = vmatprep.subr.bf16.mxu0 0
  %4896 = vmatpush1.bf16.msra.mxu0 0
  %4897 = vmatprep.subr.bf16.mxu0 0
  %4898 = vmatpush1.bf16.msra.mxu0 0
  %4899 = vmatprep.subr.bf16.mxu0 0
  %4900 = vmatpush1.bf16.msra.mxu0 0
  %4901 = vmatprep.subr.bf16.mxu0 0
  %4902 = vmatpush1.bf16.msra.mxu0 0
  %4903 = vmatprep.subr.bf16.mxu0 0
  %4904 = vmatpush1.bf16.msra.mxu0 0
  %4905 = vmatprep.subr.bf16.mxu0 0
  %4906 = vmatpush1.bf16.msra.mxu0 0
  %4907 = vmatprep.subr.bf16.mxu0 0
  %4908 = vmatpush1.bf16.msra.mxu0 0
  %4909 = vmatprep.subr.bf16.mxu0 0
  %4910 = vmatpush1.bf16.msra.mxu0 0
  %4911 = vmatprep.subr.bf16.mxu0 0
  %4912 = vmatpush1.bf16.msra.mxu0 0
  %4913 = vmatprep.subr.bf16.mxu0 0
  %4914 = vmatpush1.bf16.msra.mxu0 0
  %4915 = vmatprep.subr.bf16.mxu0 0
  %4916 = vmatpush1.bf16.msra.mxu0 0
  %4917 = vmatprep.subr.bf16.mxu0 0
  %4918 = vmatpush1.bf16.msra.mxu0 0
  %4919 = vmatprep.mubr.bf16.mxu0 0
  %4920 = vmatmul.mubr.bf16.gmra.mrb[0].mxu0 %v4842
  %v4921 = vpop.f32.mrb[0].mxu0
  %v4922 = vadd.f32 %v4612, %v4921
  %v4923 = vpop.f32.mrb[0].mxu0
  %v4924 = vadd.f32 %v4616, %v4923
  %v4925 = vpop.f32.mrb[0].mxu0
  %v4926 = vadd.f32 %v4612, %v4925
  %v4927 = vpop.f32.mrb[0].mxu0
  %v4928 = vadd.f32 %v4616, %v4927
  %4929 = vdwg.mxu0
  %4930 = vmatprep.subr.bf16.mxu0 %v4782
  %4931 = vmatpush1.bf16.msra.mxu0 %v4781
  %4932 = vmatprep.subr.bf16.mxu0 %v4798
  %4933 = vmatpush1.bf16.msra.mxu0 %v4797
  %4934 = vmatprep.subr.bf16.mxu0 0
  %4935 = vmatpush1.bf16.msra.mxu0 0
  %4936 = vmatprep.subr.bf16.mxu0 0
  %4937 = vmatpush1.bf16.msra.mxu0 0
  %4938 = vmatprep.subr.bf16.mxu0 0
  %4939 = vmatpush1.bf16.msra.mxu0 0
  %4940 = vmatprep.subr.bf16.mxu0 0
  %4941 = vmatpush1.bf16.msra.mxu0 0
  %4942 = vmatprep.subr.bf16.mxu0 0
  %4943 = vmatpush1.bf16.msra.mxu0 0
  %4944 = vmatprep.subr.bf16.mxu0 0
  %4945 = vmatpush1.bf16.msra.mxu0 0
  %4946 = vmatprep.subr.bf16.mxu0 0
  %4947 = vmatpush1.bf16.msra.mxu0 0
  %4948 = vmatprep.subr.bf16.mxu0 0
  %4949 = vmatpush1.bf16.msra.mxu0 0
  %4950 = vmatprep.subr.bf16.mxu0 0
  %4951 = vmatpush1.bf16.msra.mxu0 0
  %4952 = vmatprep.subr.bf16.mxu0 0
  %4953 = vmatpush1.bf16.msra.mxu0 0
  %4954 = vmatprep.subr.bf16.mxu0 0
  %4955 = vmatpush1.bf16.msra.mxu0 0
  %4956 = vmatprep.subr.bf16.mxu0 0
  %4957 = vmatpush1.bf16.msra.mxu0 0
  %4958 = vmatprep.subr.bf16.mxu0 0
  %4959 = vmatpush1.bf16.msra.mxu0 0
  %4960 = vmatprep.subr.bf16.mxu0 0
  %4961 = vmatpush1.bf16.msra.mxu0 0
  %4962 = vmatprep.mubr.bf16.mxu0 0
  %4963 = vmatmul.mubr.bf16.gmra.mrb[0].mxu0 %v4842
  %v4964 = vpop.f32.mrb[0].mxu0
  %v4965 = vadd.f32 %v4620, %v4964
  %v4966 = vpop.f32.mrb[0].mxu0
  %v4967 = vadd.f32 %v4624, %v4966
  %v4968 = vpop.f32.mrb[0].mxu0
  %v4969 = vadd.f32 %v4620, %v4968
  %v4970 = vpop.f32.mrb[0].mxu0
  %v4971 = vadd.f32 %v4624, %v4970
  %4972 = vdwg.mxu0
  %4973 = vmatprep.subr.bf16.mxu0 %v4784
  %4974 = vmatpush1.bf16.msra.mxu0 %v4783
  %4975 = vmatprep.subr.bf16.mxu0 %v4800
  %4976 = vmatpush1.bf16.msra.mxu0 %v4799
  %4977 = vmatprep.subr.bf16.mxu0 0
  %4978 = vmatpush1.bf16.msra.mxu0 0
  %4979 = vmatprep.subr.bf16.mxu0 0
  %4980 = vmatpush1.bf16.msra.mxu0 0
  %4981 = vmatprep.subr.bf16.mxu0 0
  %4982 = vmatpush1.bf16.msra.mxu0 0
  %4983 = vmatprep.subr.bf16.mxu0 0
  %4984 = vmatpush1.bf16.msra.mxu0 0
  %4985 = vmatprep.subr.bf16.mxu0 0
  %4986 = vmatpush1.bf16.msra.mxu0 0
  %4987 = vmatprep.subr.bf16.mxu0 0
  %4988 = vmatpush1.bf16.msra.mxu0 0
  %4989 = vmatprep.subr.bf16.mxu0 0
  %4990 = vmatpush1.bf16.msra.mxu0 0
  %4991 = vmatprep.subr.bf16.mxu0 0
  %4992 = vmatpush1.bf16.msra.mxu0 0
  %4993 = vmatprep.subr.bf16.mxu0 0
  %4994 = vmatpush1.bf16.msra.mxu0 0
  %4995 = vmatprep.subr.bf16.mxu0 0
  %4996 = vmatpush1.bf16.msra.mxu0 0
  %4997 = vmatprep.subr.bf16.mxu0 0
  %4998 = vmatpush1.bf16.msra.mxu0 0
  %4999 = vmatprep.subr.bf16.mxu0 0
  %5000 = vmatpush1.bf16.msra.mxu0 0
  %5001 = vmatprep.subr.bf16.mxu0 0
  %5002 = vmatpush1.bf16.msra.mxu0 0
  %5003 = vmatprep.subr.bf16.mxu0 0
  %5004 = vmatpush1.bf16.msra.mxu0 0
  %5005 = vmatprep.mubr.bf16.mxu0 0
  %5006 = vmatmul.mubr.bf16.gmra.mrb[0].mxu0 %v4842
  %v5007 = vpop.f32.mrb[0].mxu0
  %v5008 = vadd.f32 %v4628, %v5007
  %v5009 = vpop.f32.mrb[0].mxu0
  %v5010 = vadd.f32 %v4632, %v5009
  %v5011 = vpop.f32.mrb[0].mxu0
  %v5012 = vadd.f32 %v4628, %v5011
  %v5013 = vpop.f32.mrb[0].mxu0
  %v5014 = vadd.f32 %v4632, %v5013
  %5015 = vdwg.mxu0
  %5016 = vmatprep.subr.bf16.mxu0 %v4786
  %5017 = vmatpush1.bf16.msra.mxu0 %v4785
  %5018 = vmatprep.subr.bf16.mxu0 %v4802
  %5019 = vmatpush1.bf16.msra.mxu0 %v4801
  %5020 = vmatprep.subr.bf16.mxu0 0
  %5021 = vmatpush1.bf16.msra.mxu0 0
  %5022 = vmatprep.subr.bf16.mxu0 0
  %5023 = vmatpush1.bf16.msra.mxu0 0
  %5024 = vmatprep.subr.bf16.mxu0 0
  %5025 = vmatpush1.bf16.msra.mxu0 0
  %5026 = vmatprep.subr.bf16.mxu0 0
  %5027 = vmatpush1.bf16.msra.mxu0 0
  %5028 = vmatprep.subr.bf16.mxu0 0
  %5029 = vmatpush1.bf16.msra.mxu0 0
  %5030 = vmatprep.subr.bf16.mxu0 0
  %5031 = vmatpush1.bf16.msra.mxu0 0
  %5032 = vmatprep.subr.bf16.mxu0 0
  %5033 = vmatpush1.bf16.msra.mxu0 0
  %5034 = vmatprep.subr.bf16.mxu0 0
  %5035 = vmatpush1.bf16.msra.mxu0 0
  %5036 = vmatprep.subr.bf16.mxu0 0
  %5037 = vmatpush1.bf16.msra.mxu0 0
  %5038 = vmatprep.subr.bf16.mxu0 0
  %5039 = vmatpush1.bf16.msra.mxu0 0
  %5040 = vmatprep.subr.bf16.mxu0 0
  %5041 = vmatpush1.bf16.msra.mxu0 0
  %5042 = vmatprep.subr.bf16.mxu0 0
  %5043 = vmatpush1.bf16.msra.mxu0 0
  %5044 = vmatprep.subr.bf16.mxu0 0
  %5045 = vmatpush1.bf16.msra.mxu0 0
  %5046 = vmatprep.subr.bf16.mxu0 0
  %5047 = vmatpush1.bf16.msra.mxu0 0
  %5048 = vmatprep.mubr.bf16.mxu0 0
  %5049 = vmatmul.mubr.bf16.gmra.mrb[0].mxu0 %v4842
  %v5050 = vpop.f32.mrb[0].mxu0
  %v5051 = vadd.f32 %v4636, %v5050
  %v5052 = vpop.f32.mrb[0].mxu0
  %v5053 = vadd.f32 %v4640, %v5052
  %v5054 = vpop.f32.mrb[0].mxu0
  %v5055 = vadd.f32 %v4636, %v5054
  %v5056 = vpop.f32.mrb[0].mxu0
  %v5057 = vadd.f32 %v4640, %v5056
  %5058 = vdwg.mxu0
  %5059 = vmatprep.subr.bf16.mxu0 %v4788
  %5060 = vmatpush1.bf16.msra.mxu0 %v4787
  %5061 = vmatprep.subr.bf16.mxu0 %v4804
  %5062 = vmatpush1.bf16.msra.mxu0 %v4803
  %5063 = vmatprep.subr.bf16.mxu0 0
  %5064 = vmatpush1.bf16.msra.mxu0 0
  %5065 = vmatprep.subr.bf16.mxu0 0
  %5066 = vmatpush1.bf16.msra.mxu0 0
  %5067 = vmatprep.subr.bf16.mxu0 0
  %5068 = vmatpush1.bf16.msra.mxu0 0
  %5069 = vmatprep.subr.bf16.mxu0 0
  %5070 = vmatpush1.bf16.msra.mxu0 0
  %5071 = vmatprep.subr.bf16.mxu0 0
  %5072 = vmatpush1.bf16.msra.mxu0 0
  %5073 = vmatprep.subr.bf16.mxu0 0
  %5074 = vmatpush1.bf16.msra.mxu0 0
  %5075 = vmatprep.subr.bf16.mxu0 0
  %5076 = vmatpush1.bf16.msra.mxu0 0
  %5077 = vmatprep.subr.bf16.mxu0 0
  %5078 = vmatpush1.bf16.msra.mxu0 0
  %5079 = vmatprep.subr.bf16.mxu0 0
  %5080 = vmatpush1.bf16.msra.mxu0 0
  %5081 = vmatprep.subr.bf16.mxu0 0
  %5082 = vmatpush1.bf16.msra.mxu0 0
  %5083 = vmatprep.subr.bf16.mxu0 0
  %5084 = vmatpush1.bf16.msra.mxu0 0
  %5085 = vmatprep.subr.bf16.mxu0 0
  %5086 = vmatpush1.bf16.msra.mxu0 0
  %5087 = vmatprep.subr.bf16.mxu0 0
  %5088 = vmatpush1.bf16.msra.mxu0 0
  %5089 = vmatprep.subr.bf16.mxu0 0
  %5090 = vmatpush1.bf16.msra.mxu0 0
  %5091 = vmatprep.mubr.bf16.mxu0 0
  %5092 = vmatmul.mubr.bf16.gmra.mrb[0].mxu0 %v4842
  %v5093 = vpop.f32.mrb[0].mxu0
  %v5094 = vadd.f32 %v4644, %v5093
  %v5095 = vpop.f32.mrb[0].mxu0
  %v5096 = vadd.f32 %v4648, %v5095
  %v5097 = vpop.f32.mrb[0].mxu0
  %v5098 = vadd.f32 %v4644, %v5097
  %v5099 = vpop.f32.mrb[0].mxu0
  %v5100 = vadd.f32 %v4648, %v5099
  %5101 = vdwg.mxu0
  %5102 = vmatprep.subr.bf16.mxu0 %v4790
  %5103 = vmatpush1.bf16.msra.mxu0 %v4789
  %5104 = vmatprep.subr.bf16.mxu0 %v4806
  %5105 = vmatpush1.bf16.msra.mxu0 %v4805
  %5106 = vmatprep.subr.bf16.mxu0 0
  %5107 = vmatpush1.bf16.msra.mxu0 0
  %5108 = vmatprep.subr.bf16.mxu0 0
  %5109 = vmatpush1.bf16.msra.mxu0 0
  %5110 = vmatprep.subr.bf16.mxu0 0
  %5111 = vmatpush1.bf16.msra.mxu0 0
  %5112 = vmatprep.subr.bf16.mxu0 0
  %5113 = vmatpush1.bf16.msra.mxu0 0
  %5114 = vmatprep.subr.bf16.mxu0 0
  %5115 = vmatpush1.bf16.msra.mxu0 0
  %5116 = vmatprep.subr.bf16.mxu0 0
  %5117 = vmatpush1.bf16.msra.mxu0 0
  %5118 = vmatprep.subr.bf16.mxu0 0
  %5119 = vmatpush1.bf16.msra.mxu0 0
  %5120 = vmatprep.subr.bf16.mxu0 0
  %5121 = vmatpush1.bf16.msra.mxu0 0
  %5122 = vmatprep.subr.bf16.mxu0 0
  %5123 = vmatpush1.bf16.msra.mxu0 0
  %5124 = vmatprep.subr.bf16.mxu0 0
  %5125 = vmatpush1.bf16.msra.mxu0 0
  %5126 = vmatprep.subr.bf16.mxu0 0
  %5127 = vmatpush1.bf16.msra.mxu0 0
  %5128 = vmatprep.subr.bf16.mxu0 0
  %5129 = vmatpush1.bf16.msra.mxu0 0
  %5130 = vmatprep.subr.bf16.mxu0 0
  %5131 = vmatpush1.bf16.msra.mxu0 0
  %5132 = vmatprep.subr.bf16.mxu0 0
  %5133 = vmatpush1.bf16.msra.mxu0 0
  %5134 = vmatprep.mubr.bf16.mxu0 0
  %5135 = vmatmul.mubr.bf16.gmra.mrb[0].mxu0 %v4842
  %v5136 = vpop.f32.mrb[0].mxu0
  %v5137 = vadd.f32 %v4652, %v5136
  %v5138 = vpop.f32.mrb[0].mxu0
  %v5139 = vadd.f32 %v4656, %v5138
  %v5140 = vpop.f32.mrb[0].mxu0
  %v5141 = vadd.f32 %v4652, %v5140
  %v5142 = vpop.f32.mrb[0].mxu0
  %v5143 = vadd.f32 %v4656, %v5142
  %5144 = vdwg.mxu0
  %5145 = vmatprep.subr.bf16.mxu0 %v4792
  %5146 = vmatpush1.bf16.msra.mxu0 %v4791
  %5147 = vmatprep.subr.bf16.mxu0 %v4808
  %5148 = vmatpush1.bf16.msra.mxu0 %v4807
  %5149 = vmatprep.subr.bf16.mxu0 0
  %5150 = vmatpush1.bf16.msra.mxu0 0
  %5151 = vmatprep.subr.bf16.mxu0 0
  %5152 = vmatpush1.bf16.msra.mxu0 0
  %5153 = vmatprep.subr.bf16.mxu0 0
  %5154 = vmatpush1.bf16.msra.mxu0 0
  %5155 = vmatprep.subr.bf16.mxu0 0
  %5156 = vmatpush1.bf16.msra.mxu0 0
  %5157 = vmatprep.subr.bf16.mxu0 0
  %5158 = vmatpush1.bf16.msra.mxu0 0
  %5159 = vmatprep.subr.bf16.mxu0 0
  %5160 = vmatpush1.bf16.msra.mxu0 0
  %5161 = vmatprep.subr.bf16.mxu0 0
  %5162 = vmatpush1.bf16.msra.mxu0 0
  %5163 = vmatprep.subr.bf16.mxu0 0
  %5164 = vmatpush1.bf16.msra.mxu0 0
  %5165 = vmatprep.subr.bf16.mxu0 0
  %5166 = vmatpush1.bf16.msra.mxu0 0
  %5167 = vmatprep.subr.bf16.mxu0 0
  %5168 = vmatpush1.bf16.msra.mxu0 0
  %5169 = vmatprep.subr.bf16.mxu0 0
  %5170 = vmatpush1.bf16.msra.mxu0 0
  %5171 = vmatprep.subr.bf16.mxu0 0
  %5172 = vmatpush1.bf16.msra.mxu0 0
  %5173 = vmatprep.subr.bf16.mxu0 0
  %5174 = vmatpush1.bf16.msra.mxu0 0
  %5175 = vmatprep.subr.bf16.mxu0 0
  %5176 = vmatpush1.bf16.msra.mxu0 0
  %5177 = vmatprep.mubr.bf16.mxu0 0
  %5178 = vmatmul.mubr.bf16.gmra.mrb[0].mxu0 %v4842
  %v5179 = vpop.f32.mrb[0].mxu0
  %v5180 = vadd.f32 %v4660, %v5179
  %v5181 = vpop.f32.mrb[0].mxu0
  %v5182 = vadd.f32 %v4664, %v5181
  %v5183 = vpop.f32.mrb[0].mxu0
  %v5184 = vadd.f32 %v4660, %v5183
  %v5185 = vpop.f32.mrb[0].mxu0
  %v5186 = vadd.f32 %v4664, %v5185
  %5187 = vdwg.mxu0
  %v5188 = vmax.f32 %v4879, 0.0
  %v5189 = vmax.f32 %v4881, 0.0
  %v5190 = vmax.f32 %v4922, 0.0
  %v5191 = vmax.f32 %v4924, 0.0
  %v5192 = vmax.f32 %v4965, 0.0
  %v5193 = vmax.f32 %v4967, 0.0
  %v5194 = vmax.f32 %v5008, 0.0
  %v5195 = vmax.f32 %v5010, 0.0
  %v5196 = vmax.f32 %v5051, 0.0
  %v5197 = vmax.f32 %v5053, 0.0
  %v5198 = vmax.f32 %v5094, 0.0
  %v5199 = vmax.f32 %v5096, 0.0
  %v5200 = vmax.f32 %v5137, 0.0
  %v5201 = vmax.f32 %v5139, 0.0
  %v5202 = vmax.f32 %v5180, 0.0
  %v5203 = vmax.f32 %v5182, 0.0
  %v5204 = vmax.f32 %v4883, 0.0
  %v5205 = vmax.f32 %v4885, 0.0
  %v5206 = vmax.f32 %v4926, 0.0
  %v5207 = vmax.f32 %v4928, 0.0
  %v5208 = vmax.f32 %v4969, 0.0
  %v5209 = vmax.f32 %v4971, 0.0
  %v5210 = vmax.f32 %v5012, 0.0
  %v5211 = vmax.f32 %v5014, 0.0
  %v5212 = vmax.f32 %v5055, 0.0
  %v5213 = vmax.f32 %v5057, 0.0
  %v5214 = vmax.f32 %v5098, 0.0
  %v5215 = vmax.f32 %v5100, 0.0
  %v5216 = vmax.f32 %v5141, 0.0
  %v5217 = vmax.f32 %v5143, 0.0
  %v5218 = vmax.f32 %v5184, 0.0
  %v5219 = vmax.f32 %v5186, 0.0
  %s5220 = scalar_lea.vmem %s13, 1024
  %v5221 = vld [vmem:[%s5220] sm:$0xf]
  %v5222 = vld [vmem:[%s5220 + $0x4] sm:$0xf]
  %v5223 = vld [vmem:[%s5220 + $0x8] sm:$0xf]
  %v5224 = vld [vmem:[%s5220 + $0xc] sm:$0xf]
  %v5225 = vld [vmem:[%s5220 + $0x10] sm:$0xf]
  %v5226 = vld [vmem:[%s5220 + $0x14] sm:$0xf]
  %v5227 = vld [vmem:[%s5220 + $0x18] sm:$0xf]
  %v5228 = vld [vmem:[%s5220 + $0x1c] sm:$0xf]
  %v5229 = vld [vmem:[%s5220 + $0x20] sm:$0xf]
  %v5230 = vld [vmem:[%s5220 + $0x24] sm:$0xf]
  %v5231 = vld [vmem:[%s5220 + $0x28] sm:$0xf]
  %v5232 = vld [vmem:[%s5220 + $0x2c] sm:$0xf]
  %v5233 = vld [vmem:[%s5220 + $0x30] sm:$0xf]
  %v5234 = vld [vmem:[%s5220 + $0x34] sm:$0xf]
  %v5235 = vld [vmem:[%s5220 + $0x38] sm:$0xf]
  %v5236 = vld [vmem:[%s5220 + $0x3c] sm:$0xf]
  %v5237 = vld [vmem:[%s5220 + $0x40] sm:$0xf]
  %v5238 = vld [vmem:[%s5220 + $0x44] sm:$0xf]
  %v5239 = vld [vmem:[%s5220 + $0x48] sm:$0xf]
  %v5240 = vld [vmem:[%s5220 + $0x4c] sm:$0xf]
  %v5241 = vld [vmem:[%s5220 + $0x50] sm:$0xf]
  %v5242 = vld [vmem:[%s5220 + $0x54] sm:$0xf]
  %v5243 = vld [vmem:[%s5220 + $0x58] sm:$0xf]
  %v5244 = vld [vmem:[%s5220 + $0x5c] sm:$0xf]
  %v5245 = vld [vmem:[%s5220 + $0x60] sm:$0xf]
  %v5246 = vld [vmem:[%s5220 + $0x64] sm:$0xf]
  %v5247 = vld [vmem:[%s5220 + $0x68] sm:$0xf]
  %v5248 = vld [vmem:[%s5220 + $0x6c] sm:$0xf]
  %v5249 = vld [vmem:[%s5220 + $0x70] sm:$0xf]
  %v5250 = vld [vmem:[%s5220 + $0x74] sm:$0xf]
  %v5251 = vld [vmem:[%s5220 + $0x78] sm:$0xf]
  %v5252 = vld [vmem:[%s5220 + $0x7c] sm:$0xf]
  %v5253 = vld [vmem:[%s5220 + $0x80] sm:$0xf]
  %v5254 = vld [vmem:[%s5220 + $0x84] sm:$0xf]
  %v5255 = vld [vmem:[%s5220 + $0x88] sm:$0xf]
  %v5256 = vld [vmem:[%s5220 + $0x8c] sm:$0xf]
  %v5257 = vld [vmem:[%s5220 + $0x90] sm:$0xf]
  %v5258 = vld [vmem:[%s5220 + $0x94] sm:$0xf]
  %v5259 = vld [vmem:[%s5220 + $0x98] sm:$0xf]
  %v5260 = vld [vmem:[%s5220 + $0x9c] sm:$0xf]
  %v5261 = vld [vmem:[%s5220 + $0xa0] sm:$0xf]
  %v5262 = vld [vmem:[%s5220 + $0xa4] sm:$0xf]
  %v5263 = vld [vmem:[%s5220 + $0xa8] sm:$0xf]
  %v5264 = vld [vmem:[%s5220 + $0xac] sm:$0xf]
  %v5265 = vld [vmem:[%s5220 + $0xb0] sm:$0xf]
  %v5266 = vld [vmem:[%s5220 + $0xb4] sm:$0xf]
  %v5267 = vld [vmem:[%s5220 + $0xb8] sm:$0xf]
  %v5268 = vld [vmem:[%s5220 + $0xbc] sm:$0xf]
  %v5269 = vld [vmem:[%s5220 + $0xc0] sm:$0xf]
  %v5270 = vld [vmem:[%s5220 + $0xc4] sm:$0xf]
  %v5271 = vld [vmem:[%s5220 + $0xc8] sm:$0xf]
  %v5272 = vld [vmem:[%s5220 + $0xcc] sm:$0xf]
  %v5273 = vld [vmem:[%s5220 + $0xd0] sm:$0xf]
  %v5274 = vld [vmem:[%s5220 + $0xd4] sm:$0xf]
  %v5275 = vld [vmem:[%s5220 + $0xd8] sm:$0xf]
  %v5276 = vld [vmem:[%s5220 + $0xdc] sm:$0xf]
  %v5277 = vld [vmem:[%s5220 + $0xe0] sm:$0xf]
  %v5278 = vld [vmem:[%s5220 + $0xe4] sm:$0xf]
  %v5279 = vld [vmem:[%s5220 + $0xe8] sm:$0xf]
  %v5280 = vld [vmem:[%s5220 + $0xec] sm:$0xf]
  %v5281 = vld [vmem:[%s5220 + $0xf0] sm:$0xf]
  %v5282 = vld [vmem:[%s5220 + $0xf4] sm:$0xf]
  %v5283 = vld [vmem:[%s5220 + $0xf8] sm:$0xf]
  %v5284 = vld [vmem:[%s5220 + $0xfc] sm:$0xf]
  %v5285 = vld [vmem:[%s5220 + $0x100] sm:$0xf]
  %v5286 = vld [vmem:[%s5220 + $0x104] sm:$0xf]
  %v5287 = vld [vmem:[%s5220 + $0x108] sm:$0xf]
  %v5288 = vld [vmem:[%s5220 + $0x10c] sm:$0xf]
  %v5289 = vld [vmem:[%s5220 + $0x110] sm:$0xf]
  %v5290 = vld [vmem:[%s5220 + $0x114] sm:$0xf]
  %v5291 = vld [vmem:[%s5220 + $0x118] sm:$0xf]
  %v5292 = vld [vmem:[%s5220 + $0x11c] sm:$0xf]
  %v5293 = vld [vmem:[%s5220 + $0x120] sm:$0xf]
  %v5294 = vld [vmem:[%s5220 + $0x124] sm:$0xf]
  %v5295 = vld [vmem:[%s5220 + $0x128] sm:$0xf]
  %v5296 = vld [vmem:[%s5220 + $0x12c] sm:$0xf]
  %v5297 = vld [vmem:[%s5220 + $0x130] sm:$0xf]
  %v5298 = vld [vmem:[%s5220 + $0x134] sm:$0xf]
  %v5299 = vld [vmem:[%s5220 + $0x138] sm:$0xf]
  %v5300 = vld [vmem:[%s5220 + $0x13c] sm:$0xf]
  %v5301 = vld [vmem:[%s5220 + $0x140] sm:$0xf]
  %v5302 = vld [vmem:[%s5220 + $0x144] sm:$0xf]
  %v5303 = vld [vmem:[%s5220 + $0x148] sm:$0xf]
  %v5304 = vld [vmem:[%s5220 + $0x14c] sm:$0xf]
  %v5305 = vld [vmem:[%s5220 + $0x150] sm:$0xf]
  %v5306 = vld [vmem:[%s5220 + $0x154] sm:$0xf]
  %v5307 = vld [vmem:[%s5220 + $0x158] sm:$0xf]
  %v5308 = vld [vmem:[%s5220 + $0x15c] sm:$0xf]
  %v5309 = vld [vmem:[%s5220 + $0x160] sm:$0xf]
  %v5310 = vld [vmem:[%s5220 + $0x164] sm:$0xf]
  %v5311 = vld [vmem:[%s5220 + $0x168] sm:$0xf]
  %v5312 = vld [vmem:[%s5220 + $0x16c] sm:$0xf]
  %v5313 = vld [vmem:[%s5220 + $0x170] sm:$0xf]
  %v5314 = vld [vmem:[%s5220 + $0x174] sm:$0xf]
  %v5315 = vld [vmem:[%s5220 + $0x178] sm:$0xf]
  %v5316 = vld [vmem:[%s5220 + $0x17c] sm:$0xf]
  %v5317 = vld [vmem:[%s5220 + $0x180] sm:$0xf]
  %v5318 = vld [vmem:[%s5220 + $0x184] sm:$0xf]
  %v5319 = vld [vmem:[%s5220 + $0x188] sm:$0xf]
  %v5320 = vld [vmem:[%s5220 + $0x18c] sm:$0xf]
  %v5321 = vld [vmem:[%s5220 + $0x190] sm:$0xf]
  %v5322 = vld [vmem:[%s5220 + $0x194] sm:$0xf]
  %v5323 = vld [vmem:[%s5220 + $0x198] sm:$0xf]
  %v5324 = vld [vmem:[%s5220 + $0x19c] sm:$0xf]
  %v5325 = vld [vmem:[%s5220 + $0x1a0] sm:$0xf]
  %v5326 = vld [vmem:[%s5220 + $0x1a4] sm:$0xf]
  %v5327 = vld [vmem:[%s5220 + $0x1a8] sm:$0xf]
  %v5328 = vld [vmem:[%s5220 + $0x1ac] sm:$0xf]
  %v5329 = vld [vmem:[%s5220 + $0x1b0] sm:$0xf]
  %v5330 = vld [vmem:[%s5220 + $0x1b4] sm:$0xf]
  %v5331 = vld [vmem:[%s5220 + $0x1b8] sm:$0xf]
  %v5332 = vld [vmem:[%s5220 + $0x1bc] sm:$0xf]
  %v5333 = vld [vmem:[%s5220 + $0x1c0] sm:$0xf]
  %v5334 = vld [vmem:[%s5220 + $0x1c4] sm:$0xf]
  %v5335 = vld [vmem:[%s5220 + $0x1c8] sm:$0xf]
  %v5336 = vld [vmem:[%s5220 + $0x1cc] sm:$0xf]
  %v5337 = vld [vmem:[%s5220 + $0x1d0] sm:$0xf]
  %v5338 = vld [vmem:[%s5220 + $0x1d4] sm:$0xf]
  %v5339 = vld [vmem:[%s5220 + $0x1d8] sm:$0xf]
  %v5340 = vld [vmem:[%s5220 + $0x1dc] sm:$0xf]
  %v5341 = vld [vmem:[%s5220 + $0x1e0] sm:$0xf]
  %v5342 = vld [vmem:[%s5220 + $0x1e4] sm:$0xf]
  %v5343 = vld [vmem:[%s5220 + $0x1e8] sm:$0xf]
  %v5344 = vld [vmem:[%s5220 + $0x1ec] sm:$0xf]
  %v5345 = vld [vmem:[%s5220 + $0x1f0] sm:$0xf]
  %v5346 = vld [vmem:[%s5220 + $0x1f4] sm:$0xf]
  %v5347 = vld [vmem:[%s5220 + $0x1f8] sm:$0xf]
  %v5348 = vld [vmem:[%s5220 + $0x1fc] sm:$0xf]
  %v5349 = vld [vmem:[%s5220 + $0x200] sm:$0xf]
  %v5350 = vld [vmem:[%s5220 + $0x204] sm:$0xf]
  %v5351 = vld [vmem:[%s5220 + $0x208] sm:$0xf]
  %v5352 = vld [vmem:[%s5220 + $0x20c] sm:$0xf]
  %v5353 = vld [vmem:[%s5220 + $0x210] sm:$0xf]
  %v5354 = vld [vmem:[%s5220 + $0x214] sm:$0xf]
  %v5355 = vld [vmem:[%s5220 + $0x218] sm:$0xf]
  %v5356 = vld [vmem:[%s5220 + $0x21c] sm:$0xf]
  %v5357 = vld [vmem:[%s5220 + $0x220] sm:$0xf]
  %v5358 = vld [vmem:[%s5220 + $0x224] sm:$0xf]
  %v5359 = vld [vmem:[%s5220 + $0x228] sm:$0xf]
  %v5360 = vld [vmem:[%s5220 + $0x22c] sm:$0xf]
  %v5361 = vld [vmem:[%s5220 + $0x230] sm:$0xf]
  %v5362 = vld [vmem:[%s5220 + $0x234] sm:$0xf]
  %v5363 = vld [vmem:[%s5220 + $0x238] sm:$0xf]
  %v5364 = vld [vmem:[%s5220 + $0x23c] sm:$0xf]
  %v5365 = vld [vmem:[%s5220 + $0x240] sm:$0xf]
  %v5366 = vld [vmem:[%s5220 + $0x244] sm:$0xf]
  %v5367 = vld [vmem:[%s5220 + $0x248] sm:$0xf]
  %v5368 = vld [vmem:[%s5220 + $0x24c] sm:$0xf]
  %v5369 = vld [vmem:[%s5220 + $0x250] sm:$0xf]
  %v5370 = vld [vmem:[%s5220 + $0x254] sm:$0xf]
  %v5371 = vld [vmem:[%s5220 + $0x258] sm:$0xf]
  %v5372 = vld [vmem:[%s5220 + $0x25c] sm:$0xf]
  %v5373 = vld [vmem:[%s5220 + $0x260] sm:$0xf]
  %v5374 = vld [vmem:[%s5220 + $0x264] sm:$0xf]
  %v5375 = vld [vmem:[%s5220 + $0x268] sm:$0xf]
  %v5376 = vld [vmem:[%s5220 + $0x26c] sm:$0xf]
  %v5377 = vld [vmem:[%s5220 + $0x270] sm:$0xf]
  %v5378 = vld [vmem:[%s5220 + $0x274] sm:$0xf]
  %v5379 = vld [vmem:[%s5220 + $0x278] sm:$0xf]
  %v5380 = vld [vmem:[%s5220 + $0x27c] sm:$0xf]
  %v5381 = vld [vmem:[%s5220 + $0x280] sm:$0xf]
  %v5382 = vld [vmem:[%s5220 + $0x284] sm:$0xf]
  %v5383 = vld [vmem:[%s5220 + $0x288] sm:$0xf]
  %v5384 = vld [vmem:[%s5220 + $0x28c] sm:$0xf]
  %v5385 = vld [vmem:[%s5220 + $0x290] sm:$0xf]
  %v5386 = vld [vmem:[%s5220 + $0x294] sm:$0xf]
  %v5387 = vld [vmem:[%s5220 + $0x298] sm:$0xf]
  %v5388 = vld [vmem:[%s5220 + $0x29c] sm:$0xf]
  %v5389 = vld [vmem:[%s5220 + $0x2a0] sm:$0xf]
  %v5390 = vld [vmem:[%s5220 + $0x2a4] sm:$0xf]
  %v5391 = vld [vmem:[%s5220 + $0x2a8] sm:$0xf]
  %v5392 = vld [vmem:[%s5220 + $0x2ac] sm:$0xf]
  %v5393 = vld [vmem:[%s5220 + $0x2b0] sm:$0xf]
  %v5394 = vld [vmem:[%s5220 + $0x2b4] sm:$0xf]
  %v5395 = vld [vmem:[%s5220 + $0x2b8] sm:$0xf]
  %v5396 = vld [vmem:[%s5220 + $0x2bc] sm:$0xf]
  %v5397 = vld [vmem:[%s5220 + $0x2c0] sm:$0xf]
  %v5398 = vld [vmem:[%s5220 + $0x2c4] sm:$0xf]
  %v5399 = vld [vmem:[%s5220 + $0x2c8] sm:$0xf]
  %v5400 = vld [vmem:[%s5220 + $0x2cc] sm:$0xf]
  %v5401 = vld [vmem:[%s5220 + $0x2d0] sm:$0xf]
  %v5402 = vld [vmem:[%s5220 + $0x2d4] sm:$0xf]
  %v5403 = vld [vmem:[%s5220 + $0x2d8] sm:$0xf]
  %v5404 = vld [vmem:[%s5220 + $0x2dc] sm:$0xf]
  %v5405 = vld [vmem:[%s5220 + $0x2e0] sm:$0xf]
  %v5406 = vld [vmem:[%s5220 + $0x2e4] sm:$0xf]
  %v5407 = vld [vmem:[%s5220 + $0x2e8] sm:$0xf]
  %v5408 = vld [vmem:[%s5220 + $0x2ec] sm:$0xf]
  %v5409 = vld [vmem:[%s5220 + $0x2f0] sm:$0xf]
  %v5410 = vld [vmem:[%s5220 + $0x2f4] sm:$0xf]
  %v5411 = vld [vmem:[%s5220 + $0x2f8] sm:$0xf]
  %v5412 = vld [vmem:[%s5220 + $0x2fc] sm:$0xf]
  %v5413 = vld [vmem:[%s5220 + $0x300] sm:$0xf]
  %v5414 = vld [vmem:[%s5220 + $0x304] sm:$0xf]
  %v5415 = vld [vmem:[%s5220 + $0x308] sm:$0xf]
  %v5416 = vld [vmem:[%s5220 + $0x30c] sm:$0xf]
  %v5417 = vld [vmem:[%s5220 + $0x310] sm:$0xf]
  %v5418 = vld [vmem:[%s5220 + $0x314] sm:$0xf]
  %v5419 = vld [vmem:[%s5220 + $0x318] sm:$0xf]
  %v5420 = vld [vmem:[%s5220 + $0x31c] sm:$0xf]
  %v5421 = vld [vmem:[%s5220 + $0x320] sm:$0xf]
  %v5422 = vld [vmem:[%s5220 + $0x324] sm:$0xf]
  %v5423 = vld [vmem:[%s5220 + $0x328] sm:$0xf]
  %v5424 = vld [vmem:[%s5220 + $0x32c] sm:$0xf]
  %v5425 = vld [vmem:[%s5220 + $0x330] sm:$0xf]
  %v5426 = vld [vmem:[%s5220 + $0x334] sm:$0xf]
  %v5427 = vld [vmem:[%s5220 + $0x338] sm:$0xf]
  %v5428 = vld [vmem:[%s5220 + $0x33c] sm:$0xf]
  %v5429 = vld [vmem:[%s5220 + $0x340] sm:$0xf]
  %v5430 = vld [vmem:[%s5220 + $0x344] sm:$0xf]
  %v5431 = vld [vmem:[%s5220 + $0x348] sm:$0xf]
  %v5432 = vld [vmem:[%s5220 + $0x34c] sm:$0xf]
  %v5433 = vld [vmem:[%s5220 + $0x350] sm:$0xf]
  %v5434 = vld [vmem:[%s5220 + $0x354] sm:$0xf]
  %v5435 = vld [vmem:[%s5220 + $0x358] sm:$0xf]
  %v5436 = vld [vmem:[%s5220 + $0x35c] sm:$0xf]
  %v5437 = vld [vmem:[%s5220 + $0x360] sm:$0xf]
  %v5438 = vld [vmem:[%s5220 + $0x364] sm:$0xf]
  %v5439 = vld [vmem:[%s5220 + $0x368] sm:$0xf]
  %v5440 = vld [vmem:[%s5220 + $0x36c] sm:$0xf]
  %v5441 = vld [vmem:[%s5220 + $0x370] sm:$0xf]
  %v5442 = vld [vmem:[%s5220 + $0x374] sm:$0xf]
  %v5443 = vld [vmem:[%s5220 + $0x378] sm:$0xf]
  %v5444 = vld [vmem:[%s5220 + $0x37c] sm:$0xf]
  %v5445 = vld [vmem:[%s5220 + $0x380] sm:$0xf]
  %v5446 = vld [vmem:[%s5220 + $0x384] sm:$0xf]
  %v5447 = vld [vmem:[%s5220 + $0x388] sm:$0xf]
  %v5448 = vld [vmem:[%s5220 + $0x38c] sm:$0xf]
  %v5449 = vld [vmem:[%s5220 + $0x390] sm:$0xf]
  %v5450 = vld [vmem:[%s5220 + $0x394] sm:$0xf]
  %v5451 = vld [vmem:[%s5220 + $0x398] sm:$0xf]
  %v5452 = vld [vmem:[%s5220 + $0x39c] sm:$0xf]
  %v5453 = vld [vmem:[%s5220 + $0x3a0] sm:$0xf]
  %v5454 = vld [vmem:[%s5220 + $0x3a4] sm:$0xf]
  %v5455 = vld [vmem:[%s5220 + $0x3a8] sm:$0xf]
  %v5456 = vld [vmem:[%s5220 + $0x3ac] sm:$0xf]
  %v5457 = vld [vmem:[%s5220 + $0x3b0] sm:$0xf]
  %v5458 = vld [vmem:[%s5220 + $0x3b4] sm:$0xf]
  %v5459 = vld [vmem:[%s5220 + $0x3b8] sm:$0xf]
  %v5460 = vld [vmem:[%s5220 + $0x3bc] sm:$0xf]
  %v5461 = vld [vmem:[%s5220 + $0x3c0] sm:$0xf]
  %v5462 = vld [vmem:[%s5220 + $0x3c4] sm:$0xf]
  %v5463 = vld [vmem:[%s5220 + $0x3c8] sm:$0xf]
  %v5464 = vld [vmem:[%s5220 + $0x3cc] sm:$0xf]
  %v5465 = vld [vmem:[%s5220 + $0x3d0] sm:$0xf]
  %v5466 = vld [vmem:[%s5220 + $0x3d4] sm:$0xf]
  %v5467 = vld [vmem:[%s5220 + $0x3d8] sm:$0xf]
  %v5468 = vld [vmem:[%s5220 + $0x3dc] sm:$0xf]
  %v5469 = vld [vmem:[%s5220 + $0x3e0] sm:$0xf]
  %v5470 = vld [vmem:[%s5220 + $0x3e4] sm:$0xf]
  %v5471 = vld [vmem:[%s5220 + $0x3e8] sm:$0xf]
  %v5472 = vld [vmem:[%s5220 + $0x3ec] sm:$0xf]
  %v5473 = vld [vmem:[%s5220 + $0x3f0] sm:$0xf]
  %v5474 = vld [vmem:[%s5220 + $0x3f4] sm:$0xf]
  %v5475 = vld [vmem:[%s5220 + $0x3f8] sm:$0xf]
  %v5476 = vld [vmem:[%s5220 + $0x3fc] sm:$0xf]
  %v5477 = vpack.c.bf16 %v5204, %v5188
  %v5478 = vpack.c.bf16 %v5205, %v5189
  %v5479 = vpack.c.bf16 %v5206, %v5190
  %v5480 = vpack.c.bf16 %v5207, %v5191
  %v5481 = vpack.c.bf16 %v5208, %v5192
  %v5482 = vpack.c.bf16 %v5209, %v5193
  %v5483 = vpack.c.bf16 %v5210, %v5194
  %v5484 = vpack.c.bf16 %v5211, %v5195
  %v5485 = vpack.c.bf16 %v5212, %v5196
  %v5486 = vpack.c.bf16 %v5213, %v5197
  %v5487 = vpack.c.bf16 %v5214, %v5198
  %v5488 = vpack.c.bf16 %v5215, %v5199
  %v5489 = vpack.c.bf16 %v5216, %v5200
  %v5490 = vpack.c.bf16 %v5217, %v5201
  %v5491 = vpack.c.bf16 %v5218, %v5202
  %v5492 = vpack.c.bf16 %v5219, %v5203
  %v5493 = vlaneseq
  %v5494 = vshrl.u32 %v5493, 7
  %v5495 = vsub.s32 1, %v5494
  %v5496 = vrot.slane %v3369, %v5495
  %v5753 = vunpack.c.l.b16 %v5221
  %v5754 = vunpack.c.l.b16 %v5222
  %v5755 = vunpack.c.l.b16 %v5223
  %v5756 = vunpack.c.l.b16 %v5224
  %v5757 = vunpack.c.l.b16 %v5225
  %v5758 = vunpack.c.l.b16 %v5226
  %v5759 = vunpack.c.l.b16 %v5227
  %v5760 = vunpack.c.l.b16 %v5228
  %v5761 = vunpack.c.l.b16 %v5229
  %v5762 = vunpack.c.l.b16 %v5230
  %v5763 = vunpack.c.l.b16 %v5231
  %v5764 = vunpack.c.l.b16 %v5232
  %v5765 = vunpack.c.l.b16 %v5233
  %v5766 = vunpack.c.l.b16 %v5234
  %v5767 = vunpack.c.l.b16 %v5235
  %v5768 = vunpack.c.l.b16 %v5236
  %v5769 = vunpack.c.l.b16 %v5237
  %v5770 = vunpack.c.l.b16 %v5238
  %v5771 = vunpack.c.l.b16 %v5239
  %v5772 = vunpack.c.l.b16 %v5240
  %v5773 = vunpack.c.l.b16 %v5241
  %v5774 = vunpack.c.l.b16 %v5242
  %v5775 = vunpack.c.l.b16 %v5243
  %v5776 = vunpack.c.l.b16 %v5244
  %v5777 = vunpack.c.l.b16 %v5245
  %v5778 = vunpack.c.l.b16 %v5246
  %v5779 = vunpack.c.l.b16 %v5247
  %v5780 = vunpack.c.l.b16 %v5248
  %v5781 = vunpack.c.l.b16 %v5249
  %v5782 = vunpack.c.l.b16 %v5250
  %v5783 = vunpack.c.l.b16 %v5251
  %v5784 = vunpack.c.l.b16 %v5252
  %v5785 = vunpack.c.l.b16 %v5253
  %v5786 = vunpack.c.l.b16 %v5254
  %v5787 = vunpack.c.l.b16 %v5255
  %v5788 = vunpack.c.l.b16 %v5256
  %v5789 = vunpack.c.l.b16 %v5257
  %v5790 = vunpack.c.l.b16 %v5258
  %v5791 = vunpack.c.l.b16 %v5259
  %v5792 = vunpack.c.l.b16 %v5260
  %v5793 = vunpack.c.l.b16 %v5261
  %v5794 = vunpack.c.l.b16 %v5262
  %v5795 = vunpack.c.l.b16 %v5263
  %v5796 = vunpack.c.l.b16 %v5264
  %v5797 = vunpack.c.l.b16 %v5265
  %v5798 = vunpack.c.l.b16 %v5266
  %v5799 = vunpack.c.l.b16 %v5267
  %v5800 = vunpack.c.l.b16 %v5268
  %v5801 = vunpack.c.l.b16 %v5269
  %v5802 = vunpack.c.l.b16 %v5270
  %v5803 = vunpack.c.l.b16 %v5271
  %v5804 = vunpack.c.l.b16 %v5272
  %v5805 = vunpack.c.l.b16 %v5273
  %v5806 = vunpack.c.l.b16 %v5274
  %v5807 = vunpack.c.l.b16 %v5275
  %v5808 = vunpack.c.l.b16 %v5276
  %v5809 = vunpack.c.l.b16 %v5277
  %v5810 = vunpack.c.l.b16 %v5278
  %v5811 = vunpack.c.l.b16 %v5279
  %v5812 = vunpack.c.l.b16 %v5280
  %v5813 = vunpack.c.l.b16 %v5281
  %v5814 = vunpack.c.l.b16 %v5282
  %v5815 = vunpack.c.l.b16 %v5283
  %v5816 = vunpack.c.l.b16 %v5284
  %v5817 = vunpack.c.l.b16 %v5285
  %v5818 = vunpack.c.l.b16 %v5286
  %v5819 = vunpack.c.l.b16 %v5287
  %v5820 = vunpack.c.l.b16 %v5288
  %v5821 = vunpack.c.l.b16 %v5289
  %v5822 = vunpack.c.l.b16 %v5290
  %v5823 = vunpack.c.l.b16 %v5291
  %v5824 = vunpack.c.l.b16 %v5292
  %v5825 = vunpack.c.l.b16 %v5293
  %v5826 = vunpack.c.l.b16 %v5294
  %v5827 = vunpack.c.l.b16 %v5295
  %v5828 = vunpack.c.l.b16 %v5296
  %v5829 = vunpack.c.l.b16 %v5297
  %v5830 = vunpack.c.l.b16 %v5298
  %v5831 = vunpack.c.l.b16 %v5299
  %v5832 = vunpack.c.l.b16 %v5300
  %v5833 = vunpack.c.l.b16 %v5301
  %v5834 = vunpack.c.l.b16 %v5302
  %v5835 = vunpack.c.l.b16 %v5303
  %v5836 = vunpack.c.l.b16 %v5304
  %v5837 = vunpack.c.l.b16 %v5305
  %v5838 = vunpack.c.l.b16 %v5306
  %v5839 = vunpack.c.l.b16 %v5307
  %v5840 = vunpack.c.l.b16 %v5308
  %v5841 = vunpack.c.l.b16 %v5309
  %v5842 = vunpack.c.l.b16 %v5310
  %v5843 = vunpack.c.l.b16 %v5311
  %v5844 = vunpack.c.l.b16 %v5312
  %v5845 = vunpack.c.l.b16 %v5313
  %v5846 = vunpack.c.l.b16 %v5314
  %v5847 = vunpack.c.l.b16 %v5315
  %v5848 = vunpack.c.l.b16 %v5316
  %v5849 = vunpack.c.l.b16 %v5317
  %v5850 = vunpack.c.l.b16 %v5318
  %v5851 = vunpack.c.l.b16 %v5319
  %v5852 = vunpack.c.l.b16 %v5320
  %v5853 = vunpack.c.l.b16 %v5321
  %v5854 = vunpack.c.l.b16 %v5322
  %v5855 = vunpack.c.l.b16 %v5323
  %v5856 = vunpack.c.l.b16 %v5324
  %v5857 = vunpack.c.l.b16 %v5325
  %v5858 = vunpack.c.l.b16 %v5326
  %v5859 = vunpack.c.l.b16 %v5327
  %v5860 = vunpack.c.l.b16 %v5328
  %v5861 = vunpack.c.l.b16 %v5329
  %v5862 = vunpack.c.l.b16 %v5330
  %v5863 = vunpack.c.l.b16 %v5331
  %v5864 = vunpack.c.l.b16 %v5332
  %v5865 = vunpack.c.l.b16 %v5333
  %v5866 = vunpack.c.l.b16 %v5334
  %v5867 = vunpack.c.l.b16 %v5335
  %v5868 = vunpack.c.l.b16 %v5336
  %v5869 = vunpack.c.l.b16 %v5337
  %v5870 = vunpack.c.l.b16 %v5338
  %v5871 = vunpack.c.l.b16 %v5339
  %v5872 = vunpack.c.l.b16 %v5340
  %v5873 = vunpack.c.l.b16 %v5341
  %v5874 = vunpack.c.l.b16 %v5342
  %v5875 = vunpack.c.l.b16 %v5343
  %v5876 = vunpack.c.l.b16 %v5344
  %v5877 = vunpack.c.l.b16 %v5345
  %v5878 = vunpack.c.l.b16 %v5346
  %v5879 = vunpack.c.l.b16 %v5347
  %v5880 = vunpack.c.l.b16 %v5348
  %v5881 = vunpack.c.l.b16 %v5349
  %v5882 = vunpack.c.l.b16 %v5350
  %v5883 = vunpack.c.l.b16 %v5351
  %v5884 = vunpack.c.l.b16 %v5352
  %v5885 = vunpack.c.l.b16 %v5353
  %v5886 = vunpack.c.l.b16 %v5354
  %v5887 = vunpack.c.l.b16 %v5355
  %v5888 = vunpack.c.l.b16 %v5356
  %v5889 = vunpack.c.l.b16 %v5357
  %v5890 = vunpack.c.l.b16 %v5358
  %v5891 = vunpack.c.l.b16 %v5359
  %v5892 = vunpack.c.l.b16 %v5360
  %v5893 = vunpack.c.l.b16 %v5361
  %v5894 = vunpack.c.l.b16 %v5362
  %v5895 = vunpack.c.l.b16 %v5363
  %v5896 = vunpack.c.l.b16 %v5364
  %v5897 = vunpack.c.l.b16 %v5365
  %v5898 = vunpack.c.l.b16 %v5366
  %v5899 = vunpack.c.l.b16 %v5367
  %v5900 = vunpack.c.l.b16 %v5368
  %v5901 = vunpack.c.l.b16 %v5369
  %v5902 = vunpack.c.l.b16 %v5370
  %v5903 = vunpack.c.l.b16 %v5371
  %v5904 = vunpack.c.l.b16 %v5372
  %v5905 = vunpack.c.l.b16 %v5373
  %v5906 = vunpack.c.l.b16 %v5374
  %v5907 = vunpack.c.l.b16 %v5375
  %v5908 = vunpack.c.l.b16 %v5376
  %v5909 = vunpack.c.l.b16 %v5377
  %v5910 = vunpack.c.l.b16 %v5378
  %v5911 = vunpack.c.l.b16 %v5379
  %v5912 = vunpack.c.l.b16 %v5380
  %v5913 = vunpack.c.l.b16 %v5381
  %v5914 = vunpack.c.l.b16 %v5382
  %v5915 = vunpack.c.l.b16 %v5383
  %v5916 = vunpack.c.l.b16 %v5384
  %v5917 = vunpack.c.l.b16 %v5385
  %v5918 = vunpack.c.l.b16 %v5386
  %v5919 = vunpack.c.l.b16 %v5387
  %v5920 = vunpack.c.l.b16 %v5388
  %v5921 = vunpack.c.l.b16 %v5389
  %v5922 = vunpack.c.l.b16 %v5390
  %v5923 = vunpack.c.l.b16 %v5391
  %v5924 = vunpack.c.l.b16 %v5392
  %v5925 = vunpack.c.l.b16 %v5393
  %v5926 = vunpack.c.l.b16 %v5394
  %v5927 = vunpack.c.l.b16 %v5395
  %v5928 = vunpack.c.l.b16 %v5396
  %v5929 = vunpack.c.l.b16 %v5397
  %v5930 = vunpack.c.l.b16 %v5398
  %v5931 = vunpack.c.l.b16 %v5399
  %v5932 = vunpack.c.l.b16 %v5400
  %v5933 = vunpack.c.l.b16 %v5401
  %v5934 = vunpack.c.l.b16 %v5402
  %v5935 = vunpack.c.l.b16 %v5403
  %v5936 = vunpack.c.l.b16 %v5404
  %v5937 = vunpack.c.l.b16 %v5405
  %v5938 = vunpack.c.l.b16 %v5406
  %v5939 = vunpack.c.l.b16 %v5407
  %v5940 = vunpack.c.l.b16 %v5408
  %v5941 = vunpack.c.l.b16 %v5409
  %v5942 = vunpack.c.l.b16 %v5410
  %v5943 = vunpack.c.l.b16 %v5411
  %v5944 = vunpack.c.l.b16 %v5412
  %v5945 = vunpack.c.l.b16 %v5413
  %v5946 = vunpack.c.l.b16 %v5414
  %v5947 = vunpack.c.l.b16 %v5415
  %v5948 = vunpack.c.l.b16 %v5416
  %v5949 = vunpack.c.l.b16 %v5417
  %v5950 = vunpack.c.l.b16 %v5418
  %v5951 = vunpack.c.l.b16 %v5419
  %v5952 = vunpack.c.l.b16 %v5420
  %v5953 = vunpack.c.l.b16 %v5421
  %v5954 = vunpack.c.l.b16 %v5422
  %v5955 = vunpack.c.l.b16 %v5423
  %v5956 = vunpack.c.l.b16 %v5424
  %v5957 = vunpack.c.l.b16 %v5425
  %v5958 = vunpack.c.l.b16 %v5426
  %v5959 = vunpack.c.l.b16 %v5427
  %v5960 = vunpack.c.l.b16 %v5428
  %v5961 = vunpack.c.l.b16 %v5429
  %v5962 = vunpack.c.l.b16 %v5430
  %v5963 = vunpack.c.l.b16 %v5431
  %v5964 = vunpack.c.l.b16 %v5432
  %v5965 = vunpack.c.l.b16 %v5433
  %v5966 = vunpack.c.l.b16 %v5434
  %v5967 = vunpack.c.l.b16 %v5435
  %v5968 = vunpack.c.l.b16 %v5436
  %v5969 = vunpack.c.l.b16 %v5437
  %v5970 = vunpack.c.l.b16 %v5438
  %v5971 = vunpack.c.l.b16 %v5439
  %v5972 = vunpack.c.l.b16 %v5440
  %v5973 = vunpack.c.l.b16 %v5441
  %v5974 = vunpack.c.l.b16 %v5442
  %v5975 = vunpack.c.l.b16 %v5443
  %v5976 = vunpack.c.l.b16 %v5444
  %v5977 = vunpack.c.l.b16 %v5445
  %v5978 = vunpack.c.l.b16 %v5446
  %v5979 = vunpack.c.l.b16 %v5447
  %v5980 = vunpack.c.l.b16 %v5448
  %v5981 = vunpack.c.l.b16 %v5449
  %v5982 = vunpack.c.l.b16 %v5450
  %v5983 = vunpack.c.l.b16 %v5451
  %v5984 = vunpack.c.l.b16 %v5452
  %v5985 = vunpack.c.l.b16 %v5453
  %v5986 = vunpack.c.l.b16 %v5454
  %v5987 = vunpack.c.l.b16 %v5455
  %v5988 = vunpack.c.l.b16 %v5456
  %v5989 = vunpack.c.l.b16 %v5457
  %v5990 = vunpack.c.l.b16 %v5458
  %v5991 = vunpack.c.l.b16 %v5459
  %v5992 = vunpack.c.l.b16 %v5460
  %v5993 = vunpack.c.l.b16 %v5461
  %v5994 = vunpack.c.l.b16 %v5462
  %v5995 = vunpack.c.l.b16 %v5463
  %v5996 = vunpack.c.l.b16 %v5464
  %v5997 = vunpack.c.l.b16 %v5465
  %v5998 = vunpack.c.l.b16 %v5466
  %v5999 = vunpack.c.l.b16 %v5467
  %v6000 = vunpack.c.l.b16 %v5468
  %v6001 = vunpack.c.l.b16 %v5469
  %v6002 = vunpack.c.l.b16 %v5470
  %v6003 = vunpack.c.l.b16 %v5471
  %v6004 = vunpack.c.l.b16 %v5472
  %v6005 = vunpack.c.l.b16 %v5473
  %v6006 = vunpack.c.l.b16 %v5474
  %v6007 = vunpack.c.l.b16 %v5475
  %v6008 = vunpack.c.l.b16 %v5476
  %v6009 = vpack.c.b16 %v5754, %v5753
  %v6010 = vpack.c.b16 %v5756, %v5755
  %v6011 = vpack.c.b16 %v5758, %v5757
  %v6012 = vpack.c.b16 %v5760, %v5759
  %v6013 = vpack.c.b16 %v5762, %v5761
  %v6014 = vpack.c.b16 %v5764, %v5763
  %v6015 = vpack.c.b16 %v5766, %v5765
  %v6016 = vpack.c.b16 %v5768, %v5767
  %v6017 = vpack.c.b16 %v5770, %v5769
  %v6018 = vpack.c.b16 %v5772, %v5771
  %v6019 = vpack.c.b16 %v5774, %v5773
  %v6020 = vpack.c.b16 %v5776, %v5775
  %v6021 = vpack.c.b16 %v5778, %v5777
  %v6022 = vpack.c.b16 %v5780, %v5779
  %v6023 = vpack.c.b16 %v5782, %v5781
  %v6024 = vpack.c.b16 %v5784, %v5783
  %v6025 = vpack.c.b16 %v5786, %v5785
  %v6026 = vpack.c.b16 %v5788, %v5787
  %v6027 = vpack.c.b16 %v5790, %v5789
  %v6028 = vpack.c.b16 %v5792, %v5791
  %v6029 = vpack.c.b16 %v5794, %v5793
  %v6030 = vpack.c.b16 %v5796, %v5795
  %v6031 = vpack.c.b16 %v5798, %v5797
  %v6032 = vpack.c.b16 %v5800, %v5799
  %v6033 = vpack.c.b16 %v5802, %v5801
  %v6034 = vpack.c.b16 %v5804, %v5803
  %v6035 = vpack.c.b16 %v5806, %v5805
  %v6036 = vpack.c.b16 %v5808, %v5807
  %v6037 = vpack.c.b16 %v5810, %v5809
  %v6038 = vpack.c.b16 %v5812, %v5811
  %v6039 = vpack.c.b16 %v5814, %v5813
  %v6040 = vpack.c.b16 %v5816, %v5815
  %v6041 = vpack.c.b16 %v5818, %v5817
  %v6042 = vpack.c.b16 %v5820, %v5819
  %v6043 = vpack.c.b16 %v5822, %v5821
  %v6044 = vpack.c.b16 %v5824, %v5823
  %v6045 = vpack.c.b16 %v5826, %v5825
  %v6046 = vpack.c.b16 %v5828, %v5827
  %v6047 = vpack.c.b16 %v5830, %v5829
  %v6048 = vpack.c.b16 %v5832, %v5831
  %v6049 = vpack.c.b16 %v5834, %v5833
  %v6050 = vpack.c.b16 %v5836, %v5835
  %v6051 = vpack.c.b16 %v5838, %v5837
  %v6052 = vpack.c.b16 %v5840, %v5839
  %v6053 = vpack.c.b16 %v5842, %v5841
  %v6054 = vpack.c.b16 %v5844, %v5843
  %v6055 = vpack.c.b16 %v5846, %v5845
  %v6056 = vpack.c.b16 %v5848, %v5847
  %v6057 = vpack.c.b16 %v5850, %v5849
  %v6058 = vpack.c.b16 %v5852, %v5851
  %v6059 = vpack.c.b16 %v5854, %v5853
  %v6060 = vpack.c.b16 %v5856, %v5855
  %v6061 = vpack.c.b16 %v5858, %v5857
  %v6062 = vpack.c.b16 %v5860, %v5859
  %v6063 = vpack.c.b16 %v5862, %v5861
  %v6064 = vpack.c.b16 %v5864, %v5863
  %v6065 = vpack.c.b16 %v5866, %v5865
  %v6066 = vpack.c.b16 %v5868, %v5867
  %v6067 = vpack.c.b16 %v5870, %v5869
  %v6068 = vpack.c.b16 %v5872, %v5871
  %v6069 = vpack.c.b16 %v5874, %v5873
  %v6070 = vpack.c.b16 %v5876, %v5875
  %v6071 = vpack.c.b16 %v5878, %v5877
  %v6072 = vpack.c.b16 %v5880, %v5879
  %v6073 = vpack.c.b16 %v5882, %v5881
  %v6074 = vpack.c.b16 %v5884, %v5883
  %v6075 = vpack.c.b16 %v5886, %v5885
  %v6076 = vpack.c.b16 %v5888, %v5887
  %v6077 = vpack.c.b16 %v5890, %v5889
  %v6078 = vpack.c.b16 %v5892, %v5891
  %v6079 = vpack.c.b16 %v5894, %v5893
  %v6080 = vpack.c.b16 %v5896, %v5895
  %v6081 = vpack.c.b16 %v5898, %v5897
  %v6082 = vpack.c.b16 %v5900, %v5899
  %v6083 = vpack.c.b16 %v5902, %v5901
  %v6084 = vpack.c.b16 %v5904, %v5903
  %v6085 = vpack.c.b16 %v5906, %v5905
  %v6086 = vpack.c.b16 %v5908, %v5907
  %v6087 = vpack.c.b16 %v5910, %v5909
  %v6088 = vpack.c.b16 %v5912, %v5911
  %v6089 = vpack.c.b16 %v5914, %v5913
  %v6090 = vpack.c.b16 %v5916, %v5915
  %v6091 = vpack.c.b16 %v5918, %v5917
  %v6092 = vpack.c.b16 %v5920, %v5919
  %v6093 = vpack.c.b16 %v5922, %v5921
  %v6094 = vpack.c.b16 %v5924, %v5923
  %v6095 = vpack.c.b16 %v5926, %v5925
  %v6096 = vpack.c.b16 %v5928, %v5927
  %v6097 = vpack.c.b16 %v5930, %v5929
  %v6098 = vpack.c.b16 %v5932, %v5931
  %v6099 = vpack.c.b16 %v5934, %v5933
  %v6100 = vpack.c.b16 %v5936, %v5935
  %v6101 = vpack.c.b16 %v5938, %v5937
  %v6102 = vpack.c.b16 %v5940, %v5939
  %v6103 = vpack.c.b16 %v5942, %v5941
  %v6104 = vpack.c.b16 %v5944, %v5943
  %v6105 = vpack.c.b16 %v5946, %v5945
  %v6106 = vpack.c.b16 %v5948, %v5947
  %v6107 = vpack.c.b16 %v5950, %v5949
  %v6108 = vpack.c.b16 %v5952, %v5951
  %v6109 = vpack.c.b16 %v5954, %v5953
  %v6110 = vpack.c.b16 %v5956, %v5955
  %v6111 = vpack.c.b16 %v5958, %v5957
  %v6112 = vpack.c.b16 %v5960, %v5959
  %v6113 = vpack.c.b16 %v5962, %v5961
  %v6114 = vpack.c.b16 %v5964, %v5963
  %v6115 = vpack.c.b16 %v5966, %v5965
  %v6116 = vpack.c.b16 %v5968, %v5967
  %v6117 = vpack.c.b16 %v5970, %v5969
  %v6118 = vpack.c.b16 %v5972, %v5971
  %v6119 = vpack.c.b16 %v5974, %v5973
  %v6120 = vpack.c.b16 %v5976, %v5975
  %v6121 = vpack.c.b16 %v5978, %v5977
  %v6122 = vpack.c.b16 %v5980, %v5979
  %v6123 = vpack.c.b16 %v5982, %v5981
  %v6124 = vpack.c.b16 %v5984, %v5983
  %v6125 = vpack.c.b16 %v5986, %v5985
  %v6126 = vpack.c.b16 %v5988, %v5987
  %v6127 = vpack.c.b16 %v5990, %v5989
  %v6128 = vpack.c.b16 %v5992, %v5991
  %v6129 = vpack.c.b16 %v5994, %v5993
  %v6130 = vpack.c.b16 %v5996, %v5995
  %v6131 = vpack.c.b16 %v5998, %v5997
  %v6132 = vpack.c.b16 %v6000, %v5999
  %v6133 = vpack.c.b16 %v6002, %v6001
  %v6134 = vpack.c.b16 %v6004, %v6003
  %v6135 = vpack.c.b16 %v6006, %v6005
  %v6136 = vpack.c.b16 %v6008, %v6007
  %6265 = vmatprep.subr.bf16.mxu0 0
  %6266 = vmatpush1.bf16.msra.mxu0 %v6009
  %6267 = vmatprep.subr.bf16.mxu0 0
  %6268 = vmatpush1.bf16.msra.mxu0 %v6010
  %6269 = vmatprep.subr.bf16.mxu0 0
  %6270 = vmatpush1.bf16.msra.mxu0 %v6011
  %6271 = vmatprep.subr.bf16.mxu0 0
  %6272 = vmatpush1.bf16.msra.mxu0 %v6012
  %6273 = vmatprep.subr.bf16.mxu0 0
  %6274 = vmatpush1.bf16.msra.mxu0 %v6013
  %6275 = vmatprep.subr.bf16.mxu0 0
  %6276 = vmatpush1.bf16.msra.mxu0 %v6014
  %6277 = vmatprep.subr.bf16.mxu0 0
  %6278 = vmatpush1.bf16.msra.mxu0 %v6015
  %6279 = vmatprep.subr.bf16.mxu0 0
  %6280 = vmatpush1.bf16.msra.mxu0 %v6016
  %6281 = vmatprep.subr.bf16.mxu0 0
  %6282 = vmatpush1.bf16.msra.mxu0 %v6017
  %6283 = vmatprep.subr.bf16.mxu0 0
  %6284 = vmatpush1.bf16.msra.mxu0 %v6018
  %6285 = vmatprep.subr.bf16.mxu0 0
  %6286 = vmatpush1.bf16.msra.mxu0 %v6019
  %6287 = vmatprep.subr.bf16.mxu0 0
  %6288 = vmatpush1.bf16.msra.mxu0 %v6020
  %6289 = vmatprep.subr.bf16.mxu0 0
  %6290 = vmatpush1.bf16.msra.mxu0 %v6021
  %6291 = vmatprep.subr.bf16.mxu0 0
  %6292 = vmatpush1.bf16.msra.mxu0 %v6022
  %6293 = vmatprep.subr.bf16.mxu0 0
  %6294 = vmatpush1.bf16.msra.mxu0 %v6023
  %6295 = vmatprep.subr.bf16.mxu0 0
  %6296 = vmatpush1.bf16.msra.mxu0 %v6024
  %6297 = vmatprep.mubr.bf16.mxu0 %v5478
  %6298 = vmatmul.mubr.bf16.gmra.mrb[0].mxu0 %v5477
  %v6299 = vpop.f32.mrb[0].mxu0
  %v6300 = vadd.f32 %v5496, %v6299
  %v6301 = vpop.f32.mrb[0].mxu0
  %v6302 = vpop.f32.mrb[0].mxu0
  %v6303 = vadd.f32 %v5496, %v6302
  %v6304 = vpop.f32.mrb[0].mxu0
  %6305 = vdwg.mxu0
  %6306 = vmatprep.subr.bf16.mxu0 0
  %6307 = vmatpush1.bf16.msra.mxu0 %v6025
  %6308 = vmatprep.subr.bf16.mxu0 0
  %6309 = vmatpush1.bf16.msra.mxu0 %v6026
  %6310 = vmatprep.subr.bf16.mxu0 0
  %6311 = vmatpush1.bf16.msra.mxu0 %v6027
  %6312 = vmatprep.subr.bf16.mxu0 0
  %6313 = vmatpush1.bf16.msra.mxu0 %v6028
  %6314 = vmatprep.subr.bf16.mxu0 0
  %6315 = vmatpush1.bf16.msra.mxu0 %v6029
  %6316 = vmatprep.subr.bf16.mxu0 0
  %6317 = vmatpush1.bf16.msra.mxu0 %v6030
  %6318 = vmatprep.subr.bf16.mxu0 0
  %6319 = vmatpush1.bf16.msra.mxu0 %v6031
  %6320 = vmatprep.subr.bf16.mxu0 0
  %6321 = vmatpush1.bf16.msra.mxu0 %v6032
  %6322 = vmatprep.subr.bf16.mxu0 0
  %6323 = vmatpush1.bf16.msra.mxu0 %v6033
  %6324 = vmatprep.subr.bf16.mxu0 0
  %6325 = vmatpush1.bf16.msra.mxu0 %v6034
  %6326 = vmatprep.subr.bf16.mxu0 0
  %6327 = vmatpush1.bf16.msra.mxu0 %v6035
  %6328 = vmatprep.subr.bf16.mxu0 0
  %6329 = vmatpush1.bf16.msra.mxu0 %v6036
  %6330 = vmatprep.subr.bf16.mxu0 0
  %6331 = vmatpush1.bf16.msra.mxu0 %v6037
  %6332 = vmatprep.subr.bf16.mxu0 0
  %6333 = vmatpush1.bf16.msra.mxu0 %v6038
  %6334 = vmatprep.subr.bf16.mxu0 0
  %6335 = vmatpush1.bf16.msra.mxu0 %v6039
  %6336 = vmatprep.subr.bf16.mxu0 0
  %6337 = vmatpush1.bf16.msra.mxu0 %v6040
  %6338 = vmatprep.mubr.bf16.mxu0 %v5480
  %6339 = vmatmul.mubr.bf16.gmra.mrb[0].mxu0 %v5479
  %v6340 = vpop.f32.mrb[0].mxu0
  %v6341 = vadd.f32 %v6300, %v6340
  %v6342 = vpop.f32.mrb[0].mxu0
  %v6343 = vpop.f32.mrb[0].mxu0
  %v6344 = vadd.f32 %v6303, %v6343
  %v6345 = vpop.f32.mrb[0].mxu0
  %6346 = vdwg.mxu0
  %6347 = vmatprep.subr.bf16.mxu0 0
  %6348 = vmatpush1.bf16.msra.mxu0 %v6041
  %6349 = vmatprep.subr.bf16.mxu0 0
  %6350 = vmatpush1.bf16.msra.mxu0 %v6042
  %6351 = vmatprep.subr.bf16.mxu0 0
  %6352 = vmatpush1.bf16.msra.mxu0 %v6043
  %6353 = vmatprep.subr.bf16.mxu0 0
  %6354 = vmatpush1.bf16.msra.mxu0 %v6044
  %6355 = vmatprep.subr.bf16.mxu0 0
  %6356 = vmatpush1.bf16.msra.mxu0 %v6045
  %6357 = vmatprep.subr.bf16.mxu0 0
  %6358 = vmatpush1.bf16.msra.mxu0 %v6046
  %6359 = vmatprep.subr.bf16.mxu0 0
  %6360 = vmatpush1.bf16.msra.mxu0 %v6047
  %6361 = vmatprep.subr.bf16.mxu0 0
  %6362 = vmatpush1.bf16.msra.mxu0 %v6048
  %6363 = vmatprep.subr.bf16.mxu0 0
  %6364 = vmatpush1.bf16.msra.mxu0 %v6049
  %6365 = vmatprep.subr.bf16.mxu0 0
  %6366 = vmatpush1.bf16.msra.mxu0 %v6050
  %6367 = vmatprep.subr.bf16.mxu0 0
  %6368 = vmatpush1.bf16.msra.mxu0 %v6051
  %6369 = vmatprep.subr.bf16.mxu0 0
  %6370 = vmatpush1.bf16.msra.mxu0 %v6052
  %6371 = vmatprep.subr.bf16.mxu0 0
  %6372 = vmatpush1.bf16.msra.mxu0 %v6053
  %6373 = vmatprep.subr.bf16.mxu0 0
  %6374 = vmatpush1.bf16.msra.mxu0 %v6054
  %6375 = vmatprep.subr.bf16.mxu0 0
  %6376 = vmatpush1.bf16.msra.mxu0 %v6055
  %6377 = vmatprep.subr.bf16.mxu0 0
  %6378 = vmatpush1.bf16.msra.mxu0 %v6056
  %6379 = vmatprep.mubr.bf16.mxu0 %v5482
  %6380 = vmatmul.mubr.bf16.gmra.mrb[0].mxu0 %v5481
  %v6381 = vpop.f32.mrb[0].mxu0
  %v6382 = vadd.f32 %v6341, %v6381
  %v6383 = vpop.f32.mrb[0].mxu0
  %v6384 = vpop.f32.mrb[0].mxu0
  %v6385 = vadd.f32 %v6344, %v6384
  %v6386 = vpop.f32.mrb[0].mxu0
  %6387 = vdwg.mxu0
  %6388 = vmatprep.subr.bf16.mxu0 0
  %6389 = vmatpush1.bf16.msra.mxu0 %v6057
  %6390 = vmatprep.subr.bf16.mxu0 0
  %6391 = vmatpush1.bf16.msra.mxu0 %v6058
  %6392 = vmatprep.subr.bf16.mxu0 0
  %6393 = vmatpush1.bf16.msra.mxu0 %v6059
  %6394 = vmatprep.subr.bf16.mxu0 0
  %6395 = vmatpush1.bf16.msra.mxu0 %v6060
  %6396 = vmatprep.subr.bf16.mxu0 0
  %6397 = vmatpush1.bf16.msra.mxu0 %v6061
  %6398 = vmatprep.subr.bf16.mxu0 0
  %6399 = vmatpush1.bf16.msra.mxu0 %v6062
  %6400 = vmatprep.subr.bf16.mxu0 0
  %6401 = vmatpush1.bf16.msra.mxu0 %v6063
  %6402 = vmatprep.subr.bf16.mxu0 0
  %6403 = vmatpush1.bf16.msra.mxu0 %v6064
  %6404 = vmatprep.subr.bf16.mxu0 0
  %6405 = vmatpush1.bf16.msra.mxu0 %v6065
  %6406 = vmatprep.subr.bf16.mxu0 0
  %6407 = vmatpush1.bf16.msra.mxu0 %v6066
  %6408 = vmatprep.subr.bf16.mxu0 0
  %6409 = vmatpush1.bf16.msra.mxu0 %v6067
  %6410 = vmatprep.subr.bf16.mxu0 0
  %6411 = vmatpush1.bf16.msra.mxu0 %v6068
  %6412 = vmatprep.subr.bf16.mxu0 0
  %6413 = vmatpush1.bf16.msra.mxu0 %v6069
  %6414 = vmatprep.subr.bf16.mxu0 0
  %6415 = vmatpush1.bf16.msra.mxu0 %v6070
  %6416 = vmatprep.subr.bf16.mxu0 0
  %6417 = vmatpush1.bf16.msra.mxu0 %v6071
  %6418 = vmatprep.subr.bf16.mxu0 0
  %6419 = vmatpush1.bf16.msra.mxu0 %v6072
  %6420 = vmatprep.mubr.bf16.mxu0 %v5484
  %6421 = vmatmul.mubr.bf16.gmra.mrb[0].mxu0 %v5483
  %v6422 = vpop.f32.mrb[0].mxu0
  %v6423 = vadd.f32 %v6382, %v6422
  %v6424 = vpop.f32.mrb[0].mxu0
  %v6425 = vpop.f32.mrb[0].mxu0
  %v6426 = vadd.f32 %v6385, %v6425
  %v6427 = vpop.f32.mrb[0].mxu0
  %6428 = vdwg.mxu0
  %6429 = vmatprep.subr.bf16.mxu0 0
  %6430 = vmatpush1.bf16.msra.mxu0 %v6073
  %6431 = vmatprep.subr.bf16.mxu0 0
  %6432 = vmatpush1.bf16.msra.mxu0 %v6074
  %6433 = vmatprep.subr.bf16.mxu0 0
  %6434 = vmatpush1.bf16.msra.mxu0 %v6075
  %6435 = vmatprep.subr.bf16.mxu0 0
  %6436 = vmatpush1.bf16.msra.mxu0 %v6076
  %6437 = vmatprep.subr.bf16.mxu0 0
  %6438 = vmatpush1.bf16.msra.mxu0 %v6077
  %6439 = vmatprep.subr.bf16.mxu0 0
  %6440 = vmatpush1.bf16.msra.mxu0 %v6078
  %6441 = vmatprep.subr.bf16.mxu0 0
  %6442 = vmatpush1.bf16.msra.mxu0 %v6079
  %6443 = vmatprep.subr.bf16.mxu0 0
  %6444 = vmatpush1.bf16.msra.mxu0 %v6080
  %6445 = vmatprep.subr.bf16.mxu0 0
  %6446 = vmatpush1.bf16.msra.mxu0 %v6081
  %6447 = vmatprep.subr.bf16.mxu0 0
  %6448 = vmatpush1.bf16.msra.mxu0 %v6082
  %6449 = vmatprep.subr.bf16.mxu0 0
  %6450 = vmatpush1.bf16.msra.mxu0 %v6083
  %6451 = vmatprep.subr.bf16.mxu0 0
  %6452 = vmatpush1.bf16.msra.mxu0 %v6084
  %6453 = vmatprep.subr.bf16.mxu0 0
  %6454 = vmatpush1.bf16.msra.mxu0 %v6085
  %6455 = vmatprep.subr.bf16.mxu0 0
  %6456 = vmatpush1.bf16.msra.mxu0 %v6086
  %6457 = vmatprep.subr.bf16.mxu0 0
  %6458 = vmatpush1.bf16.msra.mxu0 %v6087
  %6459 = vmatprep.subr.bf16.mxu0 0
  %6460 = vmatpush1.bf16.msra.mxu0 %v6088
  %6461 = vmatprep.mubr.bf16.mxu0 %v5486
  %6462 = vmatmul.mubr.bf16.gmra.mrb[0].mxu0 %v5485
  %v6463 = vpop.f32.mrb[0].mxu0
  %v6464 = vadd.f32 %v6423, %v6463
  %v6465 = vpop.f32.mrb[0].mxu0
  %v6466 = vpop.f32.mrb[0].mxu0
  %v6467 = vadd.f32 %v6426, %v6466
  %v6468 = vpop.f32.mrb[0].mxu0
  %6469 = vdwg.mxu0
  %6470 = vmatprep.subr.bf16.mxu0 0
  %6471 = vmatpush1.bf16.msra.mxu0 %v6089
  %6472 = vmatprep.subr.bf16.mxu0 0
  %6473 = vmatpush1.bf16.msra.mxu0 %v6090
  %6474 = vmatprep.subr.bf16.mxu0 0
  %6475 = vmatpush1.bf16.msra.mxu0 %v6091
  %6476 = vmatprep.subr.bf16.mxu0 0
  %6477 = vmatpush1.bf16.msra.mxu0 %v6092
  %6478 = vmatprep.subr.bf16.mxu0 0
  %6479 = vmatpush1.bf16.msra.mxu0 %v6093
  %6480 = vmatprep.subr.bf16.mxu0 0
  %6481 = vmatpush1.bf16.msra.mxu0 %v6094
  %6482 = vmatprep.subr.bf16.mxu0 0
  %6483 = vmatpush1.bf16.msra.mxu0 %v6095
  %6484 = vmatprep.subr.bf16.mxu0 0
  %6485 = vmatpush1.bf16.msra.mxu0 %v6096
  %6486 = vmatprep.subr.bf16.mxu0 0
  %6487 = vmatpush1.bf16.msra.mxu0 %v6097
  %6488 = vmatprep.subr.bf16.mxu0 0
  %6489 = vmatpush1.bf16.msra.mxu0 %v6098
  %6490 = vmatprep.subr.bf16.mxu0 0
  %6491 = vmatpush1.bf16.msra.mxu0 %v6099
  %6492 = vmatprep.subr.bf16.mxu0 0
  %6493 = vmatpush1.bf16.msra.mxu0 %v6100
  %6494 = vmatprep.subr.bf16.mxu0 0
  %6495 = vmatpush1.bf16.msra.mxu0 %v6101
  %6496 = vmatprep.subr.bf16.mxu0 0
  %6497 = vmatpush1.bf16.msra.mxu0 %v6102
  %6498 = vmatprep.subr.bf16.mxu0 0
  %6499 = vmatpush1.bf16.msra.mxu0 %v6103
  %6500 = vmatprep.subr.bf16.mxu0 0
  %6501 = vmatpush1.bf16.msra.mxu0 %v6104
  %6502 = vmatprep.mubr.bf16.mxu0 %v5488
  %6503 = vmatmul.mubr.bf16.gmra.mrb[0].mxu0 %v5487
  %v6504 = vpop.f32.mrb[0].mxu0
  %v6505 = vadd.f32 %v6464, %v6504
  %v6506 = vpop.f32.mrb[0].mxu0
  %v6507 = vpop.f32.mrb[0].mxu0
  %v6508 = vadd.f32 %v6467, %v6507
  %v6509 = vpop.f32.mrb[0].mxu0
  %6510 = vdwg.mxu0
  %6511 = vmatprep.subr.bf16.mxu0 0
  %6512 = vmatpush1.bf16.msra.mxu0 %v6105
  %6513 = vmatprep.subr.bf16.mxu0 0
  %6514 = vmatpush1.bf16.msra.mxu0 %v6106
  %6515 = vmatprep.subr.bf16.mxu0 0
  %6516 = vmatpush1.bf16.msra.mxu0 %v6107
  %6517 = vmatprep.subr.bf16.mxu0 0
  %6518 = vmatpush1.bf16.msra.mxu0 %v6108
  %6519 = vmatprep.subr.bf16.mxu0 0
  %6520 = vmatpush1.bf16.msra.mxu0 %v6109
  %6521 = vmatprep.subr.bf16.mxu0 0
  %6522 = vmatpush1.bf16.msra.mxu0 %v6110
  %6523 = vmatprep.subr.bf16.mxu0 0
  %6524 = vmatpush1.bf16.msra.mxu0 %v6111
  %6525 = vmatprep.subr.bf16.mxu0 0
  %6526 = vmatpush1.bf16.msra.mxu0 %v6112
  %6527 = vmatprep.subr.bf16.mxu0 0
  %6528 = vmatpush1.bf16.msra.mxu0 %v6113
  %6529 = vmatprep.subr.bf16.mxu0 0
  %6530 = vmatpush1.bf16.msra.mxu0 %v6114
  %6531 = vmatprep.subr.bf16.mxu0 0
  %6532 = vmatpush1.bf16.msra.mxu0 %v6115
  %6533 = vmatprep.subr.bf16.mxu0 0
  %6534 = vmatpush1.bf16.msra.mxu0 %v6116
  %6535 = vmatprep.subr.bf16.mxu0 0
  %6536 = vmatpush1.bf16.msra.mxu0 %v6117
  %6537 = vmatprep.subr.bf16.mxu0 0
  %6538 = vmatpush1.bf16.msra.mxu0 %v6118
  %6539 = vmatprep.subr.bf16.mxu0 0
  %6540 = vmatpush1.bf16.msra.mxu0 %v6119
  %6541 = vmatprep.subr.bf16.mxu0 0
  %6542 = vmatpush1.bf16.msra.mxu0 %v6120
  %6543 = vmatprep.mubr.bf16.mxu0 %v5490
  %6544 = vmatmul.mubr.bf16.gmra.mrb[0].mxu0 %v5489
  %v6545 = vpop.f32.mrb[0].mxu0
  %v6546 = vadd.f32 %v6505, %v6545
  %v6547 = vpop.f32.mrb[0].mxu0
  %v6548 = vpop.f32.mrb[0].mxu0
  %v6549 = vadd.f32 %v6508, %v6548
  %v6550 = vpop.f32.mrb[0].mxu0
  %6551 = vdwg.mxu0
  %6552 = vmatprep.subr.bf16.mxu0 0
  %6553 = vmatpush1.bf16.msra.mxu0 %v6121
  %6554 = vmatprep.subr.bf16.mxu0 0
  %6555 = vmatpush1.bf16.msra.mxu0 %v6122
  %6556 = vmatprep.subr.bf16.mxu0 0
  %6557 = vmatpush1.bf16.msra.mxu0 %v6123
  %6558 = vmatprep.subr.bf16.mxu0 0
  %6559 = vmatpush1.bf16.msra.mxu0 %v6124
  %6560 = vmatprep.subr.bf16.mxu0 0
  %6561 = vmatpush1.bf16.msra.mxu0 %v6125
  %6562 = vmatprep.subr.bf16.mxu0 0
  %6563 = vmatpush1.bf16.msra.mxu0 %v6126
  %6564 = vmatprep.subr.bf16.mxu0 0
  %6565 = vmatpush1.bf16.msra.mxu0 %v6127
  %6566 = vmatprep.subr.bf16.mxu0 0
  %6567 = vmatpush1.bf16.msra.mxu0 %v6128
  %6568 = vmatprep.subr.bf16.mxu0 0
  %6569 = vmatpush1.bf16.msra.mxu0 %v6129
  %6570 = vmatprep.subr.bf16.mxu0 0
  %6571 = vmatpush1.bf16.msra.mxu0 %v6130
  %6572 = vmatprep.subr.bf16.mxu0 0
  %6573 = vmatpush1.bf16.msra.mxu0 %v6131
  %6574 = vmatprep.subr.bf16.mxu0 0
  %6575 = vmatpush1.bf16.msra.mxu0 %v6132
  %6576 = vmatprep.subr.bf16.mxu0 0
  %6577 = vmatpush1.bf16.msra.mxu0 %v6133
  %6578 = vmatprep.subr.bf16.mxu0 0
  %6579 = vmatpush1.bf16.msra.mxu0 %v6134
  %6580 = vmatprep.subr.bf16.mxu0 0
  %6581 = vmatpush1.bf16.msra.mxu0 %v6135
  %6582 = vmatprep.subr.bf16.mxu0 0
  %6583 = vmatpush1.bf16.msra.mxu0 %v6136
  %6584 = vmatprep.mubr.bf16.mxu0 %v5492
  %6585 = vmatmul.mubr.bf16.gmra.mrb[0].mxu0 %v5491
  %v6586 = vpop.f32.mrb[0].mxu0
  %v6587 = vadd.f32 %v6546, %v6586
  %v6588 = vpop.f32.mrb[0].mxu0
  %v6589 = vpop.f32.mrb[0].mxu0
  %v6590 = vadd.f32 %v6549, %v6589
  %v6591 = vpop.f32.mrb[0].mxu0
  %6592 = vdwg.mxu0
  %v6593 = vadd.f32 %v4559, %v6587
  %v6594 = vadd.f32 %v4560, %v6590
  %v6595 = vsel %vm130, %v6593, 0.0
  %6596 = vadd.xlane.f32.xlu0 %v6595
  %v6597 = vpop.xlane.xlu0 %6596
  %v6598 = vsel %vm130, %v6594, 0.0
  %6599 = vadd.xlane.f32.xlu0 %v6598
  %v6600 = vpop.xlane.xlu0 %6599
  %v6601 = vmul.f32 %v6597, %v629
  %v6602 = vmul.f32 %v6600, %v629
  %v6603 = vsub.f32 %v6593, %v6601
  %v6604 = vsub.f32 %v6594, %v6602
  %v6605 = vmul.f32 %v6603, %v6603
  %v6606 = vmul.f32 %v6604, %v6604
  %v6607 = vsel %vm130, %v6605, 0.0
  %6608 = vadd.xlane.f32.xlu0 %v6607
  %v6609 = vpop.xlane.xlu0 %6608
  %v6610 = vsel %vm130, %v6606, 0.0
  %6611 = vadd.xlane.f32.xlu0 %v6610
  %v6612 = vpop.xlane.xlu0 %6611
  %v6613 = vmul.f32 %v6609, %v629
  %v6614 = vmul.f32 %v6612, %v629
  %v6615 = vadd.f32 %v6613, 1e-05
  %v6616 = vadd.f32 %v6614, 1e-05
  %v6617 = vrsqrt.pop %v6615
  %v6618 = vrsqrt.pop %v6616
  %v6619 = vmul.f32 %v6603, %v6617
  %v6620 = vmul.f32 %v6604, %v6618
  %v6621 = vlaneseq
  %v6622 = vshrl.u32 %v6621, 7
  %v6623 = vsub.s32 7, %v6622
  %v6624 = vrot.slane %v3368, %v6623
  %v6625 = vmul.f32 %v6619, %v6624
  %v6626 = vmul.f32 %v6620, %v6624
  %v6627 = vlaneseq
  %v6628 = vshrl.u32 %v6627, 7
  %v6629 = vsub.s32 0, %v6628
  %v6630 = vrot.slane %v3369, %v6629
  %v6631 = vadd.f32 %v6625, %v6630
  %v6632 = vadd.f32 %v6626, %v6630
  %v6633 = vld [vmem:[%s14] sm:$0xff]
  %v6634 = vld [vmem:[%s14 + $0x8] sm:$0xff]
  %v6635 = vld [vmem:[%s14 + $0x10] sm:$0xff]
  %v6636 = vld [vmem:[%s14 + $0x18] sm:$0xff]
  %v6637 = vpack.c.bf16 %v6632, %v6631
  %v6638 = vld [vmem:[%s15] sm:$0x3]
  %v6640 = vlaneseq
  %v6641 = vshrl.u32 %v6640, 7
  %v6642 = vsub.s32 0, %v6641
  %v6643 = vrot.slane %v6638, %v6642
  %v6644 = vlaneseq
  %v6645 = vshrl.u32 %v6644, 7
  %v6646 = vsub.s32 1, %v6645
  %v6647 = vrot.slane %v6638, %v6646
  %v6654 = vunpack.c.l.b16 %v6633
  %v6655 = vunpack.c.h.b16 %v6633
  %v6656 = vunpack.c.l.b16 %v6634
  %v6657 = vunpack.c.h.b16 %v6634
  %v6658 = vunpack.c.l.b16 %v6635
  %v6659 = vunpack.c.h.b16 %v6635
  %v6660 = vunpack.c.l.b16 %v6636
  %v6661 = vunpack.c.h.b16 %v6636
  %v6662 = vpack.c.b16 %v6656, %v6654
  %v6663 = vpack.c.b16 %v6657, %v6655
  %v6664 = vpack.c.b16 %v6660, %v6658
  %v6665 = vpack.c.b16 %v6661, %v6659
  %v6671 = vsel %vm130, %v6637, 0
  %6673 = vmatprep.subr.bf16.mxu0 %v6663
  %6674 = vmatpush1.bf16.msra.mxu0 %v6662
  %6675 = vmatprep.subr.bf16.mxu0 %v6665
  %6676 = vmatpush1.bf16.msra.mxu0 %v6664
  %6677 = vmatprep.subr.bf16.mxu0 0
  %6678 = vmatpush1.bf16.msra.mxu0 0
  %6679 = vmatprep.subr.bf16.mxu0 0
  %6680 = vmatpush1.bf16.msra.mxu0 0
  %6681 = vmatprep.subr.bf16.mxu0 0
  %6682 = vmatpush1.bf16.msra.mxu0 0
  %6683 = vmatprep.subr.bf16.mxu0 0
  %6684 = vmatpush1.bf16.msra.mxu0 0
  %6685 = vmatprep.subr.bf16.mxu0 0
  %6686 = vmatpush1.bf16.msra.mxu0 0
  %6687 = vmatprep.subr.bf16.mxu0 0
  %6688 = vmatpush1.bf16.msra.mxu0 0
  %6689 = vmatprep.subr.bf16.mxu0 0
  %6690 = vmatpush1.bf16.msra.mxu0 0
  %6691 = vmatprep.subr.bf16.mxu0 0
  %6692 = vmatpush1.bf16.msra.mxu0 0
  %6693 = vmatprep.subr.bf16.mxu0 0
  %6694 = vmatpush1.bf16.msra.mxu0 0
  %6695 = vmatprep.subr.bf16.mxu0 0
  %6696 = vmatpush1.bf16.msra.mxu0 0
  %6697 = vmatprep.subr.bf16.mxu0 0
  %6698 = vmatpush1.bf16.msra.mxu0 0
  %6699 = vmatprep.subr.bf16.mxu0 0
  %6700 = vmatpush1.bf16.msra.mxu0 0
  %6701 = vmatprep.subr.bf16.mxu0 0
  %6702 = vmatpush1.bf16.msra.mxu0 0
  %6703 = vmatprep.subr.bf16.mxu0 0
  %6704 = vmatpush1.bf16.msra.mxu0 0
  %6705 = vmatprep.mubr.bf16.mxu0 0
  %6706 = vmatmul.mubr.bf16.gmra.mrb[0].mxu0 %v6671
  %v6707 = vpop.f32.mrb[0].mxu0
  %v6708 = vadd.f32 %v6643, %v6707
  %v6709 = vpop.f32.mrb[0].mxu0
  %v6710 = vadd.f32 %v6647, %v6709
  %v6711 = vpop.f32.mrb[0].mxu0
  %v6712 = vadd.f32 %v6643, %v6711
  %v6713 = vpop.f32.mrb[0].mxu0
  %v6714 = vadd.f32 %v6647, %v6713
  %6715 = vdwg.mxu0
  %6716 = vst [vmem:[%s16] sm:$0xff] %v6708
  %6717 = vst [vmem:[%s16 + $0x8] sm:$0xff] %v6710
  %6718 = vst [vmem:[%s16 + $0x10] sm:$0xff] %v6712
  %6719 = vst [vmem:[%s16 + $0x18] sm:$0xff] %v6714
  // Predicated region
  $region66: #{decoder_forward.1} parent=0 // pred_check
    _
  $region67: #{decoder_forward.1} parent=0 // pred_check_branch
    %6721 = sbr.rel (0) target = $region69
  $region68: #{decoder_forward.1} parent=0 // pred_region
    _
  $region69: #{decoder_forward.1} parent=0 // pred_fallthru
    _
  // Predicated region
  $region70: #{decoder_forward.1} parent=0 // pred_check
    _
  $region71: #{decoder_forward.1} parent=0 // pred_check_branch
    %6723 = sbr.rel (0) target = $region73
  $region72: #{decoder_forward.1} parent=0 // pred_region
    _
  $region73: #{decoder_forward.1} parent=0 // pred_fallthru
    _

</llo_original>
